<compile_context>
chip_gen: v7x
topology: tpu7x:2x2x1
jax: 0.10.0
libtpu: 0.0.40
codegen_flags: <defaults>
</compile_context>

<pallas_src>
import functools

import jax
import jax.numpy as jnp
from jax.experimental import pallas as pl
from jax.experimental.pallas import tpu as pltpu


ROW_TILE_TARGET = 512  # rows per grid step; double-buffered tiles stay well under v7x's 32 MiB scoped VMEM


def _pick_tile(total, target, multiple=8):
    """Largest divisor of `total` <= target that is a multiple of `multiple`
    (falls back to the full extent -> grid of 1)."""
    t = min(total, target)
    while t > 0:
        if total % t == 0 and (t % multiple == 0 or t == total):
            return t
        t -= 1
    return total


# TODO(synk): PyTorch nn.GELU defaults to the exact erf form; erf has no reliable
# Mosaic lowering, so the tanh approximation is used (max abs diff ~1e-3).
def _gelu(x):
    return 0.5 * x * (1.0 + jnp.tanh(0.7978845608028654 * (x + 0.044715 * x * x * x)))


def _ln(x, g, b, eps):
    """LayerNorm1d over the channel (last) axis; rsqrt keeps the normalize on the EUP."""
    u = jnp.mean(x, axis=-1, keepdims=True)
    xc = x - u
    s = jnp.mean(xc * xc, axis=-1, keepdims=True)
    return xc * jax.lax.rsqrt(s + eps) * g + b


# ----------------------------------------------------------------------------- #
# Kernel 1: fused ConvTranspose1d(k=4, s=2, p=1) + LayerNorm1d + GELU
# ----------------------------------------------------------------------------- #
def _upscale1_kernel(x_ref, w_ref, b_ref, g_ref, bb_ref, o_ref, *, w_len, eps):
    """x_ref: (TB, C) rows = (row n, base position j) flattened, TB % w_len == 0.
    w_ref: (4, C, C2) with w_ref[k] = W[:, :, k].
    o_ref: (2, TB, C2) -- slot 0 = even output positions (2j), slot 1 = odd (2j+1)."""
    xf = x_ref[...]
    s0 = jnp.dot(xf, w_ref[0], preferred_element_type=jnp.float32)
    s1 = jnp.dot(xf, w_ref[1], preferred_element_type=jnp.float32)
    s2 = jnp.dot(xf, w_ref[2], preferred_element_type=jnp.float32)
    s3 = jnp.dot(xf, w_ref[3], preferred_element_type=jnp.float32)
    tb, c2 = s0.shape
    pos = jax.lax.broadcasted_iota(jnp.int32, (tb, c2), 0) % w_len
    zrow = jnp.zeros((1, c2), jnp.float32)
    prev = jnp.concatenate([zrow, s3[:-1, :]], axis=0)   # prev[i] = s3[i-1]
    nxt = jnp.concatenate([s0[1:, :], zrow], axis=0)     # nxt[i]  = s0[i+1]
    # out[2j]   = W1^T x[j] + W3^T x[j-1];  out[2j+1] = W2^T x[j] + W0^T x[j+1]
    even = s1 + jnp.where(pos == 0, 0.0, prev) + b_ref[...]
    odd = s2 + jnp.where(pos == w_len - 1, 0.0, nxt) + b_ref[...]
    g = g_ref[...]
    bb = bb_ref[...]
    o_ref[0] = _gelu(_ln(even, g, bb, eps)).astype(o_ref.dtype)
    o_ref[1] = _gelu(_ln(odd, g, bb, eps)).astype(o_ref.dtype)


def upscale_stage1(x_flat, w1s, b1, g1, bb1, *, w_len, eps=1e-6):
    m, c = x_flat.shape
    _, _, c2 = w1s.shape
    tb = _pick_tile(m, ROW_TILE_TARGET, multiple=w_len)
    kern = functools.partial(_upscale1_kernel, w_len=w_len, eps=eps)
    return pl.pallas_call(
        kern,
        out_shape=jax.ShapeDtypeStruct((2, m, c2), jnp.float32),
        grid=(m // tb,),
        in_specs=[
            pl.BlockSpec((tb, c), lambda i: (i, 0)),
            pl.BlockSpec((4, c, c2), lambda i: (0, 0, 0)),
            pl.BlockSpec((1, c2), lambda i: (0, 0)),
            pl.BlockSpec((1, c2), lambda i: (0, 0)),
            pl.BlockSpec((1, c2), lambda i: (0, 0)),
        ],
        out_specs=pl.BlockSpec((2, tb, c2), lambda i: (0, i, 0)),
        compiler_params=pltpu.CompilerParams(dimension_semantics=("parallel",)),
    )(x_flat, w1s, b1, g1, bb1)


# ----------------------------------------------------------------------------- #
# Kernel 2: fused ConvTranspose1d (stride == kernel) + [LayerNorm1d] + GELU
# ----------------------------------------------------------------------------- #
def _expand_kernel(x_ref, w_ref, b_ref, g_ref, bb_ref, o_ref, *, kf, apply_ln, eps):
    """x_ref: (TB, Cin); w_ref: (kf, Cin, Cout); o_ref: (kf, TB, Cout).
    o_ref[k] holds the conv-transpose outputs for output positions (kf*p + k)."""
    x = x_ref[...]
    bias = b_ref[...]
    for k in range(kf):
        z = jnp.dot(x, w_ref[k], preferred_element_type=jnp.float32) + bias
        if apply_ln:
            z = _ln(z, g_ref[...], bb_ref[...], eps)
        o_ref[k] = _gelu(z).astype(o_ref.dtype)


def expand_ln_gelu(x, ws, bias, g, bb, *, apply_ln, eps=1e-6):
    m, cin = x.shape
    kf, _, cout = ws.shape
    tb = _pick_tile(m, ROW_TILE_TARGET, multiple=8)
    kern = functools.partial(_expand_kernel, kf=kf, apply_ln=apply_ln, eps=eps)
    return pl.pallas_call(
        kern,
        out_shape=jax.ShapeDtypeStruct((kf, m, cout), jnp.float32),
        grid=(m // tb,),
        in_specs=[
            pl.BlockSpec((tb, cin), lambda i: (i, 0)),
            pl.BlockSpec((kf, cin, cout), lambda i: (0, 0, 0)),
            pl.BlockSpec((1, cout), lambda i: (0, 0)),
            pl.BlockSpec((1, cout), lambda i: (0, 0)),
            pl.BlockSpec((1, cout), lambda i: (0, 0)),
        ],
        out_specs=pl.BlockSpec((kf, tb, cout), lambda i: (0, i, 0)),
        compiler_params=pltpu.CompilerParams(dimension_semantics=("parallel",)),
    )(x, ws, bias, g, bb)


# ----------------------------------------------------------------------------- #
# Kernel 3: all T hypernetwork MLPs in one call, grid=(T,)
# ----------------------------------------------------------------------------- #
def _hyper_kernel(hs_ref, w0_ref, b0_ref, w1_ref, b1_ref, w2_ref, b2_ref, o_ref):
    x = hs_ref[0]                                                       # (b, C)
    x = jnp.maximum(jnp.dot(x, w0_ref[0], preferred_element_type=jnp.float32) + b0_ref[0], 0.0)
    x = jnp.maximum(jnp.dot(x, w1_ref[0], preferred_element_type=jnp.float32) + b1_ref[0], 0.0)
    x = jnp.dot(x, w2_ref[0], preferred_element_type=jnp.float32) + b2_ref[0]
    o_ref[0] = x.astype(o_ref.dtype)


def hyper_mlps(hs, w0, b0, w1, b1, w2, b2):
    bsz, tkn, c = hs.shape
    c8 = w2.shape[-1]
    hs_t = jnp.transpose(hs, (1, 0, 2))                                 # (T, b, C)
    out = pl.pallas_call(
        _hyper_kernel,
        out_shape=jax.ShapeDtypeStruct((tkn, bsz, c8), jnp.float32),
        grid=(tkn,),
        in_specs=[
            pl.BlockSpec((1, bsz, c), lambda t: (t, 0, 0)),
            pl.BlockSpec((1, c, c), lambda t: (t, 0, 0)),
            pl.BlockSpec((1, 1, c), lambda t: (t, 0, 0)),
            pl.BlockSpec((1, c, c), lambda t: (t, 0, 0)),
            pl.BlockSpec((1, 1, c), lambda t: (t, 0, 0)),
            pl.BlockSpec((1, c, c8), lambda t: (t, 0, 0)),
            pl.BlockSpec((1, 1, c8), lambda t: (t, 0, 0)),
        ],
        out_specs=pl.BlockSpec((1, bsz, c8), lambda t: (t, 0, 0)),
        compiler_params=pltpu.CompilerParams(dimension_semantics=("parallel",)),
    )(hs_t, w0, b0, w1, b1, w2, b2)
    return jnp.transpose(out, (1, 0, 2))                                # (b, T, C8)


# ----------------------------------------------------------------------------- #
# Kernel 4: fused channel aggregator (Linear over h) + hyper_in @ upscaled
# ----------------------------------------------------------------------------- #
def _masks_kernel(y3_ref, hb_ref, ht_ref, aw_ref, ab_ref, o_ref, *, h, w, nco):
    """Per batch element:
    y3_ref: (8, 1, h*w, 8*C8)  stage-3 output, rows (k2e, hi, j), cols (k3, c8).
    hb_ref: (1, 8*C8, 8*T)     block-diagonal kron(I_8, hyper_in[b].T).
    ht_ref: (1, C8, T)         hyper_in[b].T (for the aggregator-bias term).
    aw_ref: SMEM (h, nco); ab_ref: SMEM (1, nco).
    o_ref:  (1, nco*8, w, 8*T) -> o[0, o*8+k2e, j, k3*T+t]."""
    kc = y3_ref.shape[-1]
    t8 = hb_ref.shape[-1]
    y3 = y3_ref[...].reshape(8 * h * w, kc)
    pp = jnp.dot(y3, hb_ref[0], preferred_element_type=jnp.float32)     # (8*h*w, 8*T)
    pp = pp.reshape(8, h, w, t8)
    s_t = jnp.sum(ht_ref[0], axis=0, keepdims=True)                     # (1, T)
    s_t8 = jnp.tile(s_t, (1, 8))                                        # (1, 8*T)
    for o in range(nco):
        acc = jnp.zeros((8, w, t8), jnp.float32)
        for hi in range(h):
            acc = acc + aw_ref[hi, o] * pp[:, hi, :, :]
        acc = acc + ab_ref[0, o] * s_t8
        o_ref[0, o * 8:(o + 1) * 8] = acc.astype(o_ref.dtype)
    # TODO(synk): at full SAM sizes the per-batch y3 block exceeds VMEM; tile the
    # h*w axis and keep a masks accumulator in VMEM instead of one block per batch.


def fused_masks(y3, hyper_in, agg_w, agg_b, *, b, h, w, nco):
    kc = y3.shape[-1]                                                   # 8*C8
    _, tkn, c8 = hyper_in.shape
    y3r = y3.reshape(8, b, h * w, kc)
    hyp_t = jnp.transpose(hyper_in, (0, 2, 1))                          # (b, C8, T)
    eye8 = jnp.eye(8, dtype=jnp.float32)
    hblk = jnp.einsum("ij,bct->bicjt", eye8, hyp_t).reshape(b, 8 * c8, 8 * tkn)
    kern = functools.partial(_masks_kernel, h=h, w=w, nco=nco)
    out = pl.pallas_call(
        kern,
        out_shape=jax.ShapeDtypeStruct((b, nco * 8, w, 8 * tkn), jnp.float32),
        grid=(b,),
        in_specs=[
            pl.BlockSpec((8, 1, h * w, kc), lambda i: (0, i, 0, 0)),
            pl.BlockSpec((1, 8 * c8, 8 * tkn), lambda i: (i, 0, 0)),
            pl.BlockSpec((1, c8, tkn), lambda i: (i, 0, 0)),
            pl.BlockSpec((h, nco), lambda i: (0, 0),
                         memory_space=pltpu.MemorySpace.SMEM),
            pl.BlockSpec((1, nco), lambda i: (0, 0),
                         memory_space=pltpu.MemorySpace.SMEM),
        ],
        out_specs=pl.BlockSpec((1, nco * 8, w, 8 * tkn), lambda i: (i, 0, 0, 0)),
        compiler_params=pltpu.CompilerParams(dimension_semantics=("parallel",)),
    )(y3r, hblk, hyp_t, agg_w, agg_b)
    # OUT[bi, o*8 + (k2*2+e), j, k3*T + t] -> masks[bi, t, o, 64j + 32e + 8k2 + k3]
    out = out.reshape(b, nco, 4, 2, w, 8, tkn)
    out = jnp.transpose(out, (0, 6, 1, 4, 3, 2, 5))
    return out.reshape(b, tkn, nco, 64 * w)


# ----------------------------------------------------------------------------- #
# Injected `transformer` dependency (NOT part of MaskDecoder): deterministic
# plain-JAX single-head cross-attention stand-in with SAM's TwoWayTransformer
# signature, returning (hs: (B, T, C), src: (B, H*W, C)).
# ----------------------------------------------------------------------------- #
def toy_transformer(tp, src_nchw, pos_nchw, tokens):
    b, c, h, w = src_nchw.shape
    keys = src_nchw.reshape(b, c, h * w).transpose(0, 2, 1)             # (b, hw, c)
    pos = pos_nchw.reshape(b, c, h * w).transpose(0, 2, 1)
    q = tokens @ tp["wq"]
    k = (keys + pos) @ tp["wk"]
    v = keys @ tp["wv"]
    attn = jax.nn.softmax(q @ k.transpose(0, 2, 1) / jnp.sqrt(jnp.float32(c)), axis=-1)
    hs = tokens + attn @ v
    src_out = keys + (keys + pos) @ tp["ws"]
    return hs, src_out


# ----------------------------------------------------------------------------- #
# MaskDecoder.forward / predict_masks
# ----------------------------------------------------------------------------- #
def mask_decoder_forward(prep, image_embeddings, image_pe):
    b, h, w, c = image_embeddings.shape
    tkn = prep["mask_tokens"].shape[0]
    nco = prep["agg_w"].shape[1]
    n = b * h
    assert w % 8 == 0, "w must be a multiple of 8 (sublane tiling assumption)"
    assert prep["agg_w"].shape[0] == h, "num_channel_inputs must equal h"

    tokens = jnp.broadcast_to(prep["mask_tokens"][None], (b, tkn, c))
    src = jnp.transpose(image_embeddings, (0, 3, 1, 2))                 # (b, C, h, w)
    pos = jnp.transpose(image_pe, (0, 3, 1, 2))
    hs, src_seq = toy_transformer(prep["transformer"], src, pos, tokens)

    # src.transpose(1,2).view(b,c,h,w).permute(0,2,1,3).view(b*h, c, w), channels-last:
    # flat row index = (bi*h + hi)*w + j
    x_flat = src_seq.reshape(n * w, c)

    # stage 1: ConvTranspose1d(k4,s2,p1) + LN + GELU (even/odd shift-add fused in-kernel)
    y1 = upscale_stage1(x_flat, prep["w1s"], prep["b1"], prep["ln1_g"], prep["ln1_b"], w_len=w)
    y1f = y1.reshape(2 * n * w, -1)

    # stage 2: ConvTranspose1d(k4,s4) + LN + GELU
    y2 = expand_ln_gelu(y1f, prep["w2s"], prep["b2"], prep["ln2_g"], prep["ln2_b"], apply_ln=True)
    y2f = y2.reshape(8 * n * w, -1)

    # stage 3: ConvTranspose1d(k8,s8) + GELU (single lane-dense matmul, cols = (k3, c8))
    y3 = expand_ln_gelu(y2f, prep["w3s"], prep["b3"], prep["ln3_g"], prep["ln3_b"], apply_ln=False)
    y3 = y3.reshape(8 * n * w, -1)                                      # (8*N*w, 8*C8)

    # hypernetwork MLPs (one pallas_call over the T tokens)
    hyper_in = hyper_mlps(hs, prep["hw0"], prep["hb0"], prep["hw1"], prep["hb1"],
                          prep["hw2"], prep["hb2"])                     # (b, T, C8)

    # channel aggregator + hyper_in @ upscaled, fused per batch element
    return fused_masks(y3, hyper_in, prep["agg_w"], prep["agg_b"], b=b, h=h, w=w, nco=nco)


# ----------------------------------------------------------------------------- #
# Parameter preprocessing (hoisted weight flattening / bias tiling)
# ----------------------------------------------------------------------------- #
def prepare_params(p):
    c = p["mask_tokens"].shape[1]
    c2, c4, c8 = c // 2, c // 4, c // 8
    w3_flat = jnp.transpose(p["ct3_w"], (0, 2, 1)).reshape(c4, 8 * c8)  # cols k3-major, c8-minor
    hyper = p["hyper"]
    return dict(
        mask_tokens=p["mask_tokens"],
        transformer=p["transformer"],
        w1s=jnp.transpose(p["ct1_w"], (2, 0, 1)),                       # (4, C, C2)
        b1=p["ct1_b"].reshape(1, c2),
        ln1_g=p["ln1_g"].reshape(1, c2),
        ln1_b=p["ln1_b"].reshape(1, c2),
        w2s=jnp.transpose(p["ct2_w"], (2, 0, 1)),                       # (4, C2, C4)
        b2=p["ct2_b"].reshape(1, c4),
        ln2_g=p["ln2_g"].reshape(1, c4),
        ln2_b=p["ln2_b"].reshape(1, c4),
        w3s=w3_flat[None],                                              # (1, C4, 8*C8)
        b3=jnp.tile(p["ct3_b"], 8).reshape(1, 8 * c8),
        ln3_g=jnp.ones((1, 8 * c8), jnp.float32),                       # unused (LN disabled)
        ln3_b=jnp.zeros((1, 8 * c8), jnp.float32),
        hw0=jnp.stack([hp["w0"] for hp in hyper]),                      # (T, C, C)
        hb0=jnp.stack([hp["b0"] for hp in hyper])[:, None, :],          # (T, 1, C)
        hw1=jnp.stack([hp["w1"] for hp in hyper]),
        hb1=jnp.stack([hp["b1"] for hp in hyper])[:, None, :],
        hw2=jnp.stack([hp["w2"] for hp in hyper]),                      # (T, C, C8)
        hb2=jnp.stack([hp["b2"] for hp in hyper])[:, None, :],
        agg_w=p["agg_w"],                                               # (h, nco)
        agg_b=p["agg_b"].reshape(1, -1),                                # (1, nco)
    )


# ----------------------------------------------------------------------------- #
# Deterministic parameter init (synthetic; Linear weights stored as (in, out))
# ----------------------------------------------------------------------------- #
def init_params(key, c, tkn, h, nco):
    c2, c4, c8 = c // 2, c // 4, c // 8
    keys = iter(jax.random.split(key, 64))

    def rnd(shape, scale=0.02):
        return (scale * jax.random.normal(next(keys), shape)).astype(jnp.float32)

    return {
        "mask_tokens": rnd((tkn, c)),
        "ct1_w": rnd((c, c2, 4)), "ct1_b": rnd((c2,)),
        "ln1_g": jnp.ones((c2,), jnp.float32), "ln1_b": jnp.zeros((c2,), jnp.float32),
        "ct2_w": rnd((c2, c4, 4)), "ct2_b": rnd((c4,)),
        "ln2_g": jnp.ones((c4,), jnp.float32), "ln2_b": jnp.zeros((c4,), jnp.float32),
        "ct3_w": rnd((c4, c8, 8)), "ct3_b": rnd((c8,)),
        "agg_w": rnd((h, nco)), "agg_b": rnd((nco,)),
        "hyper": [
            {"w0": rnd((c, c)), "b0": rnd((c,)),
             "w1": rnd((c, c)), "b1": rnd((c,)),
             "w2": rnd((c, c8)), "b2": rnd((c8,))}
            for _ in range(tkn)
        ],
        "transformer": {"wq": rnd((c, c)), "wk": rnd((c, c)),
                        "wv": rnd((c, c)), "ws": rnd((c, c))},
    }


if __name__ == "__main__":
    B, H, W, C = 2, 4, 16, 32          # num_channel_inputs == H (required by the module)
    T, NCO = 3, 2                      # num_multimask_outputs, num_channel_outputs

    key = jax.random.PRNGKey(0)
    kp, ki, kpe = jax.random.split(key, 3)
    params = init_params(kp, C, T, H, NCO)
    prep = prepare_params(params)

    image_embeddings = jax.random.normal(ki, (B, H, W, C), jnp.float32)
    image_pe = jax.random.normal(kpe, (B, H, W, C), jnp.float32)

    fwd = jax.jit(mask_decoder_forward)
    masks = fwd(prep, image_embeddings, image_pe)
    jax.block_until_ready(masks)
    assert masks.shape == (B, T, NCO, 64 * W), masks.shape
    print("KERNEL_OK")
</pallas_src>

<mosaic_0001>
module attributes {stable_mosaic.version = 11 : i64} {
  func.func @_hyper_kernel(%arg0: i32, %arg1: memref<1x2x32xf32, #tpu.memory_space<vmem>>, %arg2: memref<1x32x32xf32, #tpu.memory_space<vmem>>, %arg3: memref<1x1x32xf32, #tpu.memory_space<vmem>>, %arg4: memref<1x32x32xf32, #tpu.memory_space<vmem>>, %arg5: memref<1x1x32xf32, #tpu.memory_space<vmem>>, %arg6: memref<1x32x4xf32, #tpu.memory_space<vmem>>, %arg7: memref<1x1x4xf32, #tpu.memory_space<vmem>>, %arg8: memref<1x2x4xf32, #tpu.memory_space<vmem>>) attributes {dimension_semantics = [#tpu.dimension_semantics<parallel>], iteration_bounds = array<i64: 3>, scalar_prefetch = 0 : i64, scratch_operands = 0 : i64, tpu.core_type = #tpu.core_type<tc>, window_params = [{transform_indices = @transform_0, window_bounds = array<i64: 1, 2, 32>}, {transform_indices = @transform_1, window_bounds = array<i64: 1, 32, 32>}, {transform_indices = @transform_2, window_bounds = array<i64: 1, 1, 32>}, {transform_indices = @transform_3, window_bounds = array<i64: 1, 32, 32>}, {transform_indices = @transform_4, window_bounds = array<i64: 1, 1, 32>}, {transform_indices = @transform_5, window_bounds = array<i64: 1, 32, 4>}, {transform_indices = @transform_6, window_bounds = array<i64: 1, 1, 4>}, {transform_indices = @transform_7, window_bounds = array<i64: 1, 2, 4>}]} {
    %c0 = arith.constant 0 : index
    %c0_0 = arith.constant 0 : index
    %c0_1 = arith.constant 0 : index
    %0 = vector.load %arg1[%c0, %c0_0, %c0_1] : memref<1x2x32xf32, #tpu.memory_space<vmem>>, vector<1x2x32xf32>
    %1 = vector.shape_cast %0 : vector<1x2x32xf32> to vector<2x32xf32>
    %c0_2 = arith.constant 0 : index
    %c0_3 = arith.constant 0 : index
    %c0_4 = arith.constant 0 : index
    %2 = vector.load %arg2[%c0_2, %c0_3, %c0_4] : memref<1x32x32xf32, #tpu.memory_space<vmem>>, vector<1x32x32xf32>
    %3 = vector.shape_cast %2 : vector<1x32x32xf32> to vector<32x32xf32>
    %cst = arith.constant dense<0.000000e+00> : vector<2x32xf32>
    %4 = tpu.matmul %1, %3, %cst {dimension_numbers = #tpu.dot_dimension_numbers<[1], [0], [0], [1], [0, 0, 1, 1], [], []>} : vector<2x32xf32>, vector<32x32xf32>, vector<2x32xf32> -> vector<2x32xf32>
    %c0_5 = arith.constant 0 : index
    %c0_6 = arith.constant 0 : index
    %c0_7 = arith.constant 0 : index
    %5 = vector.load %arg3[%c0_5, %c0_6, %c0_7] : memref<1x1x32xf32, #tpu.memory_space<vmem>>, vector<1x1x32xf32>
    %6 = vector.shape_cast %5 : vector<1x1x32xf32> to vector<1x32xf32>
    %7 = vector.broadcast %6 : vector<1x32xf32> to vector<2x32xf32>
    %8 = arith.addf %4, %7 : vector<2x32xf32>
    %cst_8 = arith.constant 0.000000e+00 : f32
    %9 = vector.broadcast %cst_8 : f32 to vector<2x32xf32>
    %10 = arith.maximumf %8, %9 : vector<2x32xf32>
    %c0_9 = arith.constant 0 : index
    %c0_10 = arith.constant 0 : index
    %c0_11 = arith.constant 0 : index
    %11 = vector.load %arg4[%c0_9, %c0_10, %c0_11] : memref<1x32x32xf32, #tpu.memory_space<vmem>>, vector<1x32x32xf32>
    %12 = vector.shape_cast %11 : vector<1x32x32xf32> to vector<32x32xf32>
    %cst_12 = arith.constant dense<0.000000e+00> : vector<2x32xf32>
    %13 = tpu.matmul %10, %12, %cst_12 {dimension_numbers = #tpu.dot_dimension_numbers<[1], [0], [0], [1], [0, 0, 1, 1], [], []>} : vector<2x32xf32>, vector<32x32xf32>, vector<2x32xf32> -> vector<2x32xf32>
    %c0_13 = arith.constant 0 : index
    %c0_14 = arith.constant 0 : index
    %c0_15 = arith.constant 0 : index
    %14 = vector.load %arg5[%c0_13, %c0_14, %c0_15] : memref<1x1x32xf32, #tpu.memory_space<vmem>>, vector<1x1x32xf32>
    %15 = vector.shape_cast %14 : vector<1x1x32xf32> to vector<1x32xf32>
    %16 = vector.broadcast %15 : vector<1x32xf32> to vector<2x32xf32>
    %17 = arith.addf %13, %16 : vector<2x32xf32>
    %cst_16 = arith.constant 0.000000e+00 : f32
    %18 = vector.broadcast %cst_16 : f32 to vector<2x32xf32>
    %19 = arith.maximumf %17, %18 : vector<2x32xf32>
    %c0_17 = arith.constant 0 : index
    %c0_18 = arith.constant 0 : index
    %c0_19 = arith.constant 0 : index
    %20 = vector.load %arg6[%c0_17, %c0_18, %c0_19] : memref<1x32x4xf32, #tpu.memory_space<vmem>>, vector<1x32x4xf32>
    %21 = vector.shape_cast %20 : vector<1x32x4xf32> to vector<32x4xf32>
    %cst_20 = arith.constant dense<0.000000e+00> : vector<2x4xf32>
    %22 = tpu.matmul %19, %21, %cst_20 {dimension_numbers = #tpu.dot_dimension_numbers<[1], [0], [0], [1], [0, 0, 1, 1], [], []>} : vector<2x32xf32>, vector<32x4xf32>, vector<2x4xf32> -> vector<2x4xf32>
    %c0_21 = arith.constant 0 : index
    %c0_22 = arith.constant 0 : index
    %c0_23 = arith.constant 0 : index
    %23 = vector.load %arg7[%c0_21, %c0_22, %c0_23] : memref<1x1x4xf32, #tpu.memory_space<vmem>>, vector<1x1x4xf32>
    %24 = vector.shape_cast %23 : vector<1x1x4xf32> to vector<1x4xf32>
    %25 = vector.broadcast %24 : vector<1x4xf32> to vector<2x4xf32>
    %26 = arith.addf %22, %25 : vector<2x4xf32>
    %c0_24 = arith.constant 0 : index
    %c0_25 = arith.constant 0 : index
    %c0_26 = arith.constant 0 : index
    %27 = vector.load %arg8[%c0_24, %c0_25, %c0_26] : memref<1x2x4xf32, #tpu.memory_space<vmem>>, vector<1x2x4xf32>
    %28 = vector.shape_cast %27 : vector<1x2x4xf32> to vector<2x4xf32>
    %29 = vector.shape_cast %26 : vector<2x4xf32> to vector<1x2x4xf32>
    tpu.vector_store %arg8[%c0_24, %c0_25, %c0_26], %29 {strides = array<i32>} : memref<1x2x4xf32, #tpu.memory_space<vmem>>, vector<1x2x4xf32>,
    return
  }
  func.func @transform_0(%arg0: i32) -> (i32, i32, i32) {
    %c0_i32 = arith.constant 0 : i32
    %c0_i32_0 = arith.constant 0 : i32
    %c0_i32_1 = arith.constant 0 : i32
    return %arg0, %c0_i32, %c0_i32_0 : i32, i32, i32
  }
  func.func @transform_1(%arg0: i32) -> (i32, i32, i32) {
    %c0_i32 = arith.constant 0 : i32
    %c0_i32_0 = arith.constant 0 : i32
    %c0_i32_1 = arith.constant 0 : i32
    return %arg0, %c0_i32, %c0_i32_0 : i32, i32, i32
  }
  func.func @transform_2(%arg0: i32) -> (i32, i32, i32) {
    %c0_i32 = arith.constant 0 : i32
    %c0_i32_0 = arith.constant 0 : i32
    %c0_i32_1 = arith.constant 0 : i32
    return %arg0, %c0_i32, %c0_i32_0 : i32, i32, i32
  }
  func.func @transform_3(%arg0: i32) -> (i32, i32, i32) {
    %c0_i32 = arith.constant 0 : i32
    %c0_i32_0 = arith.constant 0 : i32
    %c0_i32_1 = arith.constant 0 : i32
    return %arg0, %c0_i32, %c0_i32_0 : i32, i32, i32
  }
  func.func @transform_4(%arg0: i32) -> (i32, i32, i32) {
    %c0_i32 = arith.constant 0 : i32
    %c0_i32_0 = arith.constant 0 : i32
    %c0_i32_1 = arith.constant 0 : i32
    return %arg0, %c0_i32, %c0_i32_0 : i32, i32, i32
  }
  func.func @transform_5(%arg0: i32) -> (i32, i32, i32) {
    %c0_i32 = arith.constant 0 : i32
    %c0_i32_0 = arith.constant 0 : i32
    %c0_i32_1 = arith.constant 0 : i32
    return %arg0, %c0_i32, %c0_i32_0 : i32, i32, i32
  }
  func.func @transform_6(%arg0: i32) -> (i32, i32, i32) {
    %c0_i32 = arith.constant 0 : i32
    %c0_i32_0 = arith.constant 0 : i32
    %c0_i32_1 = arith.constant 0 : i32
    return %arg0, %c0_i32, %c0_i32_0 : i32, i32, i32
  }
  func.func @transform_7(%arg0: i32) -> (i32, i32, i32) {
    %c0_i32 = arith.constant 0 : i32
    %c0_i32_0 = arith.constant 0 : i32
    %c0_i32_1 = arith.constant 0 : i32
    return %arg0, %c0_i32, %c0_i32_0 : i32, i32, i32
  }
}

module attributes {stable_mosaic.version = 11 : i64} {
  func.func @_upscale1_kernel(%arg0: i32, %arg1: memref<128x32xf32, #tpu.memory_space<vmem>>, %arg2: memref<4x32x16xf32, #tpu.memory_space<vmem>>, %arg3: memref<1x16xf32, #tpu.memory_space<vmem>>, %arg4: memref<1x16xf32, #tpu.memory_space<vmem>>, %arg5: memref<1x16xf32, #tpu.memory_space<vmem>>, %arg6: memref<2x128x16xf32, #tpu.memory_space<vmem>>) attributes {dimension_semantics = [#tpu.dimension_semantics<parallel>], iteration_bounds = array<i64: 1>, scalar_prefetch = 0 : i64, scratch_operands = 0 : i64, tpu.core_type = #tpu.core_type<tc>, window_params = [{transform_indices = @transform_0, window_bounds = array<i64: 128, 32>}, {pipeline_mode = #tpu.pipeline_mode<synchronous>, transform_indices = @transform_1, window_bounds = array<i64: 4, 32, 16>}, {pipeline_mode = #tpu.pipeline_mode<synchronous>, transform_indices = @transform_2, window_bounds = array<i64: 1, 16>}, {pipeline_mode = #tpu.pipeline_mode<synchronous>, transform_indices = @transform_3, window_bounds = array<i64: 1, 16>}, {pipeline_mode = #tpu.pipeline_mode<synchronous>, transform_indices = @transform_4, window_bounds = array<i64: 1, 16>}, {transform_indices = @transform_5, window_bounds = array<i64: 2, 128, 16>}]} {
    %c0 = arith.constant 0 : index
    %c0_0 = arith.constant 0 : index
    %0 = vector.load %arg1[%c0, %c0_0] : memref<128x32xf32, #tpu.memory_space<vmem>>, vector<128x32xf32>
    %c0_1 = arith.constant 0 : index
    %c0_2 = arith.constant 0 : index
    %c0_3 = arith.constant 0 : index
    %1 = vector.load %arg2[%c0_1, %c0_2, %c0_3] : memref<4x32x16xf32, #tpu.memory_space<vmem>>, vector<1x32x16xf32>
    %2 = vector.shape_cast %1 : vector<1x32x16xf32> to vector<32x16xf32>
    %cst = arith.constant dense<0.000000e+00> : vector<128x16xf32>
    %3 = tpu.matmul %0, %2, %cst {dimension_numbers = #tpu.dot_dimension_numbers<[1], [0], [0], [1], [0, 0, 1, 1], [], []>} : vector<128x32xf32>, vector<32x16xf32>, vector<128x16xf32> -> vector<128x16xf32>
    %c1 = arith.constant 1 : index
    %c0_4 = arith.constant 0 : index
    %c0_5 = arith.constant 0 : index
    %4 = vector.load %arg2[%c1, %c0_4, %c0_5] : memref<4x32x16xf32, #tpu.memory_space<vmem>>, vector<1x32x16xf32>
    %5 = vector.shape_cast %4 : vector<1x32x16xf32> to vector<32x16xf32>
    %cst_6 = arith.constant dense<0.000000e+00> : vector<128x16xf32>
    %6 = tpu.matmul %0, %5, %cst_6 {dimension_numbers = #tpu.dot_dimension_numbers<[1], [0], [0], [1], [0, 0, 1, 1], [], []>} : vector<128x32xf32>, vector<32x16xf32>, vector<128x16xf32> -> vector<128x16xf32>
    %c2 = arith.constant 2 : index
    %c0_7 = arith.constant 0 : index
    %c0_8 = arith.constant 0 : index
    %7 = vector.load %arg2[%c2, %c0_7, %c0_8] : memref<4x32x16xf32, #tpu.memory_space<vmem>>, vector<1x32x16xf32>
    %8 = vector.shape_cast %7 : vector<1x32x16xf32> to vector<32x16xf32>
    %cst_9 = arith.constant dense<0.000000e+00> : vector<128x16xf32>
    %9 = tpu.matmul %0, %8, %cst_9 {dimension_numbers = #tpu.dot_dimension_numbers<[1], [0], [0], [1], [0, 0, 1, 1], [], []>} : vector<128x32xf32>, vector<32x16xf32>, vector<128x16xf32> -> vector<128x16xf32>
    %c3 = arith.constant 3 : index
    %c0_10 = arith.constant 0 : index
    %c0_11 = arith.constant 0 : index
    %10 = vector.load %arg2[%c3, %c0_10, %c0_11] : memref<4x32x16xf32, #tpu.memory_space<vmem>>, vector<1x32x16xf32>
    %11 = vector.shape_cast %10 : vector<1x32x16xf32> to vector<32x16xf32>
    %cst_12 = arith.constant dense<0.000000e+00> : vector<128x16xf32>
    %12 = tpu.matmul %0, %11, %cst_12 {dimension_numbers = #tpu.dot_dimension_numbers<[1], [0], [0], [1], [0, 0, 1, 1], [], []>} : vector<128x32xf32>, vector<32x16xf32>, vector<128x16xf32> -> vector<128x16xf32>
    %13 = tpu.iota {dimensions = array<i32: 0>} : vector<128x16xi32>
    %c16_i32 = arith.constant 16 : i32
    %c0_i32 = arith.constant 0 : i32
    %14 = arith.cmpi eq, %c16_i32, %c0_i32 : i32
    %c1_i32 = arith.constant 1 : i32
    %15 = arith.select %14, %c1_i32, %c16_i32 : i32
    %16 = vector.broadcast %15 : i32 to vector<128x16xi32>
    %17 = arith.remsi %13, %16 : vector<128x16xi32>
    %c0_i32_13 = arith.constant 0 : i32
    %18 = vector.broadcast %c0_i32_13 : i32 to vector<128x16xi32>
    %19 = arith.cmpi ne, %17, %18 : vector<128x16xi32>
    %c0_i32_14 = arith.constant 0 : i32
    %20 = vector.broadcast %c0_i32_14 : i32 to vector<128x16xi32>
    %21 = arith.cmpi slt, %17, %20 : vector<128x16xi32>
    %c0_i32_15 = arith.constant 0 : i32
    %22 = arith.cmpi slt, %15, %c0_i32_15 : i32
    %23 = vector.broadcast %22 : i1 to vector<128x16xi1>
    %24 = vector.broadcast %23 : vector<128x16xi1> to vector<128x16xi1>
    %25 = arith.xori %21, %24 : vector<128x16xi1>
    %26 = arith.andi %25, %19 : vector<128x16xi1>
    %27 = vector.broadcast %15 : i32 to vector<128x16xi32>
    %28 = arith.addi %17, %27 : vector<128x16xi32>
    %29 = arith.select %26, %28, %17 : vector<128x16xi1>, vector<128x16xi32>
    %cst_16 = arith.constant 0.000000e+00 : f32
    %30 = vector.broadcast %cst_16 : f32 to vector<1x16xf32>
    %31 = vector.extract_strided_slice %12 {offsets = [0, 0], sizes = [127, 16], strides = [1, 1]} : vector<128x16xf32> to vector<127x16xf32>
    %32 = tpu.concatenate %30, %31 in 0 : vector<1x16xf32>, vector<127x16xf32> -> vector<128x16xf32>
    %33 = vector.extract_strided_slice %3 {offsets = [1, 0], sizes = [127, 16], strides = [1, 1]} : vector<128x16xf32> to vector<127x16xf32>
    %34 = tpu.concatenate %33, %30 in 0 : vector<127x16xf32>, vector<1x16xf32> -> vector<128x16xf32>
    %c0_i32_17 = arith.constant 0 : i32
    %35 = vector.broadcast %c0_i32_17 : i32 to vector<128x16xi32>
    %36 = arith.cmpi eq, %29, %35 : vector<128x16xi32>
    %cst_18 = arith.constant 0.000000e+00 : f32
    %37 = vector.broadcast %cst_18 : f32 to vector<128x16xf32>
    %38 = arith.select %36, %37, %32 : vector<128x16xi1>, vector<128x16xf32>
    %39 = arith.addf %6, %38 : vector<128x16xf32>
    %c0_19 = arith.constant 0 : index
    %c0_20 = arith.constant 0 : index
    %40 = vector.load %arg3[%c0_19, %c0_20] : memref<1x16xf32, #tpu.memory_space<vmem>>, vector<1x16xf32>
    %41 = vector.broadcast %40 : vector<1x16xf32> to vector<128x16xf32>
    %42 = arith.addf %39, %41 : vector<128x16xf32>
    %c15_i32 = arith.constant 15 : i32
    %43 = vector.broadcast %c15_i32 : i32 to vector<128x16xi32>
    %44 = arith.cmpi eq, %29, %43 : vector<128x16xi32>
    %cst_21 = arith.constant 0.000000e+00 : f32
    %45 = vector.broadcast %cst_21 : f32 to vector<128x16xf32>
    %46 = arith.select %44, %45, %34 : vector<128x16xi1>, vector<128x16xf32>
    %47 = arith.addf %9, %46 : vector<128x16xf32>
    %c0_22 = arith.constant 0 : index
    %c0_23 = arith.constant 0 : index
    %48 = vector.load %arg3[%c0_22, %c0_23] : memref<1x16xf32, #tpu.memory_space<vmem>>, vector<1x16xf32>
    %49 = vector.broadcast %48 : vector<1x16xf32> to vector<128x16xf32>
    %50 = arith.addf %47, %49 : vector<128x16xf32>
    %c0_24 = arith.constant 0 : index
    %c0_25 = arith.constant 0 : index
    %51 = vector.load %arg4[%c0_24, %c0_25] : memref<1x16xf32, #tpu.memory_space<vmem>>, vector<1x16xf32>
    %c0_26 = arith.constant 0 : index
    %c0_27 = arith.constant 0 : index
    %52 = vector.load %arg5[%c0_26, %c0_27] : memref<1x16xf32, #tpu.memory_space<vmem>>, vector<1x16xf32>
    %cst_28 = arith.constant dense<0.000000e+00> : vector<128xf32>
    %53 = vector.multi_reduction <add>, %42, %cst_28 [1] : vector<128x16xf32> to vector<128xf32>
    %54 = vector.shape_cast %53 : vector<128xf32> to vector<128x1xf32>
    %cst_29 = arith.constant 1.600000e+01 : f32
    %55 = vector.broadcast %cst_29 : f32 to vector<128x1xf32>
    %56 = arith.divf %54, %55 : vector<128x1xf32>
    %57 = vector.broadcast %56 : vector<128x1xf32> to vector<128x16xf32>
    %58 = arith.subf %42, %57 : vector<128x16xf32>
    %59 = arith.mulf %58, %58 : vector<128x16xf32>
    %cst_30 = arith.constant dense<0.000000e+00> : vector<128xf32>
    %60 = vector.multi_reduction <add>, %59, %cst_30 [1] : vector<128x16xf32> to vector<128xf32>
    %61 = vector.shape_cast %60 : vector<128xf32> to vector<128x1xf32>
    %cst_31 = arith.constant 1.600000e+01 : f32
    %62 = vector.broadcast %cst_31 : f32 to vector<128x1xf32>
    %63 = arith.divf %61, %62 : vector<128x1xf32>
    %cst_32 = arith.constant 9.99999997E-7 : f32
    %64 = vector.broadcast %cst_32 : f32 to vector<128x1xf32>
    %65 = arith.addf %63, %64 : vector<128x1xf32>
    %66 = math.rsqrt %65 : vector<128x1xf32>
    %67 = vector.broadcast %66 : vector<128x1xf32> to vector<128x16xf32>
    %68 = arith.mulf %58, %67 : vector<128x16xf32>
    %69 = vector.broadcast %51 : vector<1x16xf32> to vector<128x16xf32>
    %70 = arith.mulf %68, %69 : vector<128x16xf32>
    %71 = vector.broadcast %52 : vector<1x16xf32> to vector<128x16xf32>
    %72 = arith.addf %70, %71 : vector<128x16xf32>
    %cst_33 = arith.constant 5.000000e-01 : f32
    %73 = vector.broadcast %cst_33 : f32 to vector<128x16xf32>
    %74 = arith.mulf %73, %72 : vector<128x16xf32>
    %cst_34 = arith.constant 4.471500e-02 : f32
    %75 = vector.broadcast %cst_34 : f32 to vector<128x16xf32>
    %76 = arith.mulf %75, %72 : vector<128x16xf32>
    %77 = arith.mulf %76, %72 : vector<128x16xf32>
    %78 = arith.mulf %77, %72 : vector<128x16xf32>
    %79 = arith.addf %72, %78 : vector<128x16xf32>
    %cst_35 = arith.constant 0.797884583 : f32
    %80 = vector.broadcast %cst_35 : f32 to vector<128x16xf32>
    %81 = arith.mulf %80, %79 : vector<128x16xf32>
    %82 = math.tanh %81 : vector<128x16xf32>
    %cst_36 = arith.constant 1.000000e+00 : f32
    %83 = vector.broadcast %cst_36 : f32 to vector<128x16xf32>
    %84 = arith.addf %83, %82 : vector<128x16xf32>
    %85 = arith.mulf %74, %84 : vector<128x16xf32>
    %c0_37 = arith.constant 0 : index
    %c0_38 = arith.constant 0 : index
    %c0_39 = arith.constant 0 : index
    %86 = vector.load %arg6[%c0_37, %c0_38, %c0_39] : memref<2x128x16xf32, #tpu.memory_space<vmem>>, vector<1x128x16xf32>
    %87 = vector.shape_cast %86 : vector<1x128x16xf32> to vector<128x16xf32>
    %88 = vector.shape_cast %85 : vector<128x16xf32> to vector<1x128x16xf32>
    tpu.vector_store %arg6[%c0_37, %c0_38, %c0_39], %88 {strides = array<i32>} : memref<2x128x16xf32, #tpu.memory_space<vmem>>, vector<1x128x16xf32>,
    %cst_40 = arith.constant dense<0.000000e+00> : vector<128xf32>
    %89 = vector.multi_reduction <add>, %50, %cst_40 [1] : vector<128x16xf32> to vector<128xf32>
    %90 = vector.shape_cast %89 : vector<128xf32> to vector<128x1xf32>
    %cst_41 = arith.constant 1.600000e+01 : f32
    %91 = vector.broadcast %cst_41 : f32 to vector<128x1xf32>
    %92 = arith.divf %90, %91 : vector<128x1xf32>
    %93 = vector.broadcast %92 : vector<128x1xf32> to vector<128x16xf32>
    %94 = arith.subf %50, %93 : vector<128x16xf32>
    %95 = arith.mulf %94, %94 : vector<128x16xf32>
    %cst_42 = arith.constant dense<0.000000e+00> : vector<128xf32>
    %96 = vector.multi_reduction <add>, %95, %cst_42 [1] : vector<128x16xf32> to vector<128xf32>
    %97 = vector.shape_cast %96 : vector<128xf32> to vector<128x1xf32>
    %cst_43 = arith.constant 1.600000e+01 : f32
    %98 = vector.broadcast %cst_43 : f32 to vector<128x1xf32>
    %99 = arith.divf %97, %98 : vector<128x1xf32>
    %cst_44 = arith.constant 9.99999997E-7 : f32
    %100 = vector.broadcast %cst_44 : f32 to vector<128x1xf32>
    %101 = arith.addf %99, %100 : vector<128x1xf32>
    %102 = math.rsqrt %101 : vector<128x1xf32>
    %103 = vector.broadcast %102 : vector<128x1xf32> to vector<128x16xf32>
    %104 = arith.mulf %94, %103 : vector<128x16xf32>
    %105 = vector.broadcast %51 : vector<1x16xf32> to vector<128x16xf32>
    %106 = arith.mulf %104, %105 : vector<128x16xf32>
    %107 = vector.broadcast %52 : vector<1x16xf32> to vector<128x16xf32>
    %108 = arith.addf %106, %107 : vector<128x16xf32>
    %cst_45 = arith.constant 5.000000e-01 : f32
    %109 = vector.broadcast %cst_45 : f32 to vector<128x16xf32>
    %110 = arith.mulf %109, %108 : vector<128x16xf32>
    %cst_46 = arith.constant 4.471500e-02 : f32
    %111 = vector.broadcast %cst_46 : f32 to vector<128x16xf32>
    %112 = arith.mulf %111, %108 : vector<128x16xf32>
    %113 = arith.mulf %112, %108 : vector<128x16xf32>
    %114 = arith.mulf %113, %108 : vector<128x16xf32>
    %115 = arith.addf %108, %114 : vector<128x16xf32>
    %cst_47 = arith.constant 0.797884583 : f32
    %116 = vector.broadcast %cst_47 : f32 to vector<128x16xf32>
    %117 = arith.mulf %116, %115 : vector<128x16xf32>
    %118 = math.tanh %117 : vector<128x16xf32>
    %cst_48 = arith.constant 1.000000e+00 : f32
    %119 = vector.broadcast %cst_48 : f32 to vector<128x16xf32>
    %120 = arith.addf %119, %118 : vector<128x16xf32>
    %121 = arith.mulf %110, %120 : vector<128x16xf32>
    %c1_49 = arith.constant 1 : index
    %c0_50 = arith.constant 0 : index
    %c0_51 = arith.constant 0 : index
    %122 = vector.load %arg6[%c1_49, %c0_50, %c0_51] : memref<2x128x16xf32, #tpu.memory_space<vmem>>, vector<1x128x16xf32>
    %123 = vector.shape_cast %122 : vector<1x128x16xf32> to vector<128x16xf32>
    %124 = vector.shape_cast %121 : vector<128x16xf32> to vector<1x128x16xf32>
    tpu.vector_store %arg6[%c1_49, %c0_50, %c0_51], %124 {strides = array<i32>} : memref<2x128x16xf32, #tpu.memory_space<vmem>>, vector<1x128x16xf32>,
    return
  }
  func.func @transform_0(%arg0: i32) -> (i32, i32) {
    %c0_i32 = arith.constant 0 : i32
    %c0_i32_0 = arith.constant 0 : i32
    return %arg0, %c0_i32 : i32, i32
  }
  func.func @transform_1(%arg0: i32) -> (i32, i32, i32) {
    %c0_i32 = arith.constant 0 : i32
    %c0_i32_0 = arith.constant 0 : i32
    %c0_i32_1 = arith.constant 0 : i32
    %c0_i32_2 = arith.constant 0 : i32
    return %c0_i32, %c0_i32_0, %c0_i32_1 : i32, i32, i32
  }
  func.func @transform_2(%arg0: i32) -> (i32, i32) {
    %c0_i32 = arith.constant 0 : i32
    %c0_i32_0 = arith.constant 0 : i32
    %c0_i32_1 = arith.constant 0 : i32
    return %c0_i32, %c0_i32_0 : i32, i32
  }
  func.func @transform_3(%arg0: i32) -> (i32, i32) {
    %c0_i32 = arith.constant 0 : i32
    %c0_i32_0 = arith.constant 0 : i32
    %c0_i32_1 = arith.constant 0 : i32
    return %c0_i32, %c0_i32_0 : i32, i32
  }
  func.func @transform_4(%arg0: i32) -> (i32, i32) {
    %c0_i32 = arith.constant 0 : i32
    %c0_i32_0 = arith.constant 0 : i32
    %c0_i32_1 = arith.constant 0 : i32
    return %c0_i32, %c0_i32_0 : i32, i32
  }
  func.func @transform_5(%arg0: i32) -> (i32, i32, i32) {
    %c0_i32 = arith.constant 0 : i32
    %c0_i32_0 = arith.constant 0 : i32
    %c0_i32_1 = arith.constant 0 : i32
    return %c0_i32, %arg0, %c0_i32_0 : i32, i32, i32
  }
}

module attributes {stable_mosaic.version = 11 : i64} {
  func.func @_expand_kernel(%arg0: i32, %arg1: memref<256x16xf32, #tpu.memory_space<vmem>>, %arg2: memref<4x16x8xf32, #tpu.memory_space<vmem>>, %arg3: memref<1x8xf32, #tpu.memory_space<vmem>>, %arg4: memref<1x8xf32, #tpu.memory_space<vmem>>, %arg5: memref<1x8xf32, #tpu.memory_space<vmem>>, %arg6: memref<4x256x8xf32, #tpu.memory_space<vmem>>) attributes {dimension_semantics = [#tpu.dimension_semantics<parallel>], iteration_bounds = array<i64: 1>, scalar_prefetch = 0 : i64, scratch_operands = 0 : i64, tpu.core_type = #tpu.core_type<tc>, window_params = [{transform_indices = @transform_0, window_bounds = array<i64: 256, 16>}, {pipeline_mode = #tpu.pipeline_mode<synchronous>, transform_indices = @transform_1, window_bounds = array<i64: 4, 16, 8>}, {pipeline_mode = #tpu.pipeline_mode<synchronous>, transform_indices = @transform_2, window_bounds = array<i64: 1, 8>}, {pipeline_mode = #tpu.pipeline_mode<synchronous>, transform_indices = @transform_3, window_bounds = array<i64: 1, 8>}, {pipeline_mode = #tpu.pipeline_mode<synchronous>, transform_indices = @transform_4, window_bounds = array<i64: 1, 8>}, {transform_indices = @transform_5, window_bounds = array<i64: 4, 256, 8>}]} {
    %c0 = arith.constant 0 : index
    %c0_0 = arith.constant 0 : index
    %0 = vector.load %arg1[%c0, %c0_0] : memref<256x16xf32, #tpu.memory_space<vmem>>, vector<256x16xf32>
    %c0_1 = arith.constant 0 : index
    %c0_2 = arith.constant 0 : index
    %1 = vector.load %arg3[%c0_1, %c0_2] : memref<1x8xf32, #tpu.memory_space<vmem>>, vector<1x8xf32>
    %c0_3 = arith.constant 0 : index
    %c0_4 = arith.constant 0 : index
    %c0_5 = arith.constant 0 : index
    %2 = vector.load %arg2[%c0_3, %c0_4, %c0_5] : memref<4x16x8xf32, #tpu.memory_space<vmem>>, vector<1x16x8xf32>
    %3 = vector.shape_cast %2 : vector<1x16x8xf32> to vector<16x8xf32>
    %cst = arith.constant dense<0.000000e+00> : vector<256x8xf32>
    %4 = tpu.matmul %0, %3, %cst {dimension_numbers = #tpu.dot_dimension_numbers<[1], [0], [0], [1], [0, 0, 1, 1], [], []>} : vector<256x16xf32>, vector<16x8xf32>, vector<256x8xf32> -> vector<256x8xf32>
    %5 = vector.broadcast %1 : vector<1x8xf32> to vector<256x8xf32>
    %6 = arith.addf %4, %5 : vector<256x8xf32>
    %c0_6 = arith.constant 0 : index
    %c0_7 = arith.constant 0 : index
    %7 = vector.load %arg4[%c0_6, %c0_7] : memref<1x8xf32, #tpu.memory_space<vmem>>, vector<1x8xf32>
    %c0_8 = arith.constant 0 : index
    %c0_9 = arith.constant 0 : index
    %8 = vector.load %arg5[%c0_8, %c0_9] : memref<1x8xf32, #tpu.memory_space<vmem>>, vector<1x8xf32>
    %cst_10 = arith.constant dense<0.000000e+00> : vector<256xf32>
    %9 = vector.multi_reduction <add>, %6, %cst_10 [1] : vector<256x8xf32> to vector<256xf32>
    %10 = vector.shape_cast %9 : vector<256xf32> to vector<256x1xf32>
    %cst_11 = arith.constant 8.000000e+00 : f32
    %11 = vector.broadcast %cst_11 : f32 to vector<256x1xf32>
    %12 = arith.divf %10, %11 : vector<256x1xf32>
    %13 = vector.broadcast %12 : vector<256x1xf32> to vector<256x8xf32>
    %14 = arith.subf %6, %13 : vector<256x8xf32>
    %15 = arith.mulf %14, %14 : vector<256x8xf32>
    %cst_12 = arith.constant dense<0.000000e+00> : vector<256xf32>
    %16 = vector.multi_reduction <add>, %15, %cst_12 [1] : vector<256x8xf32> to vector<256xf32>
    %17 = vector.shape_cast %16 : vector<256xf32> to vector<256x1xf32>
    %cst_13 = arith.constant 8.000000e+00 : f32
    %18 = vector.broadcast %cst_13 : f32 to vector<256x1xf32>
    %19 = arith.divf %17, %18 : vector<256x1xf32>
    %cst_14 = arith.constant 9.99999997E-7 : f32
    %20 = vector.broadcast %cst_14 : f32 to vector<256x1xf32>
    %21 = arith.addf %19, %20 : vector<256x1xf32>
    %22 = math.rsqrt %21 : vector<256x1xf32>
    %23 = vector.broadcast %22 : vector<256x1xf32> to vector<256x8xf32>
    %24 = arith.mulf %14, %23 : vector<256x8xf32>
    %25 = vector.broadcast %7 : vector<1x8xf32> to vector<256x8xf32>
    %26 = arith.mulf %24, %25 : vector<256x8xf32>
    %27 = vector.broadcast %8 : vector<1x8xf32> to vector<256x8xf32>
    %28 = arith.addf %26, %27 : vector<256x8xf32>
    %cst_15 = arith.constant 5.000000e-01 : f32
    %29 = vector.broadcast %cst_15 : f32 to vector<256x8xf32>
    %30 = arith.mulf %29, %28 : vector<256x8xf32>
    %cst_16 = arith.constant 4.471500e-02 : f32
    %31 = vector.broadcast %cst_16 : f32 to vector<256x8xf32>
    %32 = arith.mulf %31, %28 : vector<256x8xf32>
    %33 = arith.mulf %32, %28 : vector<256x8xf32>
    %34 = arith.mulf %33, %28 : vector<256x8xf32>
    %35 = arith.addf %28, %34 : vector<256x8xf32>
    %cst_17 = arith.constant 0.797884583 : f32
    %36 = vector.broadcast %cst_17 : f32 to vector<256x8xf32>
    %37 = arith.mulf %36, %35 : vector<256x8xf32>
    %38 = math.tanh %37 : vector<256x8xf32>
    %cst_18 = arith.constant 1.000000e+00 : f32
    %39 = vector.broadcast %cst_18 : f32 to vector<256x8xf32>
    %40 = arith.addf %39, %38 : vector<256x8xf32>
    %41 = arith.mulf %30, %40 : vector<256x8xf32>
    %c0_19 = arith.constant 0 : index
    %c0_20 = arith.constant 0 : index
    %c0_21 = arith.constant 0 : index
    %42 = vector.load %arg6[%c0_19, %c0_20, %c0_21] : memref<4x256x8xf32, #tpu.memory_space<vmem>>, vector<1x256x8xf32>
    %43 = vector.shape_cast %42 : vector<1x256x8xf32> to vector<256x8xf32>
    %44 = vector.shape_cast %41 : vector<256x8xf32> to vector<1x256x8xf32>
    tpu.vector_store %arg6[%c0_19, %c0_20, %c0_21], %44 {strides = array<i32>} : memref<4x256x8xf32, #tpu.memory_space<vmem>>, vector<1x256x8xf32>,
    %c1 = arith.constant 1 : index
    %c0_22 = arith.constant 0 : index
    %c0_23 = arith.constant 0 : index
    %45 = vector.load %arg2[%c1, %c0_22, %c0_23] : memref<4x16x8xf32, #tpu.memory_space<vmem>>, vector<1x16x8xf32>
    %46 = vector.shape_cast %45 : vector<1x16x8xf32> to vector<16x8xf32>
    %cst_24 = arith.constant dense<0.000000e+00> : vector<256x8xf32>
    %47 = tpu.matmul %0, %46, %cst_24 {dimension_numbers = #tpu.dot_dimension_numbers<[1], [0], [0], [1], [0, 0, 1, 1], [], []>} : vector<256x16xf32>, vector<16x8xf32>, vector<256x8xf32> -> vector<256x8xf32>
    %48 = vector.broadcast %1 : vector<1x8xf32> to vector<256x8xf32>
    %49 = arith.addf %47, %48 : vector<256x8xf32>
    %c0_25 = arith.constant 0 : index
    %c0_26 = arith.constant 0 : index
    %50 = vector.load %arg4[%c0_25, %c0_26] : memref<1x8xf32, #tpu.memory_space<vmem>>, vector<1x8xf32>
    %c0_27 = arith.constant 0 : index
    %c0_28 = arith.constant 0 : index
    %51 = vector.load %arg5[%c0_27, %c0_28] : memref<1x8xf32, #tpu.memory_space<vmem>>, vector<1x8xf32>
    %cst_29 = arith.constant dense<0.000000e+00> : vector<256xf32>
    %52 = vector.multi_reduction <add>, %49, %cst_29 [1] : vector<256x8xf32> to vector<256xf32>
    %53 = vector.shape_cast %52 : vector<256xf32> to vector<256x1xf32>
    %cst_30 = arith.constant 8.000000e+00 : f32
    %54 = vector.broadcast %cst_30 : f32 to vector<256x1xf32>
    %55 = arith.divf %53, %54 : vector<256x1xf32>
    %56 = vector.broadcast %55 : vector<256x1xf32> to vector<256x8xf32>
    %57 = arith.subf %49, %56 : vector<256x8xf32>
    %58 = arith.mulf %57, %57 : vector<256x8xf32>
    %cst_31 = arith.constant dense<0.000000e+00> : vector<256xf32>
    %59 = vector.multi_reduction <add>, %58, %cst_31 [1] : vector<256x8xf32> to vector<256xf32>
    %60 = vector.shape_cast %59 : vector<256xf32> to vector<256x1xf32>
    %cst_32 = arith.constant 8.000000e+00 : f32
    %61 = vector.broadcast %cst_32 : f32 to vector<256x1xf32>
    %62 = arith.divf %60, %61 : vector<256x1xf32>
    %cst_33 = arith.constant 9.99999997E-7 : f32
    %63 = vector.broadcast %cst_33 : f32 to vector<256x1xf32>
    %64 = arith.addf %62, %63 : vector<256x1xf32>
    %65 = math.rsqrt %64 : vector<256x1xf32>
    %66 = vector.broadcast %65 : vector<256x1xf32> to vector<256x8xf32>
    %67 = arith.mulf %57, %66 : vector<256x8xf32>
    %68 = vector.broadcast %50 : vector<1x8xf32> to vector<256x8xf32>
    %69 = arith.mulf %67, %68 : vector<256x8xf32>
    %70 = vector.broadcast %51 : vector<1x8xf32> to vector<256x8xf32>
    %71 = arith.addf %69, %70 : vector<256x8xf32>
    %cst_34 = arith.constant 5.000000e-01 : f32
    %72 = vector.broadcast %cst_34 : f32 to vector<256x8xf32>
    %73 = arith.mulf %72, %71 : vector<256x8xf32>
    %cst_35 = arith.constant 4.471500e-02 : f32
    %74 = vector.broadcast %cst_35 : f32 to vector<256x8xf32>
    %75 = arith.mulf %74, %71 : vector<256x8xf32>
    %76 = arith.mulf %75, %71 : vector<256x8xf32>
    %77 = arith.mulf %76, %71 : vector<256x8xf32>
    %78 = arith.addf %71, %77 : vector<256x8xf32>
    %cst_36 = arith.constant 0.797884583 : f32
    %79 = vector.broadcast %cst_36 : f32 to vector<256x8xf32>
    %80 = arith.mulf %79, %78 : vector<256x8xf32>
    %81 = math.tanh %80 : vector<256x8xf32>
    %cst_37 = arith.constant 1.000000e+00 : f32
    %82 = vector.broadcast %cst_37 : f32 to vector<256x8xf32>
    %83 = arith.addf %82, %81 : vector<256x8xf32>
    %84 = arith.mulf %73, %83 : vector<256x8xf32>
    %c1_38 = arith.constant 1 : index
    %c0_39 = arith.constant 0 : index
    %c0_40 = arith.constant 0 : index
    %85 = vector.load %arg6[%c1_38, %c0_39, %c0_40] : memref<4x256x8xf32, #tpu.memory_space<vmem>>, vector<1x256x8xf32>
    %86 = vector.shape_cast %85 : vector<1x256x8xf32> to vector<256x8xf32>
    %87 = vector.shape_cast %84 : vector<256x8xf32> to vector<1x256x8xf32>
    tpu.vector_store %arg6[%c1_38, %c0_39, %c0_40], %87 {strides = array<i32>} : memref<4x256x8xf32, #tpu.memory_space<vmem>>, vector<1x256x8xf32>,
    %c2 = arith.constant 2 : index
    %c0_41 = arith.constant 0 : index
    %c0_42 = arith.constant 0 : index
    %88 = vector.load %arg2[%c2, %c0_41, %c0_42] : memref<4x16x8xf32, #tpu.memory_space<vmem>>, vector<1x16x8xf32>
    %89 = vector.shape_cast %88 : vector<1x16x8xf32> to vector<16x8xf32>
    %cst_43 = arith.constant dense<0.000000e+00> : vector<256x8xf32>
    %90 = tpu.matmul %0, %89, %cst_43 {dimension_numbers = #tpu.dot_dimension_numbers<[1], [0], [0], [1], [0, 0, 1, 1], [], []>} : vector<256x16xf32>, vector<16x8xf32>, vector<256x8xf32> -> vector<256x8xf32>
    %91 = vector.broadcast %1 : vector<1x8xf32> to vector<256x8xf32>
    %92 = arith.addf %90, %91 : vector<256x8xf32>
    %c0_44 = arith.constant 0 : index
    %c0_45 = arith.constant 0 : index
    %93 = vector.load %arg4[%c0_44, %c0_45] : memref<1x8xf32, #tpu.memory_space<vmem>>, vector<1x8xf32>
    %c0_46 = arith.constant 0 : index
    %c0_47 = arith.constant 0 : index
    %94 = vector.load %arg5[%c0_46, %c0_47] : memref<1x8xf32, #tpu.memory_space<vmem>>, vector<1x8xf32>
    %cst_48 = arith.constant dense<0.000000e+00> : vector<256xf32>
    %95 = vector.multi_reduction <add>, %92, %cst_48 [1] : vector<256x8xf32> to vector<256xf32>
    %96 = vector.shape_cast %95 : vector<256xf32> to vector<256x1xf32>
    %cst_49 = arith.constant 8.000000e+00 : f32
    %97 = vector.broadcast %cst_49 : f32 to vector<256x1xf32>
    %98 = arith.divf %96, %97 : vector<256x1xf32>
    %99 = vector.broadcast %98 : vector<256x1xf32> to vector<256x8xf32>
    %100 = arith.subf %92, %99 : vector<256x8xf32>
    %101 = arith.mulf %100, %100 : vector<256x8xf32>
    %cst_50 = arith.constant dense<0.000000e+00> : vector<256xf32>
    %102 = vector.multi_reduction <add>, %101, %cst_50 [1] : vector<256x8xf32> to vector<256xf32>
    %103 = vector.shape_cast %102 : vector<256xf32> to vector<256x1xf32>
    %cst_51 = arith.constant 8.000000e+00 : f32
    %104 = vector.broadcast %cst_51 : f32 to vector<256x1xf32>
    %105 = arith.divf %103, %104 : vector<256x1xf32>
    %cst_52 = arith.constant 9.99999997E-7 : f32
    %106 = vector.broadcast %cst_52 : f32 to vector<256x1xf32>
    %107 = arith.addf %105, %106 : vector<256x1xf32>
    %108 = math.rsqrt %107 : vector<256x1xf32>
    %109 = vector.broadcast %108 : vector<256x1xf32> to vector<256x8xf32>
    %110 = arith.mulf %100, %109 : vector<256x8xf32>
    %111 = vector.broadcast %93 : vector<1x8xf32> to vector<256x8xf32>
    %112 = arith.mulf %110, %111 : vector<256x8xf32>
    %113 = vector.broadcast %94 : vector<1x8xf32> to vector<256x8xf32>
    %114 = arith.addf %112, %113 : vector<256x8xf32>
    %cst_53 = arith.constant 5.000000e-01 : f32
    %115 = vector.broadcast %cst_53 : f32 to vector<256x8xf32>
    %116 = arith.mulf %115, %114 : vector<256x8xf32>
    %cst_54 = arith.constant 4.471500e-02 : f32
    %117 = vector.broadcast %cst_54 : f32 to vector<256x8xf32>
    %118 = arith.mulf %117, %114 : vector<256x8xf32>
    %119 = arith.mulf %118, %114 : vector<256x8xf32>
    %120 = arith.mulf %119, %114 : vector<256x8xf32>
    %121 = arith.addf %114, %120 : vector<256x8xf32>
    %cst_55 = arith.constant 0.797884583 : f32
    %122 = vector.broadcast %cst_55 : f32 to vector<256x8xf32>
    %123 = arith.mulf %122, %121 : vector<256x8xf32>
    %124 = math.tanh %123 : vector<256x8xf32>
    %cst_56 = arith.constant 1.000000e+00 : f32
    %125 = vector.broadcast %cst_56 : f32 to vector<256x8xf32>
    %126 = arith.addf %125, %124 : vector<256x8xf32>
    %127 = arith.mulf %116, %126 : vector<256x8xf32>
    %c2_57 = arith.constant 2 : index
    %c0_58 = arith.constant 0 : index
    %c0_59 = arith.constant 0 : index
    %128 = vector.load %arg6[%c2_57, %c0_58, %c0_59] : memref<4x256x8xf32, #tpu.memory_space<vmem>>, vector<1x256x8xf32>
    %129 = vector.shape_cast %128 : vector<1x256x8xf32> to vector<256x8xf32>
    %130 = vector.shape_cast %127 : vector<256x8xf32> to vector<1x256x8xf32>
    tpu.vector_store %arg6[%c2_57, %c0_58, %c0_59], %130 {strides = array<i32>} : memref<4x256x8xf32, #tpu.memory_space<vmem>>, vector<1x256x8xf32>,
    %c3 = arith.constant 3 : index
    %c0_60 = arith.constant 0 : index
    %c0_61 = arith.constant 0 : index
    %131 = vector.load %arg2[%c3, %c0_60, %c0_61] : memref<4x16x8xf32, #tpu.memory_space<vmem>>, vector<1x16x8xf32>
    %132 = vector.shape_cast %131 : vector<1x16x8xf32> to vector<16x8xf32>
    %cst_62 = arith.constant dense<0.000000e+00> : vector<256x8xf32>
    %133 = tpu.matmul %0, %132, %cst_62 {dimension_numbers = #tpu.dot_dimension_numbers<[1], [0], [0], [1], [0, 0, 1, 1], [], []>} : vector<256x16xf32>, vector<16x8xf32>, vector<256x8xf32> -> vector<256x8xf32>
    %134 = vector.broadcast %1 : vector<1x8xf32> to vector<256x8xf32>
    %135 = arith.addf %133, %134 : vector<256x8xf32>
    %c0_63 = arith.constant 0 : index
    %c0_64 = arith.constant 0 : index
    %136 = vector.load %arg4[%c0_63, %c0_64] : memref<1x8xf32, #tpu.memory_space<vmem>>, vector<1x8xf32>
    %c0_65 = arith.constant 0 : index
    %c0_66 = arith.constant 0 : index
    %137 = vector.load %arg5[%c0_65, %c0_66] : memref<1x8xf32, #tpu.memory_space<vmem>>, vector<1x8xf32>
    %cst_67 = arith.constant dense<0.000000e+00> : vector<256xf32>
    %138 = vector.multi_reduction <add>, %135, %cst_67 [1] : vector<256x8xf32> to vector<256xf32>
    %139 = vector.shape_cast %138 : vector<256xf32> to vector<256x1xf32>
    %cst_68 = arith.constant 8.000000e+00 : f32
    %140 = vector.broadcast %cst_68 : f32 to vector<256x1xf32>
    %141 = arith.divf %139, %140 : vector<256x1xf32>
    %142 = vector.broadcast %141 : vector<256x1xf32> to vector<256x8xf32>
    %143 = arith.subf %135, %142 : vector<256x8xf32>
    %144 = arith.mulf %143, %143 : vector<256x8xf32>
    %cst_69 = arith.constant dense<0.000000e+00> : vector<256xf32>
    %145 = vector.multi_reduction <add>, %144, %cst_69 [1] : vector<256x8xf32> to vector<256xf32>
    %146 = vector.shape_cast %145 : vector<256xf32> to vector<256x1xf32>
    %cst_70 = arith.constant 8.000000e+00 : f32
    %147 = vector.broadcast %cst_70 : f32 to vector<256x1xf32>
    %148 = arith.divf %146, %147 : vector<256x1xf32>
    %cst_71 = arith.constant 9.99999997E-7 : f32
    %149 = vector.broadcast %cst_71 : f32 to vector<256x1xf32>
    %150 = arith.addf %148, %149 : vector<256x1xf32>
    %151 = math.rsqrt %150 : vector<256x1xf32>
    %152 = vector.broadcast %151 : vector<256x1xf32> to vector<256x8xf32>
    %153 = arith.mulf %143, %152 : vector<256x8xf32>
    %154 = vector.broadcast %136 : vector<1x8xf32> to vector<256x8xf32>
    %155 = arith.mulf %153, %154 : vector<256x8xf32>
    %156 = vector.broadcast %137 : vector<1x8xf32> to vector<256x8xf32>
    %157 = arith.addf %155, %156 : vector<256x8xf32>
    %cst_72 = arith.constant 5.000000e-01 : f32
    %158 = vector.broadcast %cst_72 : f32 to vector<256x8xf32>
    %159 = arith.mulf %158, %157 : vector<256x8xf32>
    %cst_73 = arith.constant 4.471500e-02 : f32
    %160 = vector.broadcast %cst_73 : f32 to vector<256x8xf32>
    %161 = arith.mulf %160, %157 : vector<256x8xf32>
    %162 = arith.mulf %161, %157 : vector<256x8xf32>
    %163 = arith.mulf %162, %157 : vector<256x8xf32>
    %164 = arith.addf %157, %163 : vector<256x8xf32>
    %cst_74 = arith.constant 0.797884583 : f32
    %165 = vector.broadcast %cst_74 : f32 to vector<256x8xf32>
    %166 = arith.mulf %165, %164 : vector<256x8xf32>
    %167 = math.tanh %166 : vector<256x8xf32>
    %cst_75 = arith.constant 1.000000e+00 : f32
    %168 = vector.broadcast %cst_75 : f32 to vector<256x8xf32>
    %169 = arith.addf %168, %167 : vector<256x8xf32>
    %170 = arith.mulf %159, %169 : vector<256x8xf32>
    %c3_76 = arith.constant 3 : index
    %c0_77 = arith.constant 0 : index
    %c0_78 = arith.constant 0 : index
    %171 = vector.load %arg6[%c3_76, %c0_77, %c0_78] : memref<4x256x8xf32, #tpu.memory_space<vmem>>, vector<1x256x8xf32>
    %172 = vector.shape_cast %171 : vector<1x256x8xf32> to vector<256x8xf32>
    %173 = vector.shape_cast %170 : vector<256x8xf32> to vector<1x256x8xf32>
    tpu.vector_store %arg6[%c3_76, %c0_77, %c0_78], %173 {strides = array<i32>} : memref<4x256x8xf32, #tpu.memory_space<vmem>>, vector<1x256x8xf32>,
    return
  }
  func.func @transform_0(%arg0: i32) -> (i32, i32) {
    %c0_i32 = arith.constant 0 : i32
    %c0_i32_0 = arith.constant 0 : i32
    return %arg0, %c0_i32 : i32, i32
  }
  func.func @transform_1(%arg0: i32) -> (i32, i32, i32) {
    %c0_i32 = arith.constant 0 : i32
    %c0_i32_0 = arith.constant 0 : i32
    %c0_i32_1 = arith.constant 0 : i32
    %c0_i32_2 = arith.constant 0 : i32
    return %c0_i32, %c0_i32_0, %c0_i32_1 : i32, i32, i32
  }
  func.func @transform_2(%arg0: i32) -> (i32, i32) {
    %c0_i32 = arith.constant 0 : i32
    %c0_i32_0 = arith.constant 0 : i32
    %c0_i32_1 = arith.constant 0 : i32
    return %c0_i32, %c0_i32_0 : i32, i32
  }
  func.func @transform_3(%arg0: i32) -> (i32, i32) {
    %c0_i32 = arith.constant 0 : i32
    %c0_i32_0 = arith.constant 0 : i32
    %c0_i32_1 = arith.constant 0 : i32
    return %c0_i32, %c0_i32_0 : i32, i32
  }
  func.func @transform_4(%arg0: i32) -> (i32, i32) {
    %c0_i32 = arith.constant 0 : i32
    %c0_i32_0 = arith.constant 0 : i32
    %c0_i32_1 = arith.constant 0 : i32
    return %c0_i32, %c0_i32_0 : i32, i32
  }
  func.func @transform_5(%arg0: i32) -> (i32, i32, i32) {
    %c0_i32 = arith.constant 0 : i32
    %c0_i32_0 = arith.constant 0 : i32
    %c0_i32_1 = arith.constant 0 : i32
    return %c0_i32, %arg0, %c0_i32_0 : i32, i32, i32
  }
}

module attributes {stable_mosaic.version = 11 : i64} {
  func.func @_expand_kernel(%arg0: i32, %arg1: memref<512x8xf32, #tpu.memory_space<vmem>>, %arg2: memref<1x8x32xf32, #tpu.memory_space<vmem>>, %arg3: memref<1x32xf32, #tpu.memory_space<vmem>>, %arg4: memref<1x32xf32, #tpu.memory_space<vmem>>, %arg5: memref<1x32xf32, #tpu.memory_space<vmem>>, %arg6: memref<1x512x32xf32, #tpu.memory_space<vmem>>) attributes {dimension_semantics = [#tpu.dimension_semantics<parallel>], iteration_bounds = array<i64: 2>, scalar_prefetch = 0 : i64, scratch_operands = 0 : i64, tpu.core_type = #tpu.core_type<tc>, window_params = [{transform_indices = @transform_0, window_bounds = array<i64: 512, 8>}, {pipeline_mode = #tpu.pipeline_mode<synchronous>, transform_indices = @transform_1, window_bounds = array<i64: 1, 8, 32>}, {pipeline_mode = #tpu.pipeline_mode<synchronous>, transform_indices = @transform_2, window_bounds = array<i64: 1, 32>}, {pipeline_mode = #tpu.pipeline_mode<synchronous>, transform_indices = @transform_3, window_bounds = array<i64: 1, 32>}, {pipeline_mode = #tpu.pipeline_mode<synchronous>, transform_indices = @transform_4, window_bounds = array<i64: 1, 32>}, {transform_indices = @transform_5, window_bounds = array<i64: 1, 512, 32>}]} {
    %c0 = arith.constant 0 : index
    %c0_0 = arith.constant 0 : index
    %0 = vector.load %arg1[%c0, %c0_0] : memref<512x8xf32, #tpu.memory_space<vmem>>, vector<512x8xf32>
    %c0_1 = arith.constant 0 : index
    %c0_2 = arith.constant 0 : index
    %1 = vector.load %arg3[%c0_1, %c0_2] : memref<1x32xf32, #tpu.memory_space<vmem>>, vector<1x32xf32>
    %c0_3 = arith.constant 0 : index
    %c0_4 = arith.constant 0 : index
    %c0_5 = arith.constant 0 : index
    %2 = vector.load %arg2[%c0_3, %c0_4, %c0_5] : memref<1x8x32xf32, #tpu.memory_space<vmem>>, vector<1x8x32xf32>
    %3 = vector.shape_cast %2 : vector<1x8x32xf32> to vector<8x32xf32>
    %cst = arith.constant dense<0.000000e+00> : vector<512x32xf32>
    %4 = tpu.matmul %0, %3, %cst {dimension_numbers = #tpu.dot_dimension_numbers<[1], [0], [0], [1], [0, 0, 1, 1], [], []>} : vector<512x8xf32>, vector<8x32xf32>, vector<512x32xf32> -> vector<512x32xf32>
    %5 = vector.broadcast %1 : vector<1x32xf32> to vector<512x32xf32>
    %6 = arith.addf %4, %5 : vector<512x32xf32>
    %cst_6 = arith.constant 5.000000e-01 : f32
    %7 = vector.broadcast %cst_6 : f32 to vector<512x32xf32>
    %8 = arith.mulf %7, %6 : vector<512x32xf32>
    %cst_7 = arith.constant 4.471500e-02 : f32
    %9 = vector.broadcast %cst_7 : f32 to vector<512x32xf32>
    %10 = arith.mulf %9, %6 : vector<512x32xf32>
    %11 = arith.mulf %10, %6 : vector<512x32xf32>
    %12 = arith.mulf %11, %6 : vector<512x32xf32>
    %13 = arith.addf %6, %12 : vector<512x32xf32>
    %cst_8 = arith.constant 0.797884583 : f32
    %14 = vector.broadcast %cst_8 : f32 to vector<512x32xf32>
    %15 = arith.mulf %14, %13 : vector<512x32xf32>
    %16 = math.tanh %15 : vector<512x32xf32>
    %cst_9 = arith.constant 1.000000e+00 : f32
    %17 = vector.broadcast %cst_9 : f32 to vector<512x32xf32>
    %18 = arith.addf %17, %16 : vector<512x32xf32>
    %19 = arith.mulf %8, %18 : vector<512x32xf32>
    %c0_10 = arith.constant 0 : index
    %c0_11 = arith.constant 0 : index
    %c0_12 = arith.constant 0 : index
    %20 = vector.load %arg6[%c0_10, %c0_11, %c0_12] : memref<1x512x32xf32, #tpu.memory_space<vmem>>, vector<1x512x32xf32>
    %21 = vector.shape_cast %20 : vector<1x512x32xf32> to vector<512x32xf32>
    %22 = vector.shape_cast %19 : vector<512x32xf32> to vector<1x512x32xf32>
    tpu.vector_store %arg6[%c0_10, %c0_11, %c0_12], %22 {strides = array<i32>} : memref<1x512x32xf32, #tpu.memory_space<vmem>>, vector<1x512x32xf32>,
    return
  }
  func.func @transform_0(%arg0: i32) -> (i32, i32) {
    %c0_i32 = arith.constant 0 : i32
    %c0_i32_0 = arith.constant 0 : i32
    return %arg0, %c0_i32 : i32, i32
  }
  func.func @transform_1(%arg0: i32) -> (i32, i32, i32) {
    %c0_i32 = arith.constant 0 : i32
    %c0_i32_0 = arith.constant 0 : i32
    %c0_i32_1 = arith.constant 0 : i32
    %c0_i32_2 = arith.constant 0 : i32
    return %c0_i32, %c0_i32_0, %c0_i32_1 : i32, i32, i32
  }
  func.func @transform_2(%arg0: i32) -> (i32, i32) {
    %c0_i32 = arith.constant 0 : i32
    %c0_i32_0 = arith.constant 0 : i32
    %c0_i32_1 = arith.constant 0 : i32
    return %c0_i32, %c0_i32_0 : i32, i32
  }
  func.func @transform_3(%arg0: i32) -> (i32, i32) {
    %c0_i32 = arith.constant 0 : i32
    %c0_i32_0 = arith.constant 0 : i32
    %c0_i32_1 = arith.constant 0 : i32
    return %c0_i32, %c0_i32_0 : i32, i32
  }
  func.func @transform_4(%arg0: i32) -> (i32, i32) {
    %c0_i32 = arith.constant 0 : i32
    %c0_i32_0 = arith.constant 0 : i32
    %c0_i32_1 = arith.constant 0 : i32
    return %c0_i32, %c0_i32_0 : i32, i32
  }
  func.func @transform_5(%arg0: i32) -> (i32, i32, i32) {
    %c0_i32 = arith.constant 0 : i32
    %c0_i32_0 = arith.constant 0 : i32
    %c0_i32_1 = arith.constant 0 : i32
    return %c0_i32, %arg0, %c0_i32_0 : i32, i32, i32
  }
}

module attributes {stable_mosaic.version = 11 : i64} {
  func.func @_masks_kernel(%arg0: i32, %arg1: memref<8x1x64x32xf32, #tpu.memory_space<vmem>>, %arg2: memref<1x32x24xf32, #tpu.memory_space<vmem>>, %arg3: memref<1x4x3xf32, #tpu.memory_space<vmem>>, %arg4: memref<4x2xf32, #tpu.memory_space<smem>>, %arg5: memref<1x2xf32, #tpu.memory_space<smem>>, %arg6: memref<1x16x16x24xf32, #tpu.memory_space<vmem>>) attributes {dimension_semantics = [#tpu.dimension_semantics<parallel>], iteration_bounds = array<i64: 2>, scalar_prefetch = 0 : i64, scratch_operands = 0 : i64, tpu.core_type = #tpu.core_type<tc>, window_params = [{transform_indices = @transform_0, window_bounds = array<i64: 8, 1, 64, 32>}, {transform_indices = @transform_1, window_bounds = array<i64: 1, 32, 24>}, {transform_indices = @transform_2, window_bounds = array<i64: 1, 4, 3>}, {transform_indices = @transform_3, window_bounds = array<i64: 4, 2>}, {transform_indices = @transform_4, window_bounds = array<i64: 1, 2>}, {transform_indices = @transform_5, window_bounds = array<i64: 1, 16, 16, 24>}]} {
    %c0 = arith.constant 0 : index
    %c0_0 = arith.constant 0 : index
    %c0_1 = arith.constant 0 : index
    %c0_2 = arith.constant 0 : index
    %0 = vector.load %arg1[%c0, %c0_0, %c0_1, %c0_2] : memref<8x1x64x32xf32, #tpu.memory_space<vmem>>, vector<8x1x64x32xf32>
    %1 = vector.shape_cast %0 : vector<8x1x64x32xf32> to vector<512x32xf32>
    %c0_3 = arith.constant 0 : index
    %c0_4 = arith.constant 0 : index
    %c0_5 = arith.constant 0 : index
    %2 = vector.load %arg2[%c0_3, %c0_4, %c0_5] : memref<1x32x24xf32, #tpu.memory_space<vmem>>, vector<1x32x24xf32>
    %3 = vector.shape_cast %2 : vector<1x32x24xf32> to vector<32x24xf32>
    %cst = arith.constant dense<0.000000e+00> : vector<512x24xf32>
    %4 = tpu.matmul %1, %3, %cst {dimension_numbers = #tpu.dot_dimension_numbers<[1], [0], [0], [1], [0, 0, 1, 1], [], []>} : vector<512x32xf32>, vector<32x24xf32>, vector<512x24xf32> -> vector<512x24xf32>
    %5 = vector.shape_cast %4 : vector<512x24xf32> to vector<8x4x16x24xf32>
    %c0_6 = arith.constant 0 : index
    %c0_7 = arith.constant 0 : index
    %c0_8 = arith.constant 0 : index
    %6 = vector.load %arg3[%c0_6, %c0_7, %c0_8] : memref<1x4x3xf32, #tpu.memory_space<vmem>>, vector<1x4x3xf32>
    %7 = vector.shape_cast %6 : vector<1x4x3xf32> to vector<4x3xf32>
    %cst_9 = arith.constant dense<0.000000e+00> : vector<3xf32>
    %8 = vector.multi_reduction <add>, %7, %cst_9 [0] : vector<4x3xf32> to vector<3xf32>
    %9 = vector.shape_cast %8 : vector<3xf32> to vector<1x3xf32>
    %10 = tpu.concatenate %9, %9, %9, %9, %9, %9, %9, %9 in 1 : vector<1x3xf32>, vector<1x3xf32>, vector<1x3xf32>, vector<1x3xf32>, vector<1x3xf32>, vector<1x3xf32>, vector<1x3xf32>, vector<1x3xf32> -> vector<1x24xf32>
    %cst_10 = arith.constant 0.000000e+00 : f32
    %11 = vector.broadcast %cst_10 : f32 to vector<8x16x24xf32>
    %c0_11 = arith.constant 0 : index
    %c0_12 = arith.constant 0 : index
    %12 = memref.load %arg4[%c0_11, %c0_12] : memref<4x2xf32, #tpu.memory_space<smem>>
    %13 = vector.extract_strided_slice %5 {offsets = [0, 0, 0, 0], sizes = [8, 1, 16, 24], strides = [1, 1, 1, 1]} : vector<8x4x16x24xf32> to vector<8x1x16x24xf32>
    %14 = vector.shape_cast %13 : vector<8x1x16x24xf32> to vector<8x16x24xf32>
    %15 = vector.broadcast %12 : f32 to vector<8x16x24xf32>
    %16 = arith.mulf %15, %14 : vector<8x16x24xf32>
    %17 = arith.addf %11, %16 : vector<8x16x24xf32>
    %c1 = arith.constant 1 : index
    %c0_13 = arith.constant 0 : index
    %18 = memref.load %arg4[%c1, %c0_13] : memref<4x2xf32, #tpu.memory_space<smem>>
    %19 = vector.extract_strided_slice %5 {offsets = [0, 1, 0, 0], sizes = [8, 1, 16, 24], strides = [1, 1, 1, 1]} : vector<8x4x16x24xf32> to vector<8x1x16x24xf32>
    %20 = vector.shape_cast %19 : vector<8x1x16x24xf32> to vector<8x16x24xf32>
    %21 = vector.broadcast %18 : f32 to vector<8x16x24xf32>
    %22 = arith.mulf %21, %20 : vector<8x16x24xf32>
    %23 = arith.addf %17, %22 : vector<8x16x24xf32>
    %c2 = arith.constant 2 : index
    %c0_14 = arith.constant 0 : index
    %24 = memref.load %arg4[%c2, %c0_14] : memref<4x2xf32, #tpu.memory_space<smem>>
    %25 = vector.extract_strided_slice %5 {offsets = [0, 2, 0, 0], sizes = [8, 1, 16, 24], strides = [1, 1, 1, 1]} : vector<8x4x16x24xf32> to vector<8x1x16x24xf32>
    %26 = vector.shape_cast %25 : vector<8x1x16x24xf32> to vector<8x16x24xf32>
    %27 = vector.broadcast %24 : f32 to vector<8x16x24xf32>
    %28 = arith.mulf %27, %26 : vector<8x16x24xf32>
    %29 = arith.addf %23, %28 : vector<8x16x24xf32>
    %c3 = arith.constant 3 : index
    %c0_15 = arith.constant 0 : index
    %30 = memref.load %arg4[%c3, %c0_15] : memref<4x2xf32, #tpu.memory_space<smem>>
    %31 = vector.extract_strided_slice %5 {offsets = [0, 3, 0, 0], sizes = [8, 1, 16, 24], strides = [1, 1, 1, 1]} : vector<8x4x16x24xf32> to vector<8x1x16x24xf32>
    %32 = vector.shape_cast %31 : vector<8x1x16x24xf32> to vector<8x16x24xf32>
    %33 = vector.broadcast %30 : f32 to vector<8x16x24xf32>
    %34 = arith.mulf %33, %32 : vector<8x16x24xf32>
    %35 = arith.addf %29, %34 : vector<8x16x24xf32>
    %c0_16 = arith.constant 0 : index
    %c0_17 = arith.constant 0 : index
    %36 = memref.load %arg5[%c0_16, %c0_17] : memref<1x2xf32, #tpu.memory_space<smem>>
    %37 = vector.broadcast %36 : f32 to vector<1x24xf32>
    %38 = arith.mulf %37, %10 : vector<1x24xf32>
    %39 = vector.shape_cast %38 : vector<1x24xf32> to vector<1x1x24xf32>
    %40 = vector.broadcast %39 : vector<1x1x24xf32> to vector<8x16x24xf32>
    %41 = arith.addf %35, %40 : vector<8x16x24xf32>
    %c0_18 = arith.constant 0 : index
    %c0_19 = arith.constant 0 : index
    %c0_20 = arith.constant 0 : index
    %c0_21 = arith.constant 0 : index
    %42 = vector.load %arg6[%c0_18, %c0_19, %c0_20, %c0_21] : memref<1x16x16x24xf32, #tpu.memory_space<vmem>>, vector<1x8x16x24xf32>
    %43 = vector.shape_cast %42 : vector<1x8x16x24xf32> to vector<8x16x24xf32>
    %44 = vector.shape_cast %41 : vector<8x16x24xf32> to vector<1x8x16x24xf32>
    tpu.vector_store %arg6[%c0_18, %c0_19, %c0_20, %c0_21], %44 {strides = array<i32>} : memref<1x16x16x24xf32, #tpu.memory_space<vmem>>, vector<1x8x16x24xf32>,
    %cst_22 = arith.constant 0.000000e+00 : f32
    %45 = vector.broadcast %cst_22 : f32 to vector<8x16x24xf32>
    %c0_23 = arith.constant 0 : index
    %c1_24 = arith.constant 1 : index
    %46 = memref.load %arg4[%c0_23, %c1_24] : memref<4x2xf32, #tpu.memory_space<smem>>
    %47 = vector.extract_strided_slice %5 {offsets = [0, 0, 0, 0], sizes = [8, 1, 16, 24], strides = [1, 1, 1, 1]} : vector<8x4x16x24xf32> to vector<8x1x16x24xf32>
    %48 = vector.shape_cast %47 : vector<8x1x16x24xf32> to vector<8x16x24xf32>
    %49 = vector.broadcast %46 : f32 to vector<8x16x24xf32>
    %50 = arith.mulf %49, %48 : vector<8x16x24xf32>
    %51 = arith.addf %45, %50 : vector<8x16x24xf32>
    %c1_25 = arith.constant 1 : index
    %c1_26 = arith.constant 1 : index
    %52 = memref.load %arg4[%c1_25, %c1_26] : memref<4x2xf32, #tpu.memory_space<smem>>
    %53 = vector.extract_strided_slice %5 {offsets = [0, 1, 0, 0], sizes = [8, 1, 16, 24], strides = [1, 1, 1, 1]} : vector<8x4x16x24xf32> to vector<8x1x16x24xf32>
    %54 = vector.shape_cast %53 : vector<8x1x16x24xf32> to vector<8x16x24xf32>
    %55 = vector.broadcast %52 : f32 to vector<8x16x24xf32>
    %56 = arith.mulf %55, %54 : vector<8x16x24xf32>
    %57 = arith.addf %51, %56 : vector<8x16x24xf32>
    %c2_27 = arith.constant 2 : index
    %c1_28 = arith.constant 1 : index
    %58 = memref.load %arg4[%c2_27, %c1_28] : memref<4x2xf32, #tpu.memory_space<smem>>
    %59 = vector.extract_strided_slice %5 {offsets = [0, 2, 0, 0], sizes = [8, 1, 16, 24], strides = [1, 1, 1, 1]} : vector<8x4x16x24xf32> to vector<8x1x16x24xf32>
    %60 = vector.shape_cast %59 : vector<8x1x16x24xf32> to vector<8x16x24xf32>
    %61 = vector.broadcast %58 : f32 to vector<8x16x24xf32>
    %62 = arith.mulf %61, %60 : vector<8x16x24xf32>
    %63 = arith.addf %57, %62 : vector<8x16x24xf32>
    %c3_29 = arith.constant 3 : index
    %c1_30 = arith.constant 1 : index
    %64 = memref.load %arg4[%c3_29, %c1_30] : memref<4x2xf32, #tpu.memory_space<smem>>
    %65 = vector.extract_strided_slice %5 {offsets = [0, 3, 0, 0], sizes = [8, 1, 16, 24], strides = [1, 1, 1, 1]} : vector<8x4x16x24xf32> to vector<8x1x16x24xf32>
    %66 = vector.shape_cast %65 : vector<8x1x16x24xf32> to vector<8x16x24xf32>
    %67 = vector.broadcast %64 : f32 to vector<8x16x24xf32>
    %68 = arith.mulf %67, %66 : vector<8x16x24xf32>
    %69 = arith.addf %63, %68 : vector<8x16x24xf32>
    %c0_31 = arith.constant 0 : index
    %c1_32 = arith.constant 1 : index
    %70 = memref.load %arg5[%c0_31, %c1_32] : memref<1x2xf32, #tpu.memory_space<smem>>
    %71 = vector.broadcast %70 : f32 to vector<1x24xf32>
    %72 = arith.mulf %71, %10 : vector<1x24xf32>
    %73 = vector.shape_cast %72 : vector<1x24xf32> to vector<1x1x24xf32>
    %74 = vector.broadcast %73 : vector<1x1x24xf32> to vector<8x16x24xf32>
    %75 = arith.addf %69, %74 : vector<8x16x24xf32>
    %c0_33 = arith.constant 0 : index
    %c8 = arith.constant 8 : index
    %c0_34 = arith.constant 0 : index
    %c0_35 = arith.constant 0 : index
    %76 = vector.load %arg6[%c0_33, %c8, %c0_34, %c0_35] : memref<1x16x16x24xf32, #tpu.memory_space<vmem>>, vector<1x8x16x24xf32>
    %77 = vector.shape_cast %76 : vector<1x8x16x24xf32> to vector<8x16x24xf32>
    %78 = vector.shape_cast %75 : vector<8x16x24xf32> to vector<1x8x16x24xf32>
    tpu.vector_store %arg6[%c0_33, %c8, %c0_34, %c0_35], %78 {strides = array<i32>} : memref<1x16x16x24xf32, #tpu.memory_space<vmem>>, vector<1x8x16x24xf32>,
    return
  }
  func.func @transform_0(%arg0: i32) -> (i32, i32, i32, i32) {
    %c0_i32 = arith.constant 0 : i32
    %c0_i32_0 = arith.constant 0 : i32
    %c0_i32_1 = arith.constant 0 : i32
    %c0_i32_2 = arith.constant 0 : i32
    return %c0_i32, %arg0, %c0_i32_0, %c0_i32_1 : i32, i32, i32, i32
  }
  func.func @transform_1(%arg0: i32) -> (i32, i32, i32) {
    %c0_i32 = arith.constant 0 : i32
    %c0_i32_0 = arith.constant 0 : i32
    %c0_i32_1 = arith.constant 0 : i32
    return %arg0, %c0_i32, %c0_i32_0 : i32, i32, i32
  }
  func.func @transform_2(%arg0: i32) -> (i32, i32, i32) {
    %c0_i32 = arith.constant 0 : i32
    %c0_i32_0 = arith.constant 0 : i32
    %c0_i32_1 = arith.constant 0 : i32
    return %arg0, %c0_i32, %c0_i32_0 : i32, i32, i32
  }
  func.func @transform_3(%arg0: i32) -> (i32, i32) {
    %c0_i32 = arith.constant 0 : i32
    %c0_i32_0 = arith.constant 0 : i32
    %c0_i32_1 = arith.constant 0 : i32
    return %c0_i32, %c0_i32_0 : i32, i32
  }
  func.func @transform_4(%arg0: i32) -> (i32, i32) {
    %c0_i32 = arith.constant 0 : i32
    %c0_i32_0 = arith.constant 0 : i32
    %c0_i32_1 = arith.constant 0 : i32
    return %c0_i32, %c0_i32_0 : i32, i32
  }
  func.func @transform_5(%arg0: i32) -> (i32, i32, i32, i32) {
    %c0_i32 = arith.constant 0 : i32
    %c0_i32_0 = arith.constant 0 : i32
    %c0_i32_1 = arith.constant 0 : i32
    %c0_i32_2 = arith.constant 0 : i32
    return %arg0, %c0_i32, %c0_i32_0, %c0_i32_1 : i32, i32, i32, i32
  }
}

</mosaic_0001>

<llo_original>
// kernel: mask_decoder_forward.8
$region0: #{mask_decoder_forward.8}
  #allocation0 [shape = 'u32[]', space=smem, size = 0x4, offset = 0x4, fixed_abs, tag = 'smem constant byte address 0x4 - core index']
  #allocation1 [shape = 'u32[144,128]{1,0:T(1,128)}', space=vmem, size = 0x12000, scoped, tag = 'internal scratch']
  %s0 = inlined_call_operand.vmem [shape: f32[3,2,32], index: 0, kind: input, shape index: {}]
  %s1 = inlined_call_operand.vmem [shape: f32[3,32,32], index: 1, kind: input, shape index: {}]
  %s2 = inlined_call_operand.vmem [shape: f32[3,1,32], index: 2, kind: input, shape index: {}]
  %s3 = inlined_call_operand.vmem [shape: f32[3,32,32], index: 3, kind: input, shape index: {}]
  %s4 = inlined_call_operand.vmem [shape: f32[3,1,32], index: 4, kind: input, shape index: {}]
  %s5 = inlined_call_operand.vmem [shape: f32[3,32,4], index: 5, kind: input, shape index: {}]
  %s6 = inlined_call_operand.vmem [shape: f32[3,1,4], index: 6, kind: input, shape index: {}]
  %s7 = inlined_call_operand.vmem [shape: f32[3,2,4], index: 7, kind: output, shape index: {}]
  %s8 = sld [smem:[#allocation0]]
  $region61: #{mask_decoder_forward.8} parent=0
    _
  %s10 = ssub.s32 1, %s8
  %s11 = scalar_select 0, %s10, %s8
  loop: start=0, step=1, limit=5
  $region2: #{mask_decoder_forward.8} parent=0 // loop_pre_header
    _
  $region3: #{mask_decoder_forward.8} parent=0 // loop_header
    %s13 = sphi 0, %s17
    %p14 = scmp.ge.s32.totalorder %s13, 5
    %s23 = sphi 0, %s25
    %s26 = sphi 0, %s23
    %s27 = sphi 0, %s26
    %s43 = sphi 0, %s27
    %s49 = sphi 0, %s51
    %s52 = sphi 0, %s49
    %s53 = sphi 0, %s52
    %s69 = sphi 0, %s53
    %s75 = sphi 0, %s77
    %s78 = sphi 0, %s75
    %s79 = sphi 0, %s78
    %s95 = sphi 0, %s79
    %s101 = sphi 0, %s103
    %s104 = sphi 0, %s101
    %s105 = sphi 0, %s104
    %s121 = sphi 0, %s105
    %s127 = sphi 0, %s129
    %s130 = sphi 0, %s127
    %s131 = sphi 0, %s130
    %s147 = sphi 0, %s131
    %s153 = sphi 0, %s155
    %s156 = sphi 0, %s153
    %s157 = sphi 0, %s156
    %s173 = sphi 0, %s157
    %s179 = sphi 0, %s181
    %s182 = sphi 0, %s179
    %s183 = sphi 0, %s182
    %s199 = sphi 0, %s183
    %s205 = sphi 0, %s207
    %s208 = sphi 0, %s205
    %s209 = sphi 0, %s208
    %s225 = sphi 0, %s209
  $region4: #{mask_decoder_forward.8} parent=0 // loop_header_branch
    %16 = sbr.rel (%p14) target = $region8
  $region5: #{mask_decoder_forward.8} parent=0 // loop_body
    %s18 = ssub.s32 %s13, 1
    %s19 = ssub.s32 %s13, 2
    %s20 = sadd.s32 %s13, 1
    %s21 = ssub.s32 %s13, %s20
    %p22 = scmp.eq.s32.totalorder %s21, 0
    %s24 = sadd.s32 %s23, 1
    %s25 = scalar_select %p22, %s23, %s24
    %p28 = pneg %p22
    %p29 = scmp.eq.s32.totalorder %s13, 2
    %p30 = por %p28, %p29
    %p31 = scmp.ne.s32.totalorder %s23, %s26
    %p32 = scmp.eq.s32.totalorder %s13, 0
    %p33 = por %p31, %p32
    %p34 = scmp.ne.s32.totalorder %s23, %s26
    %p35 = scmp.eq.s32.totalorder %s18, 2
    %p36 = por %p34, %p35
    %p37 = scmp.ne.s32.totalorder %s26, %s27
    %p38 = scmp.eq.s32.totalorder %s18, 0
    %p39 = por %p37, %p38
    %p40 = scmp.ne.s32.totalorder %s26, %s27
    %p41 = scmp.eq.s32.totalorder %s19, 2
    %p42 = por %p40, %p41
    %p44 = scmp.ne.s32.totalorder %s27, %s43
    %p45 = scmp.eq.s32.totalorder %s19, 0
    %p46 = por %p44, %p45
    %s47 = ssub.s32 %s13, %s20
    %p48 = scmp.eq.s32.totalorder %s47, 0
    %s50 = sadd.s32 %s49, 1
    %s51 = scalar_select %p48, %s49, %s50
    %p54 = pneg %p48
    %p55 = scmp.eq.s32.totalorder %s13, 2
    %p56 = por %p54, %p55
    %p57 = scmp.ne.s32.totalorder %s49, %s52
    %p58 = scmp.eq.s32.totalorder %s13, 0
    %p59 = por %p57, %p58
    %p60 = scmp.ne.s32.totalorder %s49, %s52
    %p61 = scmp.eq.s32.totalorder %s18, 2
    %p62 = por %p60, %p61
    %p63 = scmp.ne.s32.totalorder %s52, %s53
    %p64 = scmp.eq.s32.totalorder %s18, 0
    %p65 = por %p63, %p64
    %p66 = scmp.ne.s32.totalorder %s52, %s53
    %p67 = scmp.eq.s32.totalorder %s19, 2
    %p68 = por %p66, %p67
    %p70 = scmp.ne.s32.totalorder %s53, %s69
    %p71 = scmp.eq.s32.totalorder %s19, 0
    %p72 = por %p70, %p71
    %s73 = ssub.s32 %s13, %s20
    %p74 = scmp.eq.s32.totalorder %s73, 0
    %s76 = sadd.s32 %s75, 1
    %s77 = scalar_select %p74, %s75, %s76
    %p80 = pneg %p74
    %p81 = scmp.eq.s32.totalorder %s13, 2
    %p82 = por %p80, %p81
    %p83 = scmp.ne.s32.totalorder %s75, %s78
    %p84 = scmp.eq.s32.totalorder %s13, 0
    %p85 = por %p83, %p84
    %p86 = scmp.ne.s32.totalorder %s75, %s78
    %p87 = scmp.eq.s32.totalorder %s18, 2
    %p88 = por %p86, %p87
    %p89 = scmp.ne.s32.totalorder %s78, %s79
    %p90 = scmp.eq.s32.totalorder %s18, 0
    %p91 = por %p89, %p90
    %p92 = scmp.ne.s32.totalorder %s78, %s79
    %p93 = scmp.eq.s32.totalorder %s19, 2
    %p94 = por %p92, %p93
    %p96 = scmp.ne.s32.totalorder %s79, %s95
    %p97 = scmp.eq.s32.totalorder %s19, 0
    %p98 = por %p96, %p97
    %s99 = ssub.s32 %s13, %s20
    %p100 = scmp.eq.s32.totalorder %s99, 0
    %s102 = sadd.s32 %s101, 1
    %s103 = scalar_select %p100, %s101, %s102
    %p106 = pneg %p100
    %p107 = scmp.eq.s32.totalorder %s13, 2
    %p108 = por %p106, %p107
    %p109 = scmp.ne.s32.totalorder %s101, %s104
    %p110 = scmp.eq.s32.totalorder %s13, 0
    %p111 = por %p109, %p110
    %p112 = scmp.ne.s32.totalorder %s101, %s104
    %p113 = scmp.eq.s32.totalorder %s18, 2
    %p114 = por %p112, %p113
    %p115 = scmp.ne.s32.totalorder %s104, %s105
    %p116 = scmp.eq.s32.totalorder %s18, 0
    %p117 = por %p115, %p116
    %p118 = scmp.ne.s32.totalorder %s104, %s105
    %p119 = scmp.eq.s32.totalorder %s19, 2
    %p120 = por %p118, %p119
    %p122 = scmp.ne.s32.totalorder %s105, %s121
    %p123 = scmp.eq.s32.totalorder %s19, 0
    %p124 = por %p122, %p123
    %s125 = ssub.s32 %s13, %s20
    %p126 = scmp.eq.s32.totalorder %s125, 0
    %s128 = sadd.s32 %s127, 1
    %s129 = scalar_select %p126, %s127, %s128
    %p132 = pneg %p126
    %p133 = scmp.eq.s32.totalorder %s13, 2
    %p134 = por %p132, %p133
    %p135 = scmp.ne.s32.totalorder %s127, %s130
    %p136 = scmp.eq.s32.totalorder %s13, 0
    %p137 = por %p135, %p136
    %p138 = scmp.ne.s32.totalorder %s127, %s130
    %p139 = scmp.eq.s32.totalorder %s18, 2
    %p140 = por %p138, %p139
    %p141 = scmp.ne.s32.totalorder %s130, %s131
    %p142 = scmp.eq.s32.totalorder %s18, 0
    %p143 = por %p141, %p142
    %p144 = scmp.ne.s32.totalorder %s130, %s131
    %p145 = scmp.eq.s32.totalorder %s19, 2
    %p146 = por %p144, %p145
    %p148 = scmp.ne.s32.totalorder %s131, %s147
    %p149 = scmp.eq.s32.totalorder %s19, 0
    %p150 = por %p148, %p149
    %s151 = ssub.s32 %s13, %s20
    %p152 = scmp.eq.s32.totalorder %s151, 0
    %s154 = sadd.s32 %s153, 1
    %s155 = scalar_select %p152, %s153, %s154
    %p158 = pneg %p152
    %p159 = scmp.eq.s32.totalorder %s13, 2
    %p160 = por %p158, %p159
    %p161 = scmp.ne.s32.totalorder %s153, %s156
    %p162 = scmp.eq.s32.totalorder %s13, 0
    %p163 = por %p161, %p162
    %p164 = scmp.ne.s32.totalorder %s153, %s156
    %p165 = scmp.eq.s32.totalorder %s18, 2
    %p166 = por %p164, %p165
    %p167 = scmp.ne.s32.totalorder %s156, %s157
    %p168 = scmp.eq.s32.totalorder %s18, 0
    %p169 = por %p167, %p168
    %p170 = scmp.ne.s32.totalorder %s156, %s157
    %p171 = scmp.eq.s32.totalorder %s19, 2
    %p172 = por %p170, %p171
    %p174 = scmp.ne.s32.totalorder %s157, %s173
    %p175 = scmp.eq.s32.totalorder %s19, 0
    %p176 = por %p174, %p175
    %s177 = ssub.s32 %s13, %s20
    %p178 = scmp.eq.s32.totalorder %s177, 0
    %s180 = sadd.s32 %s179, 1
    %s181 = scalar_select %p178, %s179, %s180
    %p184 = pneg %p178
    %p185 = scmp.eq.s32.totalorder %s13, 2
    %p186 = por %p184, %p185
    %p187 = scmp.ne.s32.totalorder %s179, %s182
    %p188 = scmp.eq.s32.totalorder %s13, 0
    %p189 = por %p187, %p188
    %p190 = scmp.ne.s32.totalorder %s179, %s182
    %p191 = scmp.eq.s32.totalorder %s18, 2
    %p192 = por %p190, %p191
    %p193 = scmp.ne.s32.totalorder %s182, %s183
    %p194 = scmp.eq.s32.totalorder %s18, 0
    %p195 = por %p193, %p194
    %p196 = scmp.ne.s32.totalorder %s182, %s183
    %p197 = scmp.eq.s32.totalorder %s19, 2
    %p198 = por %p196, %p197
    %p200 = scmp.ne.s32.totalorder %s183, %s199
    %p201 = scmp.eq.s32.totalorder %s19, 0
    %p202 = por %p200, %p201
    %s203 = ssub.s32 %s13, %s20
    %p204 = scmp.eq.s32.totalorder %s203, 0
    %s206 = sadd.s32 %s205, 1
    %s207 = scalar_select %p204, %s205, %s206
    %p210 = pneg %p204
    %p211 = scmp.eq.s32.totalorder %s13, 2
    %p212 = por %p210, %p211
    %p213 = scmp.ne.s32.totalorder %s205, %s208
    %p214 = scmp.eq.s32.totalorder %s13, 0
    %p215 = por %p213, %p214
    %p216 = scmp.ne.s32.totalorder %s205, %s208
    %p217 = scmp.eq.s32.totalorder %s18, 2
    %p218 = por %p216, %p217
    %p219 = scmp.ne.s32.totalorder %s208, %s209
    %p220 = scmp.eq.s32.totalorder %s18, 0
    %p221 = por %p219, %p220
    %p222 = scmp.ne.s32.totalorder %s208, %s209
    %p223 = scmp.eq.s32.totalorder %s19, 2
    %p224 = por %p222, %p223
    %p226 = scmp.ne.s32.totalorder %s209, %s225
    %p227 = scmp.eq.s32.totalorder %s19, 0
    %p228 = por %p226, %p227
    %p229 = scmp.le.s32.totalorder 1, %s13
    %p230 = scmp.lt.s32.totalorder %s13, 4
    %p231 = pnand %p229, %p230
    %p232 = pneg %p231
    // Predicated region
    $region9: #{mask_decoder_forward.8} parent=5 // pred_check
      _
    $region10: #{mask_decoder_forward.8} parent=5 // pred_check_branch
      %234 = sbr.rel (%p231) target = $region12
    $region11: #{mask_decoder_forward.8} parent=5 // pred_region
      %s235 = ssub.s32 %s13, 1
    $region12: #{mask_decoder_forward.8} parent=5 // pred_fallthru
      _
    %p236 = scmp.lt.s32.totalorder %s13, 3
    // Predicated region
    $region13: #{mask_decoder_forward.8} parent=5 // pred_check
      %p237 = pneg %p236
    $region14: #{mask_decoder_forward.8} parent=5 // pred_check_branch
      %239 = sbr.rel (%p237) target = $region16
    $region15: #{mask_decoder_forward.8} parent=5 // pred_region
      // Predicated region
      $region17: #{mask_decoder_forward.8} parent=15 // pred_check
        %p240 = pneg %p33
      $region18: #{mask_decoder_forward.8} parent=15 // pred_check_branch
        %242 = sbr.rel (%p240) target = $region20
      $region19: #{mask_decoder_forward.8} parent=15 // pred_region
        %p243 = scmp.lt.s32.totalorder %s13, 2
        %s244 = scalar_select %p243, %s13, 2
        %s245 = smul.addr %s244, 2
        %s246 = scalar_lea.vmem %s0, %s245
      $region20: #{mask_decoder_forward.8} parent=15 // pred_fallthru
        _
      // Predicated region
      $region21: #{mask_decoder_forward.8} parent=15 // pred_check
        %p247 = pneg %p59
      $region22: #{mask_decoder_forward.8} parent=15 // pred_check_branch
        %249 = sbr.rel (%p247) target = $region24
      $region23: #{mask_decoder_forward.8} parent=15 // pred_region
        %p250 = scmp.lt.s32.totalorder %s13, 2
        %s251 = scalar_select %p250, %s13, 2
        %s252 = smul.addr %s251, 4
        %s253 = smul.addr %s252, 8
        %s254 = scalar_lea.vmem %s1, %s253
      $region24: #{mask_decoder_forward.8} parent=15 // pred_fallthru
        _
      // Predicated region
      $region25: #{mask_decoder_forward.8} parent=15 // pred_check
        %p255 = pneg %p85
      $region26: #{mask_decoder_forward.8} parent=15 // pred_check_branch
        %257 = sbr.rel (%p255) target = $region28
      $region27: #{mask_decoder_forward.8} parent=15 // pred_region
        %p258 = scmp.lt.s32.totalorder %s13, 2
        %s259 = scalar_select %p258, %s13, 2
        %s260 = scalar_lea.vmem %s2, %s259
      $region28: #{mask_decoder_forward.8} parent=15 // pred_fallthru
        _
      // Predicated region
      $region29: #{mask_decoder_forward.8} parent=15 // pred_check
        %p261 = pneg %p111
      $region30: #{mask_decoder_forward.8} parent=15 // pred_check_branch
        %263 = sbr.rel (%p261) target = $region32
      $region31: #{mask_decoder_forward.8} parent=15 // pred_region
        %p264 = scmp.lt.s32.totalorder %s13, 2
        %s265 = scalar_select %p264, %s13, 2
        %s266 = smul.addr %s265, 4
        %s267 = smul.addr %s266, 8
        %s268 = scalar_lea.vmem %s3, %s267
      $region32: #{mask_decoder_forward.8} parent=15 // pred_fallthru
        _
      // Predicated region
      $region33: #{mask_decoder_forward.8} parent=15 // pred_check
        %p269 = pneg %p137
      $region34: #{mask_decoder_forward.8} parent=15 // pred_check_branch
        %271 = sbr.rel (%p269) target = $region36
      $region35: #{mask_decoder_forward.8} parent=15 // pred_region
        %p272 = scmp.lt.s32.totalorder %s13, 2
        %s273 = scalar_select %p272, %s13, 2
        %s274 = scalar_lea.vmem %s4, %s273
      $region36: #{mask_decoder_forward.8} parent=15 // pred_fallthru
        _
      // Predicated region
      $region37: #{mask_decoder_forward.8} parent=15 // pred_check
        %p275 = pneg %p163
      $region38: #{mask_decoder_forward.8} parent=15 // pred_check_branch
        %277 = sbr.rel (%p275) target = $region40
      $region39: #{mask_decoder_forward.8} parent=15 // pred_region
        %p278 = scmp.lt.s32.totalorder %s13, 2
        %s279 = scalar_select %p278, %s13, 2
        %s280 = smul.addr %s279, 4
        %s281 = smul.addr %s280, 8
        %s282 = scalar_lea.vmem %s5, %s281
      $region40: #{mask_decoder_forward.8} parent=15 // pred_fallthru
        _
      // Predicated region
      $region41: #{mask_decoder_forward.8} parent=15 // pred_check
        %p283 = pneg %p189
      $region42: #{mask_decoder_forward.8} parent=15 // pred_check_branch
        %285 = sbr.rel (%p283) target = $region44
      $region43: #{mask_decoder_forward.8} parent=15 // pred_region
        %p286 = scmp.lt.s32.totalorder %s13, 2
        %s287 = scalar_select %p286, %s13, 2
        %s288 = scalar_lea.vmem %s6, %s287
      $region44: #{mask_decoder_forward.8} parent=15 // pred_fallthru
        _
    $region16: #{mask_decoder_forward.8} parent=5 // pred_fallthru
      _
    %p289 = scmp.le.s32.totalorder 1, %s13
    %p290 = scmp.lt.s32.totalorder %s13, 4
    %p291 = pnand %p289, %p290
    %p292 = pneg %p291
    // Predicated region
    $region45: #{mask_decoder_forward.8} parent=5 // pred_check
      _
    $region46: #{mask_decoder_forward.8} parent=5 // pred_check_branch
      %294 = sbr.rel (%p291) target = $region48
    $region47: #{mask_decoder_forward.8} parent=5 // pred_region
      %s295 = ssub.s32 %s13, 1
      %p296 = scmp.lt.s32.totalorder %s18, 2
      %s297 = scalar_select %p296, %s18, 2
      %s298 = smul.addr %s297, 2
      %s299 = scalar_lea.vmem %s0, %s298
      %p300 = pneg %p39
      %p301 = pneg %p36
      %p302 = scmp.lt.s32.totalorder %s18, 2
      %s303 = scalar_select %p302, %s18, 2
      %s304 = smul.addr %s303, 4
      %s305 = smul.addr %s304, 8
      %s306 = scalar_lea.vmem %s1, %s305
      %p307 = pneg %p65
      %p308 = pneg %p62
      %p309 = scmp.lt.s32.totalorder %s18, 2
      %s310 = scalar_select %p309, %s18, 2
      %s311 = scalar_lea.vmem %s2, %s310
      %p312 = pneg %p91
      %p313 = pneg %p88
      %p314 = scmp.lt.s32.totalorder %s18, 2
      %s315 = scalar_select %p314, %s18, 2
      %s316 = smul.addr %s315, 4
      %s317 = smul.addr %s316, 8
      %s318 = scalar_lea.vmem %s3, %s317
      %p319 = pneg %p117
      %p320 = pneg %p114
      %p321 = scmp.lt.s32.totalorder %s18, 2
      %s322 = scalar_select %p321, %s18, 2
      %s323 = scalar_lea.vmem %s4, %s322
      %p324 = pneg %p143
      %p325 = pneg %p140
      %p326 = scmp.lt.s32.totalorder %s18, 2
      %s327 = scalar_select %p326, %s18, 2
      %s328 = smul.addr %s327, 4
      %s329 = smul.addr %s328, 8
      %s330 = scalar_lea.vmem %s5, %s329
      %p331 = pneg %p169
      %p332 = pneg %p166
      %p333 = scmp.lt.s32.totalorder %s18, 2
      %s334 = scalar_select %p333, %s18, 2
      %s335 = scalar_lea.vmem %s6, %s334
      %p336 = pneg %p195
      %p337 = pneg %p192
      %p338 = pneg %p221
      %p339 = pneg %p218
      %p340 = scmp.lt.s32.totalorder %s18, 2
      %s341 = scalar_select %p340, %s18, 2
      %s342 = smul.addr %s341, 2
      %s343 = scalar_lea.vmem %s7, %s342
      %p344 = scmp.lt.s32.totalorder %s18, 2
      %s345 = scalar_select %p344, %s18, 2
      %s346 = smul.addr %s345, 2
      %s347 = scalar_lea.vmem %s0, %s346
      %p348 = scmp.lt.s32.totalorder %s18, 2
      %s349 = scalar_select %p348, %s18, 2
      %s350 = smul.addr %s349, 4
      %s351 = smul.addr %s350, 8
      %s352 = scalar_lea.vmem %s1, %s351
      %p353 = scmp.lt.s32.totalorder %s18, 2
      %s354 = scalar_select %p353, %s18, 2
      %s355 = scalar_lea.vmem %s2, %s354
      %p356 = scmp.lt.s32.totalorder %s18, 2
      %s357 = scalar_select %p356, %s18, 2
      %s358 = smul.addr %s357, 4
      %s359 = smul.addr %s358, 8
      %s360 = scalar_lea.vmem %s3, %s359
      %p361 = scmp.lt.s32.totalorder %s18, 2
      %s362 = scalar_select %p361, %s18, 2
      %s363 = scalar_lea.vmem %s4, %s362
      %p364 = scmp.lt.s32.totalorder %s18, 2
      %s365 = scalar_select %p364, %s18, 2
      %s366 = smul.addr %s365, 4
      %s367 = smul.addr %s366, 8
      %s368 = scalar_lea.vmem %s5, %s367
      %p369 = scmp.lt.s32.totalorder %s18, 2
      %s370 = scalar_select %p369, %s18, 2
      %s371 = scalar_lea.vmem %s6, %s370
      %p372 = scmp.lt.s32.totalorder %s18, 2
      %s373 = scalar_select %p372, %s18, 2
      %s374 = smul.addr %s373, 2
      %s375 = scalar_lea.vmem %s7, %s374
      %v376 = vld [vmem:[%s347] sm:$0x3]
      %v377 = vld [vmem:[%s352] sm:$0xff]
      %v378 = vld [vmem:[%s352 + $0x8] sm:$0xff]
      %v379 = vld [vmem:[%s352 + $0x10] sm:$0xff]
      %v380 = vld [vmem:[%s352 + $0x18] sm:$0xff]
      %v381 = vld [vmem:[%s355] sm:$0x1]
      %v383 = vlaneseq
      %v384 = vshrl.u32 %v383, 7
      %v385 = vsub.s32 0, %v384
      %v386 = vrot.slane %v381, %v385
      %vm388 = vcmask 261120
      %v390 = vsel %vm388, %v376, 0
      %392 = vmatprep.subr.mxu0 0.0
      %393 = vmatpush1.msra.mxu0 %v377
      %394 = vmatprep.subr.mxu0 0.0
      %395 = vmatpush1.msra.mxu0 %v378
      %396 = vmatprep.subr.mxu0 0.0
      %397 = vmatpush1.msra.mxu0 %v379
      %398 = vmatprep.subr.mxu0 0.0
      %399 = vmatpush1.msra.mxu0 %v380
      %400 = vmatprep.subr.mxu0 0.0
      %401 = vmatpush1.msra.mxu0 0.0
      %402 = vmatprep.subr.mxu0 0.0
      %403 = vmatpush1.msra.mxu0 0.0
      %404 = vmatprep.subr.mxu0 0.0
      %405 = vmatpush1.msra.mxu0 0.0
      %406 = vmatprep.subr.mxu0 0.0
      %407 = vmatpush1.msra.mxu0 0.0
      %408 = vmatprep.subr.mxu0 0.0
      %409 = vmatpush1.msra.mxu0 0.0
      %410 = vmatprep.subr.mxu0 0.0
      %411 = vmatpush1.msra.mxu0 0.0
      %412 = vmatprep.subr.mxu0 0.0
      %413 = vmatpush1.msra.mxu0 0.0
      %414 = vmatprep.subr.mxu0 0.0
      %415 = vmatpush1.msra.mxu0 0.0
      %416 = vmatprep.subr.mxu0 0.0
      %417 = vmatpush1.msra.mxu0 0.0
      %418 = vmatprep.subr.mxu0 0.0
      %419 = vmatpush1.msra.mxu0 0.0
      %420 = vmatprep.subr.mxu0 0.0
      %421 = vmatpush1.msra.mxu0 0.0
      %422 = vmatprep.subr.mxu0 0.0
      %423 = vmatpush1.msra.mxu0 0.0
      %424 = vmatprep.subr.mxu0 0.0
      %425 = vmatpush1.msra.mxu0 0.0
      %426 = vmatprep.subr.mxu0 0.0
      %427 = vmatpush1.msra.mxu0 0.0
      %428 = vmatprep.subr.mxu0 0.0
      %429 = vmatpush1.msra.mxu0 0.0
      %430 = vmatprep.subr.mxu0 0.0
      %431 = vmatpush1.msra.mxu0 0.0
      %432 = vmatprep.subr.mxu0 0.0
      %433 = vmatpush1.msra.mxu0 0.0
      %434 = vmatprep.subr.mxu0 0.0
      %435 = vmatpush1.msra.mxu0 0.0
      %436 = vmatprep.subr.mxu0 0.0
      %437 = vmatpush1.msra.mxu0 0.0
      %438 = vmatprep.subr.mxu0 0.0
      %439 = vmatpush1.msra.mxu0 0.0
      %440 = vmatprep.subr.mxu0 0.0
      %441 = vmatpush1.msra.mxu0 0.0
      %442 = vmatprep.subr.mxu0 0.0
      %443 = vmatpush1.msra.mxu0 0.0
      %444 = vmatprep.subr.mxu0 0.0
      %445 = vmatpush1.msra.mxu0 0.0
      %446 = vmatprep.subr.mxu0 0.0
      %447 = vmatpush1.msra.mxu0 0.0
      %448 = vmatprep.subr.mxu0 0.0
      %449 = vmatpush1.msra.mxu0 0.0
      %450 = vmatprep.subr.mxu0 0.0
      %451 = vmatpush1.msra.mxu0 0.0
      %452 = vmatprep.subr.mxu0 0.0
      %453 = vmatpush1.msra.mxu0 0.0
      %454 = vmatprep.subr.mxu0 0.0
      %455 = vmatpush1.msra.mxu0 0.0
      %456 = vmatprep.mubr.f32.mxu0 0.0
      %457 = vmatmul.mubr.f32.gmra.mrb[0].mxu0 %v390
      %v458 = vpop.f32.mrb[0].mxu0
      %v459 = vadd.f32 %v386, %v458
      %v460 = vpop.f32.mrb[0].mxu0
      %461 = vdwg.mxu0
      %v462 = vmax.f32 %v459, 0.0
      %v463 = vld [vmem:[%s360] sm:$0xff]
      %v464 = vld [vmem:[%s360 + $0x8] sm:$0xff]
      %v465 = vld [vmem:[%s360 + $0x10] sm:$0xff]
      %v466 = vld [vmem:[%s360 + $0x18] sm:$0xff]
      %v467 = vld [vmem:[%s363] sm:$0x1]
      %v469 = vlaneseq
      %v470 = vshrl.u32 %v469, 7
      %v471 = vsub.s32 0, %v470
      %v472 = vrot.slane %v467, %v471
      %v475 = vsel %vm388, %v462, 0
      %477 = vmatprep.subr.mxu0 0.0
      %478 = vmatpush1.msra.mxu0 %v463
      %479 = vmatprep.subr.mxu0 0.0
      %480 = vmatpush1.msra.mxu0 %v464
      %481 = vmatprep.subr.mxu0 0.0
      %482 = vmatpush1.msra.mxu0 %v465
      %483 = vmatprep.subr.mxu0 0.0
      %484 = vmatpush1.msra.mxu0 %v466
      %485 = vmatprep.subr.mxu0 0.0
      %486 = vmatpush1.msra.mxu0 0.0
      %487 = vmatprep.subr.mxu0 0.0
      %488 = vmatpush1.msra.mxu0 0.0
      %489 = vmatprep.subr.mxu0 0.0
      %490 = vmatpush1.msra.mxu0 0.0
      %491 = vmatprep.subr.mxu0 0.0
      %492 = vmatpush1.msra.mxu0 0.0
      %493 = vmatprep.subr.mxu0 0.0
      %494 = vmatpush1.msra.mxu0 0.0
      %495 = vmatprep.subr.mxu0 0.0
      %496 = vmatpush1.msra.mxu0 0.0
      %497 = vmatprep.subr.mxu0 0.0
      %498 = vmatpush1.msra.mxu0 0.0
      %499 = vmatprep.subr.mxu0 0.0
      %500 = vmatpush1.msra.mxu0 0.0
      %501 = vmatprep.subr.mxu0 0.0
      %502 = vmatpush1.msra.mxu0 0.0
      %503 = vmatprep.subr.mxu0 0.0
      %504 = vmatpush1.msra.mxu0 0.0
      %505 = vmatprep.subr.mxu0 0.0
      %506 = vmatpush1.msra.mxu0 0.0
      %507 = vmatprep.subr.mxu0 0.0
      %508 = vmatpush1.msra.mxu0 0.0
      %509 = vmatprep.subr.mxu0 0.0
      %510 = vmatpush1.msra.mxu0 0.0
      %511 = vmatprep.subr.mxu0 0.0
      %512 = vmatpush1.msra.mxu0 0.0
      %513 = vmatprep.subr.mxu0 0.0
      %514 = vmatpush1.msra.mxu0 0.0
      %515 = vmatprep.subr.mxu0 0.0
      %516 = vmatpush1.msra.mxu0 0.0
      %517 = vmatprep.subr.mxu0 0.0
      %518 = vmatpush1.msra.mxu0 0.0
      %519 = vmatprep.subr.mxu0 0.0
      %520 = vmatpush1.msra.mxu0 0.0
      %521 = vmatprep.subr.mxu0 0.0
      %522 = vmatpush1.msra.mxu0 0.0
      %523 = vmatprep.subr.mxu0 0.0
      %524 = vmatpush1.msra.mxu0 0.0
      %525 = vmatprep.subr.mxu0 0.0
      %526 = vmatpush1.msra.mxu0 0.0
      %527 = vmatprep.subr.mxu0 0.0
      %528 = vmatpush1.msra.mxu0 0.0
      %529 = vmatprep.subr.mxu0 0.0
      %530 = vmatpush1.msra.mxu0 0.0
      %531 = vmatprep.subr.mxu0 0.0
      %532 = vmatpush1.msra.mxu0 0.0
      %533 = vmatprep.subr.mxu0 0.0
      %534 = vmatpush1.msra.mxu0 0.0
      %535 = vmatprep.subr.mxu0 0.0
      %536 = vmatpush1.msra.mxu0 0.0
      %537 = vmatprep.subr.mxu0 0.0
      %538 = vmatpush1.msra.mxu0 0.0
      %539 = vmatprep.subr.mxu0 0.0
      %540 = vmatpush1.msra.mxu0 0.0
      %541 = vmatprep.mubr.f32.mxu0 0.0
      %542 = vmatmul.mubr.f32.gmra.mrb[0].mxu0 %v475
      %v543 = vpop.f32.mrb[0].mxu0
      %v544 = vadd.f32 %v472, %v543
      %v545 = vpop.f32.mrb[0].mxu0
      %546 = vdwg.mxu0
      %v547 = vmax.f32 %v544, 0.0
      %v548 = vld [vmem:[%s368] sm:$0xff]
      %v549 = vld [vmem:[%s368 + $0x8] sm:$0xff]
      %v550 = vld [vmem:[%s368 + $0x10] sm:$0xff]
      %v551 = vld [vmem:[%s368 + $0x18] sm:$0xff]
      %v552 = vld [vmem:[%s371] sm:$0x1]
      %v554 = vlaneseq
      %v555 = vshrl.u32 %v554, 7
      %v556 = vsub.s32 0, %v555
      %v557 = vrot.slane %v552, %v556
      %v560 = vsel %vm388, %v547, 0
      %562 = vmatprep.subr.mxu0 0.0
      %563 = vmatpush1.msra.mxu0 %v548
      %564 = vmatprep.subr.mxu0 0.0
      %565 = vmatpush1.msra.mxu0 %v549
      %566 = vmatprep.subr.mxu0 0.0
      %567 = vmatpush1.msra.mxu0 %v550
      %568 = vmatprep.subr.mxu0 0.0
      %569 = vmatpush1.msra.mxu0 %v551
      %570 = vmatprep.subr.mxu0 0.0
      %571 = vmatpush1.msra.mxu0 0.0
      %572 = vmatprep.subr.mxu0 0.0
      %573 = vmatpush1.msra.mxu0 0.0
      %574 = vmatprep.subr.mxu0 0.0
      %575 = vmatpush1.msra.mxu0 0.0
      %576 = vmatprep.subr.mxu0 0.0
      %577 = vmatpush1.msra.mxu0 0.0
      %578 = vmatprep.subr.mxu0 0.0
      %579 = vmatpush1.msra.mxu0 0.0
      %580 = vmatprep.subr.mxu0 0.0
      %581 = vmatpush1.msra.mxu0 0.0
      %582 = vmatprep.subr.mxu0 0.0
      %583 = vmatpush1.msra.mxu0 0.0
      %584 = vmatprep.subr.mxu0 0.0
      %585 = vmatpush1.msra.mxu0 0.0
      %586 = vmatprep.subr.mxu0 0.0
      %587 = vmatpush1.msra.mxu0 0.0
      %588 = vmatprep.subr.mxu0 0.0
      %589 = vmatpush1.msra.mxu0 0.0
      %590 = vmatprep.subr.mxu0 0.0
      %591 = vmatpush1.msra.mxu0 0.0
      %592 = vmatprep.subr.mxu0 0.0
      %593 = vmatpush1.msra.mxu0 0.0
      %594 = vmatprep.subr.mxu0 0.0
      %595 = vmatpush1.msra.mxu0 0.0
      %596 = vmatprep.subr.mxu0 0.0
      %597 = vmatpush1.msra.mxu0 0.0
      %598 = vmatprep.subr.mxu0 0.0
      %599 = vmatpush1.msra.mxu0 0.0
      %600 = vmatprep.subr.mxu0 0.0
      %601 = vmatpush1.msra.mxu0 0.0
      %602 = vmatprep.subr.mxu0 0.0
      %603 = vmatpush1.msra.mxu0 0.0
      %604 = vmatprep.subr.mxu0 0.0
      %605 = vmatpush1.msra.mxu0 0.0
      %606 = vmatprep.subr.mxu0 0.0
      %607 = vmatpush1.msra.mxu0 0.0
      %608 = vmatprep.subr.mxu0 0.0
      %609 = vmatpush1.msra.mxu0 0.0
      %610 = vmatprep.subr.mxu0 0.0
      %611 = vmatpush1.msra.mxu0 0.0
      %612 = vmatprep.subr.mxu0 0.0
      %613 = vmatpush1.msra.mxu0 0.0
      %614 = vmatprep.subr.mxu0 0.0
      %615 = vmatpush1.msra.mxu0 0.0
      %616 = vmatprep.subr.mxu0 0.0
      %617 = vmatpush1.msra.mxu0 0.0
      %618 = vmatprep.subr.mxu0 0.0
      %619 = vmatpush1.msra.mxu0 0.0
      %620 = vmatprep.subr.mxu0 0.0
      %621 = vmatpush1.msra.mxu0 0.0
      %622 = vmatprep.subr.mxu0 0.0
      %623 = vmatpush1.msra.mxu0 0.0
      %624 = vmatprep.subr.mxu0 0.0
      %625 = vmatpush1.msra.mxu0 0.0
      %626 = vmatprep.mubr.f32.mxu0 0.0
      %627 = vmatmul.mubr.f32.gmra.mrb[0].mxu0 %v560
      %v628 = vpop.f32.mrb[0].mxu0
      %v629 = vadd.f32 %v557, %v628
      %v630 = vpop.f32.mrb[0].mxu0
      %631 = vdwg.mxu0
      %vm632 = vcmask 25600
      %633 = vst.msk [vmem:[%s375] sm:$0x3] %vm632, %v629
      %p634 = scmp.lt.s32.totalorder %s18, 2
      %s635 = scalar_select %p634, %s18, 2
      %s636 = smul.addr %s635, 2
      %s637 = scalar_lea.vmem %s7, %s636
      // Predicated region
      $region49: #{mask_decoder_forward.8} parent=47 // pred_check
        %p638 = pneg %p218
      $region50: #{mask_decoder_forward.8} parent=47 // pred_check_branch
        %640 = sbr.rel (%p638) target = $region52
      $region51: #{mask_decoder_forward.8} parent=47 // pred_region
        _
      $region52: #{mask_decoder_forward.8} parent=47 // pred_fallthru
        _
    $region48: #{mask_decoder_forward.8} parent=5 // pred_fallthru
      _
    %p641 = scmp.le.s32.totalorder 2, %s13
    // Predicated region
    $region53: #{mask_decoder_forward.8} parent=5 // pred_check
      %p642 = pneg %p641
    $region54: #{mask_decoder_forward.8} parent=5 // pred_check_branch
      %644 = sbr.rel (%p642) target = $region56
    $region55: #{mask_decoder_forward.8} parent=5 // pred_region
      %s645 = ssub.s32 %s13, 2
      // Predicated region
      $region57: #{mask_decoder_forward.8} parent=55 // pred_check
        %p646 = pneg %p224
      $region58: #{mask_decoder_forward.8} parent=55 // pred_check_branch
        %648 = sbr.rel (%p646) target = $region60
      $region59: #{mask_decoder_forward.8} parent=55 // pred_region
        %p649 = scmp.lt.s32.totalorder %s19, 2
        %s650 = scalar_select %p649, %s19, 2
        %s651 = smul.addr %s650, 2
        %s652 = scalar_lea.vmem %s7, %s651
      $region60: #{mask_decoder_forward.8} parent=55 // pred_fallthru
        _
    $region56: #{mask_decoder_forward.8} parent=5 // pred_fallthru
      _
  $region6: #{mask_decoder_forward.8} parent=0 // loop_footer
    %s17 = sadd.s32 1, %s13
  $region7: #{mask_decoder_forward.8} parent=0 // loop_footer_branch
    %12 = sbr.rel target = $region3
  $region8: #{mask_decoder_forward.8} parent=0 // loop_exit
    _

// kernel: mask_decoder_forward.7
$region0: #{mask_decoder_forward.7}
  #allocation0 [shape = 'u32[]', space=smem, size = 0x4, offset = 0x4, fixed_abs, tag = 'smem constant byte address 0x4 - core index']
  #allocation1 [shape = 'u32[144,128]{1,0:T(1,128)}', space=vmem, size = 0x12000, scoped, tag = 'internal scratch']
  %s0 = inlined_call_operand.vmem [shape: f32[1024,8], index: 0, kind: input, shape index: {}]
  %s1 = inlined_call_operand.vmem [shape: f32[1,8,32], index: 1, kind: input, shape index: {}]
  %s2 = inlined_call_operand.vmem [shape: f32[1,32], index: 2, kind: input, shape index: {}]
  %s3 = inlined_call_operand.vmem [shape: f32[1,32], index: 3, kind: input, shape index: {}]
  %s4 = inlined_call_operand.vmem [shape: f32[1,32], index: 4, kind: input, shape index: {}]
  %s5 = inlined_call_operand.vmem [shape: f32[1,1024,32], index: 5, kind: output, shape index: {}]
  %s6 = sld [smem:[#allocation0]]
  $region53: #{mask_decoder_forward.7} parent=0
    _
  %s8 = ssub.s32 1, %s6
  %s9 = scalar_select 0, %s8, %s6
  loop: start=0, step=1, limit=4
  $region2: #{mask_decoder_forward.7} parent=0 // loop_pre_header
    _
  $region3: #{mask_decoder_forward.7} parent=0 // loop_header
    %s11 = sphi 0, %s15
    %p12 = scmp.ge.s32.totalorder %s11, 4
    %s21 = sphi 0, %s23
    %s24 = sphi 0, %s21
    %s25 = sphi 0, %s24
    %s41 = sphi 0, %s25
    %s45 = sphi 0, %s45
    %s47 = sphi 0, %s45
    %s48 = sphi 0, %s47
    %s62 = sphi 0, %s48
    %s66 = sphi 0, %s66
    %s68 = sphi 0, %s66
    %s69 = sphi 0, %s68
    %s83 = sphi 0, %s69
    %s87 = sphi 0, %s87
    %s89 = sphi 0, %s87
    %s90 = sphi 0, %s89
    %s104 = sphi 0, %s90
    %s108 = sphi 0, %s108
    %s110 = sphi 0, %s108
    %s111 = sphi 0, %s110
    %s125 = sphi 0, %s111
    %s131 = sphi 0, %s133
    %s134 = sphi 0, %s131
    %s135 = sphi 0, %s134
    %s151 = sphi 0, %s135
  $region4: #{mask_decoder_forward.7} parent=0 // loop_header_branch
    %14 = sbr.rel (%p12) target = $region8
  $region5: #{mask_decoder_forward.7} parent=0 // loop_body
    %s16 = ssub.s32 %s11, 1
    %s17 = ssub.s32 %s11, 2
    %s18 = sadd.s32 %s11, 1
    %s19 = ssub.s32 %s11, %s18
    %p20 = scmp.eq.s32.totalorder %s19, 0
    %s22 = sadd.s32 %s21, 1
    %s23 = scalar_select %p20, %s21, %s22
    %p26 = pneg %p20
    %p27 = scmp.eq.s32.totalorder %s11, 1
    %p28 = por %p26, %p27
    %p29 = scmp.ne.s32.totalorder %s21, %s24
    %p30 = scmp.eq.s32.totalorder %s11, 0
    %p31 = por %p29, %p30
    %p32 = scmp.ne.s32.totalorder %s21, %s24
    %p33 = scmp.eq.s32.totalorder %s16, 1
    %p34 = por %p32, %p33
    %p35 = scmp.ne.s32.totalorder %s24, %s25
    %p36 = scmp.eq.s32.totalorder %s16, 0
    %p37 = por %p35, %p36
    %p38 = scmp.ne.s32.totalorder %s24, %s25
    %p39 = scmp.eq.s32.totalorder %s17, 1
    %p40 = por %p38, %p39
    %p42 = scmp.ne.s32.totalorder %s25, %s41
    %p43 = scmp.eq.s32.totalorder %s17, 0
    %p44 = por %p42, %p43
    %s46 = sadd.s32 %s45, 1
    %p49 = scmp.eq.s32.totalorder %s11, 1
    %p50 = scmp.ne.s32.totalorder %s45, %s47
    %p51 = scmp.eq.s32.totalorder %s11, 0
    %p52 = por %p50, %p51
    %p53 = scmp.ne.s32.totalorder %s45, %s47
    %p54 = scmp.eq.s32.totalorder %s16, 1
    %p55 = por %p53, %p54
    %p56 = scmp.ne.s32.totalorder %s47, %s48
    %p57 = scmp.eq.s32.totalorder %s16, 0
    %p58 = por %p56, %p57
    %p59 = scmp.ne.s32.totalorder %s47, %s48
    %p60 = scmp.eq.s32.totalorder %s17, 1
    %p61 = por %p59, %p60
    %p63 = scmp.ne.s32.totalorder %s48, %s62
    %p64 = scmp.eq.s32.totalorder %s17, 0
    %p65 = por %p63, %p64
    %s67 = sadd.s32 %s66, 1
    %p70 = scmp.eq.s32.totalorder %s11, 1
    %p71 = scmp.ne.s32.totalorder %s66, %s68
    %p72 = scmp.eq.s32.totalorder %s11, 0
    %p73 = por %p71, %p72
    %p74 = scmp.ne.s32.totalorder %s66, %s68
    %p75 = scmp.eq.s32.totalorder %s16, 1
    %p76 = por %p74, %p75
    %p77 = scmp.ne.s32.totalorder %s68, %s69
    %p78 = scmp.eq.s32.totalorder %s16, 0
    %p79 = por %p77, %p78
    %p80 = scmp.ne.s32.totalorder %s68, %s69
    %p81 = scmp.eq.s32.totalorder %s17, 1
    %p82 = por %p80, %p81
    %p84 = scmp.ne.s32.totalorder %s69, %s83
    %p85 = scmp.eq.s32.totalorder %s17, 0
    %p86 = por %p84, %p85
    %s88 = sadd.s32 %s87, 1
    %p91 = scmp.eq.s32.totalorder %s11, 1
    %p92 = scmp.ne.s32.totalorder %s87, %s89
    %p93 = scmp.eq.s32.totalorder %s11, 0
    %p94 = por %p92, %p93
    %p95 = scmp.ne.s32.totalorder %s87, %s89
    %p96 = scmp.eq.s32.totalorder %s16, 1
    %p97 = por %p95, %p96
    %p98 = scmp.ne.s32.totalorder %s89, %s90
    %p99 = scmp.eq.s32.totalorder %s16, 0
    %p100 = por %p98, %p99
    %p101 = scmp.ne.s32.totalorder %s89, %s90
    %p102 = scmp.eq.s32.totalorder %s17, 1
    %p103 = por %p101, %p102
    %p105 = scmp.ne.s32.totalorder %s90, %s104
    %p106 = scmp.eq.s32.totalorder %s17, 0
    %p107 = por %p105, %p106
    %s109 = sadd.s32 %s108, 1
    %p112 = scmp.eq.s32.totalorder %s11, 1
    %p113 = scmp.ne.s32.totalorder %s108, %s110
    %p114 = scmp.eq.s32.totalorder %s11, 0
    %p115 = por %p113, %p114
    %p116 = scmp.ne.s32.totalorder %s108, %s110
    %p117 = scmp.eq.s32.totalorder %s16, 1
    %p118 = por %p116, %p117
    %p119 = scmp.ne.s32.totalorder %s110, %s111
    %p120 = scmp.eq.s32.totalorder %s16, 0
    %p121 = por %p119, %p120
    %p122 = scmp.ne.s32.totalorder %s110, %s111
    %p123 = scmp.eq.s32.totalorder %s17, 1
    %p124 = por %p122, %p123
    %p126 = scmp.ne.s32.totalorder %s111, %s125
    %p127 = scmp.eq.s32.totalorder %s17, 0
    %p128 = por %p126, %p127
    %s129 = ssub.s32 %s11, %s18
    %p130 = scmp.eq.s32.totalorder %s129, 0
    %s132 = sadd.s32 %s131, 1
    %s133 = scalar_select %p130, %s131, %s132
    %p136 = pneg %p130
    %p137 = scmp.eq.s32.totalorder %s11, 1
    %p138 = por %p136, %p137
    %p139 = scmp.ne.s32.totalorder %s131, %s134
    %p140 = scmp.eq.s32.totalorder %s11, 0
    %p141 = por %p139, %p140
    %p142 = scmp.ne.s32.totalorder %s131, %s134
    %p143 = scmp.eq.s32.totalorder %s16, 1
    %p144 = por %p142, %p143
    %p145 = scmp.ne.s32.totalorder %s134, %s135
    %p146 = scmp.eq.s32.totalorder %s16, 0
    %p147 = por %p145, %p146
    %p148 = scmp.ne.s32.totalorder %s134, %s135
    %p149 = scmp.eq.s32.totalorder %s17, 1
    %p150 = por %p148, %p149
    %p152 = scmp.ne.s32.totalorder %s135, %s151
    %p153 = scmp.eq.s32.totalorder %s17, 0
    %p154 = por %p152, %p153
    %p155 = scmp.le.s32.totalorder 1, %s11
    %p156 = scmp.lt.s32.totalorder %s11, 3
    %p157 = pnand %p155, %p156
    %p158 = pneg %p157
    // Predicated region
    $region9: #{mask_decoder_forward.7} parent=5 // pred_check
      _
    $region10: #{mask_decoder_forward.7} parent=5 // pred_check_branch
      %160 = sbr.rel (%p157) target = $region12
    $region11: #{mask_decoder_forward.7} parent=5 // pred_region
      %s161 = ssub.s32 %s11, 1
      // Predicated region
      $region13: #{mask_decoder_forward.7} parent=11 // pred_check
        %p162 = pneg %p58
      $region14: #{mask_decoder_forward.7} parent=11 // pred_check_branch
        %164 = sbr.rel (%p162) target = $region16
      $region15: #{mask_decoder_forward.7} parent=11 // pred_region
        _
      $region16: #{mask_decoder_forward.7} parent=11 // pred_fallthru
        _
      // Predicated region
      $region17: #{mask_decoder_forward.7} parent=11 // pred_check
        %p165 = pneg %p79
      $region18: #{mask_decoder_forward.7} parent=11 // pred_check_branch
        %167 = sbr.rel (%p165) target = $region20
      $region19: #{mask_decoder_forward.7} parent=11 // pred_region
        _
      $region20: #{mask_decoder_forward.7} parent=11 // pred_fallthru
        _
      // Predicated region
      $region21: #{mask_decoder_forward.7} parent=11 // pred_check
        %p168 = pneg %p100
      $region22: #{mask_decoder_forward.7} parent=11 // pred_check_branch
        %170 = sbr.rel (%p168) target = $region24
      $region23: #{mask_decoder_forward.7} parent=11 // pred_region
        _
      $region24: #{mask_decoder_forward.7} parent=11 // pred_fallthru
        _
      // Predicated region
      $region25: #{mask_decoder_forward.7} parent=11 // pred_check
        %p171 = pneg %p121
      $region26: #{mask_decoder_forward.7} parent=11 // pred_check_branch
        %173 = sbr.rel (%p171) target = $region28
      $region27: #{mask_decoder_forward.7} parent=11 // pred_region
        _
      $region28: #{mask_decoder_forward.7} parent=11 // pred_fallthru
        _
    $region12: #{mask_decoder_forward.7} parent=5 // pred_fallthru
      _
    %p174 = scmp.lt.s32.totalorder %s11, 2
    // Predicated region
    $region29: #{mask_decoder_forward.7} parent=5 // pred_check
      %p175 = pneg %p174
    $region30: #{mask_decoder_forward.7} parent=5 // pred_check_branch
      %177 = sbr.rel (%p175) target = $region32
    $region31: #{mask_decoder_forward.7} parent=5 // pred_region
      // Predicated region
      $region33: #{mask_decoder_forward.7} parent=31 // pred_check
        %p178 = pneg %p31
      $region34: #{mask_decoder_forward.7} parent=31 // pred_check_branch
        %180 = sbr.rel (%p178) target = $region36
      $region35: #{mask_decoder_forward.7} parent=31 // pred_region
        %s181 = smul.u32 64, %s11
        %p182 = scmp.lt.s32.totalorder %s181, 127
        %s183 = scalar_select %p182, %s181, 127
        %s184 = smul.addr %s183, 8
        %s185 = scalar_lea.vmem %s0, %s184
        %s186 = smul.u32 64, %s11
      $region36: #{mask_decoder_forward.7} parent=31 // pred_fallthru
        _
    $region32: #{mask_decoder_forward.7} parent=5 // pred_fallthru
      _
    %p187 = scmp.le.s32.totalorder 1, %s11
    %p188 = scmp.lt.s32.totalorder %s11, 3
    %p189 = pnand %p187, %p188
    %p190 = pneg %p189
    // Predicated region
    $region37: #{mask_decoder_forward.7} parent=5 // pred_check
      _
    $region38: #{mask_decoder_forward.7} parent=5 // pred_check_branch
      %192 = sbr.rel (%p189) target = $region40
    $region39: #{mask_decoder_forward.7} parent=5 // pred_region
      %s193 = ssub.s32 %s11, 1
      %s194 = smul.u32 64, %s16
      %p195 = scmp.lt.s32.totalorder %s194, 127
      %s196 = scalar_select %p195, %s194, 127
      %s197 = smul.addr %s196, 8
      %s198 = scalar_lea.vmem %s0, %s197
      %p199 = pneg %p37
      %p200 = pneg %p34
      %p201 = pneg %p58
      %p202 = pneg %p55
      %p203 = pneg %p79
      %p204 = pneg %p76
      %p205 = pneg %p100
      %p206 = pneg %p97
      %p207 = pneg %p121
      %p208 = pneg %p118
      %p209 = pneg %p147
      %p210 = pneg %p144
      %s211 = smul.u32 64, %s16
      %p212 = scmp.lt.s32.totalorder %s211, 127
      %s213 = scalar_select %p212, %s211, 127
      %s214 = smul.addr %s213, 8
      %s215 = scalar_lea.vmem %s5, %s214
      %s216 = smul.u32 64, %s16
      %p217 = scmp.lt.s32.totalorder %s216, 127
      %s218 = scalar_select %p217, %s216, 127
      %s219 = smul.addr %s218, 8
      %s220 = scalar_lea.vmem %s0, %s219
      %s221 = smul.u32 64, %s16
      %s222 = smul.u32 64, %s16
      %p223 = scmp.lt.s32.totalorder %s222, 127
      %s224 = scalar_select %p223, %s222, 127
      %s225 = smul.addr %s224, 8
      %s226 = scalar_lea.vmem %s5, %s225
      %s227 = smul.u32 64, %s16
      %v228 = vld [vmem:[%s220] sm:$0xff]
      %v229 = vld [vmem:[%s220 + $0x8] sm:$0xff]
      %v230 = vld [vmem:[%s220 + $0x10] sm:$0xff]
      %v231 = vld [vmem:[%s220 + $0x18] sm:$0xff]
      %v232 = vld [vmem:[%s220 + $0x20] sm:$0xff]
      %v233 = vld [vmem:[%s220 + $0x28] sm:$0xff]
      %v234 = vld [vmem:[%s220 + $0x30] sm:$0xff]
      %v235 = vld [vmem:[%s220 + $0x38] sm:$0xff]
      %v236 = vld [vmem:[%s220 + $0x40] sm:$0xff]
      %v237 = vld [vmem:[%s220 + $0x48] sm:$0xff]
      %v238 = vld [vmem:[%s220 + $0x50] sm:$0xff]
      %v239 = vld [vmem:[%s220 + $0x58] sm:$0xff]
      %v240 = vld [vmem:[%s220 + $0x60] sm:$0xff]
      %v241 = vld [vmem:[%s220 + $0x68] sm:$0xff]
      %v242 = vld [vmem:[%s220 + $0x70] sm:$0xff]
      %v243 = vld [vmem:[%s220 + $0x78] sm:$0xff]
      %v244 = vld [vmem:[%s220 + $0x80] sm:$0xff]
      %v245 = vld [vmem:[%s220 + $0x88] sm:$0xff]
      %v246 = vld [vmem:[%s220 + $0x90] sm:$0xff]
      %v247 = vld [vmem:[%s220 + $0x98] sm:$0xff]
      %v248 = vld [vmem:[%s220 + $0xa0] sm:$0xff]
      %v249 = vld [vmem:[%s220 + $0xa8] sm:$0xff]
      %v250 = vld [vmem:[%s220 + $0xb0] sm:$0xff]
      %v251 = vld [vmem:[%s220 + $0xb8] sm:$0xff]
      %v252 = vld [vmem:[%s220 + $0xc0] sm:$0xff]
      %v253 = vld [vmem:[%s220 + $0xc8] sm:$0xff]
      %v254 = vld [vmem:[%s220 + $0xd0] sm:$0xff]
      %v255 = vld [vmem:[%s220 + $0xd8] sm:$0xff]
      %v256 = vld [vmem:[%s220 + $0xe0] sm:$0xff]
      %v257 = vld [vmem:[%s220 + $0xe8] sm:$0xff]
      %v258 = vld [vmem:[%s220 + $0xf0] sm:$0xff]
      %v259 = vld [vmem:[%s220 + $0xf8] sm:$0xff]
      %v260 = vld [vmem:[%s220 + $0x100] sm:$0xff]
      %v261 = vld [vmem:[%s220 + $0x108] sm:$0xff]
      %v262 = vld [vmem:[%s220 + $0x110] sm:$0xff]
      %v263 = vld [vmem:[%s220 + $0x118] sm:$0xff]
      %v264 = vld [vmem:[%s220 + $0x120] sm:$0xff]
      %v265 = vld [vmem:[%s220 + $0x128] sm:$0xff]
      %v266 = vld [vmem:[%s220 + $0x130] sm:$0xff]
      %v267 = vld [vmem:[%s220 + $0x138] sm:$0xff]
      %v268 = vld [vmem:[%s220 + $0x140] sm:$0xff]
      %v269 = vld [vmem:[%s220 + $0x148] sm:$0xff]
      %v270 = vld [vmem:[%s220 + $0x150] sm:$0xff]
      %v271 = vld [vmem:[%s220 + $0x158] sm:$0xff]
      %v272 = vld [vmem:[%s220 + $0x160] sm:$0xff]
      %v273 = vld [vmem:[%s220 + $0x168] sm:$0xff]
      %v274 = vld [vmem:[%s220 + $0x170] sm:$0xff]
      %v275 = vld [vmem:[%s220 + $0x178] sm:$0xff]
      %v276 = vld [vmem:[%s220 + $0x180] sm:$0xff]
      %v277 = vld [vmem:[%s220 + $0x188] sm:$0xff]
      %v278 = vld [vmem:[%s220 + $0x190] sm:$0xff]
      %v279 = vld [vmem:[%s220 + $0x198] sm:$0xff]
      %v280 = vld [vmem:[%s220 + $0x1a0] sm:$0xff]
      %v281 = vld [vmem:[%s220 + $0x1a8] sm:$0xff]
      %v282 = vld [vmem:[%s220 + $0x1b0] sm:$0xff]
      %v283 = vld [vmem:[%s220 + $0x1b8] sm:$0xff]
      %v284 = vld [vmem:[%s220 + $0x1c0] sm:$0xff]
      %v285 = vld [vmem:[%s220 + $0x1c8] sm:$0xff]
      %v286 = vld [vmem:[%s220 + $0x1d0] sm:$0xff]
      %v287 = vld [vmem:[%s220 + $0x1d8] sm:$0xff]
      %v288 = vld [vmem:[%s220 + $0x1e0] sm:$0xff]
      %v289 = vld [vmem:[%s220 + $0x1e8] sm:$0xff]
      %v290 = vld [vmem:[%s220 + $0x1f0] sm:$0xff]
      %v291 = vld [vmem:[%s220 + $0x1f8] sm:$0xff]
      %v292 = vld [vmem:[%s2] sm:$0x1]
      %v293 = vld [vmem:[%s1] sm:$0xff]
      %v295 = vlaneseq
      %v296 = vshrl.u32 %v295, 7
      %v297 = vsub.s32 0, %v296
      %v298 = vrot.slane %v292, %v297
      %vm300 = vcmask 64512
      %v302 = vsel %vm300, %v228, 0
      %v305 = vsel %vm300, %v229, 0
      %v308 = vsel %vm300, %v230, 0
      %v311 = vsel %vm300, %v231, 0
      %v314 = vsel %vm300, %v232, 0
      %v317 = vsel %vm300, %v233, 0
      %v320 = vsel %vm300, %v234, 0
      %v323 = vsel %vm300, %v235, 0
      %v326 = vsel %vm300, %v236, 0
      %v329 = vsel %vm300, %v237, 0
      %v332 = vsel %vm300, %v238, 0
      %v335 = vsel %vm300, %v239, 0
      %v338 = vsel %vm300, %v240, 0
      %v341 = vsel %vm300, %v241, 0
      %v344 = vsel %vm300, %v242, 0
      %v347 = vsel %vm300, %v243, 0
      %v350 = vsel %vm300, %v244, 0
      %v353 = vsel %vm300, %v245, 0
      %v356 = vsel %vm300, %v246, 0
      %v359 = vsel %vm300, %v247, 0
      %v362 = vsel %vm300, %v248, 0
      %v365 = vsel %vm300, %v249, 0
      %v368 = vsel %vm300, %v250, 0
      %v371 = vsel %vm300, %v251, 0
      %v374 = vsel %vm300, %v252, 0
      %v377 = vsel %vm300, %v253, 0
      %v380 = vsel %vm300, %v254, 0
      %v383 = vsel %vm300, %v255, 0
      %v386 = vsel %vm300, %v256, 0
      %v389 = vsel %vm300, %v257, 0
      %v392 = vsel %vm300, %v258, 0
      %v395 = vsel %vm300, %v259, 0
      %v398 = vsel %vm300, %v260, 0
      %v401 = vsel %vm300, %v261, 0
      %v404 = vsel %vm300, %v262, 0
      %v407 = vsel %vm300, %v263, 0
      %v410 = vsel %vm300, %v264, 0
      %v413 = vsel %vm300, %v265, 0
      %v416 = vsel %vm300, %v266, 0
      %v419 = vsel %vm300, %v267, 0
      %v422 = vsel %vm300, %v268, 0
      %v425 = vsel %vm300, %v269, 0
      %v428 = vsel %vm300, %v270, 0
      %v431 = vsel %vm300, %v271, 0
      %v434 = vsel %vm300, %v272, 0
      %v437 = vsel %vm300, %v273, 0
      %v440 = vsel %vm300, %v274, 0
      %v443 = vsel %vm300, %v275, 0
      %v446 = vsel %vm300, %v276, 0
      %v449 = vsel %vm300, %v277, 0
      %v452 = vsel %vm300, %v278, 0
      %v455 = vsel %vm300, %v279, 0
      %v458 = vsel %vm300, %v280, 0
      %v461 = vsel %vm300, %v281, 0
      %v464 = vsel %vm300, %v282, 0
      %v467 = vsel %vm300, %v283, 0
      %v470 = vsel %vm300, %v284, 0
      %v473 = vsel %vm300, %v285, 0
      %v476 = vsel %vm300, %v286, 0
      %v479 = vsel %vm300, %v287, 0
      %v482 = vsel %vm300, %v288, 0
      %v485 = vsel %vm300, %v289, 0
      %v488 = vsel %vm300, %v290, 0
      %v491 = vsel %vm300, %v291, 0
      %493 = vmatprep.subr.mxu0 0.0
      %494 = vmatpush1.msra.mxu0 %v293
      %495 = vmatprep.subr.mxu0 0.0
      %496 = vmatpush1.msra.mxu0 0.0
      %497 = vmatprep.subr.mxu0 0.0
      %498 = vmatpush1.msra.mxu0 0.0
      %499 = vmatprep.subr.mxu0 0.0
      %500 = vmatpush1.msra.mxu0 0.0
      %501 = vmatprep.subr.mxu0 0.0
      %502 = vmatpush1.msra.mxu0 0.0
      %503 = vmatprep.subr.mxu0 0.0
      %504 = vmatpush1.msra.mxu0 0.0
      %505 = vmatprep.subr.mxu0 0.0
      %506 = vmatpush1.msra.mxu0 0.0
      %507 = vmatprep.subr.mxu0 0.0
      %508 = vmatpush1.msra.mxu0 0.0
      %509 = vmatprep.subr.mxu0 0.0
      %510 = vmatpush1.msra.mxu0 0.0
      %511 = vmatprep.subr.mxu0 0.0
      %512 = vmatpush1.msra.mxu0 0.0
      %513 = vmatprep.subr.mxu0 0.0
      %514 = vmatpush1.msra.mxu0 0.0
      %515 = vmatprep.subr.mxu0 0.0
      %516 = vmatpush1.msra.mxu0 0.0
      %517 = vmatprep.subr.mxu0 0.0
      %518 = vmatpush1.msra.mxu0 0.0
      %519 = vmatprep.subr.mxu0 0.0
      %520 = vmatpush1.msra.mxu0 0.0
      %521 = vmatprep.subr.mxu0 0.0
      %522 = vmatpush1.msra.mxu0 0.0
      %523 = vmatprep.subr.mxu0 0.0
      %524 = vmatpush1.msra.mxu0 0.0
      %525 = vmatprep.subr.mxu0 0.0
      %526 = vmatpush1.msra.mxu0 0.0
      %527 = vmatprep.subr.mxu0 0.0
      %528 = vmatpush1.msra.mxu0 0.0
      %529 = vmatprep.subr.mxu0 0.0
      %530 = vmatpush1.msra.mxu0 0.0
      %531 = vmatprep.subr.mxu0 0.0
      %532 = vmatpush1.msra.mxu0 0.0
      %533 = vmatprep.subr.mxu0 0.0
      %534 = vmatpush1.msra.mxu0 0.0
      %535 = vmatprep.subr.mxu0 0.0
      %536 = vmatpush1.msra.mxu0 0.0
      %537 = vmatprep.subr.mxu0 0.0
      %538 = vmatpush1.msra.mxu0 0.0
      %539 = vmatprep.subr.mxu0 0.0
      %540 = vmatpush1.msra.mxu0 0.0
      %541 = vmatprep.subr.mxu0 0.0
      %542 = vmatpush1.msra.mxu0 0.0
      %543 = vmatprep.subr.mxu0 0.0
      %544 = vmatpush1.msra.mxu0 0.0
      %545 = vmatprep.subr.mxu0 0.0
      %546 = vmatpush1.msra.mxu0 0.0
      %547 = vmatprep.subr.mxu0 0.0
      %548 = vmatpush1.msra.mxu0 0.0
      %549 = vmatprep.subr.mxu0 0.0
      %550 = vmatpush1.msra.mxu0 0.0
      %551 = vmatprep.subr.mxu0 0.0
      %552 = vmatpush1.msra.mxu0 0.0
      %553 = vmatprep.subr.mxu0 0.0
      %554 = vmatpush1.msra.mxu0 0.0
      %555 = vmatprep.subr.mxu0 0.0
      %556 = vmatpush1.msra.mxu0 0.0
      %557 = vmatprep.mubr.f32.mxu0 0.0
      %558 = vmatmul.mubr.f32.gmra.mrb[0].mxu0 %v302
      %v559 = vpop.f32.mrb[0].mxu0
      %v560 = vadd.f32 %v298, %v559
      %v561 = vpop.f32.mrb[0].mxu0
      %562 = vmatprep.mubr.f32.mxu0 0.0
      %563 = vmatmul.mubr.f32.gmra.mrb[0].mxu0 %v305
      %v564 = vpop.f32.mrb[0].mxu0
      %v565 = vadd.f32 %v298, %v564
      %v566 = vpop.f32.mrb[0].mxu0
      %567 = vmatprep.mubr.f32.mxu0 0.0
      %568 = vmatmul.mubr.f32.gmra.mrb[0].mxu0 %v308
      %v569 = vpop.f32.mrb[0].mxu0
      %v570 = vadd.f32 %v298, %v569
      %v571 = vpop.f32.mrb[0].mxu0
      %572 = vmatprep.mubr.f32.mxu0 0.0
      %573 = vmatmul.mubr.f32.gmra.mrb[0].mxu0 %v311
      %v574 = vpop.f32.mrb[0].mxu0
      %v575 = vadd.f32 %v298, %v574
      %v576 = vpop.f32.mrb[0].mxu0
      %577 = vmatprep.mubr.f32.mxu0 0.0
      %578 = vmatmul.mubr.f32.gmra.mrb[0].mxu0 %v314
      %v579 = vpop.f32.mrb[0].mxu0
      %v580 = vadd.f32 %v298, %v579
      %v581 = vpop.f32.mrb[0].mxu0
      %582 = vmatprep.mubr.f32.mxu0 0.0
      %583 = vmatmul.mubr.f32.gmra.mrb[0].mxu0 %v317
      %v584 = vpop.f32.mrb[0].mxu0
      %v585 = vadd.f32 %v298, %v584
      %v586 = vpop.f32.mrb[0].mxu0
      %587 = vmatprep.mubr.f32.mxu0 0.0
      %588 = vmatmul.mubr.f32.gmra.mrb[0].mxu0 %v320
      %v589 = vpop.f32.mrb[0].mxu0
      %v590 = vadd.f32 %v298, %v589
      %v591 = vpop.f32.mrb[0].mxu0
      %592 = vmatprep.mubr.f32.mxu0 0.0
      %593 = vmatmul.mubr.f32.gmra.mrb[0].mxu0 %v323
      %v594 = vpop.f32.mrb[0].mxu0
      %v595 = vadd.f32 %v298, %v594
      %v596 = vpop.f32.mrb[0].mxu0
      %597 = vmatprep.mubr.f32.mxu0 0.0
      %598 = vmatmul.mubr.f32.gmra.mrb[0].mxu0 %v326
      %v599 = vpop.f32.mrb[0].mxu0
      %v600 = vadd.f32 %v298, %v599
      %v601 = vpop.f32.mrb[0].mxu0
      %602 = vmatprep.mubr.f32.mxu0 0.0
      %603 = vmatmul.mubr.f32.gmra.mrb[0].mxu0 %v329
      %v604 = vpop.f32.mrb[0].mxu0
      %v605 = vadd.f32 %v298, %v604
      %v606 = vpop.f32.mrb[0].mxu0
      %607 = vmatprep.mubr.f32.mxu0 0.0
      %608 = vmatmul.mubr.f32.gmra.mrb[0].mxu0 %v332
      %v609 = vpop.f32.mrb[0].mxu0
      %v610 = vadd.f32 %v298, %v609
      %v611 = vpop.f32.mrb[0].mxu0
      %612 = vmatprep.mubr.f32.mxu0 0.0
      %613 = vmatmul.mubr.f32.gmra.mrb[0].mxu0 %v335
      %v614 = vpop.f32.mrb[0].mxu0
      %v615 = vadd.f32 %v298, %v614
      %v616 = vpop.f32.mrb[0].mxu0
      %617 = vmatprep.mubr.f32.mxu0 0.0
      %618 = vmatmul.mubr.f32.gmra.mrb[0].mxu0 %v338
      %v619 = vpop.f32.mrb[0].mxu0
      %v620 = vadd.f32 %v298, %v619
      %v621 = vpop.f32.mrb[0].mxu0
      %622 = vmatprep.mubr.f32.mxu0 0.0
      %623 = vmatmul.mubr.f32.gmra.mrb[0].mxu0 %v341
      %v624 = vpop.f32.mrb[0].mxu0
      %v625 = vadd.f32 %v298, %v624
      %v626 = vpop.f32.mrb[0].mxu0
      %627 = vmatprep.mubr.f32.mxu0 0.0
      %628 = vmatmul.mubr.f32.gmra.mrb[0].mxu0 %v344
      %v629 = vpop.f32.mrb[0].mxu0
      %v630 = vadd.f32 %v298, %v629
      %v631 = vpop.f32.mrb[0].mxu0
      %632 = vmatprep.mubr.f32.mxu0 0.0
      %633 = vmatmul.mubr.f32.gmra.mrb[0].mxu0 %v347
      %v634 = vpop.f32.mrb[0].mxu0
      %v635 = vadd.f32 %v298, %v634
      %v636 = vpop.f32.mrb[0].mxu0
      %637 = vmatprep.mubr.f32.mxu0 0.0
      %638 = vmatmul.mubr.f32.gmra.mrb[0].mxu0 %v350
      %v639 = vpop.f32.mrb[0].mxu0
      %v640 = vadd.f32 %v298, %v639
      %v641 = vpop.f32.mrb[0].mxu0
      %642 = vmatprep.mubr.f32.mxu0 0.0
      %643 = vmatmul.mubr.f32.gmra.mrb[0].mxu0 %v353
      %v644 = vpop.f32.mrb[0].mxu0
      %v645 = vadd.f32 %v298, %v644
      %v646 = vpop.f32.mrb[0].mxu0
      %647 = vmatprep.mubr.f32.mxu0 0.0
      %648 = vmatmul.mubr.f32.gmra.mrb[0].mxu0 %v356
      %v649 = vpop.f32.mrb[0].mxu0
      %v650 = vadd.f32 %v298, %v649
      %v651 = vpop.f32.mrb[0].mxu0
      %652 = vmatprep.mubr.f32.mxu0 0.0
      %653 = vmatmul.mubr.f32.gmra.mrb[0].mxu0 %v359
      %v654 = vpop.f32.mrb[0].mxu0
      %v655 = vadd.f32 %v298, %v654
      %v656 = vpop.f32.mrb[0].mxu0
      %657 = vmatprep.mubr.f32.mxu0 0.0
      %658 = vmatmul.mubr.f32.gmra.mrb[0].mxu0 %v362
      %v659 = vpop.f32.mrb[0].mxu0
      %v660 = vadd.f32 %v298, %v659
      %v661 = vpop.f32.mrb[0].mxu0
      %662 = vmatprep.mubr.f32.mxu0 0.0
      %663 = vmatmul.mubr.f32.gmra.mrb[0].mxu0 %v365
      %v664 = vpop.f32.mrb[0].mxu0
      %v665 = vadd.f32 %v298, %v664
      %v666 = vpop.f32.mrb[0].mxu0
      %667 = vmatprep.mubr.f32.mxu0 0.0
      %668 = vmatmul.mubr.f32.gmra.mrb[0].mxu0 %v368
      %v669 = vpop.f32.mrb[0].mxu0
      %v670 = vadd.f32 %v298, %v669
      %v671 = vpop.f32.mrb[0].mxu0
      %672 = vmatprep.mubr.f32.mxu0 0.0
      %673 = vmatmul.mubr.f32.gmra.mrb[0].mxu0 %v371
      %v674 = vpop.f32.mrb[0].mxu0
      %v675 = vadd.f32 %v298, %v674
      %v676 = vpop.f32.mrb[0].mxu0
      %677 = vmatprep.mubr.f32.mxu0 0.0
      %678 = vmatmul.mubr.f32.gmra.mrb[0].mxu0 %v374
      %v679 = vpop.f32.mrb[0].mxu0
      %v680 = vadd.f32 %v298, %v679
      %v681 = vpop.f32.mrb[0].mxu0
      %682 = vmatprep.mubr.f32.mxu0 0.0
      %683 = vmatmul.mubr.f32.gmra.mrb[0].mxu0 %v377
      %v684 = vpop.f32.mrb[0].mxu0
      %v685 = vadd.f32 %v298, %v684
      %v686 = vpop.f32.mrb[0].mxu0
      %687 = vmatprep.mubr.f32.mxu0 0.0
      %688 = vmatmul.mubr.f32.gmra.mrb[0].mxu0 %v380
      %v689 = vpop.f32.mrb[0].mxu0
      %v690 = vadd.f32 %v298, %v689
      %v691 = vpop.f32.mrb[0].mxu0
      %692 = vmatprep.mubr.f32.mxu0 0.0
      %693 = vmatmul.mubr.f32.gmra.mrb[0].mxu0 %v383
      %v694 = vpop.f32.mrb[0].mxu0
      %v695 = vadd.f32 %v298, %v694
      %v696 = vpop.f32.mrb[0].mxu0
      %697 = vmatprep.mubr.f32.mxu0 0.0
      %698 = vmatmul.mubr.f32.gmra.mrb[0].mxu0 %v386
      %v699 = vpop.f32.mrb[0].mxu0
      %v700 = vadd.f32 %v298, %v699
      %v701 = vpop.f32.mrb[0].mxu0
      %702 = vmatprep.mubr.f32.mxu0 0.0
      %703 = vmatmul.mubr.f32.gmra.mrb[0].mxu0 %v389
      %v704 = vpop.f32.mrb[0].mxu0
      %v705 = vadd.f32 %v298, %v704
      %v706 = vpop.f32.mrb[0].mxu0
      %707 = vmatprep.mubr.f32.mxu0 0.0
      %708 = vmatmul.mubr.f32.gmra.mrb[0].mxu0 %v392
      %v709 = vpop.f32.mrb[0].mxu0
      %v710 = vadd.f32 %v298, %v709
      %v711 = vpop.f32.mrb[0].mxu0
      %712 = vmatprep.mubr.f32.mxu0 0.0
      %713 = vmatmul.mubr.f32.gmra.mrb[0].mxu0 %v395
      %v714 = vpop.f32.mrb[0].mxu0
      %v715 = vadd.f32 %v298, %v714
      %v716 = vpop.f32.mrb[0].mxu0
      %717 = vmatprep.mubr.f32.mxu0 0.0
      %718 = vmatmul.mubr.f32.gmra.mrb[0].mxu0 %v398
      %v719 = vpop.f32.mrb[0].mxu0
      %v720 = vadd.f32 %v298, %v719
      %v721 = vpop.f32.mrb[0].mxu0
      %722 = vmatprep.mubr.f32.mxu0 0.0
      %723 = vmatmul.mubr.f32.gmra.mrb[0].mxu0 %v401
      %v724 = vpop.f32.mrb[0].mxu0
      %v725 = vadd.f32 %v298, %v724
      %v726 = vpop.f32.mrb[0].mxu0
      %727 = vmatprep.mubr.f32.mxu0 0.0
      %728 = vmatmul.mubr.f32.gmra.mrb[0].mxu0 %v404
      %v729 = vpop.f32.mrb[0].mxu0
      %v730 = vadd.f32 %v298, %v729
      %v731 = vpop.f32.mrb[0].mxu0
      %732 = vmatprep.mubr.f32.mxu0 0.0
      %733 = vmatmul.mubr.f32.gmra.mrb[0].mxu0 %v407
      %v734 = vpop.f32.mrb[0].mxu0
      %v735 = vadd.f32 %v298, %v734
      %v736 = vpop.f32.mrb[0].mxu0
      %737 = vmatprep.mubr.f32.mxu0 0.0
      %738 = vmatmul.mubr.f32.gmra.mrb[0].mxu0 %v410
      %v739 = vpop.f32.mrb[0].mxu0
      %v740 = vadd.f32 %v298, %v739
      %v741 = vpop.f32.mrb[0].mxu0
      %742 = vmatprep.mubr.f32.mxu0 0.0
      %743 = vmatmul.mubr.f32.gmra.mrb[0].mxu0 %v413
      %v744 = vpop.f32.mrb[0].mxu0
      %v745 = vadd.f32 %v298, %v744
      %v746 = vpop.f32.mrb[0].mxu0
      %747 = vmatprep.mubr.f32.mxu0 0.0
      %748 = vmatmul.mubr.f32.gmra.mrb[0].mxu0 %v416
      %v749 = vpop.f32.mrb[0].mxu0
      %v750 = vadd.f32 %v298, %v749
      %v751 = vpop.f32.mrb[0].mxu0
      %752 = vmatprep.mubr.f32.mxu0 0.0
      %753 = vmatmul.mubr.f32.gmra.mrb[0].mxu0 %v419
      %v754 = vpop.f32.mrb[0].mxu0
      %v755 = vadd.f32 %v298, %v754
      %v756 = vpop.f32.mrb[0].mxu0
      %757 = vmatprep.mubr.f32.mxu0 0.0
      %758 = vmatmul.mubr.f32.gmra.mrb[0].mxu0 %v422
      %v759 = vpop.f32.mrb[0].mxu0
      %v760 = vadd.f32 %v298, %v759
      %v761 = vpop.f32.mrb[0].mxu0
      %762 = vmatprep.mubr.f32.mxu0 0.0
      %763 = vmatmul.mubr.f32.gmra.mrb[0].mxu0 %v425
      %v764 = vpop.f32.mrb[0].mxu0
      %v765 = vadd.f32 %v298, %v764
      %v766 = vpop.f32.mrb[0].mxu0
      %767 = vmatprep.mubr.f32.mxu0 0.0
      %768 = vmatmul.mubr.f32.gmra.mrb[0].mxu0 %v428
      %v769 = vpop.f32.mrb[0].mxu0
      %v770 = vadd.f32 %v298, %v769
      %v771 = vpop.f32.mrb[0].mxu0
      %772 = vmatprep.mubr.f32.mxu0 0.0
      %773 = vmatmul.mubr.f32.gmra.mrb[0].mxu0 %v431
      %v774 = vpop.f32.mrb[0].mxu0
      %v775 = vadd.f32 %v298, %v774
      %v776 = vpop.f32.mrb[0].mxu0
      %777 = vmatprep.mubr.f32.mxu0 0.0
      %778 = vmatmul.mubr.f32.gmra.mrb[0].mxu0 %v434
      %v779 = vpop.f32.mrb[0].mxu0
      %v780 = vadd.f32 %v298, %v779
      %v781 = vpop.f32.mrb[0].mxu0
      %782 = vmatprep.mubr.f32.mxu0 0.0
      %783 = vmatmul.mubr.f32.gmra.mrb[0].mxu0 %v437
      %v784 = vpop.f32.mrb[0].mxu0
      %v785 = vadd.f32 %v298, %v784
      %v786 = vpop.f32.mrb[0].mxu0
      %787 = vmatprep.mubr.f32.mxu0 0.0
      %788 = vmatmul.mubr.f32.gmra.mrb[0].mxu0 %v440
      %v789 = vpop.f32.mrb[0].mxu0
      %v790 = vadd.f32 %v298, %v789
      %v791 = vpop.f32.mrb[0].mxu0
      %792 = vmatprep.mubr.f32.mxu0 0.0
      %793 = vmatmul.mubr.f32.gmra.mrb[0].mxu0 %v443
      %v794 = vpop.f32.mrb[0].mxu0
      %v795 = vadd.f32 %v298, %v794
      %v796 = vpop.f32.mrb[0].mxu0
      %797 = vmatprep.mubr.f32.mxu0 0.0
      %798 = vmatmul.mubr.f32.gmra.mrb[0].mxu0 %v446
      %v799 = vpop.f32.mrb[0].mxu0
      %v800 = vadd.f32 %v298, %v799
      %v801 = vpop.f32.mrb[0].mxu0
      %802 = vmatprep.mubr.f32.mxu0 0.0
      %803 = vmatmul.mubr.f32.gmra.mrb[0].mxu0 %v449
      %v804 = vpop.f32.mrb[0].mxu0
      %v805 = vadd.f32 %v298, %v804
      %v806 = vpop.f32.mrb[0].mxu0
      %807 = vmatprep.mubr.f32.mxu0 0.0
      %808 = vmatmul.mubr.f32.gmra.mrb[0].mxu0 %v452
      %v809 = vpop.f32.mrb[0].mxu0
      %v810 = vadd.f32 %v298, %v809
      %v811 = vpop.f32.mrb[0].mxu0
      %812 = vmatprep.mubr.f32.mxu0 0.0
      %813 = vmatmul.mubr.f32.gmra.mrb[0].mxu0 %v455
      %v814 = vpop.f32.mrb[0].mxu0
      %v815 = vadd.f32 %v298, %v814
      %v816 = vpop.f32.mrb[0].mxu0
      %817 = vmatprep.mubr.f32.mxu0 0.0
      %818 = vmatmul.mubr.f32.gmra.mrb[0].mxu0 %v458
      %v819 = vpop.f32.mrb[0].mxu0
      %v820 = vadd.f32 %v298, %v819
      %v821 = vpop.f32.mrb[0].mxu0
      %822 = vmatprep.mubr.f32.mxu0 0.0
      %823 = vmatmul.mubr.f32.gmra.mrb[0].mxu0 %v461
      %v824 = vpop.f32.mrb[0].mxu0
      %v825 = vadd.f32 %v298, %v824
      %v826 = vpop.f32.mrb[0].mxu0
      %827 = vmatprep.mubr.f32.mxu0 0.0
      %828 = vmatmul.mubr.f32.gmra.mrb[0].mxu0 %v464
      %v829 = vpop.f32.mrb[0].mxu0
      %v830 = vadd.f32 %v298, %v829
      %v831 = vpop.f32.mrb[0].mxu0
      %832 = vmatprep.mubr.f32.mxu0 0.0
      %833 = vmatmul.mubr.f32.gmra.mrb[0].mxu0 %v467
      %v834 = vpop.f32.mrb[0].mxu0
      %v835 = vadd.f32 %v298, %v834
      %v836 = vpop.f32.mrb[0].mxu0
      %837 = vmatprep.mubr.f32.mxu0 0.0
      %838 = vmatmul.mubr.f32.gmra.mrb[0].mxu0 %v470
      %v839 = vpop.f32.mrb[0].mxu0
      %v840 = vadd.f32 %v298, %v839
      %v841 = vpop.f32.mrb[0].mxu0
      %842 = vmatprep.mubr.f32.mxu0 0.0
      %843 = vmatmul.mubr.f32.gmra.mrb[0].mxu0 %v473
      %v844 = vpop.f32.mrb[0].mxu0
      %v845 = vadd.f32 %v298, %v844
      %v846 = vpop.f32.mrb[0].mxu0
      %847 = vmatprep.mubr.f32.mxu0 0.0
      %848 = vmatmul.mubr.f32.gmra.mrb[0].mxu0 %v476
      %v849 = vpop.f32.mrb[0].mxu0
      %v850 = vadd.f32 %v298, %v849
      %v851 = vpop.f32.mrb[0].mxu0
      %852 = vmatprep.mubr.f32.mxu0 0.0
      %853 = vmatmul.mubr.f32.gmra.mrb[0].mxu0 %v479
      %v854 = vpop.f32.mrb[0].mxu0
      %v855 = vadd.f32 %v298, %v854
      %v856 = vpop.f32.mrb[0].mxu0
      %857 = vmatprep.mubr.f32.mxu0 0.0
      %858 = vmatmul.mubr.f32.gmra.mrb[0].mxu0 %v482
      %v859 = vpop.f32.mrb[0].mxu0
      %v860 = vadd.f32 %v298, %v859
      %v861 = vpop.f32.mrb[0].mxu0
      %862 = vmatprep.mubr.f32.mxu0 0.0
      %863 = vmatmul.mubr.f32.gmra.mrb[0].mxu0 %v485
      %v864 = vpop.f32.mrb[0].mxu0
      %v865 = vadd.f32 %v298, %v864
      %v866 = vpop.f32.mrb[0].mxu0
      %867 = vmatprep.mubr.f32.mxu0 0.0
      %868 = vmatmul.mubr.f32.gmra.mrb[0].mxu0 %v488
      %v869 = vpop.f32.mrb[0].mxu0
      %v870 = vadd.f32 %v298, %v869
      %v871 = vpop.f32.mrb[0].mxu0
      %872 = vmatprep.mubr.f32.mxu0 0.0
      %873 = vmatmul.mubr.f32.gmra.mrb[0].mxu0 %v491
      %v874 = vpop.f32.mrb[0].mxu0
      %v875 = vadd.f32 %v298, %v874
      %v876 = vpop.f32.mrb[0].mxu0
      %877 = vdwg.mxu0
      %v878 = vmul.f32 %v560, 0.5
      %v879 = vmul.f32 %v565, 0.5
      %v880 = vmul.f32 %v570, 0.5
      %v881 = vmul.f32 %v575, 0.5
      %v882 = vmul.f32 %v580, 0.5
      %v883 = vmul.f32 %v585, 0.5
      %v884 = vmul.f32 %v590, 0.5
      %v885 = vmul.f32 %v595, 0.5
      %v886 = vmul.f32 %v600, 0.5
      %v887 = vmul.f32 %v605, 0.5
      %v888 = vmul.f32 %v610, 0.5
      %v889 = vmul.f32 %v615, 0.5
      %v890 = vmul.f32 %v620, 0.5
      %v891 = vmul.f32 %v625, 0.5
      %v892 = vmul.f32 %v630, 0.5
      %v893 = vmul.f32 %v635, 0.5
      %v894 = vmul.f32 %v640, 0.5
      %v895 = vmul.f32 %v645, 0.5
      %v896 = vmul.f32 %v650, 0.5
      %v897 = vmul.f32 %v655, 0.5
      %v898 = vmul.f32 %v660, 0.5
      %v899 = vmul.f32 %v665, 0.5
      %v900 = vmul.f32 %v670, 0.5
      %v901 = vmul.f32 %v675, 0.5
      %v902 = vmul.f32 %v680, 0.5
      %v903 = vmul.f32 %v685, 0.5
      %v904 = vmul.f32 %v690, 0.5
      %v905 = vmul.f32 %v695, 0.5
      %v906 = vmul.f32 %v700, 0.5
      %v907 = vmul.f32 %v705, 0.5
      %v908 = vmul.f32 %v710, 0.5
      %v909 = vmul.f32 %v715, 0.5
      %v910 = vmul.f32 %v720, 0.5
      %v911 = vmul.f32 %v725, 0.5
      %v912 = vmul.f32 %v730, 0.5
      %v913 = vmul.f32 %v735, 0.5
      %v914 = vmul.f32 %v740, 0.5
      %v915 = vmul.f32 %v745, 0.5
      %v916 = vmul.f32 %v750, 0.5
      %v917 = vmul.f32 %v755, 0.5
      %v918 = vmul.f32 %v760, 0.5
      %v919 = vmul.f32 %v765, 0.5
      %v920 = vmul.f32 %v770, 0.5
      %v921 = vmul.f32 %v775, 0.5
      %v922 = vmul.f32 %v780, 0.5
      %v923 = vmul.f32 %v785, 0.5
      %v924 = vmul.f32 %v790, 0.5
      %v925 = vmul.f32 %v795, 0.5
      %v926 = vmul.f32 %v800, 0.5
      %v927 = vmul.f32 %v805, 0.5
      %v928 = vmul.f32 %v810, 0.5
      %v929 = vmul.f32 %v815, 0.5
      %v930 = vmul.f32 %v820, 0.5
      %v931 = vmul.f32 %v825, 0.5
      %v932 = vmul.f32 %v830, 0.5
      %v933 = vmul.f32 %v835, 0.5
      %v934 = vmul.f32 %v840, 0.5
      %v935 = vmul.f32 %v845, 0.5
      %v936 = vmul.f32 %v850, 0.5
      %v937 = vmul.f32 %v855, 0.5
      %v938 = vmul.f32 %v860, 0.5
      %v939 = vmul.f32 %v865, 0.5
      %v940 = vmul.f32 %v870, 0.5
      %v941 = vmul.f32 %v875, 0.5
      %v942 = vmul.f32 %v560, 0.044715
      %v943 = vmul.f32 %v565, 0.044715
      %v944 = vmul.f32 %v570, 0.044715
      %v945 = vmul.f32 %v575, 0.044715
      %v946 = vmul.f32 %v580, 0.044715
      %v947 = vmul.f32 %v585, 0.044715
      %v948 = vmul.f32 %v590, 0.044715
      %v949 = vmul.f32 %v595, 0.044715
      %v950 = vmul.f32 %v600, 0.044715
      %v951 = vmul.f32 %v605, 0.044715
      %v952 = vmul.f32 %v610, 0.044715
      %v953 = vmul.f32 %v615, 0.044715
      %v954 = vmul.f32 %v620, 0.044715
      %v955 = vmul.f32 %v625, 0.044715
      %v956 = vmul.f32 %v630, 0.044715
      %v957 = vmul.f32 %v635, 0.044715
      %v958 = vmul.f32 %v640, 0.044715
      %v959 = vmul.f32 %v645, 0.044715
      %v960 = vmul.f32 %v650, 0.044715
      %v961 = vmul.f32 %v655, 0.044715
      %v962 = vmul.f32 %v660, 0.044715
      %v963 = vmul.f32 %v665, 0.044715
      %v964 = vmul.f32 %v670, 0.044715
      %v965 = vmul.f32 %v675, 0.044715
      %v966 = vmul.f32 %v680, 0.044715
      %v967 = vmul.f32 %v685, 0.044715
      %v968 = vmul.f32 %v690, 0.044715
      %v969 = vmul.f32 %v695, 0.044715
      %v970 = vmul.f32 %v700, 0.044715
      %v971 = vmul.f32 %v705, 0.044715
      %v972 = vmul.f32 %v710, 0.044715
      %v973 = vmul.f32 %v715, 0.044715
      %v974 = vmul.f32 %v720, 0.044715
      %v975 = vmul.f32 %v725, 0.044715
      %v976 = vmul.f32 %v730, 0.044715
      %v977 = vmul.f32 %v735, 0.044715
      %v978 = vmul.f32 %v740, 0.044715
      %v979 = vmul.f32 %v745, 0.044715
      %v980 = vmul.f32 %v750, 0.044715
      %v981 = vmul.f32 %v755, 0.044715
      %v982 = vmul.f32 %v760, 0.044715
      %v983 = vmul.f32 %v765, 0.044715
      %v984 = vmul.f32 %v770, 0.044715
      %v985 = vmul.f32 %v775, 0.044715
      %v986 = vmul.f32 %v780, 0.044715
      %v987 = vmul.f32 %v785, 0.044715
      %v988 = vmul.f32 %v790, 0.044715
      %v989 = vmul.f32 %v795, 0.044715
      %v990 = vmul.f32 %v800, 0.044715
      %v991 = vmul.f32 %v805, 0.044715
      %v992 = vmul.f32 %v810, 0.044715
      %v993 = vmul.f32 %v815, 0.044715
      %v994 = vmul.f32 %v820, 0.044715
      %v995 = vmul.f32 %v825, 0.044715
      %v996 = vmul.f32 %v830, 0.044715
      %v997 = vmul.f32 %v835, 0.044715
      %v998 = vmul.f32 %v840, 0.044715
      %v999 = vmul.f32 %v845, 0.044715
      %v1000 = vmul.f32 %v850, 0.044715
      %v1001 = vmul.f32 %v855, 0.044715
      %v1002 = vmul.f32 %v860, 0.044715
      %v1003 = vmul.f32 %v865, 0.044715
      %v1004 = vmul.f32 %v870, 0.044715
      %v1005 = vmul.f32 %v875, 0.044715
      %v1006 = vmul.f32 %v942, %v560
      %v1007 = vmul.f32 %v943, %v565
      %v1008 = vmul.f32 %v944, %v570
      %v1009 = vmul.f32 %v945, %v575
      %v1010 = vmul.f32 %v946, %v580
      %v1011 = vmul.f32 %v947, %v585
      %v1012 = vmul.f32 %v948, %v590
      %v1013 = vmul.f32 %v949, %v595
      %v1014 = vmul.f32 %v950, %v600
      %v1015 = vmul.f32 %v951, %v605
      %v1016 = vmul.f32 %v952, %v610
      %v1017 = vmul.f32 %v953, %v615
      %v1018 = vmul.f32 %v954, %v620
      %v1019 = vmul.f32 %v955, %v625
      %v1020 = vmul.f32 %v956, %v630
      %v1021 = vmul.f32 %v957, %v635
      %v1022 = vmul.f32 %v958, %v640
      %v1023 = vmul.f32 %v959, %v645
      %v1024 = vmul.f32 %v960, %v650
      %v1025 = vmul.f32 %v961, %v655
      %v1026 = vmul.f32 %v962, %v660
      %v1027 = vmul.f32 %v963, %v665
      %v1028 = vmul.f32 %v964, %v670
      %v1029 = vmul.f32 %v965, %v675
      %v1030 = vmul.f32 %v966, %v680
      %v1031 = vmul.f32 %v967, %v685
      %v1032 = vmul.f32 %v968, %v690
      %v1033 = vmul.f32 %v969, %v695
      %v1034 = vmul.f32 %v970, %v700
      %v1035 = vmul.f32 %v971, %v705
      %v1036 = vmul.f32 %v972, %v710
      %v1037 = vmul.f32 %v973, %v715
      %v1038 = vmul.f32 %v974, %v720
      %v1039 = vmul.f32 %v975, %v725
      %v1040 = vmul.f32 %v976, %v730
      %v1041 = vmul.f32 %v977, %v735
      %v1042 = vmul.f32 %v978, %v740
      %v1043 = vmul.f32 %v979, %v745
      %v1044 = vmul.f32 %v980, %v750
      %v1045 = vmul.f32 %v981, %v755
      %v1046 = vmul.f32 %v982, %v760
      %v1047 = vmul.f32 %v983, %v765
      %v1048 = vmul.f32 %v984, %v770
      %v1049 = vmul.f32 %v985, %v775
      %v1050 = vmul.f32 %v986, %v780
      %v1051 = vmul.f32 %v987, %v785
      %v1052 = vmul.f32 %v988, %v790
      %v1053 = vmul.f32 %v989, %v795
      %v1054 = vmul.f32 %v990, %v800
      %v1055 = vmul.f32 %v991, %v805
      %v1056 = vmul.f32 %v992, %v810
      %v1057 = vmul.f32 %v993, %v815
      %v1058 = vmul.f32 %v994, %v820
      %v1059 = vmul.f32 %v995, %v825
      %v1060 = vmul.f32 %v996, %v830
      %v1061 = vmul.f32 %v997, %v835
      %v1062 = vmul.f32 %v998, %v840
      %v1063 = vmul.f32 %v999, %v845
      %v1064 = vmul.f32 %v1000, %v850
      %v1065 = vmul.f32 %v1001, %v855
      %v1066 = vmul.f32 %v1002, %v860
      %v1067 = vmul.f32 %v1003, %v865
      %v1068 = vmul.f32 %v1004, %v870
      %v1069 = vmul.f32 %v1005, %v875
      %v1070 = vmul.f32 %v1006, %v560
      %v1071 = vmul.f32 %v1007, %v565
      %v1072 = vmul.f32 %v1008, %v570
      %v1073 = vmul.f32 %v1009, %v575
      %v1074 = vmul.f32 %v1010, %v580
      %v1075 = vmul.f32 %v1011, %v585
      %v1076 = vmul.f32 %v1012, %v590
      %v1077 = vmul.f32 %v1013, %v595
      %v1078 = vmul.f32 %v1014, %v600
      %v1079 = vmul.f32 %v1015, %v605
      %v1080 = vmul.f32 %v1016, %v610
      %v1081 = vmul.f32 %v1017, %v615
      %v1082 = vmul.f32 %v1018, %v620
      %v1083 = vmul.f32 %v1019, %v625
      %v1084 = vmul.f32 %v1020, %v630
      %v1085 = vmul.f32 %v1021, %v635
      %v1086 = vmul.f32 %v1022, %v640
      %v1087 = vmul.f32 %v1023, %v645
      %v1088 = vmul.f32 %v1024, %v650
      %v1089 = vmul.f32 %v1025, %v655
      %v1090 = vmul.f32 %v1026, %v660
      %v1091 = vmul.f32 %v1027, %v665
      %v1092 = vmul.f32 %v1028, %v670
      %v1093 = vmul.f32 %v1029, %v675
      %v1094 = vmul.f32 %v1030, %v680
      %v1095 = vmul.f32 %v1031, %v685
      %v1096 = vmul.f32 %v1032, %v690
      %v1097 = vmul.f32 %v1033, %v695
      %v1098 = vmul.f32 %v1034, %v700
      %v1099 = vmul.f32 %v1035, %v705
      %v1100 = vmul.f32 %v1036, %v710
      %v1101 = vmul.f32 %v1037, %v715
      %v1102 = vmul.f32 %v1038, %v720
      %v1103 = vmul.f32 %v1039, %v725
      %v1104 = vmul.f32 %v1040, %v730
      %v1105 = vmul.f32 %v1041, %v735
      %v1106 = vmul.f32 %v1042, %v740
      %v1107 = vmul.f32 %v1043, %v745
      %v1108 = vmul.f32 %v1044, %v750
      %v1109 = vmul.f32 %v1045, %v755
      %v1110 = vmul.f32 %v1046, %v760
      %v1111 = vmul.f32 %v1047, %v765
      %v1112 = vmul.f32 %v1048, %v770
      %v1113 = vmul.f32 %v1049, %v775
      %v1114 = vmul.f32 %v1050, %v780
      %v1115 = vmul.f32 %v1051, %v785
      %v1116 = vmul.f32 %v1052, %v790
      %v1117 = vmul.f32 %v1053, %v795
      %v1118 = vmul.f32 %v1054, %v800
      %v1119 = vmul.f32 %v1055, %v805
      %v1120 = vmul.f32 %v1056, %v810
      %v1121 = vmul.f32 %v1057, %v815
      %v1122 = vmul.f32 %v1058, %v820
      %v1123 = vmul.f32 %v1059, %v825
      %v1124 = vmul.f32 %v1060, %v830
      %v1125 = vmul.f32 %v1061, %v835
      %v1126 = vmul.f32 %v1062, %v840
      %v1127 = vmul.f32 %v1063, %v845
      %v1128 = vmul.f32 %v1064, %v850
      %v1129 = vmul.f32 %v1065, %v855
      %v1130 = vmul.f32 %v1066, %v860
      %v1131 = vmul.f32 %v1067, %v865
      %v1132 = vmul.f32 %v1068, %v870
      %v1133 = vmul.f32 %v1069, %v875
      %v1134 = vadd.f32 %v560, %v1070
      %v1135 = vadd.f32 %v565, %v1071
      %v1136 = vadd.f32 %v570, %v1072
      %v1137 = vadd.f32 %v575, %v1073
      %v1138 = vadd.f32 %v580, %v1074
      %v1139 = vadd.f32 %v585, %v1075
      %v1140 = vadd.f32 %v590, %v1076
      %v1141 = vadd.f32 %v595, %v1077
      %v1142 = vadd.f32 %v600, %v1078
      %v1143 = vadd.f32 %v605, %v1079
      %v1144 = vadd.f32 %v610, %v1080
      %v1145 = vadd.f32 %v615, %v1081
      %v1146 = vadd.f32 %v620, %v1082
      %v1147 = vadd.f32 %v625, %v1083
      %v1148 = vadd.f32 %v630, %v1084
      %v1149 = vadd.f32 %v635, %v1085
      %v1150 = vadd.f32 %v640, %v1086
      %v1151 = vadd.f32 %v645, %v1087
      %v1152 = vadd.f32 %v650, %v1088
      %v1153 = vadd.f32 %v655, %v1089
      %v1154 = vadd.f32 %v660, %v1090
      %v1155 = vadd.f32 %v665, %v1091
      %v1156 = vadd.f32 %v670, %v1092
      %v1157 = vadd.f32 %v675, %v1093
      %v1158 = vadd.f32 %v680, %v1094
      %v1159 = vadd.f32 %v685, %v1095
      %v1160 = vadd.f32 %v690, %v1096
      %v1161 = vadd.f32 %v695, %v1097
      %v1162 = vadd.f32 %v700, %v1098
      %v1163 = vadd.f32 %v705, %v1099
      %v1164 = vadd.f32 %v710, %v1100
      %v1165 = vadd.f32 %v715, %v1101
      %v1166 = vadd.f32 %v720, %v1102
      %v1167 = vadd.f32 %v725, %v1103
      %v1168 = vadd.f32 %v730, %v1104
      %v1169 = vadd.f32 %v735, %v1105
      %v1170 = vadd.f32 %v740, %v1106
      %v1171 = vadd.f32 %v745, %v1107
      %v1172 = vadd.f32 %v750, %v1108
      %v1173 = vadd.f32 %v755, %v1109
      %v1174 = vadd.f32 %v760, %v1110
      %v1175 = vadd.f32 %v765, %v1111
      %v1176 = vadd.f32 %v770, %v1112
      %v1177 = vadd.f32 %v775, %v1113
      %v1178 = vadd.f32 %v780, %v1114
      %v1179 = vadd.f32 %v785, %v1115
      %v1180 = vadd.f32 %v790, %v1116
      %v1181 = vadd.f32 %v795, %v1117
      %v1182 = vadd.f32 %v800, %v1118
      %v1183 = vadd.f32 %v805, %v1119
      %v1184 = vadd.f32 %v810, %v1120
      %v1185 = vadd.f32 %v815, %v1121
      %v1186 = vadd.f32 %v820, %v1122
      %v1187 = vadd.f32 %v825, %v1123
      %v1188 = vadd.f32 %v830, %v1124
      %v1189 = vadd.f32 %v835, %v1125
      %v1190 = vadd.f32 %v840, %v1126
      %v1191 = vadd.f32 %v845, %v1127
      %v1192 = vadd.f32 %v850, %v1128
      %v1193 = vadd.f32 %v855, %v1129
      %v1194 = vadd.f32 %v860, %v1130
      %v1195 = vadd.f32 %v865, %v1131
      %v1196 = vadd.f32 %v870, %v1132
      %v1197 = vadd.f32 %v875, %v1133
      %v1198 = vmul.f32 %v1134, 0.7978846
      %v1199 = vmul.f32 %v1135, 0.7978846
      %v1200 = vmul.f32 %v1136, 0.7978846
      %v1201 = vmul.f32 %v1137, 0.7978846
      %v1202 = vmul.f32 %v1138, 0.7978846
      %v1203 = vmul.f32 %v1139, 0.7978846
      %v1204 = vmul.f32 %v1140, 0.7978846
      %v1205 = vmul.f32 %v1141, 0.7978846
      %v1206 = vmul.f32 %v1142, 0.7978846
      %v1207 = vmul.f32 %v1143, 0.7978846
      %v1208 = vmul.f32 %v1144, 0.7978846
      %v1209 = vmul.f32 %v1145, 0.7978846
      %v1210 = vmul.f32 %v1146, 0.7978846
      %v1211 = vmul.f32 %v1147, 0.7978846
      %v1212 = vmul.f32 %v1148, 0.7978846
      %v1213 = vmul.f32 %v1149, 0.7978846
      %v1214 = vmul.f32 %v1150, 0.7978846
      %v1215 = vmul.f32 %v1151, 0.7978846
      %v1216 = vmul.f32 %v1152, 0.7978846
      %v1217 = vmul.f32 %v1153, 0.7978846
      %v1218 = vmul.f32 %v1154, 0.7978846
      %v1219 = vmul.f32 %v1155, 0.7978846
      %v1220 = vmul.f32 %v1156, 0.7978846
      %v1221 = vmul.f32 %v1157, 0.7978846
      %v1222 = vmul.f32 %v1158, 0.7978846
      %v1223 = vmul.f32 %v1159, 0.7978846
      %v1224 = vmul.f32 %v1160, 0.7978846
      %v1225 = vmul.f32 %v1161, 0.7978846
      %v1226 = vmul.f32 %v1162, 0.7978846
      %v1227 = vmul.f32 %v1163, 0.7978846
      %v1228 = vmul.f32 %v1164, 0.7978846
      %v1229 = vmul.f32 %v1165, 0.7978846
      %v1230 = vmul.f32 %v1166, 0.7978846
      %v1231 = vmul.f32 %v1167, 0.7978846
      %v1232 = vmul.f32 %v1168, 0.7978846
      %v1233 = vmul.f32 %v1169, 0.7978846
      %v1234 = vmul.f32 %v1170, 0.7978846
      %v1235 = vmul.f32 %v1171, 0.7978846
      %v1236 = vmul.f32 %v1172, 0.7978846
      %v1237 = vmul.f32 %v1173, 0.7978846
      %v1238 = vmul.f32 %v1174, 0.7978846
      %v1239 = vmul.f32 %v1175, 0.7978846
      %v1240 = vmul.f32 %v1176, 0.7978846
      %v1241 = vmul.f32 %v1177, 0.7978846
      %v1242 = vmul.f32 %v1178, 0.7978846
      %v1243 = vmul.f32 %v1179, 0.7978846
      %v1244 = vmul.f32 %v1180, 0.7978846
      %v1245 = vmul.f32 %v1181, 0.7978846
      %v1246 = vmul.f32 %v1182, 0.7978846
      %v1247 = vmul.f32 %v1183, 0.7978846
      %v1248 = vmul.f32 %v1184, 0.7978846
      %v1249 = vmul.f32 %v1185, 0.7978846
      %v1250 = vmul.f32 %v1186, 0.7978846
      %v1251 = vmul.f32 %v1187, 0.7978846
      %v1252 = vmul.f32 %v1188, 0.7978846
      %v1253 = vmul.f32 %v1189, 0.7978846
      %v1254 = vmul.f32 %v1190, 0.7978846
      %v1255 = vmul.f32 %v1191, 0.7978846
      %v1256 = vmul.f32 %v1192, 0.7978846
      %v1257 = vmul.f32 %v1193, 0.7978846
      %v1258 = vmul.f32 %v1194, 0.7978846
      %v1259 = vmul.f32 %v1195, 0.7978846
      %v1260 = vmul.f32 %v1196, 0.7978846
      %v1261 = vmul.f32 %v1197, 0.7978846
      %v1262 = vtanh.pop %v1198
      %v1263 = vtanh.pop %v1199
      %v1264 = vtanh.pop %v1200
      %v1265 = vtanh.pop %v1201
      %v1266 = vtanh.pop %v1202
      %v1267 = vtanh.pop %v1203
      %v1268 = vtanh.pop %v1204
      %v1269 = vtanh.pop %v1205
      %v1270 = vtanh.pop %v1206
      %v1271 = vtanh.pop %v1207
      %v1272 = vtanh.pop %v1208
      %v1273 = vtanh.pop %v1209
      %v1274 = vtanh.pop %v1210
      %v1275 = vtanh.pop %v1211
      %v1276 = vtanh.pop %v1212
      %v1277 = vtanh.pop %v1213
      %v1278 = vtanh.pop %v1214
      %v1279 = vtanh.pop %v1215
      %v1280 = vtanh.pop %v1216
      %v1281 = vtanh.pop %v1217
      %v1282 = vtanh.pop %v1218
      %v1283 = vtanh.pop %v1219
      %v1284 = vtanh.pop %v1220
      %v1285 = vtanh.pop %v1221
      %v1286 = vtanh.pop %v1222
      %v1287 = vtanh.pop %v1223
      %v1288 = vtanh.pop %v1224
      %v1289 = vtanh.pop %v1225
      %v1290 = vtanh.pop %v1226
      %v1291 = vtanh.pop %v1227
      %v1292 = vtanh.pop %v1228
      %v1293 = vtanh.pop %v1229
      %v1294 = vtanh.pop %v1230
      %v1295 = vtanh.pop %v1231
      %v1296 = vtanh.pop %v1232
      %v1297 = vtanh.pop %v1233
      %v1298 = vtanh.pop %v1234
      %v1299 = vtanh.pop %v1235
      %v1300 = vtanh.pop %v1236
      %v1301 = vtanh.pop %v1237
      %v1302 = vtanh.pop %v1238
      %v1303 = vtanh.pop %v1239
      %v1304 = vtanh.pop %v1240
      %v1305 = vtanh.pop %v1241
      %v1306 = vtanh.pop %v1242
      %v1307 = vtanh.pop %v1243
      %v1308 = vtanh.pop %v1244
      %v1309 = vtanh.pop %v1245
      %v1310 = vtanh.pop %v1246
      %v1311 = vtanh.pop %v1247
      %v1312 = vtanh.pop %v1248
      %v1313 = vtanh.pop %v1249
      %v1314 = vtanh.pop %v1250
      %v1315 = vtanh.pop %v1251
      %v1316 = vtanh.pop %v1252
      %v1317 = vtanh.pop %v1253
      %v1318 = vtanh.pop %v1254
      %v1319 = vtanh.pop %v1255
      %v1320 = vtanh.pop %v1256
      %v1321 = vtanh.pop %v1257
      %v1322 = vtanh.pop %v1258
      %v1323 = vtanh.pop %v1259
      %v1324 = vtanh.pop %v1260
      %v1325 = vtanh.pop %v1261
      %v1326 = vadd.f32 %v1262, 1.0
      %v1327 = vadd.f32 %v1263, 1.0
      %v1328 = vadd.f32 %v1264, 1.0
      %v1329 = vadd.f32 %v1265, 1.0
      %v1330 = vadd.f32 %v1266, 1.0
      %v1331 = vadd.f32 %v1267, 1.0
      %v1332 = vadd.f32 %v1268, 1.0
      %v1333 = vadd.f32 %v1269, 1.0
      %v1334 = vadd.f32 %v1270, 1.0
      %v1335 = vadd.f32 %v1271, 1.0
      %v1336 = vadd.f32 %v1272, 1.0
      %v1337 = vadd.f32 %v1273, 1.0
      %v1338 = vadd.f32 %v1274, 1.0
      %v1339 = vadd.f32 %v1275, 1.0
      %v1340 = vadd.f32 %v1276, 1.0
      %v1341 = vadd.f32 %v1277, 1.0
      %v1342 = vadd.f32 %v1278, 1.0
      %v1343 = vadd.f32 %v1279, 1.0
      %v1344 = vadd.f32 %v1280, 1.0
      %v1345 = vadd.f32 %v1281, 1.0
      %v1346 = vadd.f32 %v1282, 1.0
      %v1347 = vadd.f32 %v1283, 1.0
      %v1348 = vadd.f32 %v1284, 1.0
      %v1349 = vadd.f32 %v1285, 1.0
      %v1350 = vadd.f32 %v1286, 1.0
      %v1351 = vadd.f32 %v1287, 1.0
      %v1352 = vadd.f32 %v1288, 1.0
      %v1353 = vadd.f32 %v1289, 1.0
      %v1354 = vadd.f32 %v1290, 1.0
      %v1355 = vadd.f32 %v1291, 1.0
      %v1356 = vadd.f32 %v1292, 1.0
      %v1357 = vadd.f32 %v1293, 1.0
      %v1358 = vadd.f32 %v1294, 1.0
      %v1359 = vadd.f32 %v1295, 1.0
      %v1360 = vadd.f32 %v1296, 1.0
      %v1361 = vadd.f32 %v1297, 1.0
      %v1362 = vadd.f32 %v1298, 1.0
      %v1363 = vadd.f32 %v1299, 1.0
      %v1364 = vadd.f32 %v1300, 1.0
      %v1365 = vadd.f32 %v1301, 1.0
      %v1366 = vadd.f32 %v1302, 1.0
      %v1367 = vadd.f32 %v1303, 1.0
      %v1368 = vadd.f32 %v1304, 1.0
      %v1369 = vadd.f32 %v1305, 1.0
      %v1370 = vadd.f32 %v1306, 1.0
      %v1371 = vadd.f32 %v1307, 1.0
      %v1372 = vadd.f32 %v1308, 1.0
      %v1373 = vadd.f32 %v1309, 1.0
      %v1374 = vadd.f32 %v1310, 1.0
      %v1375 = vadd.f32 %v1311, 1.0
      %v1376 = vadd.f32 %v1312, 1.0
      %v1377 = vadd.f32 %v1313, 1.0
      %v1378 = vadd.f32 %v1314, 1.0
      %v1379 = vadd.f32 %v1315, 1.0
      %v1380 = vadd.f32 %v1316, 1.0
      %v1381 = vadd.f32 %v1317, 1.0
      %v1382 = vadd.f32 %v1318, 1.0
      %v1383 = vadd.f32 %v1319, 1.0
      %v1384 = vadd.f32 %v1320, 1.0
      %v1385 = vadd.f32 %v1321, 1.0
      %v1386 = vadd.f32 %v1322, 1.0
      %v1387 = vadd.f32 %v1323, 1.0
      %v1388 = vadd.f32 %v1324, 1.0
      %v1389 = vadd.f32 %v1325, 1.0
      %v1390 = vmul.f32 %v878, %v1326
      %v1391 = vmul.f32 %v879, %v1327
      %v1392 = vmul.f32 %v880, %v1328
      %v1393 = vmul.f32 %v881, %v1329
      %v1394 = vmul.f32 %v882, %v1330
      %v1395 = vmul.f32 %v883, %v1331
      %v1396 = vmul.f32 %v884, %v1332
      %v1397 = vmul.f32 %v885, %v1333
      %v1398 = vmul.f32 %v886, %v1334
      %v1399 = vmul.f32 %v887, %v1335
      %v1400 = vmul.f32 %v888, %v1336
      %v1401 = vmul.f32 %v889, %v1337
      %v1402 = vmul.f32 %v890, %v1338
      %v1403 = vmul.f32 %v891, %v1339
      %v1404 = vmul.f32 %v892, %v1340
      %v1405 = vmul.f32 %v893, %v1341
      %v1406 = vmul.f32 %v894, %v1342
      %v1407 = vmul.f32 %v895, %v1343
      %v1408 = vmul.f32 %v896, %v1344
      %v1409 = vmul.f32 %v897, %v1345
      %v1410 = vmul.f32 %v898, %v1346
      %v1411 = vmul.f32 %v899, %v1347
      %v1412 = vmul.f32 %v900, %v1348
      %v1413 = vmul.f32 %v901, %v1349
      %v1414 = vmul.f32 %v902, %v1350
      %v1415 = vmul.f32 %v903, %v1351
      %v1416 = vmul.f32 %v904, %v1352
      %v1417 = vmul.f32 %v905, %v1353
      %v1418 = vmul.f32 %v906, %v1354
      %v1419 = vmul.f32 %v907, %v1355
      %v1420 = vmul.f32 %v908, %v1356
      %v1421 = vmul.f32 %v909, %v1357
      %v1422 = vmul.f32 %v910, %v1358
      %v1423 = vmul.f32 %v911, %v1359
      %v1424 = vmul.f32 %v912, %v1360
      %v1425 = vmul.f32 %v913, %v1361
      %v1426 = vmul.f32 %v914, %v1362
      %v1427 = vmul.f32 %v915, %v1363
      %v1428 = vmul.f32 %v916, %v1364
      %v1429 = vmul.f32 %v917, %v1365
      %v1430 = vmul.f32 %v918, %v1366
      %v1431 = vmul.f32 %v919, %v1367
      %v1432 = vmul.f32 %v920, %v1368
      %v1433 = vmul.f32 %v921, %v1369
      %v1434 = vmul.f32 %v922, %v1370
      %v1435 = vmul.f32 %v923, %v1371
      %v1436 = vmul.f32 %v924, %v1372
      %v1437 = vmul.f32 %v925, %v1373
      %v1438 = vmul.f32 %v926, %v1374
      %v1439 = vmul.f32 %v927, %v1375
      %v1440 = vmul.f32 %v928, %v1376
      %v1441 = vmul.f32 %v929, %v1377
      %v1442 = vmul.f32 %v930, %v1378
      %v1443 = vmul.f32 %v931, %v1379
      %v1444 = vmul.f32 %v932, %v1380
      %v1445 = vmul.f32 %v933, %v1381
      %v1446 = vmul.f32 %v934, %v1382
      %v1447 = vmul.f32 %v935, %v1383
      %v1448 = vmul.f32 %v936, %v1384
      %v1449 = vmul.f32 %v937, %v1385
      %v1450 = vmul.f32 %v938, %v1386
      %v1451 = vmul.f32 %v939, %v1387
      %v1452 = vmul.f32 %v940, %v1388
      %v1453 = vmul.f32 %v941, %v1389
      %vm1454 = vcmask 261120
      %1455 = vst.msk [vmem:[%s226] sm:$0xff] %vm1454, %v1390
      %1456 = vst.msk [vmem:[%s226 + $0x8] sm:$0xff] %vm1454, %v1391
      %1457 = vst.msk [vmem:[%s226 + $0x10] sm:$0xff] %vm1454, %v1392
      %1458 = vst.msk [vmem:[%s226 + $0x18] sm:$0xff] %vm1454, %v1393
      %1459 = vst.msk [vmem:[%s226 + $0x20] sm:$0xff] %vm1454, %v1394
      %1460 = vst.msk [vmem:[%s226 + $0x28] sm:$0xff] %vm1454, %v1395
      %1461 = vst.msk [vmem:[%s226 + $0x30] sm:$0xff] %vm1454, %v1396
      %1462 = vst.msk [vmem:[%s226 + $0x38] sm:$0xff] %vm1454, %v1397
      %1463 = vst.msk [vmem:[%s226 + $0x40] sm:$0xff] %vm1454, %v1398
      %1464 = vst.msk [vmem:[%s226 + $0x48] sm:$0xff] %vm1454, %v1399
      %1465 = vst.msk [vmem:[%s226 + $0x50] sm:$0xff] %vm1454, %v1400
      %1466 = vst.msk [vmem:[%s226 + $0x58] sm:$0xff] %vm1454, %v1401
      %1467 = vst.msk [vmem:[%s226 + $0x60] sm:$0xff] %vm1454, %v1402
      %1468 = vst.msk [vmem:[%s226 + $0x68] sm:$0xff] %vm1454, %v1403
      %1469 = vst.msk [vmem:[%s226 + $0x70] sm:$0xff] %vm1454, %v1404
      %1470 = vst.msk [vmem:[%s226 + $0x78] sm:$0xff] %vm1454, %v1405
      %1471 = vst.msk [vmem:[%s226 + $0x80] sm:$0xff] %vm1454, %v1406
      %1472 = vst.msk [vmem:[%s226 + $0x88] sm:$0xff] %vm1454, %v1407
      %1473 = vst.msk [vmem:[%s226 + $0x90] sm:$0xff] %vm1454, %v1408
      %1474 = vst.msk [vmem:[%s226 + $0x98] sm:$0xff] %vm1454, %v1409
      %1475 = vst.msk [vmem:[%s226 + $0xa0] sm:$0xff] %vm1454, %v1410
      %1476 = vst.msk [vmem:[%s226 + $0xa8] sm:$0xff] %vm1454, %v1411
      %1477 = vst.msk [vmem:[%s226 + $0xb0] sm:$0xff] %vm1454, %v1412
      %1478 = vst.msk [vmem:[%s226 + $0xb8] sm:$0xff] %vm1454, %v1413
      %1479 = vst.msk [vmem:[%s226 + $0xc0] sm:$0xff] %vm1454, %v1414
      %1480 = vst.msk [vmem:[%s226 + $0xc8] sm:$0xff] %vm1454, %v1415
      %1481 = vst.msk [vmem:[%s226 + $0xd0] sm:$0xff] %vm1454, %v1416
      %1482 = vst.msk [vmem:[%s226 + $0xd8] sm:$0xff] %vm1454, %v1417
      %1483 = vst.msk [vmem:[%s226 + $0xe0] sm:$0xff] %vm1454, %v1418
      %1484 = vst.msk [vmem:[%s226 + $0xe8] sm:$0xff] %vm1454, %v1419
      %1485 = vst.msk [vmem:[%s226 + $0xf0] sm:$0xff] %vm1454, %v1420
      %1486 = vst.msk [vmem:[%s226 + $0xf8] sm:$0xff] %vm1454, %v1421
      %1487 = vst.msk [vmem:[%s226 + $0x100] sm:$0xff] %vm1454, %v1422
      %1488 = vst.msk [vmem:[%s226 + $0x108] sm:$0xff] %vm1454, %v1423
      %1489 = vst.msk [vmem:[%s226 + $0x110] sm:$0xff] %vm1454, %v1424
      %1490 = vst.msk [vmem:[%s226 + $0x118] sm:$0xff] %vm1454, %v1425
      %1491 = vst.msk [vmem:[%s226 + $0x120] sm:$0xff] %vm1454, %v1426
      %1492 = vst.msk [vmem:[%s226 + $0x128] sm:$0xff] %vm1454, %v1427
      %1493 = vst.msk [vmem:[%s226 + $0x130] sm:$0xff] %vm1454, %v1428
      %1494 = vst.msk [vmem:[%s226 + $0x138] sm:$0xff] %vm1454, %v1429
      %1495 = vst.msk [vmem:[%s226 + $0x140] sm:$0xff] %vm1454, %v1430
      %1496 = vst.msk [vmem:[%s226 + $0x148] sm:$0xff] %vm1454, %v1431
      %1497 = vst.msk [vmem:[%s226 + $0x150] sm:$0xff] %vm1454, %v1432
      %1498 = vst.msk [vmem:[%s226 + $0x158] sm:$0xff] %vm1454, %v1433
      %1499 = vst.msk [vmem:[%s226 + $0x160] sm:$0xff] %vm1454, %v1434
      %1500 = vst.msk [vmem:[%s226 + $0x168] sm:$0xff] %vm1454, %v1435
      %1501 = vst.msk [vmem:[%s226 + $0x170] sm:$0xff] %vm1454, %v1436
      %1502 = vst.msk [vmem:[%s226 + $0x178] sm:$0xff] %vm1454, %v1437
      %1503 = vst.msk [vmem:[%s226 + $0x180] sm:$0xff] %vm1454, %v1438
      %1504 = vst.msk [vmem:[%s226 + $0x188] sm:$0xff] %vm1454, %v1439
      %1505 = vst.msk [vmem:[%s226 + $0x190] sm:$0xff] %vm1454, %v1440
      %1506 = vst.msk [vmem:[%s226 + $0x198] sm:$0xff] %vm1454, %v1441
      %1507 = vst.msk [vmem:[%s226 + $0x1a0] sm:$0xff] %vm1454, %v1442
      %1508 = vst.msk [vmem:[%s226 + $0x1a8] sm:$0xff] %vm1454, %v1443
      %1509 = vst.msk [vmem:[%s226 + $0x1b0] sm:$0xff] %vm1454, %v1444
      %1510 = vst.msk [vmem:[%s226 + $0x1b8] sm:$0xff] %vm1454, %v1445
      %1511 = vst.msk [vmem:[%s226 + $0x1c0] sm:$0xff] %vm1454, %v1446
      %1512 = vst.msk [vmem:[%s226 + $0x1c8] sm:$0xff] %vm1454, %v1447
      %1513 = vst.msk [vmem:[%s226 + $0x1d0] sm:$0xff] %vm1454, %v1448
      %1514 = vst.msk [vmem:[%s226 + $0x1d8] sm:$0xff] %vm1454, %v1449
      %1515 = vst.msk [vmem:[%s226 + $0x1e0] sm:$0xff] %vm1454, %v1450
      %1516 = vst.msk [vmem:[%s226 + $0x1e8] sm:$0xff] %vm1454, %v1451
      %1517 = vst.msk [vmem:[%s226 + $0x1f0] sm:$0xff] %vm1454, %v1452
      %1518 = vst.msk [vmem:[%s226 + $0x1f8] sm:$0xff] %vm1454, %v1453
      %s1519 = smul.u32 64, %s16
      %p1520 = scmp.lt.s32.totalorder %s1519, 127
      %s1521 = scalar_select %p1520, %s1519, 127
      %s1522 = smul.addr %s1521, 8
      %s1523 = scalar_lea.vmem %s5, %s1522
      // Predicated region
      $region41: #{mask_decoder_forward.7} parent=39 // pred_check
        %p1524 = pneg %p144
      $region42: #{mask_decoder_forward.7} parent=39 // pred_check_branch
        %1526 = sbr.rel (%p1524) target = $region44
      $region43: #{mask_decoder_forward.7} parent=39 // pred_region
        %s1527 = smul.u32 64, %s16
      $region44: #{mask_decoder_forward.7} parent=39 // pred_fallthru
        _
    $region40: #{mask_decoder_forward.7} parent=5 // pred_fallthru
      _
    %p1528 = scmp.le.s32.totalorder 2, %s11
    // Predicated region
    $region45: #{mask_decoder_forward.7} parent=5 // pred_check
      %p1529 = pneg %p1528
    $region46: #{mask_decoder_forward.7} parent=5 // pred_check_branch
      %1531 = sbr.rel (%p1529) target = $region48
    $region47: #{mask_decoder_forward.7} parent=5 // pred_region
      %s1532 = ssub.s32 %s11, 2
      // Predicated region
      $region49: #{mask_decoder_forward.7} parent=47 // pred_check
        %p1533 = pneg %p150
      $region50: #{mask_decoder_forward.7} parent=47 // pred_check_branch
        %1535 = sbr.rel (%p1533) target = $region52
      $region51: #{mask_decoder_forward.7} parent=47 // pred_region
        %s1536 = smul.u32 64, %s17
        %p1537 = scmp.lt.s32.totalorder %s1536, 127
        %s1538 = scalar_select %p1537, %s1536, 127
        %s1539 = smul.addr %s1538, 8
        %s1540 = scalar_lea.vmem %s5, %s1539
      $region52: #{mask_decoder_forward.7} parent=47 // pred_fallthru
        _
    $region48: #{mask_decoder_forward.7} parent=5 // pred_fallthru
      _
  $region6: #{mask_decoder_forward.7} parent=0 // loop_footer
    %s15 = sadd.s32 1, %s11
  $region7: #{mask_decoder_forward.7} parent=0 // loop_footer_branch
    %10 = sbr.rel target = $region3
  $region8: #{mask_decoder_forward.7} parent=0 // loop_exit
    _

// kernel: mask_decoder_forward.5
$region0: #{mask_decoder_forward.5}
  #allocation0 [shape = 'u32[]', space=smem, size = 0x4, offset = 0x4, fixed_abs, tag = 'smem constant byte address 0x4 - core index']
  #allocation1 [shape = 'u32[144,128]{1,0:T(1,128)}', space=vmem, size = 0x12000, scoped, tag = 'internal scratch']
  %s0 = inlined_call_operand.vmem [shape: f32[128,32], index: 0, kind: input, shape index: {}]
  %s1 = inlined_call_operand.vmem [shape: f32[4,32,16], index: 1, kind: input, shape index: {}]
  %s2 = inlined_call_operand.vmem [shape: f32[1,16], index: 2, kind: input, shape index: {}]
  %s3 = inlined_call_operand.vmem [shape: f32[1,16], index: 3, kind: input, shape index: {}]
  %s4 = inlined_call_operand.vmem [shape: f32[1,16], index: 4, kind: input, shape index: {}]
  %s5 = inlined_call_operand.vmem [shape: f32[2,128,16], index: 5, kind: output, shape index: {}]
  %s6 = sld [smem:[#allocation0]]
  $region30: #{mask_decoder_forward.5} parent=0
    _
  %s8 = ssub.s32 1, %s6
  %s9 = scalar_select 0, %s8, %s6
  // Predicated region
  $region2: #{mask_decoder_forward.5} parent=0 // pred_check
    _
  $region3: #{mask_decoder_forward.5} parent=0 // pred_check_branch
    %11 = sbr.rel (0) target = $region5
  $region4: #{mask_decoder_forward.5} parent=0 // pred_region
    _
  $region5: #{mask_decoder_forward.5} parent=0 // pred_fallthru
    _
  // Predicated region
  $region6: #{mask_decoder_forward.5} parent=0 // pred_check
    _
  $region7: #{mask_decoder_forward.5} parent=0 // pred_check_branch
    %13 = sbr.rel (0) target = $region9
  $region8: #{mask_decoder_forward.5} parent=0 // pred_region
    _
  $region9: #{mask_decoder_forward.5} parent=0 // pred_fallthru
    _
  // Predicated region
  $region10: #{mask_decoder_forward.5} parent=0 // pred_check
    _
  $region11: #{mask_decoder_forward.5} parent=0 // pred_check_branch
    %15 = sbr.rel (0) target = $region13
  $region12: #{mask_decoder_forward.5} parent=0 // pred_region
    _
  $region13: #{mask_decoder_forward.5} parent=0 // pred_fallthru
    _
  // Predicated region
  $region14: #{mask_decoder_forward.5} parent=0 // pred_check
    _
  $region15: #{mask_decoder_forward.5} parent=0 // pred_check_branch
    %17 = sbr.rel (0) target = $region17
  $region16: #{mask_decoder_forward.5} parent=0 // pred_region
    _
  $region17: #{mask_decoder_forward.5} parent=0 // pred_fallthru
    _
  // Predicated region
  $region18: #{mask_decoder_forward.5} parent=0 // pred_check
    _
  $region19: #{mask_decoder_forward.5} parent=0 // pred_check_branch
    %19 = sbr.rel (0) target = $region21
  $region20: #{mask_decoder_forward.5} parent=0 // pred_region
    _
  $region21: #{mask_decoder_forward.5} parent=0 // pred_fallthru
    _
  %v20 = vld [vmem:[%s0] sm:$0xff]
  %v21 = vld [vmem:[%s0 + $0x8] sm:$0xff]
  %v22 = vld [vmem:[%s0 + $0x10] sm:$0xff]
  %v23 = vld [vmem:[%s0 + $0x18] sm:$0xff]
  %v24 = vld [vmem:[%s0 + $0x20] sm:$0xff]
  %v25 = vld [vmem:[%s0 + $0x28] sm:$0xff]
  %v26 = vld [vmem:[%s0 + $0x30] sm:$0xff]
  %v27 = vld [vmem:[%s0 + $0x38] sm:$0xff]
  %v28 = vld [vmem:[%s0 + $0x40] sm:$0xff]
  %v29 = vld [vmem:[%s0 + $0x48] sm:$0xff]
  %v30 = vld [vmem:[%s0 + $0x50] sm:$0xff]
  %v31 = vld [vmem:[%s0 + $0x58] sm:$0xff]
  %v32 = vld [vmem:[%s0 + $0x60] sm:$0xff]
  %v33 = vld [vmem:[%s0 + $0x68] sm:$0xff]
  %v34 = vld [vmem:[%s0 + $0x70] sm:$0xff]
  %v35 = vld [vmem:[%s0 + $0x78] sm:$0xff]
  %v36 = vld [vmem:[%s1] sm:$0xff]
  %v37 = vld [vmem:[%s1 + $0x8] sm:$0xff]
  %v38 = vld [vmem:[%s1 + $0x10] sm:$0xff]
  %v39 = vld [vmem:[%s1 + $0x18] sm:$0xff]
  %vm40 = vcmask 261120
  %v42 = vsel %vm40, %v20, 0
  %v45 = vsel %vm40, %v21, 0
  %v48 = vsel %vm40, %v22, 0
  %v51 = vsel %vm40, %v23, 0
  %v54 = vsel %vm40, %v24, 0
  %v57 = vsel %vm40, %v25, 0
  %v60 = vsel %vm40, %v26, 0
  %v63 = vsel %vm40, %v27, 0
  %v66 = vsel %vm40, %v28, 0
  %v69 = vsel %vm40, %v29, 0
  %v72 = vsel %vm40, %v30, 0
  %v75 = vsel %vm40, %v31, 0
  %v78 = vsel %vm40, %v32, 0
  %v81 = vsel %vm40, %v33, 0
  %v84 = vsel %vm40, %v34, 0
  %v87 = vsel %vm40, %v35, 0
  %89 = vmatprep.subr.mxu0 0.0
  %90 = vmatpush1.msra.mxu0 %v36
  %91 = vmatprep.subr.mxu0 0.0
  %92 = vmatpush1.msra.mxu0 %v37
  %93 = vmatprep.subr.mxu0 0.0
  %94 = vmatpush1.msra.mxu0 %v38
  %95 = vmatprep.subr.mxu0 0.0
  %96 = vmatpush1.msra.mxu0 %v39
  %97 = vmatprep.subr.mxu0 0.0
  %98 = vmatpush1.msra.mxu0 0.0
  %99 = vmatprep.subr.mxu0 0.0
  %100 = vmatpush1.msra.mxu0 0.0
  %101 = vmatprep.subr.mxu0 0.0
  %102 = vmatpush1.msra.mxu0 0.0
  %103 = vmatprep.subr.mxu0 0.0
  %104 = vmatpush1.msra.mxu0 0.0
  %105 = vmatprep.subr.mxu0 0.0
  %106 = vmatpush1.msra.mxu0 0.0
  %107 = vmatprep.subr.mxu0 0.0
  %108 = vmatpush1.msra.mxu0 0.0
  %109 = vmatprep.subr.mxu0 0.0
  %110 = vmatpush1.msra.mxu0 0.0
  %111 = vmatprep.subr.mxu0 0.0
  %112 = vmatpush1.msra.mxu0 0.0
  %113 = vmatprep.subr.mxu0 0.0
  %114 = vmatpush1.msra.mxu0 0.0
  %115 = vmatprep.subr.mxu0 0.0
  %116 = vmatpush1.msra.mxu0 0.0
  %117 = vmatprep.subr.mxu0 0.0
  %118 = vmatpush1.msra.mxu0 0.0
  %119 = vmatprep.subr.mxu0 0.0
  %120 = vmatpush1.msra.mxu0 0.0
  %121 = vmatprep.subr.mxu0 0.0
  %122 = vmatpush1.msra.mxu0 0.0
  %123 = vmatprep.subr.mxu0 0.0
  %124 = vmatpush1.msra.mxu0 0.0
  %125 = vmatprep.subr.mxu0 0.0
  %126 = vmatpush1.msra.mxu0 0.0
  %127 = vmatprep.subr.mxu0 0.0
  %128 = vmatpush1.msra.mxu0 0.0
  %129 = vmatprep.subr.mxu0 0.0
  %130 = vmatpush1.msra.mxu0 0.0
  %131 = vmatprep.subr.mxu0 0.0
  %132 = vmatpush1.msra.mxu0 0.0
  %133 = vmatprep.subr.mxu0 0.0
  %134 = vmatpush1.msra.mxu0 0.0
  %135 = vmatprep.subr.mxu0 0.0
  %136 = vmatpush1.msra.mxu0 0.0
  %137 = vmatprep.subr.mxu0 0.0
  %138 = vmatpush1.msra.mxu0 0.0
  %139 = vmatprep.subr.mxu0 0.0
  %140 = vmatpush1.msra.mxu0 0.0
  %141 = vmatprep.subr.mxu0 0.0
  %142 = vmatpush1.msra.mxu0 0.0
  %143 = vmatprep.subr.mxu0 0.0
  %144 = vmatpush1.msra.mxu0 0.0
  %145 = vmatprep.subr.mxu0 0.0
  %146 = vmatpush1.msra.mxu0 0.0
  %147 = vmatprep.subr.mxu0 0.0
  %148 = vmatpush1.msra.mxu0 0.0
  %149 = vmatprep.subr.mxu0 0.0
  %150 = vmatpush1.msra.mxu0 0.0
  %151 = vmatprep.subr.mxu0 0.0
  %152 = vmatpush1.msra.mxu0 0.0
  %153 = vmatprep.mubr.f32.mxu0 0.0
  %154 = vmatmul.mubr.f32.gmra.mrb[0].mxu0 %v42
  %v155 = vpop.f32.mrb[0].mxu0
  %v156 = vadd.f32 0.0, %v155
  %v157 = vpop.f32.mrb[0].mxu0
  %158 = vmatprep.mubr.f32.mxu0 0.0
  %159 = vmatmul.mubr.f32.gmra.mrb[0].mxu0 %v45
  %v160 = vpop.f32.mrb[0].mxu0
  %v161 = vadd.f32 0.0, %v160
  %v162 = vpop.f32.mrb[0].mxu0
  %163 = vmatprep.mubr.f32.mxu0 0.0
  %164 = vmatmul.mubr.f32.gmra.mrb[0].mxu0 %v48
  %v165 = vpop.f32.mrb[0].mxu0
  %v166 = vadd.f32 0.0, %v165
  %v167 = vpop.f32.mrb[0].mxu0
  %168 = vmatprep.mubr.f32.mxu0 0.0
  %169 = vmatmul.mubr.f32.gmra.mrb[0].mxu0 %v51
  %v170 = vpop.f32.mrb[0].mxu0
  %v171 = vadd.f32 0.0, %v170
  %v172 = vpop.f32.mrb[0].mxu0
  %173 = vmatprep.mubr.f32.mxu0 0.0
  %174 = vmatmul.mubr.f32.gmra.mrb[0].mxu0 %v54
  %v175 = vpop.f32.mrb[0].mxu0
  %v176 = vadd.f32 0.0, %v175
  %v177 = vpop.f32.mrb[0].mxu0
  %178 = vmatprep.mubr.f32.mxu0 0.0
  %179 = vmatmul.mubr.f32.gmra.mrb[0].mxu0 %v57
  %v180 = vpop.f32.mrb[0].mxu0
  %v181 = vadd.f32 0.0, %v180
  %v182 = vpop.f32.mrb[0].mxu0
  %183 = vmatprep.mubr.f32.mxu0 0.0
  %184 = vmatmul.mubr.f32.gmra.mrb[0].mxu0 %v60
  %v185 = vpop.f32.mrb[0].mxu0
  %v186 = vadd.f32 0.0, %v185
  %v187 = vpop.f32.mrb[0].mxu0
  %188 = vmatprep.mubr.f32.mxu0 0.0
  %189 = vmatmul.mubr.f32.gmra.mrb[0].mxu0 %v63
  %v190 = vpop.f32.mrb[0].mxu0
  %v191 = vadd.f32 0.0, %v190
  %v192 = vpop.f32.mrb[0].mxu0
  %193 = vmatprep.mubr.f32.mxu0 0.0
  %194 = vmatmul.mubr.f32.gmra.mrb[0].mxu0 %v66
  %v195 = vpop.f32.mrb[0].mxu0
  %v196 = vadd.f32 0.0, %v195
  %v197 = vpop.f32.mrb[0].mxu0
  %198 = vmatprep.mubr.f32.mxu0 0.0
  %199 = vmatmul.mubr.f32.gmra.mrb[0].mxu0 %v69
  %v200 = vpop.f32.mrb[0].mxu0
  %v201 = vadd.f32 0.0, %v200
  %v202 = vpop.f32.mrb[0].mxu0
  %203 = vmatprep.mubr.f32.mxu0 0.0
  %204 = vmatmul.mubr.f32.gmra.mrb[0].mxu0 %v72
  %v205 = vpop.f32.mrb[0].mxu0
  %v206 = vadd.f32 0.0, %v205
  %v207 = vpop.f32.mrb[0].mxu0
  %208 = vmatprep.mubr.f32.mxu0 0.0
  %209 = vmatmul.mubr.f32.gmra.mrb[0].mxu0 %v75
  %v210 = vpop.f32.mrb[0].mxu0
  %v211 = vadd.f32 0.0, %v210
  %v212 = vpop.f32.mrb[0].mxu0
  %213 = vmatprep.mubr.f32.mxu0 0.0
  %214 = vmatmul.mubr.f32.gmra.mrb[0].mxu0 %v78
  %v215 = vpop.f32.mrb[0].mxu0
  %v216 = vadd.f32 0.0, %v215
  %v217 = vpop.f32.mrb[0].mxu0
  %218 = vmatprep.mubr.f32.mxu0 0.0
  %219 = vmatmul.mubr.f32.gmra.mrb[0].mxu0 %v81
  %v220 = vpop.f32.mrb[0].mxu0
  %v221 = vadd.f32 0.0, %v220
  %v222 = vpop.f32.mrb[0].mxu0
  %223 = vmatprep.mubr.f32.mxu0 0.0
  %224 = vmatmul.mubr.f32.gmra.mrb[0].mxu0 %v84
  %v225 = vpop.f32.mrb[0].mxu0
  %v226 = vadd.f32 0.0, %v225
  %v227 = vpop.f32.mrb[0].mxu0
  %228 = vmatprep.mubr.f32.mxu0 0.0
  %229 = vmatmul.mubr.f32.gmra.mrb[0].mxu0 %v87
  %v230 = vpop.f32.mrb[0].mxu0
  %v231 = vadd.f32 0.0, %v230
  %v232 = vpop.f32.mrb[0].mxu0
  %233 = vdwg.mxu0
  %s234 = scalar_lea.vmem %s1, 32
  %v235 = vld [vmem:[%s234] sm:$0xff]
  %v236 = vld [vmem:[%s234 + $0x8] sm:$0xff]
  %v237 = vld [vmem:[%s234 + $0x10] sm:$0xff]
  %v238 = vld [vmem:[%s234 + $0x18] sm:$0xff]
  %s239 = scalar_lea.vmem %s1, 64
  %v240 = vld [vmem:[%s239] sm:$0xff]
  %v241 = vld [vmem:[%s239 + $0x8] sm:$0xff]
  %v242 = vld [vmem:[%s239 + $0x10] sm:$0xff]
  %v243 = vld [vmem:[%s239 + $0x18] sm:$0xff]
  %s244 = scalar_lea.vmem %s1, 96
  %v245 = vld [vmem:[%s244] sm:$0xff]
  %v246 = vld [vmem:[%s244 + $0x8] sm:$0xff]
  %v247 = vld [vmem:[%s244 + $0x10] sm:$0xff]
  %v248 = vld [vmem:[%s244 + $0x18] sm:$0xff]
  %249 = vmatprep.subr.mxu0 0.0
  %250 = vmatpush1.msra.mxu0 %v245
  %251 = vmatprep.subr.mxu0 0.0
  %252 = vmatpush1.msra.mxu0 %v246
  %253 = vmatprep.subr.mxu0 0.0
  %254 = vmatpush1.msra.mxu0 %v247
  %255 = vmatprep.subr.mxu0 0.0
  %256 = vmatpush1.msra.mxu0 %v248
  %257 = vmatprep.subr.mxu0 0.0
  %258 = vmatpush1.msra.mxu0 0.0
  %259 = vmatprep.subr.mxu0 0.0
  %260 = vmatpush1.msra.mxu0 0.0
  %261 = vmatprep.subr.mxu0 0.0
  %262 = vmatpush1.msra.mxu0 0.0
  %263 = vmatprep.subr.mxu0 0.0
  %264 = vmatpush1.msra.mxu0 0.0
  %265 = vmatprep.subr.mxu0 0.0
  %266 = vmatpush1.msra.mxu0 0.0
  %267 = vmatprep.subr.mxu0 0.0
  %268 = vmatpush1.msra.mxu0 0.0
  %269 = vmatprep.subr.mxu0 0.0
  %270 = vmatpush1.msra.mxu0 0.0
  %271 = vmatprep.subr.mxu0 0.0
  %272 = vmatpush1.msra.mxu0 0.0
  %273 = vmatprep.subr.mxu0 0.0
  %274 = vmatpush1.msra.mxu0 0.0
  %275 = vmatprep.subr.mxu0 0.0
  %276 = vmatpush1.msra.mxu0 0.0
  %277 = vmatprep.subr.mxu0 0.0
  %278 = vmatpush1.msra.mxu0 0.0
  %279 = vmatprep.subr.mxu0 0.0
  %280 = vmatpush1.msra.mxu0 0.0
  %281 = vmatprep.subr.mxu0 0.0
  %282 = vmatpush1.msra.mxu0 0.0
  %283 = vmatprep.subr.mxu0 0.0
  %284 = vmatpush1.msra.mxu0 0.0
  %285 = vmatprep.subr.mxu0 0.0
  %286 = vmatpush1.msra.mxu0 0.0
  %287 = vmatprep.subr.mxu0 0.0
  %288 = vmatpush1.msra.mxu0 0.0
  %289 = vmatprep.subr.mxu0 0.0
  %290 = vmatpush1.msra.mxu0 0.0
  %291 = vmatprep.subr.mxu0 0.0
  %292 = vmatpush1.msra.mxu0 0.0
  %293 = vmatprep.subr.mxu0 0.0
  %294 = vmatpush1.msra.mxu0 0.0
  %295 = vmatprep.subr.mxu0 0.0
  %296 = vmatpush1.msra.mxu0 0.0
  %297 = vmatprep.subr.mxu0 0.0
  %298 = vmatpush1.msra.mxu0 0.0
  %299 = vmatprep.subr.mxu0 0.0
  %300 = vmatpush1.msra.mxu0 0.0
  %301 = vmatprep.subr.mxu0 0.0
  %302 = vmatpush1.msra.mxu0 0.0
  %303 = vmatprep.subr.mxu0 0.0
  %304 = vmatpush1.msra.mxu0 0.0
  %305 = vmatprep.subr.mxu0 0.0
  %306 = vmatpush1.msra.mxu0 0.0
  %307 = vmatprep.subr.mxu0 0.0
  %308 = vmatpush1.msra.mxu0 0.0
  %309 = vmatprep.subr.mxu0 0.0
  %310 = vmatpush1.msra.mxu0 0.0
  %311 = vmatprep.subr.mxu0 0.0
  %312 = vmatpush1.msra.mxu0 0.0
  %313 = vmatprep.mubr.f32.mxu0 0.0
  %314 = vmatmul.mubr.f32.gmra.mrb[0].mxu0 %v42
  %v315 = vpop.f32.mrb[0].mxu0
  %v316 = vadd.f32 0.0, %v315
  %v317 = vpop.f32.mrb[0].mxu0
  %318 = vmatprep.mubr.f32.mxu0 0.0
  %319 = vmatmul.mubr.f32.gmra.mrb[0].mxu0 %v45
  %v320 = vpop.f32.mrb[0].mxu0
  %v321 = vadd.f32 0.0, %v320
  %v322 = vpop.f32.mrb[0].mxu0
  %323 = vmatprep.mubr.f32.mxu0 0.0
  %324 = vmatmul.mubr.f32.gmra.mrb[0].mxu0 %v48
  %v325 = vpop.f32.mrb[0].mxu0
  %v326 = vadd.f32 0.0, %v325
  %v327 = vpop.f32.mrb[0].mxu0
  %328 = vmatprep.mubr.f32.mxu0 0.0
  %329 = vmatmul.mubr.f32.gmra.mrb[0].mxu0 %v51
  %v330 = vpop.f32.mrb[0].mxu0
  %v331 = vadd.f32 0.0, %v330
  %v332 = vpop.f32.mrb[0].mxu0
  %333 = vmatprep.mubr.f32.mxu0 0.0
  %334 = vmatmul.mubr.f32.gmra.mrb[0].mxu0 %v54
  %v335 = vpop.f32.mrb[0].mxu0
  %v336 = vadd.f32 0.0, %v335
  %v337 = vpop.f32.mrb[0].mxu0
  %338 = vmatprep.mubr.f32.mxu0 0.0
  %339 = vmatmul.mubr.f32.gmra.mrb[0].mxu0 %v57
  %v340 = vpop.f32.mrb[0].mxu0
  %v341 = vadd.f32 0.0, %v340
  %v342 = vpop.f32.mrb[0].mxu0
  %343 = vmatprep.mubr.f32.mxu0 0.0
  %344 = vmatmul.mubr.f32.gmra.mrb[0].mxu0 %v60
  %v345 = vpop.f32.mrb[0].mxu0
  %v346 = vadd.f32 0.0, %v345
  %v347 = vpop.f32.mrb[0].mxu0
  %348 = vmatprep.mubr.f32.mxu0 0.0
  %349 = vmatmul.mubr.f32.gmra.mrb[0].mxu0 %v63
  %v350 = vpop.f32.mrb[0].mxu0
  %v351 = vadd.f32 0.0, %v350
  %v352 = vpop.f32.mrb[0].mxu0
  %353 = vmatprep.mubr.f32.mxu0 0.0
  %354 = vmatmul.mubr.f32.gmra.mrb[0].mxu0 %v66
  %v355 = vpop.f32.mrb[0].mxu0
  %v356 = vadd.f32 0.0, %v355
  %v357 = vpop.f32.mrb[0].mxu0
  %358 = vmatprep.mubr.f32.mxu0 0.0
  %359 = vmatmul.mubr.f32.gmra.mrb[0].mxu0 %v69
  %v360 = vpop.f32.mrb[0].mxu0
  %v361 = vadd.f32 0.0, %v360
  %v362 = vpop.f32.mrb[0].mxu0
  %363 = vmatprep.mubr.f32.mxu0 0.0
  %364 = vmatmul.mubr.f32.gmra.mrb[0].mxu0 %v72
  %v365 = vpop.f32.mrb[0].mxu0
  %v366 = vadd.f32 0.0, %v365
  %v367 = vpop.f32.mrb[0].mxu0
  %368 = vmatprep.mubr.f32.mxu0 0.0
  %369 = vmatmul.mubr.f32.gmra.mrb[0].mxu0 %v75
  %v370 = vpop.f32.mrb[0].mxu0
  %v371 = vadd.f32 0.0, %v370
  %v372 = vpop.f32.mrb[0].mxu0
  %373 = vmatprep.mubr.f32.mxu0 0.0
  %374 = vmatmul.mubr.f32.gmra.mrb[0].mxu0 %v78
  %v375 = vpop.f32.mrb[0].mxu0
  %v376 = vadd.f32 0.0, %v375
  %v377 = vpop.f32.mrb[0].mxu0
  %378 = vmatprep.mubr.f32.mxu0 0.0
  %379 = vmatmul.mubr.f32.gmra.mrb[0].mxu0 %v81
  %v380 = vpop.f32.mrb[0].mxu0
  %v381 = vadd.f32 0.0, %v380
  %v382 = vpop.f32.mrb[0].mxu0
  %383 = vmatprep.mubr.f32.mxu0 0.0
  %384 = vmatmul.mubr.f32.gmra.mrb[0].mxu0 %v84
  %v385 = vpop.f32.mrb[0].mxu0
  %v386 = vadd.f32 0.0, %v385
  %v387 = vpop.f32.mrb[0].mxu0
  %388 = vmatprep.mubr.f32.mxu0 0.0
  %389 = vmatmul.mubr.f32.gmra.mrb[0].mxu0 %v87
  %v390 = vpop.f32.mrb[0].mxu0
  %v391 = vadd.f32 0.0, %v390
  %v392 = vpop.f32.mrb[0].mxu0
  %393 = vdwg.mxu0
  %v394 = vlaneseq
  %v395 = vshrl.u32 %v394, 7
  %v396 = vadd.s32 %v395, 8
  %v397 = vadd.s32 %v395, 16
  %v398 = vadd.s32 %v395, 24
  %v399 = vadd.s32 %v395, 32
  %v400 = vadd.s32 %v395, 40
  %v401 = vadd.s32 %v395, 48
  %v402 = vadd.s32 %v395, 56
  %v403 = vadd.s32 %v395, 64
  %v404 = vadd.s32 %v395, 72
  %v405 = vadd.s32 %v395, 80
  %v406 = vadd.s32 %v395, 88
  %v407 = vadd.s32 %v395, 96
  %v408 = vadd.s32 %v395, 104
  %v409 = vadd.s32 %v395, 112
  %v410 = vadd.s32 %v395, 120
  %vm411 = vcmp.lt.s32.totalorder %v395, 0
  %v412 = vsub.s32 0, %v395
  %v413 = vsel %vm411, %v412, %v395
  %v414 = vshrl.u32 %v413, 4
  %v415 = vand.u32 %v413, 15
  %v416 = vsub.s32 0, %v415
  %v417 = vsel %vm411, %v416, %v415
  %vm418 = vcmp.lt.s32.totalorder %v396, 0
  %v419 = vsub.s32 0, %v396
  %v420 = vsel %vm418, %v419, %v396
  %v421 = vshrl.u32 %v420, 4
  %v422 = vand.u32 %v420, 15
  %v423 = vsub.s32 0, %v422
  %v424 = vsel %vm418, %v423, %v422
  %vm425 = vcmp.lt.s32.totalorder %v397, 0
  %v426 = vsub.s32 0, %v397
  %v427 = vsel %vm425, %v426, %v397
  %v428 = vshrl.u32 %v427, 4
  %v429 = vand.u32 %v427, 15
  %v430 = vsub.s32 0, %v429
  %v431 = vsel %vm425, %v430, %v429
  %vm432 = vcmp.lt.s32.totalorder %v398, 0
  %v433 = vsub.s32 0, %v398
  %v434 = vsel %vm432, %v433, %v398
  %v435 = vshrl.u32 %v434, 4
  %v436 = vand.u32 %v434, 15
  %v437 = vsub.s32 0, %v436
  %v438 = vsel %vm432, %v437, %v436
  %vm439 = vcmp.lt.s32.totalorder %v399, 0
  %v440 = vsub.s32 0, %v399
  %v441 = vsel %vm439, %v440, %v399
  %v442 = vshrl.u32 %v441, 4
  %v443 = vand.u32 %v441, 15
  %v444 = vsub.s32 0, %v443
  %v445 = vsel %vm439, %v444, %v443
  %vm446 = vcmp.lt.s32.totalorder %v400, 0
  %v447 = vsub.s32 0, %v400
  %v448 = vsel %vm446, %v447, %v400
  %v449 = vshrl.u32 %v448, 4
  %v450 = vand.u32 %v448, 15
  %v451 = vsub.s32 0, %v450
  %v452 = vsel %vm446, %v451, %v450
  %vm453 = vcmp.lt.s32.totalorder %v401, 0
  %v454 = vsub.s32 0, %v401
  %v455 = vsel %vm453, %v454, %v401
  %v456 = vshrl.u32 %v455, 4
  %v457 = vand.u32 %v455, 15
  %v458 = vsub.s32 0, %v457
  %v459 = vsel %vm453, %v458, %v457
  %vm460 = vcmp.lt.s32.totalorder %v402, 0
  %v461 = vsub.s32 0, %v402
  %v462 = vsel %vm460, %v461, %v402
  %v463 = vshrl.u32 %v462, 4
  %v464 = vand.u32 %v462, 15
  %v465 = vsub.s32 0, %v464
  %v466 = vsel %vm460, %v465, %v464
  %vm467 = vcmp.lt.s32.totalorder %v403, 0
  %v468 = vsub.s32 0, %v403
  %v469 = vsel %vm467, %v468, %v403
  %v470 = vshrl.u32 %v469, 4
  %v471 = vand.u32 %v469, 15
  %v472 = vsub.s32 0, %v471
  %v473 = vsel %vm467, %v472, %v471
  %vm474 = vcmp.lt.s32.totalorder %v404, 0
  %v475 = vsub.s32 0, %v404
  %v476 = vsel %vm474, %v475, %v404
  %v477 = vshrl.u32 %v476, 4
  %v478 = vand.u32 %v476, 15
  %v479 = vsub.s32 0, %v478
  %v480 = vsel %vm474, %v479, %v478
  %vm481 = vcmp.lt.s32.totalorder %v405, 0
  %v482 = vsub.s32 0, %v405
  %v483 = vsel %vm481, %v482, %v405
  %v484 = vshrl.u32 %v483, 4
  %v485 = vand.u32 %v483, 15
  %v486 = vsub.s32 0, %v485
  %v487 = vsel %vm481, %v486, %v485
  %vm488 = vcmp.lt.s32.totalorder %v406, 0
  %v489 = vsub.s32 0, %v406
  %v490 = vsel %vm488, %v489, %v406
  %v491 = vshrl.u32 %v490, 4
  %v492 = vand.u32 %v490, 15
  %v493 = vsub.s32 0, %v492
  %v494 = vsel %vm488, %v493, %v492
  %vm495 = vcmp.lt.s32.totalorder %v407, 0
  %v496 = vsub.s32 0, %v407
  %v497 = vsel %vm495, %v496, %v407
  %v498 = vshrl.u32 %v497, 4
  %v499 = vand.u32 %v497, 15
  %v500 = vsub.s32 0, %v499
  %v501 = vsel %vm495, %v500, %v499
  %vm502 = vcmp.lt.s32.totalorder %v408, 0
  %v503 = vsub.s32 0, %v408
  %v504 = vsel %vm502, %v503, %v408
  %v505 = vshrl.u32 %v504, 4
  %v506 = vand.u32 %v504, 15
  %v507 = vsub.s32 0, %v506
  %v508 = vsel %vm502, %v507, %v506
  %vm509 = vcmp.lt.s32.totalorder %v409, 0
  %v510 = vsub.s32 0, %v409
  %v511 = vsel %vm509, %v510, %v409
  %v512 = vshrl.u32 %v511, 4
  %v513 = vand.u32 %v511, 15
  %v514 = vsub.s32 0, %v513
  %v515 = vsel %vm509, %v514, %v513
  %vm516 = vcmp.lt.s32.totalorder %v410, 0
  %v517 = vsub.s32 0, %v410
  %v518 = vsel %vm516, %v517, %v410
  %v519 = vshrl.u32 %v518, 4
  %v520 = vand.u32 %v518, 15
  %v521 = vsub.s32 0, %v520
  %v522 = vsel %vm516, %v521, %v520
  %vm523 = vcmp.ne.s32.totalorder %v417, 0
  %vm524 = vcmp.ne.s32.totalorder %v424, 0
  %vm525 = vcmp.ne.s32.totalorder %v431, 0
  %vm526 = vcmp.ne.s32.totalorder %v438, 0
  %vm527 = vcmp.ne.s32.totalorder %v445, 0
  %vm528 = vcmp.ne.s32.totalorder %v452, 0
  %vm529 = vcmp.ne.s32.totalorder %v459, 0
  %vm530 = vcmp.ne.s32.totalorder %v466, 0
  %vm531 = vcmp.ne.s32.totalorder %v473, 0
  %vm532 = vcmp.ne.s32.totalorder %v480, 0
  %vm533 = vcmp.ne.s32.totalorder %v487, 0
  %vm534 = vcmp.ne.s32.totalorder %v494, 0
  %vm535 = vcmp.ne.s32.totalorder %v501, 0
  %vm536 = vcmp.ne.s32.totalorder %v508, 0
  %vm537 = vcmp.ne.s32.totalorder %v515, 0
  %vm538 = vcmp.ne.s32.totalorder %v522, 0
  %vm539 = vcmp.lt.s32.totalorder %v417, 0
  %vm540 = vcmp.lt.s32.totalorder %v424, 0
  %vm541 = vcmp.lt.s32.totalorder %v431, 0
  %vm542 = vcmp.lt.s32.totalorder %v438, 0
  %vm543 = vcmp.lt.s32.totalorder %v445, 0
  %vm544 = vcmp.lt.s32.totalorder %v452, 0
  %vm545 = vcmp.lt.s32.totalorder %v459, 0
  %vm546 = vcmp.lt.s32.totalorder %v466, 0
  %vm547 = vcmp.lt.s32.totalorder %v473, 0
  %vm548 = vcmp.lt.s32.totalorder %v480, 0
  %vm549 = vcmp.lt.s32.totalorder %v487, 0
  %vm550 = vcmp.lt.s32.totalorder %v494, 0
  %vm551 = vcmp.lt.s32.totalorder %v501, 0
  %vm552 = vcmp.lt.s32.totalorder %v508, 0
  %vm553 = vcmp.lt.s32.totalorder %v515, 0
  %vm554 = vcmp.lt.s32.totalorder %v522, 0
  %vm555 = vmand %vm539, %vm523
  %vm556 = vmand %vm540, %vm524
  %vm557 = vmand %vm541, %vm525
  %vm558 = vmand %vm542, %vm526
  %vm559 = vmand %vm543, %vm527
  %vm560 = vmand %vm544, %vm528
  %vm561 = vmand %vm545, %vm529
  %vm562 = vmand %vm546, %vm530
  %vm563 = vmand %vm547, %vm531
  %vm564 = vmand %vm548, %vm532
  %vm565 = vmand %vm549, %vm533
  %vm566 = vmand %vm550, %vm534
  %vm567 = vmand %vm551, %vm535
  %vm568 = vmand %vm552, %vm536
  %vm569 = vmand %vm553, %vm537
  %vm570 = vmand %vm554, %vm538
  %v571 = vadd.s32 %v417, 16
  %v572 = vadd.s32 %v424, 16
  %v573 = vadd.s32 %v431, 16
  %v574 = vadd.s32 %v438, 16
  %v575 = vadd.s32 %v445, 16
  %v576 = vadd.s32 %v452, 16
  %v577 = vadd.s32 %v459, 16
  %v578 = vadd.s32 %v466, 16
  %v579 = vadd.s32 %v473, 16
  %v580 = vadd.s32 %v480, 16
  %v581 = vadd.s32 %v487, 16
  %v582 = vadd.s32 %v494, 16
  %v583 = vadd.s32 %v501, 16
  %v584 = vadd.s32 %v508, 16
  %v585 = vadd.s32 %v515, 16
  %v586 = vadd.s32 %v522, 16
  %v587 = vsel %vm555, %v571, %v417
  %v588 = vsel %vm556, %v572, %v424
  %v589 = vsel %vm557, %v573, %v431
  %v590 = vsel %vm558, %v574, %v438
  %v591 = vsel %vm559, %v575, %v445
  %v592 = vsel %vm560, %v576, %v452
  %v593 = vsel %vm561, %v577, %v459
  %v594 = vsel %vm562, %v578, %v466
  %v595 = vsel %vm563, %v579, %v473
  %v596 = vsel %vm564, %v580, %v480
  %v597 = vsel %vm565, %v581, %v487
  %v598 = vsel %vm566, %v582, %v494
  %v599 = vsel %vm567, %v583, %v501
  %v600 = vsel %vm568, %v584, %v508
  %v601 = vsel %vm569, %v585, %v515
  %v602 = vsel %vm570, %v586, %v522
  %vm619 = vcmask 1040384
  %v620 = vrot.slane %v316, 7
  %v621 = vrot.slane %v321, 7
  %v622 = vsel %vm619, %v620, %v621
  %v623 = vrot.slane %v326, 7
  %v624 = vsel %vm619, %v621, %v623
  %v625 = vrot.slane %v331, 7
  %v626 = vsel %vm619, %v623, %v625
  %v627 = vrot.slane %v336, 7
  %v628 = vsel %vm619, %v625, %v627
  %v629 = vrot.slane %v341, 7
  %v630 = vsel %vm619, %v627, %v629
  %v631 = vrot.slane %v346, 7
  %v632 = vsel %vm619, %v629, %v631
  %v633 = vrot.slane %v351, 7
  %v634 = vsel %vm619, %v631, %v633
  %v635 = vrot.slane %v356, 7
  %v636 = vsel %vm619, %v633, %v635
  %v637 = vrot.slane %v361, 7
  %v638 = vsel %vm619, %v635, %v637
  %v639 = vrot.slane %v366, 7
  %v640 = vsel %vm619, %v637, %v639
  %v641 = vrot.slane %v371, 7
  %v642 = vsel %vm619, %v639, %v641
  %v643 = vrot.slane %v376, 7
  %v644 = vsel %vm619, %v641, %v643
  %v645 = vrot.slane %v381, 7
  %v646 = vsel %vm619, %v643, %v645
  %v647 = vrot.slane %v386, 7
  %v648 = vsel %vm619, %v645, %v647
  %v649 = vrot.slane %v391, 7
  %v650 = vsel %vm619, %v647, %v649
  %v667 = vsel %vm619, 0.0, %v620
  %vm684 = vcmask 1046528
  %v685 = vrot.slane %v156, 1
  %v686 = vrot.slane %v161, 1
  %v687 = vsel %vm684, %v685, %v686
  %v688 = vrot.slane %v166, 1
  %v689 = vsel %vm684, %v686, %v688
  %v690 = vrot.slane %v171, 1
  %v691 = vsel %vm684, %v688, %v690
  %v692 = vrot.slane %v176, 1
  %v693 = vsel %vm684, %v690, %v692
  %v694 = vrot.slane %v181, 1
  %v695 = vsel %vm684, %v692, %v694
  %v696 = vrot.slane %v186, 1
  %v697 = vsel %vm684, %v694, %v696
  %v698 = vrot.slane %v191, 1
  %v699 = vsel %vm684, %v696, %v698
  %v700 = vrot.slane %v196, 1
  %v701 = vsel %vm684, %v698, %v700
  %v702 = vrot.slane %v201, 1
  %v703 = vsel %vm684, %v700, %v702
  %v704 = vrot.slane %v206, 1
  %v705 = vsel %vm684, %v702, %v704
  %v706 = vrot.slane %v211, 1
  %v707 = vsel %vm684, %v704, %v706
  %v708 = vrot.slane %v216, 1
  %v709 = vsel %vm684, %v706, %v708
  %v710 = vrot.slane %v221, 1
  %v711 = vsel %vm684, %v708, %v710
  %v712 = vrot.slane %v226, 1
  %v713 = vsel %vm684, %v710, %v712
  %v714 = vrot.slane %v231, 1
  %v715 = vsel %vm684, %v712, %v714
  %v732 = vsel %vm684, %v714, 0.0
  %vm733 = vcmp.eq.s32.totalorder %v587, 0
  %vm734 = vcmp.eq.s32.totalorder %v588, 0
  %vm735 = vcmp.eq.s32.totalorder %v589, 0
  %vm736 = vcmp.eq.s32.totalorder %v590, 0
  %vm737 = vcmp.eq.s32.totalorder %v591, 0
  %vm738 = vcmp.eq.s32.totalorder %v592, 0
  %vm739 = vcmp.eq.s32.totalorder %v593, 0
  %vm740 = vcmp.eq.s32.totalorder %v594, 0
  %vm741 = vcmp.eq.s32.totalorder %v595, 0
  %vm742 = vcmp.eq.s32.totalorder %v596, 0
  %vm743 = vcmp.eq.s32.totalorder %v597, 0
  %vm744 = vcmp.eq.s32.totalorder %v598, 0
  %vm745 = vcmp.eq.s32.totalorder %v599, 0
  %vm746 = vcmp.eq.s32.totalorder %v600, 0
  %vm747 = vcmp.eq.s32.totalorder %v601, 0
  %vm748 = vcmp.eq.s32.totalorder %v602, 0
  %v749 = vsel %vm733, 0.0, %v667
  %v750 = vsel %vm734, 0.0, %v622
  %v751 = vsel %vm735, 0.0, %v624
  %v752 = vsel %vm736, 0.0, %v626
  %v753 = vsel %vm737, 0.0, %v628
  %v754 = vsel %vm738, 0.0, %v630
  %v755 = vsel %vm739, 0.0, %v632
  %v756 = vsel %vm740, 0.0, %v634
  %v757 = vsel %vm741, 0.0, %v636
  %v758 = vsel %vm742, 0.0, %v638
  %v759 = vsel %vm743, 0.0, %v640
  %v760 = vsel %vm744, 0.0, %v642
  %v761 = vsel %vm745, 0.0, %v644
  %v762 = vsel %vm746, 0.0, %v646
  %v763 = vsel %vm747, 0.0, %v648
  %v764 = vsel %vm748, 0.0, %v650
  %765 = vmatprep.subr.mxu0 0.0
  %766 = vmatpush1.msra.mxu0 %v235
  %767 = vmatprep.subr.mxu0 0.0
  %768 = vmatpush1.msra.mxu0 %v236
  %769 = vmatprep.subr.mxu0 0.0
  %770 = vmatpush1.msra.mxu0 %v237
  %771 = vmatprep.subr.mxu0 0.0
  %772 = vmatpush1.msra.mxu0 %v238
  %773 = vmatprep.subr.mxu0 0.0
  %774 = vmatpush1.msra.mxu0 0.0
  %775 = vmatprep.subr.mxu0 0.0
  %776 = vmatpush1.msra.mxu0 0.0
  %777 = vmatprep.subr.mxu0 0.0
  %778 = vmatpush1.msra.mxu0 0.0
  %779 = vmatprep.subr.mxu0 0.0
  %780 = vmatpush1.msra.mxu0 0.0
  %781 = vmatprep.subr.mxu0 0.0
  %782 = vmatpush1.msra.mxu0 0.0
  %783 = vmatprep.subr.mxu0 0.0
  %784 = vmatpush1.msra.mxu0 0.0
  %785 = vmatprep.subr.mxu0 0.0
  %786 = vmatpush1.msra.mxu0 0.0
  %787 = vmatprep.subr.mxu0 0.0
  %788 = vmatpush1.msra.mxu0 0.0
  %789 = vmatprep.subr.mxu0 0.0
  %790 = vmatpush1.msra.mxu0 0.0
  %791 = vmatprep.subr.mxu0 0.0
  %792 = vmatpush1.msra.mxu0 0.0
  %793 = vmatprep.subr.mxu0 0.0
  %794 = vmatpush1.msra.mxu0 0.0
  %795 = vmatprep.subr.mxu0 0.0
  %796 = vmatpush1.msra.mxu0 0.0
  %797 = vmatprep.subr.mxu0 0.0
  %798 = vmatpush1.msra.mxu0 0.0
  %799 = vmatprep.subr.mxu0 0.0
  %800 = vmatpush1.msra.mxu0 0.0
  %801 = vmatprep.subr.mxu0 0.0
  %802 = vmatpush1.msra.mxu0 0.0
  %803 = vmatprep.subr.mxu0 0.0
  %804 = vmatpush1.msra.mxu0 0.0
  %805 = vmatprep.subr.mxu0 0.0
  %806 = vmatpush1.msra.mxu0 0.0
  %807 = vmatprep.subr.mxu0 0.0
  %808 = vmatpush1.msra.mxu0 0.0
  %809 = vmatprep.subr.mxu0 0.0
  %810 = vmatpush1.msra.mxu0 0.0
  %811 = vmatprep.subr.mxu0 0.0
  %812 = vmatpush1.msra.mxu0 0.0
  %813 = vmatprep.subr.mxu0 0.0
  %814 = vmatpush1.msra.mxu0 0.0
  %815 = vmatprep.subr.mxu0 0.0
  %816 = vmatpush1.msra.mxu0 0.0
  %817 = vmatprep.subr.mxu0 0.0
  %818 = vmatpush1.msra.mxu0 0.0
  %819 = vmatprep.subr.mxu0 0.0
  %820 = vmatpush1.msra.mxu0 0.0
  %821 = vmatprep.subr.mxu0 0.0
  %822 = vmatpush1.msra.mxu0 0.0
  %823 = vmatprep.subr.mxu0 0.0
  %824 = vmatpush1.msra.mxu0 0.0
  %825 = vmatprep.subr.mxu0 0.0
  %826 = vmatpush1.msra.mxu0 0.0
  %827 = vmatprep.subr.mxu0 0.0
  %828 = vmatpush1.msra.mxu0 0.0
  %829 = vmatprep.mubr.f32.mxu0 0.0
  %830 = vmatmul.mubr.f32.gmra.mrb[0].mxu0 %v42
  %v831 = vpop.f32.mrb[0].mxu0
  %v832 = vadd.f32 %v749, %v831
  %v833 = vpop.f32.mrb[0].mxu0
  %834 = vmatprep.mubr.f32.mxu0 0.0
  %835 = vmatmul.mubr.f32.gmra.mrb[0].mxu0 %v45
  %v836 = vpop.f32.mrb[0].mxu0
  %v837 = vadd.f32 %v750, %v836
  %v838 = vpop.f32.mrb[0].mxu0
  %839 = vmatprep.mubr.f32.mxu0 0.0
  %840 = vmatmul.mubr.f32.gmra.mrb[0].mxu0 %v48
  %v841 = vpop.f32.mrb[0].mxu0
  %v842 = vadd.f32 %v751, %v841
  %v843 = vpop.f32.mrb[0].mxu0
  %844 = vmatprep.mubr.f32.mxu0 0.0
  %845 = vmatmul.mubr.f32.gmra.mrb[0].mxu0 %v51
  %v846 = vpop.f32.mrb[0].mxu0
  %v847 = vadd.f32 %v752, %v846
  %v848 = vpop.f32.mrb[0].mxu0
  %849 = vmatprep.mubr.f32.mxu0 0.0
  %850 = vmatmul.mubr.f32.gmra.mrb[0].mxu0 %v54
  %v851 = vpop.f32.mrb[0].mxu0
  %v852 = vadd.f32 %v753, %v851
  %v853 = vpop.f32.mrb[0].mxu0
  %854 = vmatprep.mubr.f32.mxu0 0.0
  %855 = vmatmul.mubr.f32.gmra.mrb[0].mxu0 %v57
  %v856 = vpop.f32.mrb[0].mxu0
  %v857 = vadd.f32 %v754, %v856
  %v858 = vpop.f32.mrb[0].mxu0
  %859 = vmatprep.mubr.f32.mxu0 0.0
  %860 = vmatmul.mubr.f32.gmra.mrb[0].mxu0 %v60
  %v861 = vpop.f32.mrb[0].mxu0
  %v862 = vadd.f32 %v755, %v861
  %v863 = vpop.f32.mrb[0].mxu0
  %864 = vmatprep.mubr.f32.mxu0 0.0
  %865 = vmatmul.mubr.f32.gmra.mrb[0].mxu0 %v63
  %v866 = vpop.f32.mrb[0].mxu0
  %v867 = vadd.f32 %v756, %v866
  %v868 = vpop.f32.mrb[0].mxu0
  %869 = vmatprep.mubr.f32.mxu0 0.0
  %870 = vmatmul.mubr.f32.gmra.mrb[0].mxu0 %v66
  %v871 = vpop.f32.mrb[0].mxu0
  %v872 = vadd.f32 %v757, %v871
  %v873 = vpop.f32.mrb[0].mxu0
  %874 = vmatprep.mubr.f32.mxu0 0.0
  %875 = vmatmul.mubr.f32.gmra.mrb[0].mxu0 %v69
  %v876 = vpop.f32.mrb[0].mxu0
  %v877 = vadd.f32 %v758, %v876
  %v878 = vpop.f32.mrb[0].mxu0
  %879 = vmatprep.mubr.f32.mxu0 0.0
  %880 = vmatmul.mubr.f32.gmra.mrb[0].mxu0 %v72
  %v881 = vpop.f32.mrb[0].mxu0
  %v882 = vadd.f32 %v759, %v881
  %v883 = vpop.f32.mrb[0].mxu0
  %884 = vmatprep.mubr.f32.mxu0 0.0
  %885 = vmatmul.mubr.f32.gmra.mrb[0].mxu0 %v75
  %v886 = vpop.f32.mrb[0].mxu0
  %v887 = vadd.f32 %v760, %v886
  %v888 = vpop.f32.mrb[0].mxu0
  %889 = vmatprep.mubr.f32.mxu0 0.0
  %890 = vmatmul.mubr.f32.gmra.mrb[0].mxu0 %v78
  %v891 = vpop.f32.mrb[0].mxu0
  %v892 = vadd.f32 %v761, %v891
  %v893 = vpop.f32.mrb[0].mxu0
  %894 = vmatprep.mubr.f32.mxu0 0.0
  %895 = vmatmul.mubr.f32.gmra.mrb[0].mxu0 %v81
  %v896 = vpop.f32.mrb[0].mxu0
  %v897 = vadd.f32 %v762, %v896
  %v898 = vpop.f32.mrb[0].mxu0
  %899 = vmatprep.mubr.f32.mxu0 0.0
  %900 = vmatmul.mubr.f32.gmra.mrb[0].mxu0 %v84
  %v901 = vpop.f32.mrb[0].mxu0
  %v902 = vadd.f32 %v763, %v901
  %v903 = vpop.f32.mrb[0].mxu0
  %904 = vmatprep.mubr.f32.mxu0 0.0
  %905 = vmatmul.mubr.f32.gmra.mrb[0].mxu0 %v87
  %v906 = vpop.f32.mrb[0].mxu0
  %v907 = vadd.f32 %v764, %v906
  %v908 = vpop.f32.mrb[0].mxu0
  %909 = vdwg.mxu0
  %v910 = vld [vmem:[%s2] sm:$0x1]
  %v912 = vlaneseq
  %v913 = vshrl.u32 %v912, 7
  %v914 = vsub.s32 0, %v913
  %v915 = vrot.slane %v910, %v914
  %v917 = vadd.f32 %v832, %v915
  %v918 = vadd.f32 %v837, %v915
  %v919 = vadd.f32 %v842, %v915
  %v920 = vadd.f32 %v847, %v915
  %v921 = vadd.f32 %v852, %v915
  %v922 = vadd.f32 %v857, %v915
  %v923 = vadd.f32 %v862, %v915
  %v924 = vadd.f32 %v867, %v915
  %v925 = vadd.f32 %v872, %v915
  %v926 = vadd.f32 %v877, %v915
  %v927 = vadd.f32 %v882, %v915
  %v928 = vadd.f32 %v887, %v915
  %v929 = vadd.f32 %v892, %v915
  %v930 = vadd.f32 %v897, %v915
  %v931 = vadd.f32 %v902, %v915
  %v932 = vadd.f32 %v907, %v915
  %vm933 = vcmp.eq.s32.totalorder %v587, 15
  %vm934 = vcmp.eq.s32.totalorder %v588, 15
  %vm935 = vcmp.eq.s32.totalorder %v589, 15
  %vm936 = vcmp.eq.s32.totalorder %v590, 15
  %vm937 = vcmp.eq.s32.totalorder %v591, 15
  %vm938 = vcmp.eq.s32.totalorder %v592, 15
  %vm939 = vcmp.eq.s32.totalorder %v593, 15
  %vm940 = vcmp.eq.s32.totalorder %v594, 15
  %vm941 = vcmp.eq.s32.totalorder %v595, 15
  %vm942 = vcmp.eq.s32.totalorder %v596, 15
  %vm943 = vcmp.eq.s32.totalorder %v597, 15
  %vm944 = vcmp.eq.s32.totalorder %v598, 15
  %vm945 = vcmp.eq.s32.totalorder %v599, 15
  %vm946 = vcmp.eq.s32.totalorder %v600, 15
  %vm947 = vcmp.eq.s32.totalorder %v601, 15
  %vm948 = vcmp.eq.s32.totalorder %v602, 15
  %v949 = vsel %vm933, 0.0, %v687
  %v950 = vsel %vm934, 0.0, %v689
  %v951 = vsel %vm935, 0.0, %v691
  %v952 = vsel %vm936, 0.0, %v693
  %v953 = vsel %vm937, 0.0, %v695
  %v954 = vsel %vm938, 0.0, %v697
  %v955 = vsel %vm939, 0.0, %v699
  %v956 = vsel %vm940, 0.0, %v701
  %v957 = vsel %vm941, 0.0, %v703
  %v958 = vsel %vm942, 0.0, %v705
  %v959 = vsel %vm943, 0.0, %v707
  %v960 = vsel %vm944, 0.0, %v709
  %v961 = vsel %vm945, 0.0, %v711
  %v962 = vsel %vm946, 0.0, %v713
  %v963 = vsel %vm947, 0.0, %v715
  %v964 = vsel %vm948, 0.0, %v732
  %965 = vmatprep.subr.mxu0 0.0
  %966 = vmatpush1.msra.mxu0 %v240
  %967 = vmatprep.subr.mxu0 0.0
  %968 = vmatpush1.msra.mxu0 %v241
  %969 = vmatprep.subr.mxu0 0.0
  %970 = vmatpush1.msra.mxu0 %v242
  %971 = vmatprep.subr.mxu0 0.0
  %972 = vmatpush1.msra.mxu0 %v243
  %973 = vmatprep.subr.mxu0 0.0
  %974 = vmatpush1.msra.mxu0 0.0
  %975 = vmatprep.subr.mxu0 0.0
  %976 = vmatpush1.msra.mxu0 0.0
  %977 = vmatprep.subr.mxu0 0.0
  %978 = vmatpush1.msra.mxu0 0.0
  %979 = vmatprep.subr.mxu0 0.0
  %980 = vmatpush1.msra.mxu0 0.0
  %981 = vmatprep.subr.mxu0 0.0
  %982 = vmatpush1.msra.mxu0 0.0
  %983 = vmatprep.subr.mxu0 0.0
  %984 = vmatpush1.msra.mxu0 0.0
  %985 = vmatprep.subr.mxu0 0.0
  %986 = vmatpush1.msra.mxu0 0.0
  %987 = vmatprep.subr.mxu0 0.0
  %988 = vmatpush1.msra.mxu0 0.0
  %989 = vmatprep.subr.mxu0 0.0
  %990 = vmatpush1.msra.mxu0 0.0
  %991 = vmatprep.subr.mxu0 0.0
  %992 = vmatpush1.msra.mxu0 0.0
  %993 = vmatprep.subr.mxu0 0.0
  %994 = vmatpush1.msra.mxu0 0.0
  %995 = vmatprep.subr.mxu0 0.0
  %996 = vmatpush1.msra.mxu0 0.0
  %997 = vmatprep.subr.mxu0 0.0
  %998 = vmatpush1.msra.mxu0 0.0
  %999 = vmatprep.subr.mxu0 0.0
  %1000 = vmatpush1.msra.mxu0 0.0
  %1001 = vmatprep.subr.mxu0 0.0
  %1002 = vmatpush1.msra.mxu0 0.0
  %1003 = vmatprep.subr.mxu0 0.0
  %1004 = vmatpush1.msra.mxu0 0.0
  %1005 = vmatprep.subr.mxu0 0.0
  %1006 = vmatpush1.msra.mxu0 0.0
  %1007 = vmatprep.subr.mxu0 0.0
  %1008 = vmatpush1.msra.mxu0 0.0
  %1009 = vmatprep.subr.mxu0 0.0
  %1010 = vmatpush1.msra.mxu0 0.0
  %1011 = vmatprep.subr.mxu0 0.0
  %1012 = vmatpush1.msra.mxu0 0.0
  %1013 = vmatprep.subr.mxu0 0.0
  %1014 = vmatpush1.msra.mxu0 0.0
  %1015 = vmatprep.subr.mxu0 0.0
  %1016 = vmatpush1.msra.mxu0 0.0
  %1017 = vmatprep.subr.mxu0 0.0
  %1018 = vmatpush1.msra.mxu0 0.0
  %1019 = vmatprep.subr.mxu0 0.0
  %1020 = vmatpush1.msra.mxu0 0.0
  %1021 = vmatprep.subr.mxu0 0.0
  %1022 = vmatpush1.msra.mxu0 0.0
  %1023 = vmatprep.subr.mxu0 0.0
  %1024 = vmatpush1.msra.mxu0 0.0
  %1025 = vmatprep.subr.mxu0 0.0
  %1026 = vmatpush1.msra.mxu0 0.0
  %1027 = vmatprep.subr.mxu0 0.0
  %1028 = vmatpush1.msra.mxu0 0.0
  %1029 = vmatprep.mubr.f32.mxu0 0.0
  %1030 = vmatmul.mubr.f32.gmra.mrb[0].mxu0 %v42
  %v1031 = vpop.f32.mrb[0].mxu0
  %v1032 = vadd.f32 %v949, %v1031
  %v1033 = vpop.f32.mrb[0].mxu0
  %1034 = vmatprep.mubr.f32.mxu0 0.0
  %1035 = vmatmul.mubr.f32.gmra.mrb[0].mxu0 %v45
  %v1036 = vpop.f32.mrb[0].mxu0
  %v1037 = vadd.f32 %v950, %v1036
  %v1038 = vpop.f32.mrb[0].mxu0
  %1039 = vmatprep.mubr.f32.mxu0 0.0
  %1040 = vmatmul.mubr.f32.gmra.mrb[0].mxu0 %v48
  %v1041 = vpop.f32.mrb[0].mxu0
  %v1042 = vadd.f32 %v951, %v1041
  %v1043 = vpop.f32.mrb[0].mxu0
  %1044 = vmatprep.mubr.f32.mxu0 0.0
  %1045 = vmatmul.mubr.f32.gmra.mrb[0].mxu0 %v51
  %v1046 = vpop.f32.mrb[0].mxu0
  %v1047 = vadd.f32 %v952, %v1046
  %v1048 = vpop.f32.mrb[0].mxu0
  %1049 = vmatprep.mubr.f32.mxu0 0.0
  %1050 = vmatmul.mubr.f32.gmra.mrb[0].mxu0 %v54
  %v1051 = vpop.f32.mrb[0].mxu0
  %v1052 = vadd.f32 %v953, %v1051
  %v1053 = vpop.f32.mrb[0].mxu0
  %1054 = vmatprep.mubr.f32.mxu0 0.0
  %1055 = vmatmul.mubr.f32.gmra.mrb[0].mxu0 %v57
  %v1056 = vpop.f32.mrb[0].mxu0
  %v1057 = vadd.f32 %v954, %v1056
  %v1058 = vpop.f32.mrb[0].mxu0
  %1059 = vmatprep.mubr.f32.mxu0 0.0
  %1060 = vmatmul.mubr.f32.gmra.mrb[0].mxu0 %v60
  %v1061 = vpop.f32.mrb[0].mxu0
  %v1062 = vadd.f32 %v955, %v1061
  %v1063 = vpop.f32.mrb[0].mxu0
  %1064 = vmatprep.mubr.f32.mxu0 0.0
  %1065 = vmatmul.mubr.f32.gmra.mrb[0].mxu0 %v63
  %v1066 = vpop.f32.mrb[0].mxu0
  %v1067 = vadd.f32 %v956, %v1066
  %v1068 = vpop.f32.mrb[0].mxu0
  %1069 = vmatprep.mubr.f32.mxu0 0.0
  %1070 = vmatmul.mubr.f32.gmra.mrb[0].mxu0 %v66
  %v1071 = vpop.f32.mrb[0].mxu0
  %v1072 = vadd.f32 %v957, %v1071
  %v1073 = vpop.f32.mrb[0].mxu0
  %1074 = vmatprep.mubr.f32.mxu0 0.0
  %1075 = vmatmul.mubr.f32.gmra.mrb[0].mxu0 %v69
  %v1076 = vpop.f32.mrb[0].mxu0
  %v1077 = vadd.f32 %v958, %v1076
  %v1078 = vpop.f32.mrb[0].mxu0
  %1079 = vmatprep.mubr.f32.mxu0 0.0
  %1080 = vmatmul.mubr.f32.gmra.mrb[0].mxu0 %v72
  %v1081 = vpop.f32.mrb[0].mxu0
  %v1082 = vadd.f32 %v959, %v1081
  %v1083 = vpop.f32.mrb[0].mxu0
  %1084 = vmatprep.mubr.f32.mxu0 0.0
  %1085 = vmatmul.mubr.f32.gmra.mrb[0].mxu0 %v75
  %v1086 = vpop.f32.mrb[0].mxu0
  %v1087 = vadd.f32 %v960, %v1086
  %v1088 = vpop.f32.mrb[0].mxu0
  %1089 = vmatprep.mubr.f32.mxu0 0.0
  %1090 = vmatmul.mubr.f32.gmra.mrb[0].mxu0 %v78
  %v1091 = vpop.f32.mrb[0].mxu0
  %v1092 = vadd.f32 %v961, %v1091
  %v1093 = vpop.f32.mrb[0].mxu0
  %1094 = vmatprep.mubr.f32.mxu0 0.0
  %1095 = vmatmul.mubr.f32.gmra.mrb[0].mxu0 %v81
  %v1096 = vpop.f32.mrb[0].mxu0
  %v1097 = vadd.f32 %v962, %v1096
  %v1098 = vpop.f32.mrb[0].mxu0
  %1099 = vmatprep.mubr.f32.mxu0 0.0
  %1100 = vmatmul.mubr.f32.gmra.mrb[0].mxu0 %v84
  %v1101 = vpop.f32.mrb[0].mxu0
  %v1102 = vadd.f32 %v963, %v1101
  %v1103 = vpop.f32.mrb[0].mxu0
  %1104 = vmatprep.mubr.f32.mxu0 0.0
  %1105 = vmatmul.mubr.f32.gmra.mrb[0].mxu0 %v87
  %v1106 = vpop.f32.mrb[0].mxu0
  %v1107 = vadd.f32 %v964, %v1106
  %v1108 = vpop.f32.mrb[0].mxu0
  %1109 = vdwg.mxu0
  %v1110 = vadd.f32 %v1032, %v915
  %v1111 = vadd.f32 %v1037, %v915
  %v1112 = vadd.f32 %v1042, %v915
  %v1113 = vadd.f32 %v1047, %v915
  %v1114 = vadd.f32 %v1052, %v915
  %v1115 = vadd.f32 %v1057, %v915
  %v1116 = vadd.f32 %v1062, %v915
  %v1117 = vadd.f32 %v1067, %v915
  %v1118 = vadd.f32 %v1072, %v915
  %v1119 = vadd.f32 %v1077, %v915
  %v1120 = vadd.f32 %v1082, %v915
  %v1121 = vadd.f32 %v1087, %v915
  %v1122 = vadd.f32 %v1092, %v915
  %v1123 = vadd.f32 %v1097, %v915
  %v1124 = vadd.f32 %v1102, %v915
  %v1125 = vadd.f32 %v1107, %v915
  %v1126 = vld [vmem:[%s3] sm:$0x1]
  %v1127 = vld [vmem:[%s4] sm:$0x1]
  %vm1128 = vcmask 130048
  %v1129 = vsel %vm1128, %v917, 0.0
  %1130 = vadd.xlane.f32.xlu0 %v1129
  %v1131 = vpop.xlane.xlu0 %1130
  %v1132 = vsel %vm1128, %v918, 0.0
  %1133 = vadd.xlane.f32.xlu0 %v1132
  %v1134 = vpop.xlane.xlu0 %1133
  %v1135 = vsel %vm1128, %v919, 0.0
  %1136 = vadd.xlane.f32.xlu0 %v1135
  %v1137 = vpop.xlane.xlu0 %1136
  %v1138 = vsel %vm1128, %v920, 0.0
  %1139 = vadd.xlane.f32.xlu0 %v1138
  %v1140 = vpop.xlane.xlu0 %1139
  %v1141 = vsel %vm1128, %v921, 0.0
  %1142 = vadd.xlane.f32.xlu0 %v1141
  %v1143 = vpop.xlane.xlu0 %1142
  %v1144 = vsel %vm1128, %v922, 0.0
  %1145 = vadd.xlane.f32.xlu0 %v1144
  %v1146 = vpop.xlane.xlu0 %1145
  %v1147 = vsel %vm1128, %v923, 0.0
  %1148 = vadd.xlane.f32.xlu0 %v1147
  %v1149 = vpop.xlane.xlu0 %1148
  %v1150 = vsel %vm1128, %v924, 0.0
  %1151 = vadd.xlane.f32.xlu0 %v1150
  %v1152 = vpop.xlane.xlu0 %1151
  %v1153 = vsel %vm1128, %v925, 0.0
  %1154 = vadd.xlane.f32.xlu0 %v1153
  %v1155 = vpop.xlane.xlu0 %1154
  %v1156 = vsel %vm1128, %v926, 0.0
  %1157 = vadd.xlane.f32.xlu0 %v1156
  %v1158 = vpop.xlane.xlu0 %1157
  %v1159 = vsel %vm1128, %v927, 0.0
  %1160 = vadd.xlane.f32.xlu0 %v1159
  %v1161 = vpop.xlane.xlu0 %1160
  %v1162 = vsel %vm1128, %v928, 0.0
  %1163 = vadd.xlane.f32.xlu0 %v1162
  %v1164 = vpop.xlane.xlu0 %1163
  %v1165 = vsel %vm1128, %v929, 0.0
  %1166 = vadd.xlane.f32.xlu0 %v1165
  %v1167 = vpop.xlane.xlu0 %1166
  %v1168 = vsel %vm1128, %v930, 0.0
  %1169 = vadd.xlane.f32.xlu0 %v1168
  %v1170 = vpop.xlane.xlu0 %1169
  %v1171 = vsel %vm1128, %v931, 0.0
  %1172 = vadd.xlane.f32.xlu0 %v1171
  %v1173 = vpop.xlane.xlu0 %1172
  %v1174 = vsel %vm1128, %v932, 0.0
  %1175 = vadd.xlane.f32.xlu0 %v1174
  %v1176 = vpop.xlane.xlu0 %1175
  %v1177 = vrcp.pop 16.0
  %v1178 = vmul.f32 %v1131, %v1177
  %v1179 = vmul.f32 %v1134, %v1177
  %v1180 = vmul.f32 %v1137, %v1177
  %v1181 = vmul.f32 %v1140, %v1177
  %v1182 = vmul.f32 %v1143, %v1177
  %v1183 = vmul.f32 %v1146, %v1177
  %v1184 = vmul.f32 %v1149, %v1177
  %v1185 = vmul.f32 %v1152, %v1177
  %v1186 = vmul.f32 %v1155, %v1177
  %v1187 = vmul.f32 %v1158, %v1177
  %v1188 = vmul.f32 %v1161, %v1177
  %v1189 = vmul.f32 %v1164, %v1177
  %v1190 = vmul.f32 %v1167, %v1177
  %v1191 = vmul.f32 %v1170, %v1177
  %v1192 = vmul.f32 %v1173, %v1177
  %v1193 = vmul.f32 %v1176, %v1177
  %v1194 = vsub.f32 %v917, %v1178
  %v1195 = vsub.f32 %v918, %v1179
  %v1196 = vsub.f32 %v919, %v1180
  %v1197 = vsub.f32 %v920, %v1181
  %v1198 = vsub.f32 %v921, %v1182
  %v1199 = vsub.f32 %v922, %v1183
  %v1200 = vsub.f32 %v923, %v1184
  %v1201 = vsub.f32 %v924, %v1185
  %v1202 = vsub.f32 %v925, %v1186
  %v1203 = vsub.f32 %v926, %v1187
  %v1204 = vsub.f32 %v927, %v1188
  %v1205 = vsub.f32 %v928, %v1189
  %v1206 = vsub.f32 %v929, %v1190
  %v1207 = vsub.f32 %v930, %v1191
  %v1208 = vsub.f32 %v931, %v1192
  %v1209 = vsub.f32 %v932, %v1193
  %v1210 = vmul.f32 %v1194, %v1194
  %v1211 = vmul.f32 %v1195, %v1195
  %v1212 = vmul.f32 %v1196, %v1196
  %v1213 = vmul.f32 %v1197, %v1197
  %v1214 = vmul.f32 %v1198, %v1198
  %v1215 = vmul.f32 %v1199, %v1199
  %v1216 = vmul.f32 %v1200, %v1200
  %v1217 = vmul.f32 %v1201, %v1201
  %v1218 = vmul.f32 %v1202, %v1202
  %v1219 = vmul.f32 %v1203, %v1203
  %v1220 = vmul.f32 %v1204, %v1204
  %v1221 = vmul.f32 %v1205, %v1205
  %v1222 = vmul.f32 %v1206, %v1206
  %v1223 = vmul.f32 %v1207, %v1207
  %v1224 = vmul.f32 %v1208, %v1208
  %v1225 = vmul.f32 %v1209, %v1209
  %v1226 = vsel %vm1128, %v1210, 0.0
  %1227 = vadd.xlane.f32.xlu0 %v1226
  %v1228 = vpop.xlane.xlu0 %1227
  %v1229 = vsel %vm1128, %v1211, 0.0
  %1230 = vadd.xlane.f32.xlu0 %v1229
  %v1231 = vpop.xlane.xlu0 %1230
  %v1232 = vsel %vm1128, %v1212, 0.0
  %1233 = vadd.xlane.f32.xlu0 %v1232
  %v1234 = vpop.xlane.xlu0 %1233
  %v1235 = vsel %vm1128, %v1213, 0.0
  %1236 = vadd.xlane.f32.xlu0 %v1235
  %v1237 = vpop.xlane.xlu0 %1236
  %v1238 = vsel %vm1128, %v1214, 0.0
  %1239 = vadd.xlane.f32.xlu0 %v1238
  %v1240 = vpop.xlane.xlu0 %1239
  %v1241 = vsel %vm1128, %v1215, 0.0
  %1242 = vadd.xlane.f32.xlu0 %v1241
  %v1243 = vpop.xlane.xlu0 %1242
  %v1244 = vsel %vm1128, %v1216, 0.0
  %1245 = vadd.xlane.f32.xlu0 %v1244
  %v1246 = vpop.xlane.xlu0 %1245
  %v1247 = vsel %vm1128, %v1217, 0.0
  %1248 = vadd.xlane.f32.xlu0 %v1247
  %v1249 = vpop.xlane.xlu0 %1248
  %v1250 = vsel %vm1128, %v1218, 0.0
  %1251 = vadd.xlane.f32.xlu0 %v1250
  %v1252 = vpop.xlane.xlu0 %1251
  %v1253 = vsel %vm1128, %v1219, 0.0
  %1254 = vadd.xlane.f32.xlu0 %v1253
  %v1255 = vpop.xlane.xlu0 %1254
  %v1256 = vsel %vm1128, %v1220, 0.0
  %1257 = vadd.xlane.f32.xlu0 %v1256
  %v1258 = vpop.xlane.xlu0 %1257
  %v1259 = vsel %vm1128, %v1221, 0.0
  %1260 = vadd.xlane.f32.xlu0 %v1259
  %v1261 = vpop.xlane.xlu0 %1260
  %v1262 = vsel %vm1128, %v1222, 0.0
  %1263 = vadd.xlane.f32.xlu0 %v1262
  %v1264 = vpop.xlane.xlu0 %1263
  %v1265 = vsel %vm1128, %v1223, 0.0
  %1266 = vadd.xlane.f32.xlu0 %v1265
  %v1267 = vpop.xlane.xlu0 %1266
  %v1268 = vsel %vm1128, %v1224, 0.0
  %1269 = vadd.xlane.f32.xlu0 %v1268
  %v1270 = vpop.xlane.xlu0 %1269
  %v1271 = vsel %vm1128, %v1225, 0.0
  %1272 = vadd.xlane.f32.xlu0 %v1271
  %v1273 = vpop.xlane.xlu0 %1272
  %v1274 = vmul.f32 %v1228, %v1177
  %v1275 = vmul.f32 %v1231, %v1177
  %v1276 = vmul.f32 %v1234, %v1177
  %v1277 = vmul.f32 %v1237, %v1177
  %v1278 = vmul.f32 %v1240, %v1177
  %v1279 = vmul.f32 %v1243, %v1177
  %v1280 = vmul.f32 %v1246, %v1177
  %v1281 = vmul.f32 %v1249, %v1177
  %v1282 = vmul.f32 %v1252, %v1177
  %v1283 = vmul.f32 %v1255, %v1177
  %v1284 = vmul.f32 %v1258, %v1177
  %v1285 = vmul.f32 %v1261, %v1177
  %v1286 = vmul.f32 %v1264, %v1177
  %v1287 = vmul.f32 %v1267, %v1177
  %v1288 = vmul.f32 %v1270, %v1177
  %v1289 = vmul.f32 %v1273, %v1177
  %v1290 = vadd.f32 %v1274, 1e-06
  %v1291 = vadd.f32 %v1275, 1e-06
  %v1292 = vadd.f32 %v1276, 1e-06
  %v1293 = vadd.f32 %v1277, 1e-06
  %v1294 = vadd.f32 %v1278, 1e-06
  %v1295 = vadd.f32 %v1279, 1e-06
  %v1296 = vadd.f32 %v1280, 1e-06
  %v1297 = vadd.f32 %v1281, 1e-06
  %v1298 = vadd.f32 %v1282, 1e-06
  %v1299 = vadd.f32 %v1283, 1e-06
  %v1300 = vadd.f32 %v1284, 1e-06
  %v1301 = vadd.f32 %v1285, 1e-06
  %v1302 = vadd.f32 %v1286, 1e-06
  %v1303 = vadd.f32 %v1287, 1e-06
  %v1304 = vadd.f32 %v1288, 1e-06
  %v1305 = vadd.f32 %v1289, 1e-06
  %v1306 = vrsqrt.pop %v1290
  %v1307 = vrsqrt.pop %v1291
  %v1308 = vrsqrt.pop %v1292
  %v1309 = vrsqrt.pop %v1293
  %v1310 = vrsqrt.pop %v1294
  %v1311 = vrsqrt.pop %v1295
  %v1312 = vrsqrt.pop %v1296
  %v1313 = vrsqrt.pop %v1297
  %v1314 = vrsqrt.pop %v1298
  %v1315 = vrsqrt.pop %v1299
  %v1316 = vrsqrt.pop %v1300
  %v1317 = vrsqrt.pop %v1301
  %v1318 = vrsqrt.pop %v1302
  %v1319 = vrsqrt.pop %v1303
  %v1320 = vrsqrt.pop %v1304
  %v1321 = vrsqrt.pop %v1305
  %v1322 = vmul.f32 %v1194, %v1306
  %v1323 = vmul.f32 %v1195, %v1307
  %v1324 = vmul.f32 %v1196, %v1308
  %v1325 = vmul.f32 %v1197, %v1309
  %v1326 = vmul.f32 %v1198, %v1310
  %v1327 = vmul.f32 %v1199, %v1311
  %v1328 = vmul.f32 %v1200, %v1312
  %v1329 = vmul.f32 %v1201, %v1313
  %v1330 = vmul.f32 %v1202, %v1314
  %v1331 = vmul.f32 %v1203, %v1315
  %v1332 = vmul.f32 %v1204, %v1316
  %v1333 = vmul.f32 %v1205, %v1317
  %v1334 = vmul.f32 %v1206, %v1318
  %v1335 = vmul.f32 %v1207, %v1319
  %v1336 = vmul.f32 %v1208, %v1320
  %v1337 = vmul.f32 %v1209, %v1321
  %v1339 = vlaneseq
  %v1340 = vshrl.u32 %v1339, 7
  %v1341 = vsub.s32 0, %v1340
  %v1342 = vrot.slane %v1126, %v1341
  %v1344 = vmul.f32 %v1322, %v1342
  %v1345 = vmul.f32 %v1323, %v1342
  %v1346 = vmul.f32 %v1324, %v1342
  %v1347 = vmul.f32 %v1325, %v1342
  %v1348 = vmul.f32 %v1326, %v1342
  %v1349 = vmul.f32 %v1327, %v1342
  %v1350 = vmul.f32 %v1328, %v1342
  %v1351 = vmul.f32 %v1329, %v1342
  %v1352 = vmul.f32 %v1330, %v1342
  %v1353 = vmul.f32 %v1331, %v1342
  %v1354 = vmul.f32 %v1332, %v1342
  %v1355 = vmul.f32 %v1333, %v1342
  %v1356 = vmul.f32 %v1334, %v1342
  %v1357 = vmul.f32 %v1335, %v1342
  %v1358 = vmul.f32 %v1336, %v1342
  %v1359 = vmul.f32 %v1337, %v1342
  %v1361 = vlaneseq
  %v1362 = vshrl.u32 %v1361, 7
  %v1363 = vsub.s32 0, %v1362
  %v1364 = vrot.slane %v1127, %v1363
  %v1366 = vadd.f32 %v1344, %v1364
  %v1367 = vadd.f32 %v1345, %v1364
  %v1368 = vadd.f32 %v1346, %v1364
  %v1369 = vadd.f32 %v1347, %v1364
  %v1370 = vadd.f32 %v1348, %v1364
  %v1371 = vadd.f32 %v1349, %v1364
  %v1372 = vadd.f32 %v1350, %v1364
  %v1373 = vadd.f32 %v1351, %v1364
  %v1374 = vadd.f32 %v1352, %v1364
  %v1375 = vadd.f32 %v1353, %v1364
  %v1376 = vadd.f32 %v1354, %v1364
  %v1377 = vadd.f32 %v1355, %v1364
  %v1378 = vadd.f32 %v1356, %v1364
  %v1379 = vadd.f32 %v1357, %v1364
  %v1380 = vadd.f32 %v1358, %v1364
  %v1381 = vadd.f32 %v1359, %v1364
  %v1382 = vmul.f32 %v1366, 0.5
  %v1383 = vmul.f32 %v1367, 0.5
  %v1384 = vmul.f32 %v1368, 0.5
  %v1385 = vmul.f32 %v1369, 0.5
  %v1386 = vmul.f32 %v1370, 0.5
  %v1387 = vmul.f32 %v1371, 0.5
  %v1388 = vmul.f32 %v1372, 0.5
  %v1389 = vmul.f32 %v1373, 0.5
  %v1390 = vmul.f32 %v1374, 0.5
  %v1391 = vmul.f32 %v1375, 0.5
  %v1392 = vmul.f32 %v1376, 0.5
  %v1393 = vmul.f32 %v1377, 0.5
  %v1394 = vmul.f32 %v1378, 0.5
  %v1395 = vmul.f32 %v1379, 0.5
  %v1396 = vmul.f32 %v1380, 0.5
  %v1397 = vmul.f32 %v1381, 0.5
  %v1398 = vmul.f32 %v1366, 0.044715
  %v1399 = vmul.f32 %v1367, 0.044715
  %v1400 = vmul.f32 %v1368, 0.044715
  %v1401 = vmul.f32 %v1369, 0.044715
  %v1402 = vmul.f32 %v1370, 0.044715
  %v1403 = vmul.f32 %v1371, 0.044715
  %v1404 = vmul.f32 %v1372, 0.044715
  %v1405 = vmul.f32 %v1373, 0.044715
  %v1406 = vmul.f32 %v1374, 0.044715
  %v1407 = vmul.f32 %v1375, 0.044715
  %v1408 = vmul.f32 %v1376, 0.044715
  %v1409 = vmul.f32 %v1377, 0.044715
  %v1410 = vmul.f32 %v1378, 0.044715
  %v1411 = vmul.f32 %v1379, 0.044715
  %v1412 = vmul.f32 %v1380, 0.044715
  %v1413 = vmul.f32 %v1381, 0.044715
  %v1414 = vmul.f32 %v1398, %v1366
  %v1415 = vmul.f32 %v1399, %v1367
  %v1416 = vmul.f32 %v1400, %v1368
  %v1417 = vmul.f32 %v1401, %v1369
  %v1418 = vmul.f32 %v1402, %v1370
  %v1419 = vmul.f32 %v1403, %v1371
  %v1420 = vmul.f32 %v1404, %v1372
  %v1421 = vmul.f32 %v1405, %v1373
  %v1422 = vmul.f32 %v1406, %v1374
  %v1423 = vmul.f32 %v1407, %v1375
  %v1424 = vmul.f32 %v1408, %v1376
  %v1425 = vmul.f32 %v1409, %v1377
  %v1426 = vmul.f32 %v1410, %v1378
  %v1427 = vmul.f32 %v1411, %v1379
  %v1428 = vmul.f32 %v1412, %v1380
  %v1429 = vmul.f32 %v1413, %v1381
  %v1430 = vmul.f32 %v1414, %v1366
  %v1431 = vmul.f32 %v1415, %v1367
  %v1432 = vmul.f32 %v1416, %v1368
  %v1433 = vmul.f32 %v1417, %v1369
  %v1434 = vmul.f32 %v1418, %v1370
  %v1435 = vmul.f32 %v1419, %v1371
  %v1436 = vmul.f32 %v1420, %v1372
  %v1437 = vmul.f32 %v1421, %v1373
  %v1438 = vmul.f32 %v1422, %v1374
  %v1439 = vmul.f32 %v1423, %v1375
  %v1440 = vmul.f32 %v1424, %v1376
  %v1441 = vmul.f32 %v1425, %v1377
  %v1442 = vmul.f32 %v1426, %v1378
  %v1443 = vmul.f32 %v1427, %v1379
  %v1444 = vmul.f32 %v1428, %v1380
  %v1445 = vmul.f32 %v1429, %v1381
  %v1446 = vadd.f32 %v1366, %v1430
  %v1447 = vadd.f32 %v1367, %v1431
  %v1448 = vadd.f32 %v1368, %v1432
  %v1449 = vadd.f32 %v1369, %v1433
  %v1450 = vadd.f32 %v1370, %v1434
  %v1451 = vadd.f32 %v1371, %v1435
  %v1452 = vadd.f32 %v1372, %v1436
  %v1453 = vadd.f32 %v1373, %v1437
  %v1454 = vadd.f32 %v1374, %v1438
  %v1455 = vadd.f32 %v1375, %v1439
  %v1456 = vadd.f32 %v1376, %v1440
  %v1457 = vadd.f32 %v1377, %v1441
  %v1458 = vadd.f32 %v1378, %v1442
  %v1459 = vadd.f32 %v1379, %v1443
  %v1460 = vadd.f32 %v1380, %v1444
  %v1461 = vadd.f32 %v1381, %v1445
  %v1462 = vmul.f32 %v1446, 0.7978846
  %v1463 = vmul.f32 %v1447, 0.7978846
  %v1464 = vmul.f32 %v1448, 0.7978846
  %v1465 = vmul.f32 %v1449, 0.7978846
  %v1466 = vmul.f32 %v1450, 0.7978846
  %v1467 = vmul.f32 %v1451, 0.7978846
  %v1468 = vmul.f32 %v1452, 0.7978846
  %v1469 = vmul.f32 %v1453, 0.7978846
  %v1470 = vmul.f32 %v1454, 0.7978846
  %v1471 = vmul.f32 %v1455, 0.7978846
  %v1472 = vmul.f32 %v1456, 0.7978846
  %v1473 = vmul.f32 %v1457, 0.7978846
  %v1474 = vmul.f32 %v1458, 0.7978846
  %v1475 = vmul.f32 %v1459, 0.7978846
  %v1476 = vmul.f32 %v1460, 0.7978846
  %v1477 = vmul.f32 %v1461, 0.7978846
  %v1478 = vtanh.pop %v1462
  %v1479 = vtanh.pop %v1463
  %v1480 = vtanh.pop %v1464
  %v1481 = vtanh.pop %v1465
  %v1482 = vtanh.pop %v1466
  %v1483 = vtanh.pop %v1467
  %v1484 = vtanh.pop %v1468
  %v1485 = vtanh.pop %v1469
  %v1486 = vtanh.pop %v1470
  %v1487 = vtanh.pop %v1471
  %v1488 = vtanh.pop %v1472
  %v1489 = vtanh.pop %v1473
  %v1490 = vtanh.pop %v1474
  %v1491 = vtanh.pop %v1475
  %v1492 = vtanh.pop %v1476
  %v1493 = vtanh.pop %v1477
  %v1494 = vadd.f32 %v1478, 1.0
  %v1495 = vadd.f32 %v1479, 1.0
  %v1496 = vadd.f32 %v1480, 1.0
  %v1497 = vadd.f32 %v1481, 1.0
  %v1498 = vadd.f32 %v1482, 1.0
  %v1499 = vadd.f32 %v1483, 1.0
  %v1500 = vadd.f32 %v1484, 1.0
  %v1501 = vadd.f32 %v1485, 1.0
  %v1502 = vadd.f32 %v1486, 1.0
  %v1503 = vadd.f32 %v1487, 1.0
  %v1504 = vadd.f32 %v1488, 1.0
  %v1505 = vadd.f32 %v1489, 1.0
  %v1506 = vadd.f32 %v1490, 1.0
  %v1507 = vadd.f32 %v1491, 1.0
  %v1508 = vadd.f32 %v1492, 1.0
  %v1509 = vadd.f32 %v1493, 1.0
  %v1510 = vmul.f32 %v1382, %v1494
  %v1511 = vmul.f32 %v1383, %v1495
  %v1512 = vmul.f32 %v1384, %v1496
  %v1513 = vmul.f32 %v1385, %v1497
  %v1514 = vmul.f32 %v1386, %v1498
  %v1515 = vmul.f32 %v1387, %v1499
  %v1516 = vmul.f32 %v1388, %v1500
  %v1517 = vmul.f32 %v1389, %v1501
  %v1518 = vmul.f32 %v1390, %v1502
  %v1519 = vmul.f32 %v1391, %v1503
  %v1520 = vmul.f32 %v1392, %v1504
  %v1521 = vmul.f32 %v1393, %v1505
  %v1522 = vmul.f32 %v1394, %v1506
  %v1523 = vmul.f32 %v1395, %v1507
  %v1524 = vmul.f32 %v1396, %v1508
  %v1525 = vmul.f32 %v1397, %v1509
  %1526 = vst.msk [vmem:[%s5] sm:$0xff] %vm1128, %v1510
  %1527 = vst.msk [vmem:[%s5 + $0x8] sm:$0xff] %vm1128, %v1511
  %1528 = vst.msk [vmem:[%s5 + $0x10] sm:$0xff] %vm1128, %v1512
  %1529 = vst.msk [vmem:[%s5 + $0x18] sm:$0xff] %vm1128, %v1513
  %1530 = vst.msk [vmem:[%s5 + $0x20] sm:$0xff] %vm1128, %v1514
  %1531 = vst.msk [vmem:[%s5 + $0x28] sm:$0xff] %vm1128, %v1515
  %1532 = vst.msk [vmem:[%s5 + $0x30] sm:$0xff] %vm1128, %v1516
  %1533 = vst.msk [vmem:[%s5 + $0x38] sm:$0xff] %vm1128, %v1517
  %1534 = vst.msk [vmem:[%s5 + $0x40] sm:$0xff] %vm1128, %v1518
  %1535 = vst.msk [vmem:[%s5 + $0x48] sm:$0xff] %vm1128, %v1519
  %1536 = vst.msk [vmem:[%s5 + $0x50] sm:$0xff] %vm1128, %v1520
  %1537 = vst.msk [vmem:[%s5 + $0x58] sm:$0xff] %vm1128, %v1521
  %1538 = vst.msk [vmem:[%s5 + $0x60] sm:$0xff] %vm1128, %v1522
  %1539 = vst.msk [vmem:[%s5 + $0x68] sm:$0xff] %vm1128, %v1523
  %1540 = vst.msk [vmem:[%s5 + $0x70] sm:$0xff] %vm1128, %v1524
  %1541 = vst.msk [vmem:[%s5 + $0x78] sm:$0xff] %vm1128, %v1525
  %v1542 = vsel %vm1128, %v1110, 0.0
  %1543 = vadd.xlane.f32.xlu0 %v1542
  %v1544 = vpop.xlane.xlu0 %1543
  %v1545 = vsel %vm1128, %v1111, 0.0
  %1546 = vadd.xlane.f32.xlu0 %v1545
  %v1547 = vpop.xlane.xlu0 %1546
  %v1548 = vsel %vm1128, %v1112, 0.0
  %1549 = vadd.xlane.f32.xlu0 %v1548
  %v1550 = vpop.xlane.xlu0 %1549
  %v1551 = vsel %vm1128, %v1113, 0.0
  %1552 = vadd.xlane.f32.xlu0 %v1551
  %v1553 = vpop.xlane.xlu0 %1552
  %v1554 = vsel %vm1128, %v1114, 0.0
  %1555 = vadd.xlane.f32.xlu0 %v1554
  %v1556 = vpop.xlane.xlu0 %1555
  %v1557 = vsel %vm1128, %v1115, 0.0
  %1558 = vadd.xlane.f32.xlu0 %v1557
  %v1559 = vpop.xlane.xlu0 %1558
  %v1560 = vsel %vm1128, %v1116, 0.0
  %1561 = vadd.xlane.f32.xlu0 %v1560
  %v1562 = vpop.xlane.xlu0 %1561
  %v1563 = vsel %vm1128, %v1117, 0.0
  %1564 = vadd.xlane.f32.xlu0 %v1563
  %v1565 = vpop.xlane.xlu0 %1564
  %v1566 = vsel %vm1128, %v1118, 0.0
  %1567 = vadd.xlane.f32.xlu0 %v1566
  %v1568 = vpop.xlane.xlu0 %1567
  %v1569 = vsel %vm1128, %v1119, 0.0
  %1570 = vadd.xlane.f32.xlu0 %v1569
  %v1571 = vpop.xlane.xlu0 %1570
  %v1572 = vsel %vm1128, %v1120, 0.0
  %1573 = vadd.xlane.f32.xlu0 %v1572
  %v1574 = vpop.xlane.xlu0 %1573
  %v1575 = vsel %vm1128, %v1121, 0.0
  %1576 = vadd.xlane.f32.xlu0 %v1575
  %v1577 = vpop.xlane.xlu0 %1576
  %v1578 = vsel %vm1128, %v1122, 0.0
  %1579 = vadd.xlane.f32.xlu0 %v1578
  %v1580 = vpop.xlane.xlu0 %1579
  %v1581 = vsel %vm1128, %v1123, 0.0
  %1582 = vadd.xlane.f32.xlu0 %v1581
  %v1583 = vpop.xlane.xlu0 %1582
  %v1584 = vsel %vm1128, %v1124, 0.0
  %1585 = vadd.xlane.f32.xlu0 %v1584
  %v1586 = vpop.xlane.xlu0 %1585
  %v1587 = vsel %vm1128, %v1125, 0.0
  %1588 = vadd.xlane.f32.xlu0 %v1587
  %v1589 = vpop.xlane.xlu0 %1588
  %v1590 = vmul.f32 %v1544, %v1177
  %v1591 = vmul.f32 %v1547, %v1177
  %v1592 = vmul.f32 %v1550, %v1177
  %v1593 = vmul.f32 %v1553, %v1177
  %v1594 = vmul.f32 %v1556, %v1177
  %v1595 = vmul.f32 %v1559, %v1177
  %v1596 = vmul.f32 %v1562, %v1177
  %v1597 = vmul.f32 %v1565, %v1177
  %v1598 = vmul.f32 %v1568, %v1177
  %v1599 = vmul.f32 %v1571, %v1177
  %v1600 = vmul.f32 %v1574, %v1177
  %v1601 = vmul.f32 %v1577, %v1177
  %v1602 = vmul.f32 %v1580, %v1177
  %v1603 = vmul.f32 %v1583, %v1177
  %v1604 = vmul.f32 %v1586, %v1177
  %v1605 = vmul.f32 %v1589, %v1177
  %v1606 = vsub.f32 %v1110, %v1590
  %v1607 = vsub.f32 %v1111, %v1591
  %v1608 = vsub.f32 %v1112, %v1592
  %v1609 = vsub.f32 %v1113, %v1593
  %v1610 = vsub.f32 %v1114, %v1594
  %v1611 = vsub.f32 %v1115, %v1595
  %v1612 = vsub.f32 %v1116, %v1596
  %v1613 = vsub.f32 %v1117, %v1597
  %v1614 = vsub.f32 %v1118, %v1598
  %v1615 = vsub.f32 %v1119, %v1599
  %v1616 = vsub.f32 %v1120, %v1600
  %v1617 = vsub.f32 %v1121, %v1601
  %v1618 = vsub.f32 %v1122, %v1602
  %v1619 = vsub.f32 %v1123, %v1603
  %v1620 = vsub.f32 %v1124, %v1604
  %v1621 = vsub.f32 %v1125, %v1605
  %v1622 = vmul.f32 %v1606, %v1606
  %v1623 = vmul.f32 %v1607, %v1607
  %v1624 = vmul.f32 %v1608, %v1608
  %v1625 = vmul.f32 %v1609, %v1609
  %v1626 = vmul.f32 %v1610, %v1610
  %v1627 = vmul.f32 %v1611, %v1611
  %v1628 = vmul.f32 %v1612, %v1612
  %v1629 = vmul.f32 %v1613, %v1613
  %v1630 = vmul.f32 %v1614, %v1614
  %v1631 = vmul.f32 %v1615, %v1615
  %v1632 = vmul.f32 %v1616, %v1616
  %v1633 = vmul.f32 %v1617, %v1617
  %v1634 = vmul.f32 %v1618, %v1618
  %v1635 = vmul.f32 %v1619, %v1619
  %v1636 = vmul.f32 %v1620, %v1620
  %v1637 = vmul.f32 %v1621, %v1621
  %v1638 = vsel %vm1128, %v1622, 0.0
  %1639 = vadd.xlane.f32.xlu0 %v1638
  %v1640 = vpop.xlane.xlu0 %1639
  %v1641 = vsel %vm1128, %v1623, 0.0
  %1642 = vadd.xlane.f32.xlu0 %v1641
  %v1643 = vpop.xlane.xlu0 %1642
  %v1644 = vsel %vm1128, %v1624, 0.0
  %1645 = vadd.xlane.f32.xlu0 %v1644
  %v1646 = vpop.xlane.xlu0 %1645
  %v1647 = vsel %vm1128, %v1625, 0.0
  %1648 = vadd.xlane.f32.xlu0 %v1647
  %v1649 = vpop.xlane.xlu0 %1648
  %v1650 = vsel %vm1128, %v1626, 0.0
  %1651 = vadd.xlane.f32.xlu0 %v1650
  %v1652 = vpop.xlane.xlu0 %1651
  %v1653 = vsel %vm1128, %v1627, 0.0
  %1654 = vadd.xlane.f32.xlu0 %v1653
  %v1655 = vpop.xlane.xlu0 %1654
  %v1656 = vsel %vm1128, %v1628, 0.0
  %1657 = vadd.xlane.f32.xlu0 %v1656
  %v1658 = vpop.xlane.xlu0 %1657
  %v1659 = vsel %vm1128, %v1629, 0.0
  %1660 = vadd.xlane.f32.xlu0 %v1659
  %v1661 = vpop.xlane.xlu0 %1660
  %v1662 = vsel %vm1128, %v1630, 0.0
  %1663 = vadd.xlane.f32.xlu0 %v1662
  %v1664 = vpop.xlane.xlu0 %1663
  %v1665 = vsel %vm1128, %v1631, 0.0
  %1666 = vadd.xlane.f32.xlu0 %v1665
  %v1667 = vpop.xlane.xlu0 %1666
  %v1668 = vsel %vm1128, %v1632, 0.0
  %1669 = vadd.xlane.f32.xlu0 %v1668
  %v1670 = vpop.xlane.xlu0 %1669
  %v1671 = vsel %vm1128, %v1633, 0.0
  %1672 = vadd.xlane.f32.xlu0 %v1671
  %v1673 = vpop.xlane.xlu0 %1672
  %v1674 = vsel %vm1128, %v1634, 0.0
  %1675 = vadd.xlane.f32.xlu0 %v1674
  %v1676 = vpop.xlane.xlu0 %1675
  %v1677 = vsel %vm1128, %v1635, 0.0
  %1678 = vadd.xlane.f32.xlu0 %v1677
  %v1679 = vpop.xlane.xlu0 %1678
  %v1680 = vsel %vm1128, %v1636, 0.0
  %1681 = vadd.xlane.f32.xlu0 %v1680
  %v1682 = vpop.xlane.xlu0 %1681
  %v1683 = vsel %vm1128, %v1637, 0.0
  %1684 = vadd.xlane.f32.xlu0 %v1683
  %v1685 = vpop.xlane.xlu0 %1684
  %v1686 = vmul.f32 %v1640, %v1177
  %v1687 = vmul.f32 %v1643, %v1177
  %v1688 = vmul.f32 %v1646, %v1177
  %v1689 = vmul.f32 %v1649, %v1177
  %v1690 = vmul.f32 %v1652, %v1177
  %v1691 = vmul.f32 %v1655, %v1177
  %v1692 = vmul.f32 %v1658, %v1177
  %v1693 = vmul.f32 %v1661, %v1177
  %v1694 = vmul.f32 %v1664, %v1177
  %v1695 = vmul.f32 %v1667, %v1177
  %v1696 = vmul.f32 %v1670, %v1177
  %v1697 = vmul.f32 %v1673, %v1177
  %v1698 = vmul.f32 %v1676, %v1177
  %v1699 = vmul.f32 %v1679, %v1177
  %v1700 = vmul.f32 %v1682, %v1177
  %v1701 = vmul.f32 %v1685, %v1177
  %v1702 = vadd.f32 %v1686, 1e-06
  %v1703 = vadd.f32 %v1687, 1e-06
  %v1704 = vadd.f32 %v1688, 1e-06
  %v1705 = vadd.f32 %v1689, 1e-06
  %v1706 = vadd.f32 %v1690, 1e-06
  %v1707 = vadd.f32 %v1691, 1e-06
  %v1708 = vadd.f32 %v1692, 1e-06
  %v1709 = vadd.f32 %v1693, 1e-06
  %v1710 = vadd.f32 %v1694, 1e-06
  %v1711 = vadd.f32 %v1695, 1e-06
  %v1712 = vadd.f32 %v1696, 1e-06
  %v1713 = vadd.f32 %v1697, 1e-06
  %v1714 = vadd.f32 %v1698, 1e-06
  %v1715 = vadd.f32 %v1699, 1e-06
  %v1716 = vadd.f32 %v1700, 1e-06
  %v1717 = vadd.f32 %v1701, 1e-06
  %v1718 = vrsqrt.pop %v1702
  %v1719 = vrsqrt.pop %v1703
  %v1720 = vrsqrt.pop %v1704
  %v1721 = vrsqrt.pop %v1705
  %v1722 = vrsqrt.pop %v1706
  %v1723 = vrsqrt.pop %v1707
  %v1724 = vrsqrt.pop %v1708
  %v1725 = vrsqrt.pop %v1709
  %v1726 = vrsqrt.pop %v1710
  %v1727 = vrsqrt.pop %v1711
  %v1728 = vrsqrt.pop %v1712
  %v1729 = vrsqrt.pop %v1713
  %v1730 = vrsqrt.pop %v1714
  %v1731 = vrsqrt.pop %v1715
  %v1732 = vrsqrt.pop %v1716
  %v1733 = vrsqrt.pop %v1717
  %v1734 = vmul.f32 %v1606, %v1718
  %v1735 = vmul.f32 %v1607, %v1719
  %v1736 = vmul.f32 %v1608, %v1720
  %v1737 = vmul.f32 %v1609, %v1721
  %v1738 = vmul.f32 %v1610, %v1722
  %v1739 = vmul.f32 %v1611, %v1723
  %v1740 = vmul.f32 %v1612, %v1724
  %v1741 = vmul.f32 %v1613, %v1725
  %v1742 = vmul.f32 %v1614, %v1726
  %v1743 = vmul.f32 %v1615, %v1727
  %v1744 = vmul.f32 %v1616, %v1728
  %v1745 = vmul.f32 %v1617, %v1729
  %v1746 = vmul.f32 %v1618, %v1730
  %v1747 = vmul.f32 %v1619, %v1731
  %v1748 = vmul.f32 %v1620, %v1732
  %v1749 = vmul.f32 %v1621, %v1733
  %v1750 = vmul.f32 %v1734, %v1342
  %v1751 = vmul.f32 %v1735, %v1342
  %v1752 = vmul.f32 %v1736, %v1342
  %v1753 = vmul.f32 %v1737, %v1342
  %v1754 = vmul.f32 %v1738, %v1342
  %v1755 = vmul.f32 %v1739, %v1342
  %v1756 = vmul.f32 %v1740, %v1342
  %v1757 = vmul.f32 %v1741, %v1342
  %v1758 = vmul.f32 %v1742, %v1342
  %v1759 = vmul.f32 %v1743, %v1342
  %v1760 = vmul.f32 %v1744, %v1342
  %v1761 = vmul.f32 %v1745, %v1342
  %v1762 = vmul.f32 %v1746, %v1342
  %v1763 = vmul.f32 %v1747, %v1342
  %v1764 = vmul.f32 %v1748, %v1342
  %v1765 = vmul.f32 %v1749, %v1342
  %v1766 = vadd.f32 %v1750, %v1364
  %v1767 = vadd.f32 %v1751, %v1364
  %v1768 = vadd.f32 %v1752, %v1364
  %v1769 = vadd.f32 %v1753, %v1364
  %v1770 = vadd.f32 %v1754, %v1364
  %v1771 = vadd.f32 %v1755, %v1364
  %v1772 = vadd.f32 %v1756, %v1364
  %v1773 = vadd.f32 %v1757, %v1364
  %v1774 = vadd.f32 %v1758, %v1364
  %v1775 = vadd.f32 %v1759, %v1364
  %v1776 = vadd.f32 %v1760, %v1364
  %v1777 = vadd.f32 %v1761, %v1364
  %v1778 = vadd.f32 %v1762, %v1364
  %v1779 = vadd.f32 %v1763, %v1364
  %v1780 = vadd.f32 %v1764, %v1364
  %v1781 = vadd.f32 %v1765, %v1364
  %v1782 = vmul.f32 %v1766, 0.5
  %v1783 = vmul.f32 %v1767, 0.5
  %v1784 = vmul.f32 %v1768, 0.5
  %v1785 = vmul.f32 %v1769, 0.5
  %v1786 = vmul.f32 %v1770, 0.5
  %v1787 = vmul.f32 %v1771, 0.5
  %v1788 = vmul.f32 %v1772, 0.5
  %v1789 = vmul.f32 %v1773, 0.5
  %v1790 = vmul.f32 %v1774, 0.5
  %v1791 = vmul.f32 %v1775, 0.5
  %v1792 = vmul.f32 %v1776, 0.5
  %v1793 = vmul.f32 %v1777, 0.5
  %v1794 = vmul.f32 %v1778, 0.5
  %v1795 = vmul.f32 %v1779, 0.5
  %v1796 = vmul.f32 %v1780, 0.5
  %v1797 = vmul.f32 %v1781, 0.5
  %v1798 = vmul.f32 %v1766, 0.044715
  %v1799 = vmul.f32 %v1767, 0.044715
  %v1800 = vmul.f32 %v1768, 0.044715
  %v1801 = vmul.f32 %v1769, 0.044715
  %v1802 = vmul.f32 %v1770, 0.044715
  %v1803 = vmul.f32 %v1771, 0.044715
  %v1804 = vmul.f32 %v1772, 0.044715
  %v1805 = vmul.f32 %v1773, 0.044715
  %v1806 = vmul.f32 %v1774, 0.044715
  %v1807 = vmul.f32 %v1775, 0.044715
  %v1808 = vmul.f32 %v1776, 0.044715
  %v1809 = vmul.f32 %v1777, 0.044715
  %v1810 = vmul.f32 %v1778, 0.044715
  %v1811 = vmul.f32 %v1779, 0.044715
  %v1812 = vmul.f32 %v1780, 0.044715
  %v1813 = vmul.f32 %v1781, 0.044715
  %v1814 = vmul.f32 %v1798, %v1766
  %v1815 = vmul.f32 %v1799, %v1767
  %v1816 = vmul.f32 %v1800, %v1768
  %v1817 = vmul.f32 %v1801, %v1769
  %v1818 = vmul.f32 %v1802, %v1770
  %v1819 = vmul.f32 %v1803, %v1771
  %v1820 = vmul.f32 %v1804, %v1772
  %v1821 = vmul.f32 %v1805, %v1773
  %v1822 = vmul.f32 %v1806, %v1774
  %v1823 = vmul.f32 %v1807, %v1775
  %v1824 = vmul.f32 %v1808, %v1776
  %v1825 = vmul.f32 %v1809, %v1777
  %v1826 = vmul.f32 %v1810, %v1778
  %v1827 = vmul.f32 %v1811, %v1779
  %v1828 = vmul.f32 %v1812, %v1780
  %v1829 = vmul.f32 %v1813, %v1781
  %v1830 = vmul.f32 %v1814, %v1766
  %v1831 = vmul.f32 %v1815, %v1767
  %v1832 = vmul.f32 %v1816, %v1768
  %v1833 = vmul.f32 %v1817, %v1769
  %v1834 = vmul.f32 %v1818, %v1770
  %v1835 = vmul.f32 %v1819, %v1771
  %v1836 = vmul.f32 %v1820, %v1772
  %v1837 = vmul.f32 %v1821, %v1773
  %v1838 = vmul.f32 %v1822, %v1774
  %v1839 = vmul.f32 %v1823, %v1775
  %v1840 = vmul.f32 %v1824, %v1776
  %v1841 = vmul.f32 %v1825, %v1777
  %v1842 = vmul.f32 %v1826, %v1778
  %v1843 = vmul.f32 %v1827, %v1779
  %v1844 = vmul.f32 %v1828, %v1780
  %v1845 = vmul.f32 %v1829, %v1781
  %v1846 = vadd.f32 %v1766, %v1830
  %v1847 = vadd.f32 %v1767, %v1831
  %v1848 = vadd.f32 %v1768, %v1832
  %v1849 = vadd.f32 %v1769, %v1833
  %v1850 = vadd.f32 %v1770, %v1834
  %v1851 = vadd.f32 %v1771, %v1835
  %v1852 = vadd.f32 %v1772, %v1836
  %v1853 = vadd.f32 %v1773, %v1837
  %v1854 = vadd.f32 %v1774, %v1838
  %v1855 = vadd.f32 %v1775, %v1839
  %v1856 = vadd.f32 %v1776, %v1840
  %v1857 = vadd.f32 %v1777, %v1841
  %v1858 = vadd.f32 %v1778, %v1842
  %v1859 = vadd.f32 %v1779, %v1843
  %v1860 = vadd.f32 %v1780, %v1844
  %v1861 = vadd.f32 %v1781, %v1845
  %v1862 = vmul.f32 %v1846, 0.7978846
  %v1863 = vmul.f32 %v1847, 0.7978846
  %v1864 = vmul.f32 %v1848, 0.7978846
  %v1865 = vmul.f32 %v1849, 0.7978846
  %v1866 = vmul.f32 %v1850, 0.7978846
  %v1867 = vmul.f32 %v1851, 0.7978846
  %v1868 = vmul.f32 %v1852, 0.7978846
  %v1869 = vmul.f32 %v1853, 0.7978846
  %v1870 = vmul.f32 %v1854, 0.7978846
  %v1871 = vmul.f32 %v1855, 0.7978846
  %v1872 = vmul.f32 %v1856, 0.7978846
  %v1873 = vmul.f32 %v1857, 0.7978846
  %v1874 = vmul.f32 %v1858, 0.7978846
  %v1875 = vmul.f32 %v1859, 0.7978846
  %v1876 = vmul.f32 %v1860, 0.7978846
  %v1877 = vmul.f32 %v1861, 0.7978846
  %v1878 = vtanh.pop %v1862
  %v1879 = vtanh.pop %v1863
  %v1880 = vtanh.pop %v1864
  %v1881 = vtanh.pop %v1865
  %v1882 = vtanh.pop %v1866
  %v1883 = vtanh.pop %v1867
  %v1884 = vtanh.pop %v1868
  %v1885 = vtanh.pop %v1869
  %v1886 = vtanh.pop %v1870
  %v1887 = vtanh.pop %v1871
  %v1888 = vtanh.pop %v1872
  %v1889 = vtanh.pop %v1873
  %v1890 = vtanh.pop %v1874
  %v1891 = vtanh.pop %v1875
  %v1892 = vtanh.pop %v1876
  %v1893 = vtanh.pop %v1877
  %v1894 = vadd.f32 %v1878, 1.0
  %v1895 = vadd.f32 %v1879, 1.0
  %v1896 = vadd.f32 %v1880, 1.0
  %v1897 = vadd.f32 %v1881, 1.0
  %v1898 = vadd.f32 %v1882, 1.0
  %v1899 = vadd.f32 %v1883, 1.0
  %v1900 = vadd.f32 %v1884, 1.0
  %v1901 = vadd.f32 %v1885, 1.0
  %v1902 = vadd.f32 %v1886, 1.0
  %v1903 = vadd.f32 %v1887, 1.0
  %v1904 = vadd.f32 %v1888, 1.0
  %v1905 = vadd.f32 %v1889, 1.0
  %v1906 = vadd.f32 %v1890, 1.0
  %v1907 = vadd.f32 %v1891, 1.0
  %v1908 = vadd.f32 %v1892, 1.0
  %v1909 = vadd.f32 %v1893, 1.0
  %v1910 = vmul.f32 %v1782, %v1894
  %v1911 = vmul.f32 %v1783, %v1895
  %v1912 = vmul.f32 %v1784, %v1896
  %v1913 = vmul.f32 %v1785, %v1897
  %v1914 = vmul.f32 %v1786, %v1898
  %v1915 = vmul.f32 %v1787, %v1899
  %v1916 = vmul.f32 %v1788, %v1900
  %v1917 = vmul.f32 %v1789, %v1901
  %v1918 = vmul.f32 %v1790, %v1902
  %v1919 = vmul.f32 %v1791, %v1903
  %v1920 = vmul.f32 %v1792, %v1904
  %v1921 = vmul.f32 %v1793, %v1905
  %v1922 = vmul.f32 %v1794, %v1906
  %v1923 = vmul.f32 %v1795, %v1907
  %v1924 = vmul.f32 %v1796, %v1908
  %v1925 = vmul.f32 %v1797, %v1909
  %s1926 = scalar_lea.vmem %s5, 128
  %1927 = vst.msk [vmem:[%s1926] sm:$0xff] %vm1128, %v1910
  %1928 = vst.msk [vmem:[%s1926 + $0x8] sm:$0xff] %vm1128, %v1911
  %1929 = vst.msk [vmem:[%s1926 + $0x10] sm:$0xff] %vm1128, %v1912
  %1930 = vst.msk [vmem:[%s1926 + $0x18] sm:$0xff] %vm1128, %v1913
  %1931 = vst.msk [vmem:[%s1926 + $0x20] sm:$0xff] %vm1128, %v1914
  %1932 = vst.msk [vmem:[%s1926 + $0x28] sm:$0xff] %vm1128, %v1915
  %1933 = vst.msk [vmem:[%s1926 + $0x30] sm:$0xff] %vm1128, %v1916
  %1934 = vst.msk [vmem:[%s1926 + $0x38] sm:$0xff] %vm1128, %v1917
  %1935 = vst.msk [vmem:[%s1926 + $0x40] sm:$0xff] %vm1128, %v1918
  %1936 = vst.msk [vmem:[%s1926 + $0x48] sm:$0xff] %vm1128, %v1919
  %1937 = vst.msk [vmem:[%s1926 + $0x50] sm:$0xff] %vm1128, %v1920
  %1938 = vst.msk [vmem:[%s1926 + $0x58] sm:$0xff] %vm1128, %v1921
  %1939 = vst.msk [vmem:[%s1926 + $0x60] sm:$0xff] %vm1128, %v1922
  %1940 = vst.msk [vmem:[%s1926 + $0x68] sm:$0xff] %vm1128, %v1923
  %1941 = vst.msk [vmem:[%s1926 + $0x70] sm:$0xff] %vm1128, %v1924
  %1942 = vst.msk [vmem:[%s1926 + $0x78] sm:$0xff] %vm1128, %v1925
  // Predicated region
  $region22: #{mask_decoder_forward.5} parent=0 // pred_check
    _
  $region23: #{mask_decoder_forward.5} parent=0 // pred_check_branch
    %1944 = sbr.rel (0) target = $region25
  $region24: #{mask_decoder_forward.5} parent=0 // pred_region
    _
  $region25: #{mask_decoder_forward.5} parent=0 // pred_fallthru
    _
  // Predicated region
  $region26: #{mask_decoder_forward.5} parent=0 // pred_check
    _
  $region27: #{mask_decoder_forward.5} parent=0 // pred_check_branch
    %1946 = sbr.rel (0) target = $region29
  $region28: #{mask_decoder_forward.5} parent=0 // pred_region
    _
  $region29: #{mask_decoder_forward.5} parent=0 // pred_fallthru
    _

// kernel: mask_decoder_forward.9
$region0: #{mask_decoder_forward.9}
  #allocation0 [shape = 'u32[]', space=smem, size = 0x4, offset = 0x4, fixed_abs, tag = 'smem constant byte address 0x4 - core index']
  #allocation1 [shape = 'u32[144,128]{1,0:T(1,128)}', space=vmem, size = 0x12000, scoped, tag = 'internal scratch']
  %s0 = inlined_call_operand.vmem [shape: f32[8,2,64,32], index: 0, kind: input, shape index: {}]
  %s1 = inlined_call_operand.vmem [shape: f32[2,32,24], index: 1, kind: input, shape index: {}]
  %s2 = inlined_call_operand.vmem [shape: f32[2,4,3], index: 2, kind: input, shape index: {}]
  %s3 = inlined_call_operand.vmem [shape: f32[4,2], index: 3, kind: input, shape index: {}]
  %s4 = inlined_call_operand.vmem [shape: f32[1,2], index: 4, kind: input, shape index: {}]
  %s5 = inlined_call_operand.vmem [shape: f32[2,16,16,24], index: 5, kind: output, shape index: {}]
  %s6 = sld [smem:[#allocation0]]
  $region99: #{mask_decoder_forward.9} parent=0
    _
  %s8 = ssub.s32 1, %s6
  %s9 = scalar_select 0, %s8, %s6
  $region1: #{mask_decoder_forward.9} parent=0
    #allocation2 [shape = 'u8[524288]{0}', space=vmem, size = 0x80000, scoped, tag = 'input window, operand 0']
    #allocation3 [shape = 'u8[2048]{0}', space=smem, size = 0x800, scoped, tag = 'input window, operand 3, single buffered']
    #allocation4 [shape = 's32[2]{0}', space=sflag, size = 0x8, scoped, tag = 'scoped memory for mask_decoder_forward.9']
    #allocation5 [shape = 'u8[512]{0}', space=smem, size = 0x200, scoped, tag = 'input window, operand 4, single buffered']
    #allocation6 [shape = 's32[1]{0}', space=sflag, size = 0x4, scoped, tag = 'scoped memory for mask_decoder_forward.9']
    %10 = vsyncpa [#allocation4], 0
    %11 = vsyncpa [#allocation6], 0
    loop: start=0, step=1, limit=4
    $region2: #{mask_decoder_forward.9} parent=1 // loop_pre_header
      _
    $region3: #{mask_decoder_forward.9} parent=1 // loop_header
      %s13 = sphi 0, %s17
      %p14 = scmp.ge.s32.totalorder %s13, 4
      %s23 = sphi 0, %s25
      %s26 = sphi 0, %s23
      %s27 = sphi 0, %s26
      %s43 = sphi 0, %s27
      %s49 = sphi 0, %s51
      %s52 = sphi 0, %s49
      %s53 = sphi 0, %s52
      %s69 = sphi 0, %s53
      %s75 = sphi 0, %s77
      %s78 = sphi 0, %s75
      %s79 = sphi 0, %s78
      %s95 = sphi 0, %s79
      %s99 = sphi 0, %s99
      %s101 = sphi 0, %s99
      %s102 = sphi 0, %s101
      %s116 = sphi 0, %s102
      %s120 = sphi 0, %s120
      %s122 = sphi 0, %s120
      %s123 = sphi 0, %s122
      %s137 = sphi 0, %s123
      %s143 = sphi 0, %s145
      %s146 = sphi 0, %s143
      %s147 = sphi 0, %s146
      %s163 = sphi 0, %s147
    $region4: #{mask_decoder_forward.9} parent=1 // loop_header_branch
      %16 = sbr.rel (%p14) target = $region8
    $region5: #{mask_decoder_forward.9} parent=1 // loop_body
      %s18 = ssub.s32 %s13, 1
      %s19 = ssub.s32 %s13, 2
      %s20 = sadd.s32 %s13, 1
      %s21 = ssub.s32 %s13, %s20
      %p22 = scmp.eq.s32.totalorder %s21, 0
      %s24 = sadd.s32 %s23, 1
      %s25 = scalar_select %p22, %s23, %s24
      %p28 = pneg %p22
      %p29 = scmp.eq.s32.totalorder %s13, 1
      %p30 = por %p28, %p29
      %p31 = scmp.ne.s32.totalorder %s23, %s26
      %p32 = scmp.eq.s32.totalorder %s13, 0
      %p33 = por %p31, %p32
      %p34 = scmp.ne.s32.totalorder %s23, %s26
      %p35 = scmp.eq.s32.totalorder %s18, 1
      %p36 = por %p34, %p35
      %p37 = scmp.ne.s32.totalorder %s26, %s27
      %p38 = scmp.eq.s32.totalorder %s18, 0
      %p39 = por %p37, %p38
      %p40 = scmp.ne.s32.totalorder %s26, %s27
      %p41 = scmp.eq.s32.totalorder %s19, 1
      %p42 = por %p40, %p41
      %p44 = scmp.ne.s32.totalorder %s27, %s43
      %p45 = scmp.eq.s32.totalorder %s19, 0
      %p46 = por %p44, %p45
      %s47 = ssub.s32 %s13, %s20
      %p48 = scmp.eq.s32.totalorder %s47, 0
      %s50 = sadd.s32 %s49, 1
      %s51 = scalar_select %p48, %s49, %s50
      %p54 = pneg %p48
      %p55 = scmp.eq.s32.totalorder %s13, 1
      %p56 = por %p54, %p55
      %p57 = scmp.ne.s32.totalorder %s49, %s52
      %p58 = scmp.eq.s32.totalorder %s13, 0
      %p59 = por %p57, %p58
      %p60 = scmp.ne.s32.totalorder %s49, %s52
      %p61 = scmp.eq.s32.totalorder %s18, 1
      %p62 = por %p60, %p61
      %p63 = scmp.ne.s32.totalorder %s52, %s53
      %p64 = scmp.eq.s32.totalorder %s18, 0
      %p65 = por %p63, %p64
      %p66 = scmp.ne.s32.totalorder %s52, %s53
      %p67 = scmp.eq.s32.totalorder %s19, 1
      %p68 = por %p66, %p67
      %p70 = scmp.ne.s32.totalorder %s53, %s69
      %p71 = scmp.eq.s32.totalorder %s19, 0
      %p72 = por %p70, %p71
      %s73 = ssub.s32 %s13, %s20
      %p74 = scmp.eq.s32.totalorder %s73, 0
      %s76 = sadd.s32 %s75, 1
      %s77 = scalar_select %p74, %s75, %s76
      %p80 = pneg %p74
      %p81 = scmp.eq.s32.totalorder %s13, 1
      %p82 = por %p80, %p81
      %p83 = scmp.ne.s32.totalorder %s75, %s78
      %p84 = scmp.eq.s32.totalorder %s13, 0
      %p85 = por %p83, %p84
      %p86 = scmp.ne.s32.totalorder %s75, %s78
      %p87 = scmp.eq.s32.totalorder %s18, 1
      %p88 = por %p86, %p87
      %p89 = scmp.ne.s32.totalorder %s78, %s79
      %p90 = scmp.eq.s32.totalorder %s18, 0
      %p91 = por %p89, %p90
      %p92 = scmp.ne.s32.totalorder %s78, %s79
      %p93 = scmp.eq.s32.totalorder %s19, 1
      %p94 = por %p92, %p93
      %p96 = scmp.ne.s32.totalorder %s79, %s95
      %p97 = scmp.eq.s32.totalorder %s19, 0
      %p98 = por %p96, %p97
      %s100 = sadd.s32 %s99, 1
      %p103 = scmp.eq.s32.totalorder %s13, 1
      %p104 = scmp.ne.s32.totalorder %s99, %s101
      %p105 = scmp.eq.s32.totalorder %s13, 0
      %p106 = por %p104, %p105
      %p107 = scmp.ne.s32.totalorder %s99, %s101
      %p108 = scmp.eq.s32.totalorder %s18, 1
      %p109 = por %p107, %p108
      %p110 = scmp.ne.s32.totalorder %s101, %s102
      %p111 = scmp.eq.s32.totalorder %s18, 0
      %p112 = por %p110, %p111
      %p113 = scmp.ne.s32.totalorder %s101, %s102
      %p114 = scmp.eq.s32.totalorder %s19, 1
      %p115 = por %p113, %p114
      %p117 = scmp.ne.s32.totalorder %s102, %s116
      %p118 = scmp.eq.s32.totalorder %s19, 0
      %p119 = por %p117, %p118
      %s121 = sadd.s32 %s120, 1
      %p124 = scmp.eq.s32.totalorder %s13, 1
      %p125 = scmp.ne.s32.totalorder %s120, %s122
      %p126 = scmp.eq.s32.totalorder %s13, 0
      %p127 = por %p125, %p126
      %p128 = scmp.ne.s32.totalorder %s120, %s122
      %p129 = scmp.eq.s32.totalorder %s18, 1
      %p130 = por %p128, %p129
      %p131 = scmp.ne.s32.totalorder %s122, %s123
      %p132 = scmp.eq.s32.totalorder %s18, 0
      %p133 = por %p131, %p132
      %p134 = scmp.ne.s32.totalorder %s122, %s123
      %p135 = scmp.eq.s32.totalorder %s19, 1
      %p136 = por %p134, %p135
      %p138 = scmp.ne.s32.totalorder %s123, %s137
      %p139 = scmp.eq.s32.totalorder %s19, 0
      %p140 = por %p138, %p139
      %s141 = ssub.s32 %s13, %s20
      %p142 = scmp.eq.s32.totalorder %s141, 0
      %s144 = sadd.s32 %s143, 1
      %s145 = scalar_select %p142, %s143, %s144
      %p148 = pneg %p142
      %p149 = scmp.eq.s32.totalorder %s13, 1
      %p150 = por %p148, %p149
      %p151 = scmp.ne.s32.totalorder %s143, %s146
      %p152 = scmp.eq.s32.totalorder %s13, 0
      %p153 = por %p151, %p152
      %p154 = scmp.ne.s32.totalorder %s143, %s146
      %p155 = scmp.eq.s32.totalorder %s18, 1
      %p156 = por %p154, %p155
      %p157 = scmp.ne.s32.totalorder %s146, %s147
      %p158 = scmp.eq.s32.totalorder %s18, 0
      %p159 = por %p157, %p158
      %p160 = scmp.ne.s32.totalorder %s146, %s147
      %p161 = scmp.eq.s32.totalorder %s19, 1
      %p162 = por %p160, %p161
      %p164 = scmp.ne.s32.totalorder %s147, %s163
      %p165 = scmp.eq.s32.totalorder %s19, 0
      %p166 = por %p164, %p165
      %p167 = scmp.le.s32.totalorder 1, %s13
      %p168 = scmp.lt.s32.totalorder %s13, 3
      %p169 = pnand %p167, %p168
      %p170 = pneg %p169
      // Predicated region
      $region9: #{mask_decoder_forward.9} parent=5 // pred_check
        _
      $region10: #{mask_decoder_forward.9} parent=5 // pred_check_branch
        %172 = sbr.rel (%p169) target = $region12
      $region11: #{mask_decoder_forward.9} parent=5 // pred_region
        %s173 = ssub.s32 %s13, 1
        // Predicated region
        $region13: #{mask_decoder_forward.9} parent=11 // pred_check
          %p174 = pneg %p112
        $region14: #{mask_decoder_forward.9} parent=11 // pred_check_branch
          %176 = sbr.rel (%p174) target = $region16
        $region15: #{mask_decoder_forward.9} parent=11 // pred_region
          %s178 = ssub.s32 64, 64
          %179 = vsyncadd [#allocation4], %s178
          %s181 = sshll.u32 %s3, 4
          %s182 = int_to_ptr.vmem [resolvable:$true] %s181
          %184 = dma.vmem_to_smem %s182, 64, [#allocation3], [#allocation4]
        $region16: #{mask_decoder_forward.9} parent=11 // pred_fallthru
          _
        // Predicated region
        $region17: #{mask_decoder_forward.9} parent=11 // pred_check
          %p185 = pneg %p133
        $region18: #{mask_decoder_forward.9} parent=11 // pred_check_branch
          %187 = sbr.rel (%p185) target = $region20
        $region19: #{mask_decoder_forward.9} parent=11 // pred_region
          %s189 = ssub.s32 16, 16
          %190 = vsyncadd [#allocation6], %s189
          %s192 = sshll.u32 %s4, 4
          %s193 = int_to_ptr.vmem [resolvable:$true] %s192
          %195 = dma.vmem_to_smem %s193, 16, [#allocation5], [#allocation6]
        $region20: #{mask_decoder_forward.9} parent=11 // pred_fallthru
          _
      $region12: #{mask_decoder_forward.9} parent=5 // pred_fallthru
        _
      %p196 = scmp.lt.s32.totalorder %s13, 2
      // Predicated region
      $region21: #{mask_decoder_forward.9} parent=5 // pred_check
        %p197 = pneg %p196
      $region22: #{mask_decoder_forward.9} parent=5 // pred_check_branch
        %199 = sbr.rel (%p197) target = $region24
      $region23: #{mask_decoder_forward.9} parent=5 // pred_region
        // Predicated region
        $region25: #{mask_decoder_forward.9} parent=23 // pred_check
          %p200 = pneg %p33
        $region26: #{mask_decoder_forward.9} parent=23 // pred_check_branch
          %202 = sbr.rel (%p200) target = $region28
        $region27: #{mask_decoder_forward.9} parent=23 // pred_region
          %s203 = sand.u32 %s23, 1
          %s204 = sand.u32 %s23, 1
          %s205 = smul.addr %s204, 512
          %s206 = scalar_lea.vmem [#allocation2], %s205
          %s207 = smul.addr %s13, 8
          %s208 = smul.addr %s207, 8
          %s209 = scalar_lea.vmem %s0, %s208
          // Predicated region
          $region29: #{mask_decoder_forward.9} parent=27 // pred_check
            _
          $region30: #{mask_decoder_forward.9} parent=27 // pred_check_branch
            %211 = sbr.rel (0) target = $region32
          $region31: #{mask_decoder_forward.9} parent=27 // pred_region
            // Predicated region
            $region33: #{mask_decoder_forward.9} parent=31 // pred_check
              _
            $region34: #{mask_decoder_forward.9} parent=31 // pred_check_branch
              %213 = sbr.rel (0) target = $region36
            $region35: #{mask_decoder_forward.9} parent=31 // pred_region
              // Predicated region
              $region48: #{mask_decoder_forward.9} parent=35 // pred_check
                _
              $region49: #{mask_decoder_forward.9} parent=35 // pred_check_branch
                %354 = sbr.rel (0) target = $region51
              $region50: #{mask_decoder_forward.9} parent=35 // pred_region
                loop: start=0, step=1, limit=1
                $region52: #{mask_decoder_forward.9} parent=50 // loop_pre_header
                  _
                $region53: #{mask_decoder_forward.9} parent=50 // loop_header
                  %s356 = sphi 0, %s360
                  %p357 = scmp.ge.s32.totalorder %s356, 1
                  %s361 = sphi %s209, %s209
                  %s362 = sphi %s206, %s206
                $region54: #{mask_decoder_forward.9} parent=50 // loop_header_branch
                  %359 = sbr.rel (%p357) target = $region58
                $region55: #{mask_decoder_forward.9} parent=50 // loop_body
                  %v363 = vld [vmem:[%s361] sm:$0xff]
                  %364 = vst [vmem:[%s362] sm:$0xff] %v363
                  %v365 = vld [vmem:[%s361 + $0x8] sm:$0xff]
                  %366 = vst [vmem:[%s362 + $0x8] sm:$0xff] %v365
                  %v367 = vld [vmem:[%s361 + $0x10] sm:$0xff]
                  %368 = vst [vmem:[%s362 + $0x10] sm:$0xff] %v367
                  %v369 = vld [vmem:[%s361 + $0x18] sm:$0xff]
                  %370 = vst [vmem:[%s362 + $0x18] sm:$0xff] %v369
                  %v371 = vld [vmem:[%s361 + $0x20] sm:$0xff]
                  %372 = vst [vmem:[%s362 + $0x20] sm:$0xff] %v371
                  %v373 = vld [vmem:[%s361 + $0x28] sm:$0xff]
                  %374 = vst [vmem:[%s362 + $0x28] sm:$0xff] %v373
                  %v375 = vld [vmem:[%s361 + $0x30] sm:$0xff]
                  %376 = vst [vmem:[%s362 + $0x30] sm:$0xff] %v375
                  %v377 = vld [vmem:[%s361 + $0x38] sm:$0xff]
                  %378 = vst [vmem:[%s362 + $0x38] sm:$0xff] %v377
                  %v379 = vld [vmem:[%s361 + $0x80] sm:$0xff]
                  %380 = vst [vmem:[%s362 + $0x40] sm:$0xff] %v379
                  %v381 = vld [vmem:[%s361 + $0x88] sm:$0xff]
                  %382 = vst [vmem:[%s362 + $0x48] sm:$0xff] %v381
                  %v383 = vld [vmem:[%s361 + $0x90] sm:$0xff]
                  %384 = vst [vmem:[%s362 + $0x50] sm:$0xff] %v383
                  %v385 = vld [vmem:[%s361 + $0x98] sm:$0xff]
                  %386 = vst [vmem:[%s362 + $0x58] sm:$0xff] %v385
                  %v387 = vld [vmem:[%s361 + $0xa0] sm:$0xff]
                  %388 = vst [vmem:[%s362 + $0x60] sm:$0xff] %v387
                  %v389 = vld [vmem:[%s361 + $0xa8] sm:$0xff]
                  %390 = vst [vmem:[%s362 + $0x68] sm:$0xff] %v389
                  %v391 = vld [vmem:[%s361 + $0xb0] sm:$0xff]
                  %392 = vst [vmem:[%s362 + $0x70] sm:$0xff] %v391
                  %v393 = vld [vmem:[%s361 + $0xb8] sm:$0xff]
                  %394 = vst [vmem:[%s362 + $0x78] sm:$0xff] %v393
                  %v395 = vld [vmem:[%s361 + $0x100] sm:$0xff]
                  %396 = vst [vmem:[%s362 + $0x80] sm:$0xff] %v395
                  %v397 = vld [vmem:[%s361 + $0x108] sm:$0xff]
                  %398 = vst [vmem:[%s362 + $0x88] sm:$0xff] %v397
                  %v399 = vld [vmem:[%s361 + $0x110] sm:$0xff]
                  %400 = vst [vmem:[%s362 + $0x90] sm:$0xff] %v399
                  %v401 = vld [vmem:[%s361 + $0x118] sm:$0xff]
                  %402 = vst [vmem:[%s362 + $0x98] sm:$0xff] %v401
                  %v403 = vld [vmem:[%s361 + $0x120] sm:$0xff]
                  %404 = vst [vmem:[%s362 + $0xa0] sm:$0xff] %v403
                  %v405 = vld [vmem:[%s361 + $0x128] sm:$0xff]
                  %406 = vst [vmem:[%s362 + $0xa8] sm:$0xff] %v405
                  %v407 = vld [vmem:[%s361 + $0x130] sm:$0xff]
                  %408 = vst [vmem:[%s362 + $0xb0] sm:$0xff] %v407
                  %v409 = vld [vmem:[%s361 + $0x138] sm:$0xff]
                  %410 = vst [vmem:[%s362 + $0xb8] sm:$0xff] %v409
                  %v411 = vld [vmem:[%s361 + $0x180] sm:$0xff]
                  %412 = vst [vmem:[%s362 + $0xc0] sm:$0xff] %v411
                  %v413 = vld [vmem:[%s361 + $0x188] sm:$0xff]
                  %414 = vst [vmem:[%s362 + $0xc8] sm:$0xff] %v413
                  %v415 = vld [vmem:[%s361 + $0x190] sm:$0xff]
                  %416 = vst [vmem:[%s362 + $0xd0] sm:$0xff] %v415
                  %v417 = vld [vmem:[%s361 + $0x198] sm:$0xff]
                  %418 = vst [vmem:[%s362 + $0xd8] sm:$0xff] %v417
                  %v419 = vld [vmem:[%s361 + $0x1a0] sm:$0xff]
                  %420 = vst [vmem:[%s362 + $0xe0] sm:$0xff] %v419
                  %v421 = vld [vmem:[%s361 + $0x1a8] sm:$0xff]
                  %422 = vst [vmem:[%s362 + $0xe8] sm:$0xff] %v421
                  %v423 = vld [vmem:[%s361 + $0x1b0] sm:$0xff]
                  %424 = vst [vmem:[%s362 + $0xf0] sm:$0xff] %v423
                  %v425 = vld [vmem:[%s361 + $0x1b8] sm:$0xff]
                  %426 = vst [vmem:[%s362 + $0xf8] sm:$0xff] %v425
                  %v427 = vld [vmem:[%s361 + $0x200] sm:$0xff]
                  %428 = vst [vmem:[%s362 + $0x100] sm:$0xff] %v427
                  %v429 = vld [vmem:[%s361 + $0x208] sm:$0xff]
                  %430 = vst [vmem:[%s362 + $0x108] sm:$0xff] %v429
                  %v431 = vld [vmem:[%s361 + $0x210] sm:$0xff]
                  %432 = vst [vmem:[%s362 + $0x110] sm:$0xff] %v431
                  %v433 = vld [vmem:[%s361 + $0x218] sm:$0xff]
                  %434 = vst [vmem:[%s362 + $0x118] sm:$0xff] %v433
                  %v435 = vld [vmem:[%s361 + $0x220] sm:$0xff]
                  %436 = vst [vmem:[%s362 + $0x120] sm:$0xff] %v435
                  %v437 = vld [vmem:[%s361 + $0x228] sm:$0xff]
                  %438 = vst [vmem:[%s362 + $0x128] sm:$0xff] %v437
                  %v439 = vld [vmem:[%s361 + $0x230] sm:$0xff]
                  %440 = vst [vmem:[%s362 + $0x130] sm:$0xff] %v439
                  %v441 = vld [vmem:[%s361 + $0x238] sm:$0xff]
                  %442 = vst [vmem:[%s362 + $0x138] sm:$0xff] %v441
                  %v443 = vld [vmem:[%s361 + $0x280] sm:$0xff]
                  %444 = vst [vmem:[%s362 + $0x140] sm:$0xff] %v443
                  %v445 = vld [vmem:[%s361 + $0x288] sm:$0xff]
                  %446 = vst [vmem:[%s362 + $0x148] sm:$0xff] %v445
                  %v447 = vld [vmem:[%s361 + $0x290] sm:$0xff]
                  %448 = vst [vmem:[%s362 + $0x150] sm:$0xff] %v447
                  %v449 = vld [vmem:[%s361 + $0x298] sm:$0xff]
                  %450 = vst [vmem:[%s362 + $0x158] sm:$0xff] %v449
                  %v451 = vld [vmem:[%s361 + $0x2a0] sm:$0xff]
                  %452 = vst [vmem:[%s362 + $0x160] sm:$0xff] %v451
                  %v453 = vld [vmem:[%s361 + $0x2a8] sm:$0xff]
                  %454 = vst [vmem:[%s362 + $0x168] sm:$0xff] %v453
                  %v455 = vld [vmem:[%s361 + $0x2b0] sm:$0xff]
                  %456 = vst [vmem:[%s362 + $0x170] sm:$0xff] %v455
                  %v457 = vld [vmem:[%s361 + $0x2b8] sm:$0xff]
                  %458 = vst [vmem:[%s362 + $0x178] sm:$0xff] %v457
                  %v459 = vld [vmem:[%s361 + $0x300] sm:$0xff]
                  %460 = vst [vmem:[%s362 + $0x180] sm:$0xff] %v459
                  %v461 = vld [vmem:[%s361 + $0x308] sm:$0xff]
                  %462 = vst [vmem:[%s362 + $0x188] sm:$0xff] %v461
                  %v463 = vld [vmem:[%s361 + $0x310] sm:$0xff]
                  %464 = vst [vmem:[%s362 + $0x190] sm:$0xff] %v463
                  %v465 = vld [vmem:[%s361 + $0x318] sm:$0xff]
                  %466 = vst [vmem:[%s362 + $0x198] sm:$0xff] %v465
                  %v467 = vld [vmem:[%s361 + $0x320] sm:$0xff]
                  %468 = vst [vmem:[%s362 + $0x1a0] sm:$0xff] %v467
                  %v469 = vld [vmem:[%s361 + $0x328] sm:$0xff]
                  %470 = vst [vmem:[%s362 + $0x1a8] sm:$0xff] %v469
                  %v471 = vld [vmem:[%s361 + $0x330] sm:$0xff]
                  %472 = vst [vmem:[%s362 + $0x1b0] sm:$0xff] %v471
                  %v473 = vld [vmem:[%s361 + $0x338] sm:$0xff]
                  %474 = vst [vmem:[%s362 + $0x1b8] sm:$0xff] %v473
                  %v475 = vld [vmem:[%s361 + $0x380] sm:$0xff]
                  %476 = vst [vmem:[%s362 + $0x1c0] sm:$0xff] %v475
                  %v477 = vld [vmem:[%s361 + $0x388] sm:$0xff]
                  %478 = vst [vmem:[%s362 + $0x1c8] sm:$0xff] %v477
                  %v479 = vld [vmem:[%s361 + $0x390] sm:$0xff]
                  %480 = vst [vmem:[%s362 + $0x1d0] sm:$0xff] %v479
                  %v481 = vld [vmem:[%s361 + $0x398] sm:$0xff]
                  %482 = vst [vmem:[%s362 + $0x1d8] sm:$0xff] %v481
                  %v483 = vld [vmem:[%s361 + $0x3a0] sm:$0xff]
                  %484 = vst [vmem:[%s362 + $0x1e0] sm:$0xff] %v483
                  %v485 = vld [vmem:[%s361 + $0x3a8] sm:$0xff]
                  %486 = vst [vmem:[%s362 + $0x1e8] sm:$0xff] %v485
                  %v487 = vld [vmem:[%s361 + $0x3b0] sm:$0xff]
                  %488 = vst [vmem:[%s362 + $0x1f0] sm:$0xff] %v487
                  %v489 = vld [vmem:[%s361 + $0x3b8] sm:$0xff]
                  %490 = vst [vmem:[%s362 + $0x1f8] sm:$0xff] %v489
                $region56: #{mask_decoder_forward.9} parent=50 // loop_footer
                  %s360 = sadd.s32 1, %s356
                $region57: #{mask_decoder_forward.9} parent=50 // loop_footer_branch
                  %355 = sbr.rel target = $region53
                $region58: #{mask_decoder_forward.9} parent=50 // loop_exit
                  _
              $region51: #{mask_decoder_forward.9} parent=35 // pred_fallthru
                _
              // Predicated region
              $region59: #{mask_decoder_forward.9} parent=35 // pred_check
                _
              $region60: #{mask_decoder_forward.9} parent=35 // pred_check_branch
                %492 = sbr.rel target = $region62
              $region61: #{mask_decoder_forward.9} parent=35 // pred_region
                _
              $region62: #{mask_decoder_forward.9} parent=35 // pred_fallthru
                _
            $region36: #{mask_decoder_forward.9} parent=31 // pred_fallthru
              _
            // Predicated region
            $region37: #{mask_decoder_forward.9} parent=31 // pred_check
              _
            $region38: #{mask_decoder_forward.9} parent=31 // pred_check_branch
              %215 = sbr.rel target = $region40
            $region39: #{mask_decoder_forward.9} parent=31 // pred_region
              loop: start=0, step=1, limit=1
              $region41: #{mask_decoder_forward.9} parent=39 // loop_pre_header
                _
              $region42: #{mask_decoder_forward.9} parent=39 // loop_header
                %s218 = sphi 0, %s222
                %p219 = scmp.ge.s32.totalorder %s218, 1
                %s223 = sphi %s209, %s209
                %s224 = sphi %s206, %s206
              $region43: #{mask_decoder_forward.9} parent=39 // loop_header_branch
                %221 = sbr.rel (%p219) target = $region47
              $region44: #{mask_decoder_forward.9} parent=39 // loop_body
                %v225 = vld [vmem:[%s223] sm:$0xff]
                %226 = vst [vmem:[%s224] sm:$0xff] %v225
                %v227 = vld [vmem:[%s223 + $0x8] sm:$0xff]
                %228 = vst [vmem:[%s224 + $0x8] sm:$0xff] %v227
                %v229 = vld [vmem:[%s223 + $0x10] sm:$0xff]
                %230 = vst [vmem:[%s224 + $0x10] sm:$0xff] %v229
                %v231 = vld [vmem:[%s223 + $0x18] sm:$0xff]
                %232 = vst [vmem:[%s224 + $0x18] sm:$0xff] %v231
                %v233 = vld [vmem:[%s223 + $0x20] sm:$0xff]
                %234 = vst [vmem:[%s224 + $0x20] sm:$0xff] %v233
                %v235 = vld [vmem:[%s223 + $0x28] sm:$0xff]
                %236 = vst [vmem:[%s224 + $0x28] sm:$0xff] %v235
                %v237 = vld [vmem:[%s223 + $0x30] sm:$0xff]
                %238 = vst [vmem:[%s224 + $0x30] sm:$0xff] %v237
                %v239 = vld [vmem:[%s223 + $0x38] sm:$0xff]
                %240 = vst [vmem:[%s224 + $0x38] sm:$0xff] %v239
                %v241 = vld [vmem:[%s223 + $0x80] sm:$0xff]
                %242 = vst [vmem:[%s224 + $0x40] sm:$0xff] %v241
                %v243 = vld [vmem:[%s223 + $0x88] sm:$0xff]
                %244 = vst [vmem:[%s224 + $0x48] sm:$0xff] %v243
                %v245 = vld [vmem:[%s223 + $0x90] sm:$0xff]
                %246 = vst [vmem:[%s224 + $0x50] sm:$0xff] %v245
                %v247 = vld [vmem:[%s223 + $0x98] sm:$0xff]
                %248 = vst [vmem:[%s224 + $0x58] sm:$0xff] %v247
                %v249 = vld [vmem:[%s223 + $0xa0] sm:$0xff]
                %250 = vst [vmem:[%s224 + $0x60] sm:$0xff] %v249
                %v251 = vld [vmem:[%s223 + $0xa8] sm:$0xff]
                %252 = vst [vmem:[%s224 + $0x68] sm:$0xff] %v251
                %v253 = vld [vmem:[%s223 + $0xb0] sm:$0xff]
                %254 = vst [vmem:[%s224 + $0x70] sm:$0xff] %v253
                %v255 = vld [vmem:[%s223 + $0xb8] sm:$0xff]
                %256 = vst [vmem:[%s224 + $0x78] sm:$0xff] %v255
                %v257 = vld [vmem:[%s223 + $0x100] sm:$0xff]
                %258 = vst [vmem:[%s224 + $0x80] sm:$0xff] %v257
                %v259 = vld [vmem:[%s223 + $0x108] sm:$0xff]
                %260 = vst [vmem:[%s224 + $0x88] sm:$0xff] %v259
                %v261 = vld [vmem:[%s223 + $0x110] sm:$0xff]
                %262 = vst [vmem:[%s224 + $0x90] sm:$0xff] %v261
                %v263 = vld [vmem:[%s223 + $0x118] sm:$0xff]
                %264 = vst [vmem:[%s224 + $0x98] sm:$0xff] %v263
                %v265 = vld [vmem:[%s223 + $0x120] sm:$0xff]
                %266 = vst [vmem:[%s224 + $0xa0] sm:$0xff] %v265
                %v267 = vld [vmem:[%s223 + $0x128] sm:$0xff]
                %268 = vst [vmem:[%s224 + $0xa8] sm:$0xff] %v267
                %v269 = vld [vmem:[%s223 + $0x130] sm:$0xff]
                %270 = vst [vmem:[%s224 + $0xb0] sm:$0xff] %v269
                %v271 = vld [vmem:[%s223 + $0x138] sm:$0xff]
                %272 = vst [vmem:[%s224 + $0xb8] sm:$0xff] %v271
                %v273 = vld [vmem:[%s223 + $0x180] sm:$0xff]
                %274 = vst [vmem:[%s224 + $0xc0] sm:$0xff] %v273
                %v275 = vld [vmem:[%s223 + $0x188] sm:$0xff]
                %276 = vst [vmem:[%s224 + $0xc8] sm:$0xff] %v275
                %v277 = vld [vmem:[%s223 + $0x190] sm:$0xff]
                %278 = vst [vmem:[%s224 + $0xd0] sm:$0xff] %v277
                %v279 = vld [vmem:[%s223 + $0x198] sm:$0xff]
                %280 = vst [vmem:[%s224 + $0xd8] sm:$0xff] %v279
                %v281 = vld [vmem:[%s223 + $0x1a0] sm:$0xff]
                %282 = vst [vmem:[%s224 + $0xe0] sm:$0xff] %v281
                %v283 = vld [vmem:[%s223 + $0x1a8] sm:$0xff]
                %284 = vst [vmem:[%s224 + $0xe8] sm:$0xff] %v283
                %v285 = vld [vmem:[%s223 + $0x1b0] sm:$0xff]
                %286 = vst [vmem:[%s224 + $0xf0] sm:$0xff] %v285
                %v287 = vld [vmem:[%s223 + $0x1b8] sm:$0xff]
                %288 = vst [vmem:[%s224 + $0xf8] sm:$0xff] %v287
                %v289 = vld [vmem:[%s223 + $0x200] sm:$0xff]
                %290 = vst [vmem:[%s224 + $0x100] sm:$0xff] %v289
                %v291 = vld [vmem:[%s223 + $0x208] sm:$0xff]
                %292 = vst [vmem:[%s224 + $0x108] sm:$0xff] %v291
                %v293 = vld [vmem:[%s223 + $0x210] sm:$0xff]
                %294 = vst [vmem:[%s224 + $0x110] sm:$0xff] %v293
                %v295 = vld [vmem:[%s223 + $0x218] sm:$0xff]
                %296 = vst [vmem:[%s224 + $0x118] sm:$0xff] %v295
                %v297 = vld [vmem:[%s223 + $0x220] sm:$0xff]
                %298 = vst [vmem:[%s224 + $0x120] sm:$0xff] %v297
                %v299 = vld [vmem:[%s223 + $0x228] sm:$0xff]
                %300 = vst [vmem:[%s224 + $0x128] sm:$0xff] %v299
                %v301 = vld [vmem:[%s223 + $0x230] sm:$0xff]
                %302 = vst [vmem:[%s224 + $0x130] sm:$0xff] %v301
                %v303 = vld [vmem:[%s223 + $0x238] sm:$0xff]
                %304 = vst [vmem:[%s224 + $0x138] sm:$0xff] %v303
                %v305 = vld [vmem:[%s223 + $0x280] sm:$0xff]
                %306 = vst [vmem:[%s224 + $0x140] sm:$0xff] %v305
                %v307 = vld [vmem:[%s223 + $0x288] sm:$0xff]
                %308 = vst [vmem:[%s224 + $0x148] sm:$0xff] %v307
                %v309 = vld [vmem:[%s223 + $0x290] sm:$0xff]
                %310 = vst [vmem:[%s224 + $0x150] sm:$0xff] %v309
                %v311 = vld [vmem:[%s223 + $0x298] sm:$0xff]
                %312 = vst [vmem:[%s224 + $0x158] sm:$0xff] %v311
                %v313 = vld [vmem:[%s223 + $0x2a0] sm:$0xff]
                %314 = vst [vmem:[%s224 + $0x160] sm:$0xff] %v313
                %v315 = vld [vmem:[%s223 + $0x2a8] sm:$0xff]
                %316 = vst [vmem:[%s224 + $0x168] sm:$0xff] %v315
                %v317 = vld [vmem:[%s223 + $0x2b0] sm:$0xff]
                %318 = vst [vmem:[%s224 + $0x170] sm:$0xff] %v317
                %v319 = vld [vmem:[%s223 + $0x2b8] sm:$0xff]
                %320 = vst [vmem:[%s224 + $0x178] sm:$0xff] %v319
                %v321 = vld [vmem:[%s223 + $0x300] sm:$0xff]
                %322 = vst [vmem:[%s224 + $0x180] sm:$0xff] %v321
                %v323 = vld [vmem:[%s223 + $0x308] sm:$0xff]
                %324 = vst [vmem:[%s224 + $0x188] sm:$0xff] %v323
                %v325 = vld [vmem:[%s223 + $0x310] sm:$0xff]
                %326 = vst [vmem:[%s224 + $0x190] sm:$0xff] %v325
                %v327 = vld [vmem:[%s223 + $0x318] sm:$0xff]
                %328 = vst [vmem:[%s224 + $0x198] sm:$0xff] %v327
                %v329 = vld [vmem:[%s223 + $0x320] sm:$0xff]
                %330 = vst [vmem:[%s224 + $0x1a0] sm:$0xff] %v329
                %v331 = vld [vmem:[%s223 + $0x328] sm:$0xff]
                %332 = vst [vmem:[%s224 + $0x1a8] sm:$0xff] %v331
                %v333 = vld [vmem:[%s223 + $0x330] sm:$0xff]
                %334 = vst [vmem:[%s224 + $0x1b0] sm:$0xff] %v333
                %v335 = vld [vmem:[%s223 + $0x338] sm:$0xff]
                %336 = vst [vmem:[%s224 + $0x1b8] sm:$0xff] %v335
                %v337 = vld [vmem:[%s223 + $0x380] sm:$0xff]
                %338 = vst [vmem:[%s224 + $0x1c0] sm:$0xff] %v337
                %v339 = vld [vmem:[%s223 + $0x388] sm:$0xff]
                %340 = vst [vmem:[%s224 + $0x1c8] sm:$0xff] %v339
                %v341 = vld [vmem:[%s223 + $0x390] sm:$0xff]
                %342 = vst [vmem:[%s224 + $0x1d0] sm:$0xff] %v341
                %v343 = vld [vmem:[%s223 + $0x398] sm:$0xff]
                %344 = vst [vmem:[%s224 + $0x1d8] sm:$0xff] %v343
                %v345 = vld [vmem:[%s223 + $0x3a0] sm:$0xff]
                %346 = vst [vmem:[%s224 + $0x1e0] sm:$0xff] %v345
                %v347 = vld [vmem:[%s223 + $0x3a8] sm:$0xff]
                %348 = vst [vmem:[%s224 + $0x1e8] sm:$0xff] %v347
                %v349 = vld [vmem:[%s223 + $0x3b0] sm:$0xff]
                %350 = vst [vmem:[%s224 + $0x1f0] sm:$0xff] %v349
                %v351 = vld [vmem:[%s223 + $0x3b8] sm:$0xff]
                %352 = vst [vmem:[%s224 + $0x1f8] sm:$0xff] %v351
              $region45: #{mask_decoder_forward.9} parent=39 // loop_footer
                %s222 = sadd.s32 1, %s218
              $region46: #{mask_decoder_forward.9} parent=39 // loop_footer_branch
                %217 = sbr.rel target = $region42
              $region47: #{mask_decoder_forward.9} parent=39 // loop_exit
                _
            $region40: #{mask_decoder_forward.9} parent=31 // pred_fallthru
              _
          $region32: #{mask_decoder_forward.9} parent=27 // pred_fallthru
            _
          %493 = vnop
        $region28: #{mask_decoder_forward.9} parent=23 // pred_fallthru
          _
        // Predicated region
        $region63: #{mask_decoder_forward.9} parent=23 // pred_check
          %p494 = pneg %p59
        $region64: #{mask_decoder_forward.9} parent=23 // pred_check_branch
          %496 = sbr.rel (%p494) target = $region66
        $region65: #{mask_decoder_forward.9} parent=23 // pred_region
          %p497 = scmp.lt.s32.totalorder %s13, 1
          %s498 = scalar_select %p497, %s13, 1
          %s499 = smul.addr %s498, 4
          %s500 = smul.addr %s499, 8
          %s501 = scalar_lea.vmem %s1, %s500
        $region66: #{mask_decoder_forward.9} parent=23 // pred_fallthru
          _
        // Predicated region
        $region67: #{mask_decoder_forward.9} parent=23 // pred_check
          %p502 = pneg %p85
        $region68: #{mask_decoder_forward.9} parent=23 // pred_check_branch
          %504 = sbr.rel (%p502) target = $region70
        $region69: #{mask_decoder_forward.9} parent=23 // pred_region
          %p505 = scmp.lt.s32.totalorder %s13, 1
          %s506 = scalar_select %p505, %s13, 1
          %s507 = smul.addr %s506, 4
          %s508 = scalar_lea.vmem %s2, %s507
        $region70: #{mask_decoder_forward.9} parent=23 // pred_fallthru
          _
      $region24: #{mask_decoder_forward.9} parent=5 // pred_fallthru
        _
      %p509 = scmp.le.s32.totalorder 1, %s13
      %p510 = scmp.lt.s32.totalorder %s13, 3
      %p511 = pnand %p509, %p510
      %p512 = pneg %p511
      // Predicated region
      $region71: #{mask_decoder_forward.9} parent=5 // pred_check
        _
      $region72: #{mask_decoder_forward.9} parent=5 // pred_check_branch
        %514 = sbr.rel (%p511) target = $region74
      $region73: #{mask_decoder_forward.9} parent=5 // pred_region
        %s515 = ssub.s32 %s13, 1
        %s516 = sand.u32 %s26, 1
        %s517 = sand.u32 %s26, 1
        %s518 = smul.addr %s517, 512
        %s519 = scalar_lea.vmem [#allocation2], %s518
        // Predicated region
        $region75: #{mask_decoder_forward.9} parent=73 // pred_check
          %p520 = pneg %p39
        $region76: #{mask_decoder_forward.9} parent=73 // pred_check_branch
          %522 = sbr.rel (%p520) target = $region78
        $region77: #{mask_decoder_forward.9} parent=73 // pred_region
          _
        $region78: #{mask_decoder_forward.9} parent=73 // pred_fallthru
          _
        // Predicated region
        $region79: #{mask_decoder_forward.9} parent=73 // pred_check
          %p523 = pneg %p112
        $region80: #{mask_decoder_forward.9} parent=73 // pred_check_branch
          %525 = sbr.rel (%p523) target = $region82
        $region81: #{mask_decoder_forward.9} parent=73 // pred_region
          %526 = dma.done [#allocation4], 64
        $region82: #{mask_decoder_forward.9} parent=73 // pred_fallthru
          _
        // Predicated region
        $region83: #{mask_decoder_forward.9} parent=73 // pred_check
          %p527 = pneg %p133
        $region84: #{mask_decoder_forward.9} parent=73 // pred_check_branch
          %529 = sbr.rel (%p527) target = $region86
        $region85: #{mask_decoder_forward.9} parent=73 // pred_region
          %530 = dma.done [#allocation6], 16
        $region86: #{mask_decoder_forward.9} parent=73 // pred_fallthru
          _
        %531 = sfence
        %s532 = sand.u32 %s26, 1
        %s533 = sand.u32 %s26, 1
        %s534 = smul.addr %s533, 512
        %s535 = scalar_lea.vmem [#allocation2], %s534
        %p536 = pneg %p39
        %p537 = pneg %p36
        %p538 = scmp.lt.s32.totalorder %s18, 1
        %s539 = scalar_select %p538, %s18, 1
        %s540 = smul.addr %s539, 4
        %s541 = smul.addr %s540, 8
        %s542 = scalar_lea.vmem %s1, %s541
        %p543 = pneg %p65
        %p544 = pneg %p62
        %p545 = scmp.lt.s32.totalorder %s18, 1
        %s546 = scalar_select %p545, %s18, 1
        %s547 = smul.addr %s546, 4
        %s548 = scalar_lea.vmem %s2, %s547
        %p549 = pneg %p91
        %p550 = pneg %p88
        %p551 = pneg %p112
        %p552 = pneg %p109
        %p553 = pneg %p133
        %p554 = pneg %p130
        %p555 = pneg %p159
        %p556 = pneg %p156
        %p557 = scmp.lt.s32.totalorder %s18, 1
        %s558 = scalar_select %p557, %s18, 1
        %s559 = smul.addr %s558, 32
        %s560 = smul.addr %s559, 8
        %s561 = scalar_lea.vmem %s5, %s560
        %p562 = scmp.lt.s32.totalorder %s18, 1
        %s563 = scalar_select %p562, %s18, 1
        %s564 = smul.addr %s563, 4
        %s565 = smul.addr %s564, 8
        %s566 = scalar_lea.vmem %s1, %s565
        %p567 = scmp.lt.s32.totalorder %s18, 1
        %s568 = scalar_select %p567, %s18, 1
        %s569 = smul.addr %s568, 4
        %s570 = scalar_lea.vmem %s2, %s569
        %p571 = scmp.lt.s32.totalorder %s18, 1
        %s572 = scalar_select %p571, %s18, 1
        %s573 = smul.addr %s572, 32
        %s574 = smul.addr %s573, 8
        %s575 = scalar_lea.vmem %s5, %s574
        %v576 = vld [vmem:[%s519] sm:$0xff]
        %v577 = vld [vmem:[%s519 + $0x8] sm:$0xff]
        %v578 = vld [vmem:[%s519 + $0x10] sm:$0xff]
        %v579 = vld [vmem:[%s519 + $0x18] sm:$0xff]
        %v580 = vld [vmem:[%s519 + $0x20] sm:$0xff]
        %v581 = vld [vmem:[%s519 + $0x28] sm:$0xff]
        %v582 = vld [vmem:[%s519 + $0x30] sm:$0xff]
        %v583 = vld [vmem:[%s519 + $0x38] sm:$0xff]
        %v584 = vld [vmem:[%s519 + $0x40] sm:$0xff]
        %v585 = vld [vmem:[%s519 + $0x48] sm:$0xff]
        %v586 = vld [vmem:[%s519 + $0x50] sm:$0xff]
        %v587 = vld [vmem:[%s519 + $0x58] sm:$0xff]
        %v588 = vld [vmem:[%s519 + $0x60] sm:$0xff]
        %v589 = vld [vmem:[%s519 + $0x68] sm:$0xff]
        %v590 = vld [vmem:[%s519 + $0x70] sm:$0xff]
        %v591 = vld [vmem:[%s519 + $0x78] sm:$0xff]
        %v592 = vld [vmem:[%s519 + $0x80] sm:$0xff]
        %v593 = vld [vmem:[%s519 + $0x88] sm:$0xff]
        %v594 = vld [vmem:[%s519 + $0x90] sm:$0xff]
        %v595 = vld [vmem:[%s519 + $0x98] sm:$0xff]
        %v596 = vld [vmem:[%s519 + $0xa0] sm:$0xff]
        %v597 = vld [vmem:[%s519 + $0xa8] sm:$0xff]
        %v598 = vld [vmem:[%s519 + $0xb0] sm:$0xff]
        %v599 = vld [vmem:[%s519 + $0xb8] sm:$0xff]
        %v600 = vld [vmem:[%s519 + $0xc0] sm:$0xff]
        %v601 = vld [vmem:[%s519 + $0xc8] sm:$0xff]
        %v602 = vld [vmem:[%s519 + $0xd0] sm:$0xff]
        %v603 = vld [vmem:[%s519 + $0xd8] sm:$0xff]
        %v604 = vld [vmem:[%s519 + $0xe0] sm:$0xff]
        %v605 = vld [vmem:[%s519 + $0xe8] sm:$0xff]
        %v606 = vld [vmem:[%s519 + $0xf0] sm:$0xff]
        %v607 = vld [vmem:[%s519 + $0xf8] sm:$0xff]
        %v608 = vld [vmem:[%s519 + $0x100] sm:$0xff]
        %v609 = vld [vmem:[%s519 + $0x108] sm:$0xff]
        %v610 = vld [vmem:[%s519 + $0x110] sm:$0xff]
        %v611 = vld [vmem:[%s519 + $0x118] sm:$0xff]
        %v612 = vld [vmem:[%s519 + $0x120] sm:$0xff]
        %v613 = vld [vmem:[%s519 + $0x128] sm:$0xff]
        %v614 = vld [vmem:[%s519 + $0x130] sm:$0xff]
        %v615 = vld [vmem:[%s519 + $0x138] sm:$0xff]
        %v616 = vld [vmem:[%s519 + $0x140] sm:$0xff]
        %v617 = vld [vmem:[%s519 + $0x148] sm:$0xff]
        %v618 = vld [vmem:[%s519 + $0x150] sm:$0xff]
        %v619 = vld [vmem:[%s519 + $0x158] sm:$0xff]
        %v620 = vld [vmem:[%s519 + $0x160] sm:$0xff]
        %v621 = vld [vmem:[%s519 + $0x168] sm:$0xff]
        %v622 = vld [vmem:[%s519 + $0x170] sm:$0xff]
        %v623 = vld [vmem:[%s519 + $0x178] sm:$0xff]
        %v624 = vld [vmem:[%s519 + $0x180] sm:$0xff]
        %v625 = vld [vmem:[%s519 + $0x188] sm:$0xff]
        %v626 = vld [vmem:[%s519 + $0x190] sm:$0xff]
        %v627 = vld [vmem:[%s519 + $0x198] sm:$0xff]
        %v628 = vld [vmem:[%s519 + $0x1a0] sm:$0xff]
        %v629 = vld [vmem:[%s519 + $0x1a8] sm:$0xff]
        %v630 = vld [vmem:[%s519 + $0x1b0] sm:$0xff]
        %v631 = vld [vmem:[%s519 + $0x1b8] sm:$0xff]
        %v632 = vld [vmem:[%s519 + $0x1c0] sm:$0xff]
        %v633 = vld [vmem:[%s519 + $0x1c8] sm:$0xff]
        %v634 = vld [vmem:[%s519 + $0x1d0] sm:$0xff]
        %v635 = vld [vmem:[%s519 + $0x1d8] sm:$0xff]
        %v636 = vld [vmem:[%s519 + $0x1e0] sm:$0xff]
        %v637 = vld [vmem:[%s519 + $0x1e8] sm:$0xff]
        %v638 = vld [vmem:[%s519 + $0x1f0] sm:$0xff]
        %v639 = vld [vmem:[%s519 + $0x1f8] sm:$0xff]
        %v640 = vld [vmem:[%s566] sm:$0xff]
        %v641 = vld [vmem:[%s566 + $0x8] sm:$0xff]
        %v642 = vld [vmem:[%s566 + $0x10] sm:$0xff]
        %v643 = vld [vmem:[%s566 + $0x18] sm:$0xff]
        %vm644 = vcmask 261120
        %v646 = vsel %vm644, %v576, 0
        %v649 = vsel %vm644, %v577, 0
        %v652 = vsel %vm644, %v578, 0
        %v655 = vsel %vm644, %v579, 0
        %v658 = vsel %vm644, %v580, 0
        %v661 = vsel %vm644, %v581, 0
        %v664 = vsel %vm644, %v582, 0
        %v667 = vsel %vm644, %v583, 0
        %v670 = vsel %vm644, %v584, 0
        %v673 = vsel %vm644, %v585, 0
        %v676 = vsel %vm644, %v586, 0
        %v679 = vsel %vm644, %v587, 0
        %v682 = vsel %vm644, %v588, 0
        %v685 = vsel %vm644, %v589, 0
        %v688 = vsel %vm644, %v590, 0
        %v691 = vsel %vm644, %v591, 0
        %v694 = vsel %vm644, %v592, 0
        %v697 = vsel %vm644, %v593, 0
        %v700 = vsel %vm644, %v594, 0
        %v703 = vsel %vm644, %v595, 0
        %v706 = vsel %vm644, %v596, 0
        %v709 = vsel %vm644, %v597, 0
        %v712 = vsel %vm644, %v598, 0
        %v715 = vsel %vm644, %v599, 0
        %v718 = vsel %vm644, %v600, 0
        %v721 = vsel %vm644, %v601, 0
        %v724 = vsel %vm644, %v602, 0
        %v727 = vsel %vm644, %v603, 0
        %v730 = vsel %vm644, %v604, 0
        %v733 = vsel %vm644, %v605, 0
        %v736 = vsel %vm644, %v606, 0
        %v739 = vsel %vm644, %v607, 0
        %v742 = vsel %vm644, %v608, 0
        %v745 = vsel %vm644, %v609, 0
        %v748 = vsel %vm644, %v610, 0
        %v751 = vsel %vm644, %v611, 0
        %v754 = vsel %vm644, %v612, 0
        %v757 = vsel %vm644, %v613, 0
        %v760 = vsel %vm644, %v614, 0
        %v763 = vsel %vm644, %v615, 0
        %v766 = vsel %vm644, %v616, 0
        %v769 = vsel %vm644, %v617, 0
        %v772 = vsel %vm644, %v618, 0
        %v775 = vsel %vm644, %v619, 0
        %v778 = vsel %vm644, %v620, 0
        %v781 = vsel %vm644, %v621, 0
        %v784 = vsel %vm644, %v622, 0
        %v787 = vsel %vm644, %v623, 0
        %v790 = vsel %vm644, %v624, 0
        %v793 = vsel %vm644, %v625, 0
        %v796 = vsel %vm644, %v626, 0
        %v799 = vsel %vm644, %v627, 0
        %v802 = vsel %vm644, %v628, 0
        %v805 = vsel %vm644, %v629, 0
        %v808 = vsel %vm644, %v630, 0
        %v811 = vsel %vm644, %v631, 0
        %v814 = vsel %vm644, %v632, 0
        %v817 = vsel %vm644, %v633, 0
        %v820 = vsel %vm644, %v634, 0
        %v823 = vsel %vm644, %v635, 0
        %v826 = vsel %vm644, %v636, 0
        %v829 = vsel %vm644, %v637, 0
        %v832 = vsel %vm644, %v638, 0
        %v835 = vsel %vm644, %v639, 0
        %837 = vmatprep.subr.mxu0 0.0
        %838 = vmatpush1.msra.mxu0 %v640
        %839 = vmatprep.subr.mxu0 0.0
        %840 = vmatpush1.msra.mxu0 %v641
        %841 = vmatprep.subr.mxu0 0.0
        %842 = vmatpush1.msra.mxu0 %v642
        %843 = vmatprep.subr.mxu0 0.0
        %844 = vmatpush1.msra.mxu0 %v643
        %845 = vmatprep.subr.mxu0 0.0
        %846 = vmatpush1.msra.mxu0 0.0
        %847 = vmatprep.subr.mxu0 0.0
        %848 = vmatpush1.msra.mxu0 0.0
        %849 = vmatprep.subr.mxu0 0.0
        %850 = vmatpush1.msra.mxu0 0.0
        %851 = vmatprep.subr.mxu0 0.0
        %852 = vmatpush1.msra.mxu0 0.0
        %853 = vmatprep.subr.mxu0 0.0
        %854 = vmatpush1.msra.mxu0 0.0
        %855 = vmatprep.subr.mxu0 0.0
        %856 = vmatpush1.msra.mxu0 0.0
        %857 = vmatprep.subr.mxu0 0.0
        %858 = vmatpush1.msra.mxu0 0.0
        %859 = vmatprep.subr.mxu0 0.0
        %860 = vmatpush1.msra.mxu0 0.0
        %861 = vmatprep.subr.mxu0 0.0
        %862 = vmatpush1.msra.mxu0 0.0
        %863 = vmatprep.subr.mxu0 0.0
        %864 = vmatpush1.msra.mxu0 0.0
        %865 = vmatprep.subr.mxu0 0.0
        %866 = vmatpush1.msra.mxu0 0.0
        %867 = vmatprep.subr.mxu0 0.0
        %868 = vmatpush1.msra.mxu0 0.0
        %869 = vmatprep.subr.mxu0 0.0
        %870 = vmatpush1.msra.mxu0 0.0
        %871 = vmatprep.subr.mxu0 0.0
        %872 = vmatpush1.msra.mxu0 0.0
        %873 = vmatprep.subr.mxu0 0.0
        %874 = vmatpush1.msra.mxu0 0.0
        %875 = vmatprep.subr.mxu0 0.0
        %876 = vmatpush1.msra.mxu0 0.0
        %877 = vmatprep.subr.mxu0 0.0
        %878 = vmatpush1.msra.mxu0 0.0
        %879 = vmatprep.subr.mxu0 0.0
        %880 = vmatpush1.msra.mxu0 0.0
        %881 = vmatprep.subr.mxu0 0.0
        %882 = vmatpush1.msra.mxu0 0.0
        %883 = vmatprep.subr.mxu0 0.0
        %884 = vmatpush1.msra.mxu0 0.0
        %885 = vmatprep.subr.mxu0 0.0
        %886 = vmatpush1.msra.mxu0 0.0
        %887 = vmatprep.subr.mxu0 0.0
        %888 = vmatpush1.msra.mxu0 0.0
        %889 = vmatprep.subr.mxu0 0.0
        %890 = vmatpush1.msra.mxu0 0.0
        %891 = vmatprep.subr.mxu0 0.0
        %892 = vmatpush1.msra.mxu0 0.0
        %893 = vmatprep.subr.mxu0 0.0
        %894 = vmatpush1.msra.mxu0 0.0
        %895 = vmatprep.subr.mxu0 0.0
        %896 = vmatpush1.msra.mxu0 0.0
        %897 = vmatprep.subr.mxu0 0.0
        %898 = vmatpush1.msra.mxu0 0.0
        %899 = vmatprep.subr.mxu0 0.0
        %900 = vmatpush1.msra.mxu0 0.0
        %901 = vmatprep.mubr.f32.mxu0 0.0
        %902 = vmatmul.mubr.f32.gmra.mrb[0].mxu0 %v646
        %v903 = vpop.f32.mrb[0].mxu0
        %v904 = vadd.f32 0.0, %v903
        %v905 = vpop.f32.mrb[0].mxu0
        %906 = vmatprep.mubr.f32.mxu0 0.0
        %907 = vmatmul.mubr.f32.gmra.mrb[0].mxu0 %v649
        %v908 = vpop.f32.mrb[0].mxu0
        %v909 = vadd.f32 0.0, %v908
        %v910 = vpop.f32.mrb[0].mxu0
        %911 = vmatprep.mubr.f32.mxu0 0.0
        %912 = vmatmul.mubr.f32.gmra.mrb[0].mxu0 %v652
        %v913 = vpop.f32.mrb[0].mxu0
        %v914 = vadd.f32 0.0, %v913
        %v915 = vpop.f32.mrb[0].mxu0
        %916 = vmatprep.mubr.f32.mxu0 0.0
        %917 = vmatmul.mubr.f32.gmra.mrb[0].mxu0 %v655
        %v918 = vpop.f32.mrb[0].mxu0
        %v919 = vadd.f32 0.0, %v918
        %v920 = vpop.f32.mrb[0].mxu0
        %921 = vmatprep.mubr.f32.mxu0 0.0
        %922 = vmatmul.mubr.f32.gmra.mrb[0].mxu0 %v658
        %v923 = vpop.f32.mrb[0].mxu0
        %v924 = vadd.f32 0.0, %v923
        %v925 = vpop.f32.mrb[0].mxu0
        %926 = vmatprep.mubr.f32.mxu0 0.0
        %927 = vmatmul.mubr.f32.gmra.mrb[0].mxu0 %v661
        %v928 = vpop.f32.mrb[0].mxu0
        %v929 = vadd.f32 0.0, %v928
        %v930 = vpop.f32.mrb[0].mxu0
        %931 = vmatprep.mubr.f32.mxu0 0.0
        %932 = vmatmul.mubr.f32.gmra.mrb[0].mxu0 %v664
        %v933 = vpop.f32.mrb[0].mxu0
        %v934 = vadd.f32 0.0, %v933
        %v935 = vpop.f32.mrb[0].mxu0
        %936 = vmatprep.mubr.f32.mxu0 0.0
        %937 = vmatmul.mubr.f32.gmra.mrb[0].mxu0 %v667
        %v938 = vpop.f32.mrb[0].mxu0
        %v939 = vadd.f32 0.0, %v938
        %v940 = vpop.f32.mrb[0].mxu0
        %941 = vmatprep.mubr.f32.mxu0 0.0
        %942 = vmatmul.mubr.f32.gmra.mrb[0].mxu0 %v670
        %v943 = vpop.f32.mrb[0].mxu0
        %v944 = vadd.f32 0.0, %v943
        %v945 = vpop.f32.mrb[0].mxu0
        %946 = vmatprep.mubr.f32.mxu0 0.0
        %947 = vmatmul.mubr.f32.gmra.mrb[0].mxu0 %v673
        %v948 = vpop.f32.mrb[0].mxu0
        %v949 = vadd.f32 0.0, %v948
        %v950 = vpop.f32.mrb[0].mxu0
        %951 = vmatprep.mubr.f32.mxu0 0.0
        %952 = vmatmul.mubr.f32.gmra.mrb[0].mxu0 %v676
        %v953 = vpop.f32.mrb[0].mxu0
        %v954 = vadd.f32 0.0, %v953
        %v955 = vpop.f32.mrb[0].mxu0
        %956 = vmatprep.mubr.f32.mxu0 0.0
        %957 = vmatmul.mubr.f32.gmra.mrb[0].mxu0 %v679
        %v958 = vpop.f32.mrb[0].mxu0
        %v959 = vadd.f32 0.0, %v958
        %v960 = vpop.f32.mrb[0].mxu0
        %961 = vmatprep.mubr.f32.mxu0 0.0
        %962 = vmatmul.mubr.f32.gmra.mrb[0].mxu0 %v682
        %v963 = vpop.f32.mrb[0].mxu0
        %v964 = vadd.f32 0.0, %v963
        %v965 = vpop.f32.mrb[0].mxu0
        %966 = vmatprep.mubr.f32.mxu0 0.0
        %967 = vmatmul.mubr.f32.gmra.mrb[0].mxu0 %v685
        %v968 = vpop.f32.mrb[0].mxu0
        %v969 = vadd.f32 0.0, %v968
        %v970 = vpop.f32.mrb[0].mxu0
        %971 = vmatprep.mubr.f32.mxu0 0.0
        %972 = vmatmul.mubr.f32.gmra.mrb[0].mxu0 %v688
        %v973 = vpop.f32.mrb[0].mxu0
        %v974 = vadd.f32 0.0, %v973
        %v975 = vpop.f32.mrb[0].mxu0
        %976 = vmatprep.mubr.f32.mxu0 0.0
        %977 = vmatmul.mubr.f32.gmra.mrb[0].mxu0 %v691
        %v978 = vpop.f32.mrb[0].mxu0
        %v979 = vadd.f32 0.0, %v978
        %v980 = vpop.f32.mrb[0].mxu0
        %981 = vmatprep.mubr.f32.mxu0 0.0
        %982 = vmatmul.mubr.f32.gmra.mrb[0].mxu0 %v694
        %v983 = vpop.f32.mrb[0].mxu0
        %v984 = vadd.f32 0.0, %v983
        %v985 = vpop.f32.mrb[0].mxu0
        %986 = vmatprep.mubr.f32.mxu0 0.0
        %987 = vmatmul.mubr.f32.gmra.mrb[0].mxu0 %v697
        %v988 = vpop.f32.mrb[0].mxu0
        %v989 = vadd.f32 0.0, %v988
        %v990 = vpop.f32.mrb[0].mxu0
        %991 = vmatprep.mubr.f32.mxu0 0.0
        %992 = vmatmul.mubr.f32.gmra.mrb[0].mxu0 %v700
        %v993 = vpop.f32.mrb[0].mxu0
        %v994 = vadd.f32 0.0, %v993
        %v995 = vpop.f32.mrb[0].mxu0
        %996 = vmatprep.mubr.f32.mxu0 0.0
        %997 = vmatmul.mubr.f32.gmra.mrb[0].mxu0 %v703
        %v998 = vpop.f32.mrb[0].mxu0
        %v999 = vadd.f32 0.0, %v998
        %v1000 = vpop.f32.mrb[0].mxu0
        %1001 = vmatprep.mubr.f32.mxu0 0.0
        %1002 = vmatmul.mubr.f32.gmra.mrb[0].mxu0 %v706
        %v1003 = vpop.f32.mrb[0].mxu0
        %v1004 = vadd.f32 0.0, %v1003
        %v1005 = vpop.f32.mrb[0].mxu0
        %1006 = vmatprep.mubr.f32.mxu0 0.0
        %1007 = vmatmul.mubr.f32.gmra.mrb[0].mxu0 %v709
        %v1008 = vpop.f32.mrb[0].mxu0
        %v1009 = vadd.f32 0.0, %v1008
        %v1010 = vpop.f32.mrb[0].mxu0
        %1011 = vmatprep.mubr.f32.mxu0 0.0
        %1012 = vmatmul.mubr.f32.gmra.mrb[0].mxu0 %v712
        %v1013 = vpop.f32.mrb[0].mxu0
        %v1014 = vadd.f32 0.0, %v1013
        %v1015 = vpop.f32.mrb[0].mxu0
        %1016 = vmatprep.mubr.f32.mxu0 0.0
        %1017 = vmatmul.mubr.f32.gmra.mrb[0].mxu0 %v715
        %v1018 = vpop.f32.mrb[0].mxu0
        %v1019 = vadd.f32 0.0, %v1018
        %v1020 = vpop.f32.mrb[0].mxu0
        %1021 = vmatprep.mubr.f32.mxu0 0.0
        %1022 = vmatmul.mubr.f32.gmra.mrb[0].mxu0 %v718
        %v1023 = vpop.f32.mrb[0].mxu0
        %v1024 = vadd.f32 0.0, %v1023
        %v1025 = vpop.f32.mrb[0].mxu0
        %1026 = vmatprep.mubr.f32.mxu0 0.0
        %1027 = vmatmul.mubr.f32.gmra.mrb[0].mxu0 %v721
        %v1028 = vpop.f32.mrb[0].mxu0
        %v1029 = vadd.f32 0.0, %v1028
        %v1030 = vpop.f32.mrb[0].mxu0
        %1031 = vmatprep.mubr.f32.mxu0 0.0
        %1032 = vmatmul.mubr.f32.gmra.mrb[0].mxu0 %v724
        %v1033 = vpop.f32.mrb[0].mxu0
        %v1034 = vadd.f32 0.0, %v1033
        %v1035 = vpop.f32.mrb[0].mxu0
        %1036 = vmatprep.mubr.f32.mxu0 0.0
        %1037 = vmatmul.mubr.f32.gmra.mrb[0].mxu0 %v727
        %v1038 = vpop.f32.mrb[0].mxu0
        %v1039 = vadd.f32 0.0, %v1038
        %v1040 = vpop.f32.mrb[0].mxu0
        %1041 = vmatprep.mubr.f32.mxu0 0.0
        %1042 = vmatmul.mubr.f32.gmra.mrb[0].mxu0 %v730
        %v1043 = vpop.f32.mrb[0].mxu0
        %v1044 = vadd.f32 0.0, %v1043
        %v1045 = vpop.f32.mrb[0].mxu0
        %1046 = vmatprep.mubr.f32.mxu0 0.0
        %1047 = vmatmul.mubr.f32.gmra.mrb[0].mxu0 %v733
        %v1048 = vpop.f32.mrb[0].mxu0
        %v1049 = vadd.f32 0.0, %v1048
        %v1050 = vpop.f32.mrb[0].mxu0
        %1051 = vmatprep.mubr.f32.mxu0 0.0
        %1052 = vmatmul.mubr.f32.gmra.mrb[0].mxu0 %v736
        %v1053 = vpop.f32.mrb[0].mxu0
        %v1054 = vadd.f32 0.0, %v1053
        %v1055 = vpop.f32.mrb[0].mxu0
        %1056 = vmatprep.mubr.f32.mxu0 0.0
        %1057 = vmatmul.mubr.f32.gmra.mrb[0].mxu0 %v739
        %v1058 = vpop.f32.mrb[0].mxu0
        %v1059 = vadd.f32 0.0, %v1058
        %v1060 = vpop.f32.mrb[0].mxu0
        %1061 = vmatprep.mubr.f32.mxu0 0.0
        %1062 = vmatmul.mubr.f32.gmra.mrb[0].mxu0 %v742
        %v1063 = vpop.f32.mrb[0].mxu0
        %v1064 = vadd.f32 0.0, %v1063
        %v1065 = vpop.f32.mrb[0].mxu0
        %1066 = vmatprep.mubr.f32.mxu0 0.0
        %1067 = vmatmul.mubr.f32.gmra.mrb[0].mxu0 %v745
        %v1068 = vpop.f32.mrb[0].mxu0
        %v1069 = vadd.f32 0.0, %v1068
        %v1070 = vpop.f32.mrb[0].mxu0
        %1071 = vmatprep.mubr.f32.mxu0 0.0
        %1072 = vmatmul.mubr.f32.gmra.mrb[0].mxu0 %v748
        %v1073 = vpop.f32.mrb[0].mxu0
        %v1074 = vadd.f32 0.0, %v1073
        %v1075 = vpop.f32.mrb[0].mxu0
        %1076 = vmatprep.mubr.f32.mxu0 0.0
        %1077 = vmatmul.mubr.f32.gmra.mrb[0].mxu0 %v751
        %v1078 = vpop.f32.mrb[0].mxu0
        %v1079 = vadd.f32 0.0, %v1078
        %v1080 = vpop.f32.mrb[0].mxu0
        %1081 = vmatprep.mubr.f32.mxu0 0.0
        %1082 = vmatmul.mubr.f32.gmra.mrb[0].mxu0 %v754
        %v1083 = vpop.f32.mrb[0].mxu0
        %v1084 = vadd.f32 0.0, %v1083
        %v1085 = vpop.f32.mrb[0].mxu0
        %1086 = vmatprep.mubr.f32.mxu0 0.0
        %1087 = vmatmul.mubr.f32.gmra.mrb[0].mxu0 %v757
        %v1088 = vpop.f32.mrb[0].mxu0
        %v1089 = vadd.f32 0.0, %v1088
        %v1090 = vpop.f32.mrb[0].mxu0
        %1091 = vmatprep.mubr.f32.mxu0 0.0
        %1092 = vmatmul.mubr.f32.gmra.mrb[0].mxu0 %v760
        %v1093 = vpop.f32.mrb[0].mxu0
        %v1094 = vadd.f32 0.0, %v1093
        %v1095 = vpop.f32.mrb[0].mxu0
        %1096 = vmatprep.mubr.f32.mxu0 0.0
        %1097 = vmatmul.mubr.f32.gmra.mrb[0].mxu0 %v763
        %v1098 = vpop.f32.mrb[0].mxu0
        %v1099 = vadd.f32 0.0, %v1098
        %v1100 = vpop.f32.mrb[0].mxu0
        %1101 = vmatprep.mubr.f32.mxu0 0.0
        %1102 = vmatmul.mubr.f32.gmra.mrb[0].mxu0 %v766
        %v1103 = vpop.f32.mrb[0].mxu0
        %v1104 = vadd.f32 0.0, %v1103
        %v1105 = vpop.f32.mrb[0].mxu0
        %1106 = vmatprep.mubr.f32.mxu0 0.0
        %1107 = vmatmul.mubr.f32.gmra.mrb[0].mxu0 %v769
        %v1108 = vpop.f32.mrb[0].mxu0
        %v1109 = vadd.f32 0.0, %v1108
        %v1110 = vpop.f32.mrb[0].mxu0
        %1111 = vmatprep.mubr.f32.mxu0 0.0
        %1112 = vmatmul.mubr.f32.gmra.mrb[0].mxu0 %v772
        %v1113 = vpop.f32.mrb[0].mxu0
        %v1114 = vadd.f32 0.0, %v1113
        %v1115 = vpop.f32.mrb[0].mxu0
        %1116 = vmatprep.mubr.f32.mxu0 0.0
        %1117 = vmatmul.mubr.f32.gmra.mrb[0].mxu0 %v775
        %v1118 = vpop.f32.mrb[0].mxu0
        %v1119 = vadd.f32 0.0, %v1118
        %v1120 = vpop.f32.mrb[0].mxu0
        %1121 = vmatprep.mubr.f32.mxu0 0.0
        %1122 = vmatmul.mubr.f32.gmra.mrb[0].mxu0 %v778
        %v1123 = vpop.f32.mrb[0].mxu0
        %v1124 = vadd.f32 0.0, %v1123
        %v1125 = vpop.f32.mrb[0].mxu0
        %1126 = vmatprep.mubr.f32.mxu0 0.0
        %1127 = vmatmul.mubr.f32.gmra.mrb[0].mxu0 %v781
        %v1128 = vpop.f32.mrb[0].mxu0
        %v1129 = vadd.f32 0.0, %v1128
        %v1130 = vpop.f32.mrb[0].mxu0
        %1131 = vmatprep.mubr.f32.mxu0 0.0
        %1132 = vmatmul.mubr.f32.gmra.mrb[0].mxu0 %v784
        %v1133 = vpop.f32.mrb[0].mxu0
        %v1134 = vadd.f32 0.0, %v1133
        %v1135 = vpop.f32.mrb[0].mxu0
        %1136 = vmatprep.mubr.f32.mxu0 0.0
        %1137 = vmatmul.mubr.f32.gmra.mrb[0].mxu0 %v787
        %v1138 = vpop.f32.mrb[0].mxu0
        %v1139 = vadd.f32 0.0, %v1138
        %v1140 = vpop.f32.mrb[0].mxu0
        %1141 = vmatprep.mubr.f32.mxu0 0.0
        %1142 = vmatmul.mubr.f32.gmra.mrb[0].mxu0 %v790
        %v1143 = vpop.f32.mrb[0].mxu0
        %v1144 = vadd.f32 0.0, %v1143
        %v1145 = vpop.f32.mrb[0].mxu0
        %1146 = vmatprep.mubr.f32.mxu0 0.0
        %1147 = vmatmul.mubr.f32.gmra.mrb[0].mxu0 %v793
        %v1148 = vpop.f32.mrb[0].mxu0
        %v1149 = vadd.f32 0.0, %v1148
        %v1150 = vpop.f32.mrb[0].mxu0
        %1151 = vmatprep.mubr.f32.mxu0 0.0
        %1152 = vmatmul.mubr.f32.gmra.mrb[0].mxu0 %v796
        %v1153 = vpop.f32.mrb[0].mxu0
        %v1154 = vadd.f32 0.0, %v1153
        %v1155 = vpop.f32.mrb[0].mxu0
        %1156 = vmatprep.mubr.f32.mxu0 0.0
        %1157 = vmatmul.mubr.f32.gmra.mrb[0].mxu0 %v799
        %v1158 = vpop.f32.mrb[0].mxu0
        %v1159 = vadd.f32 0.0, %v1158
        %v1160 = vpop.f32.mrb[0].mxu0
        %1161 = vmatprep.mubr.f32.mxu0 0.0
        %1162 = vmatmul.mubr.f32.gmra.mrb[0].mxu0 %v802
        %v1163 = vpop.f32.mrb[0].mxu0
        %v1164 = vadd.f32 0.0, %v1163
        %v1165 = vpop.f32.mrb[0].mxu0
        %1166 = vmatprep.mubr.f32.mxu0 0.0
        %1167 = vmatmul.mubr.f32.gmra.mrb[0].mxu0 %v805
        %v1168 = vpop.f32.mrb[0].mxu0
        %v1169 = vadd.f32 0.0, %v1168
        %v1170 = vpop.f32.mrb[0].mxu0
        %1171 = vmatprep.mubr.f32.mxu0 0.0
        %1172 = vmatmul.mubr.f32.gmra.mrb[0].mxu0 %v808
        %v1173 = vpop.f32.mrb[0].mxu0
        %v1174 = vadd.f32 0.0, %v1173
        %v1175 = vpop.f32.mrb[0].mxu0
        %1176 = vmatprep.mubr.f32.mxu0 0.0
        %1177 = vmatmul.mubr.f32.gmra.mrb[0].mxu0 %v811
        %v1178 = vpop.f32.mrb[0].mxu0
        %v1179 = vadd.f32 0.0, %v1178
        %v1180 = vpop.f32.mrb[0].mxu0
        %1181 = vmatprep.mubr.f32.mxu0 0.0
        %1182 = vmatmul.mubr.f32.gmra.mrb[0].mxu0 %v814
        %v1183 = vpop.f32.mrb[0].mxu0
        %v1184 = vadd.f32 0.0, %v1183
        %v1185 = vpop.f32.mrb[0].mxu0
        %1186 = vmatprep.mubr.f32.mxu0 0.0
        %1187 = vmatmul.mubr.f32.gmra.mrb[0].mxu0 %v817
        %v1188 = vpop.f32.mrb[0].mxu0
        %v1189 = vadd.f32 0.0, %v1188
        %v1190 = vpop.f32.mrb[0].mxu0
        %1191 = vmatprep.mubr.f32.mxu0 0.0
        %1192 = vmatmul.mubr.f32.gmra.mrb[0].mxu0 %v820
        %v1193 = vpop.f32.mrb[0].mxu0
        %v1194 = vadd.f32 0.0, %v1193
        %v1195 = vpop.f32.mrb[0].mxu0
        %1196 = vmatprep.mubr.f32.mxu0 0.0
        %1197 = vmatmul.mubr.f32.gmra.mrb[0].mxu0 %v823
        %v1198 = vpop.f32.mrb[0].mxu0
        %v1199 = vadd.f32 0.0, %v1198
        %v1200 = vpop.f32.mrb[0].mxu0
        %1201 = vmatprep.mubr.f32.mxu0 0.0
        %1202 = vmatmul.mubr.f32.gmra.mrb[0].mxu0 %v826
        %v1203 = vpop.f32.mrb[0].mxu0
        %v1204 = vadd.f32 0.0, %v1203
        %v1205 = vpop.f32.mrb[0].mxu0
        %1206 = vmatprep.mubr.f32.mxu0 0.0
        %1207 = vmatmul.mubr.f32.gmra.mrb[0].mxu0 %v829
        %v1208 = vpop.f32.mrb[0].mxu0
        %v1209 = vadd.f32 0.0, %v1208
        %v1210 = vpop.f32.mrb[0].mxu0
        %1211 = vmatprep.mubr.f32.mxu0 0.0
        %1212 = vmatmul.mubr.f32.gmra.mrb[0].mxu0 %v832
        %v1213 = vpop.f32.mrb[0].mxu0
        %v1214 = vadd.f32 0.0, %v1213
        %v1215 = vpop.f32.mrb[0].mxu0
        %1216 = vmatprep.mubr.f32.mxu0 0.0
        %1217 = vmatmul.mubr.f32.gmra.mrb[0].mxu0 %v835
        %v1218 = vpop.f32.mrb[0].mxu0
        %v1219 = vadd.f32 0.0, %v1218
        %v1220 = vpop.f32.mrb[0].mxu0
        %1221 = vdwg.mxu0
        %v1222 = vld [vmem:[%s570] sm:$0xf]
        %vm1223 = vcmask 19456
        %v1224 = vsel %vm1223, %v1222, 0.0
        %v1225 = vrot.slane %v1224, 4
        %v1226 = vadd.f32 %v1224, %v1225
        %v1227 = vrot.slane %v1226, 2
        %v1228 = vadd.f32 %v1226, %v1227
        %v1229 = vrot.slane %v1228, 1
        %v1230 = vadd.f32 %v1228, %v1229
        %1232 = vrot.lane.b32.xlu0 %v1230, 3
        %v1233 = vpop.permute.xlu0 %1232
        %1235 = vrot.lane.b32.xlu0 %v1230, 6
        %v1236 = vpop.permute.xlu0 %1235
        %1238 = vrot.lane.b32.xlu0 %v1230, 9
        %v1239 = vpop.permute.xlu0 %1238
        %1241 = vrot.lane.b32.xlu0 %v1230, 12
        %v1242 = vpop.permute.xlu0 %1241
        %1244 = vrot.lane.b32.xlu0 %v1230, 15
        %v1245 = vpop.permute.xlu0 %1244
        %1247 = vrot.lane.b32.xlu0 %v1230, 18
        %v1248 = vpop.permute.xlu0 %1247
        %1250 = vrot.lane.b32.xlu0 %v1230, 21
        %v1251 = vpop.permute.xlu0 %1250
        %vm1253 = vcmask 23552
        %v1254 = vsel %vm1253, %v1230, %v1233
        %vm1255 = vcmask 48128
        %v1256 = vsel %vm1255, %v1254, %v1236
        %vm1257 = vcmask 72704
        %v1258 = vsel %vm1257, %v1256, %v1239
        %vm1259 = vcmask 97280
        %v1260 = vsel %vm1259, %v1258, %v1242
        %vm1261 = vcmask 121856
        %v1262 = vsel %vm1261, %v1260, %v1245
        %vm1263 = vcmask 146432
        %v1264 = vsel %vm1263, %v1262, %v1248
        %vm1265 = vcmask 171008
        %v1266 = vsel %vm1265, %v1264, %v1251
        %s1267 = sld [smem:[#allocation3]]
        %v1268 = vstv %s1267
        %v1269 = vmul.f32 %v1268, %v904
        %v1270 = vmul.f32 %v1268, %v909
        %v1271 = vmul.f32 %v1268, %v944
        %v1272 = vmul.f32 %v1268, %v949
        %v1273 = vmul.f32 %v1268, %v984
        %v1274 = vmul.f32 %v1268, %v989
        %v1275 = vmul.f32 %v1268, %v1024
        %v1276 = vmul.f32 %v1268, %v1029
        %v1277 = vmul.f32 %v1268, %v1064
        %v1278 = vmul.f32 %v1268, %v1069
        %v1279 = vmul.f32 %v1268, %v1104
        %v1280 = vmul.f32 %v1268, %v1109
        %v1281 = vmul.f32 %v1268, %v1144
        %v1282 = vmul.f32 %v1268, %v1149
        %v1283 = vmul.f32 %v1268, %v1184
        %v1284 = vmul.f32 %v1268, %v1189
        %v1285 = vadd.f32 %v1269, 0.0
        %v1286 = vadd.f32 %v1270, 0.0
        %v1287 = vadd.f32 %v1271, 0.0
        %v1288 = vadd.f32 %v1272, 0.0
        %v1289 = vadd.f32 %v1273, 0.0
        %v1290 = vadd.f32 %v1274, 0.0
        %v1291 = vadd.f32 %v1275, 0.0
        %v1292 = vadd.f32 %v1276, 0.0
        %v1293 = vadd.f32 %v1277, 0.0
        %v1294 = vadd.f32 %v1278, 0.0
        %v1295 = vadd.f32 %v1279, 0.0
        %v1296 = vadd.f32 %v1280, 0.0
        %v1297 = vadd.f32 %v1281, 0.0
        %v1298 = vadd.f32 %v1282, 0.0
        %v1299 = vadd.f32 %v1283, 0.0
        %v1300 = vadd.f32 %v1284, 0.0
        %s1301 = sld [smem:[#allocation3 + $0x80]]
        %v1302 = vstv %s1301
        %v1303 = vmul.f32 %v1302, %v914
        %v1304 = vmul.f32 %v1302, %v919
        %v1305 = vmul.f32 %v1302, %v954
        %v1306 = vmul.f32 %v1302, %v959
        %v1307 = vmul.f32 %v1302, %v994
        %v1308 = vmul.f32 %v1302, %v999
        %v1309 = vmul.f32 %v1302, %v1034
        %v1310 = vmul.f32 %v1302, %v1039
        %v1311 = vmul.f32 %v1302, %v1074
        %v1312 = vmul.f32 %v1302, %v1079
        %v1313 = vmul.f32 %v1302, %v1114
        %v1314 = vmul.f32 %v1302, %v1119
        %v1315 = vmul.f32 %v1302, %v1154
        %v1316 = vmul.f32 %v1302, %v1159
        %v1317 = vmul.f32 %v1302, %v1194
        %v1318 = vmul.f32 %v1302, %v1199
        %v1319 = vadd.f32 %v1285, %v1303
        %v1320 = vadd.f32 %v1286, %v1304
        %v1321 = vadd.f32 %v1287, %v1305
        %v1322 = vadd.f32 %v1288, %v1306
        %v1323 = vadd.f32 %v1289, %v1307
        %v1324 = vadd.f32 %v1290, %v1308
        %v1325 = vadd.f32 %v1291, %v1309
        %v1326 = vadd.f32 %v1292, %v1310
        %v1327 = vadd.f32 %v1293, %v1311
        %v1328 = vadd.f32 %v1294, %v1312
        %v1329 = vadd.f32 %v1295, %v1313
        %v1330 = vadd.f32 %v1296, %v1314
        %v1331 = vadd.f32 %v1297, %v1315
        %v1332 = vadd.f32 %v1298, %v1316
        %v1333 = vadd.f32 %v1299, %v1317
        %v1334 = vadd.f32 %v1300, %v1318
        %s1335 = sld [smem:[#allocation3 + $0x100]]
        %v1336 = vstv %s1335
        %v1337 = vmul.f32 %v1336, %v924
        %v1338 = vmul.f32 %v1336, %v929
        %v1339 = vmul.f32 %v1336, %v964
        %v1340 = vmul.f32 %v1336, %v969
        %v1341 = vmul.f32 %v1336, %v1004
        %v1342 = vmul.f32 %v1336, %v1009
        %v1343 = vmul.f32 %v1336, %v1044
        %v1344 = vmul.f32 %v1336, %v1049
        %v1345 = vmul.f32 %v1336, %v1084
        %v1346 = vmul.f32 %v1336, %v1089
        %v1347 = vmul.f32 %v1336, %v1124
        %v1348 = vmul.f32 %v1336, %v1129
        %v1349 = vmul.f32 %v1336, %v1164
        %v1350 = vmul.f32 %v1336, %v1169
        %v1351 = vmul.f32 %v1336, %v1204
        %v1352 = vmul.f32 %v1336, %v1209
        %v1353 = vadd.f32 %v1319, %v1337
        %v1354 = vadd.f32 %v1320, %v1338
        %v1355 = vadd.f32 %v1321, %v1339
        %v1356 = vadd.f32 %v1322, %v1340
        %v1357 = vadd.f32 %v1323, %v1341
        %v1358 = vadd.f32 %v1324, %v1342
        %v1359 = vadd.f32 %v1325, %v1343
        %v1360 = vadd.f32 %v1326, %v1344
        %v1361 = vadd.f32 %v1327, %v1345
        %v1362 = vadd.f32 %v1328, %v1346
        %v1363 = vadd.f32 %v1329, %v1347
        %v1364 = vadd.f32 %v1330, %v1348
        %v1365 = vadd.f32 %v1331, %v1349
        %v1366 = vadd.f32 %v1332, %v1350
        %v1367 = vadd.f32 %v1333, %v1351
        %v1368 = vadd.f32 %v1334, %v1352
        %s1369 = sld [smem:[#allocation3 + $0x180]]
        %v1370 = vstv %s1369
        %v1371 = vmul.f32 %v1370, %v934
        %v1372 = vmul.f32 %v1370, %v939
        %v1373 = vmul.f32 %v1370, %v974
        %v1374 = vmul.f32 %v1370, %v979
        %v1375 = vmul.f32 %v1370, %v1014
        %v1376 = vmul.f32 %v1370, %v1019
        %v1377 = vmul.f32 %v1370, %v1054
        %v1378 = vmul.f32 %v1370, %v1059
        %v1379 = vmul.f32 %v1370, %v1094
        %v1380 = vmul.f32 %v1370, %v1099
        %v1381 = vmul.f32 %v1370, %v1134
        %v1382 = vmul.f32 %v1370, %v1139
        %v1383 = vmul.f32 %v1370, %v1174
        %v1384 = vmul.f32 %v1370, %v1179
        %v1385 = vmul.f32 %v1370, %v1214
        %v1386 = vmul.f32 %v1370, %v1219
        %v1387 = vadd.f32 %v1353, %v1371
        %v1388 = vadd.f32 %v1354, %v1372
        %v1389 = vadd.f32 %v1355, %v1373
        %v1390 = vadd.f32 %v1356, %v1374
        %v1391 = vadd.f32 %v1357, %v1375
        %v1392 = vadd.f32 %v1358, %v1376
        %v1393 = vadd.f32 %v1359, %v1377
        %v1394 = vadd.f32 %v1360, %v1378
        %v1395 = vadd.f32 %v1361, %v1379
        %v1396 = vadd.f32 %v1362, %v1380
        %v1397 = vadd.f32 %v1363, %v1381
        %v1398 = vadd.f32 %v1364, %v1382
        %v1399 = vadd.f32 %v1365, %v1383
        %v1400 = vadd.f32 %v1366, %v1384
        %v1401 = vadd.f32 %v1367, %v1385
        %v1402 = vadd.f32 %v1368, %v1386
        %s1403 = sld [smem:[#allocation5]]
        %v1404 = vstv %s1403
        %v1405 = vmul.f32 %v1404, %v1266
        %v1406 = vlaneseq
        %v1407 = vshrl.u32 %v1406, 7
        %v1408 = vsub.s32 0, %v1407
        %v1409 = vrot.slane %v1405, %v1408
        %v1410 = vadd.f32 %v1387, %v1409
        %v1411 = vadd.f32 %v1388, %v1409
        %v1412 = vadd.f32 %v1389, %v1409
        %v1413 = vadd.f32 %v1390, %v1409
        %v1414 = vadd.f32 %v1391, %v1409
        %v1415 = vadd.f32 %v1392, %v1409
        %v1416 = vadd.f32 %v1393, %v1409
        %v1417 = vadd.f32 %v1394, %v1409
        %v1418 = vadd.f32 %v1395, %v1409
        %v1419 = vadd.f32 %v1396, %v1409
        %v1420 = vadd.f32 %v1397, %v1409
        %v1421 = vadd.f32 %v1398, %v1409
        %v1422 = vadd.f32 %v1399, %v1409
        %v1423 = vadd.f32 %v1400, %v1409
        %v1424 = vadd.f32 %v1401, %v1409
        %v1425 = vadd.f32 %v1402, %v1409
        %vm1426 = vcmask 195584
        %1427 = vst.msk [vmem:[%s575] sm:$0xff] %vm1426, %v1410
        %1428 = vst.msk [vmem:[%s575 + $0x8] sm:$0xff] %vm1426, %v1411
        %1429 = vst.msk [vmem:[%s575 + $0x10] sm:$0xff] %vm1426, %v1412
        %1430 = vst.msk [vmem:[%s575 + $0x18] sm:$0xff] %vm1426, %v1413
        %1431 = vst.msk [vmem:[%s575 + $0x20] sm:$0xff] %vm1426, %v1414
        %1432 = vst.msk [vmem:[%s575 + $0x28] sm:$0xff] %vm1426, %v1415
        %1433 = vst.msk [vmem:[%s575 + $0x30] sm:$0xff] %vm1426, %v1416
        %1434 = vst.msk [vmem:[%s575 + $0x38] sm:$0xff] %vm1426, %v1417
        %1435 = vst.msk [vmem:[%s575 + $0x40] sm:$0xff] %vm1426, %v1418
        %1436 = vst.msk [vmem:[%s575 + $0x48] sm:$0xff] %vm1426, %v1419
        %1437 = vst.msk [vmem:[%s575 + $0x50] sm:$0xff] %vm1426, %v1420
        %1438 = vst.msk [vmem:[%s575 + $0x58] sm:$0xff] %vm1426, %v1421
        %1439 = vst.msk [vmem:[%s575 + $0x60] sm:$0xff] %vm1426, %v1422
        %1440 = vst.msk [vmem:[%s575 + $0x68] sm:$0xff] %vm1426, %v1423
        %1441 = vst.msk [vmem:[%s575 + $0x70] sm:$0xff] %vm1426, %v1424
        %1442 = vst.msk [vmem:[%s575 + $0x78] sm:$0xff] %vm1426, %v1425
        %s1443 = sld [smem:[#allocation3 + $0x1]]
        %v1444 = vstv %s1443
        %v1445 = vmul.f32 %v1444, %v904
        %v1446 = vmul.f32 %v1444, %v909
        %v1447 = vmul.f32 %v1444, %v944
        %v1448 = vmul.f32 %v1444, %v949
        %v1449 = vmul.f32 %v1444, %v984
        %v1450 = vmul.f32 %v1444, %v989
        %v1451 = vmul.f32 %v1444, %v1024
        %v1452 = vmul.f32 %v1444, %v1029
        %v1453 = vmul.f32 %v1444, %v1064
        %v1454 = vmul.f32 %v1444, %v1069
        %v1455 = vmul.f32 %v1444, %v1104
        %v1456 = vmul.f32 %v1444, %v1109
        %v1457 = vmul.f32 %v1444, %v1144
        %v1458 = vmul.f32 %v1444, %v1149
        %v1459 = vmul.f32 %v1444, %v1184
        %v1460 = vmul.f32 %v1444, %v1189
        %v1461 = vadd.f32 %v1445, 0.0
        %v1462 = vadd.f32 %v1446, 0.0
        %v1463 = vadd.f32 %v1447, 0.0
        %v1464 = vadd.f32 %v1448, 0.0
        %v1465 = vadd.f32 %v1449, 0.0
        %v1466 = vadd.f32 %v1450, 0.0
        %v1467 = vadd.f32 %v1451, 0.0
        %v1468 = vadd.f32 %v1452, 0.0
        %v1469 = vadd.f32 %v1453, 0.0
        %v1470 = vadd.f32 %v1454, 0.0
        %v1471 = vadd.f32 %v1455, 0.0
        %v1472 = vadd.f32 %v1456, 0.0
        %v1473 = vadd.f32 %v1457, 0.0
        %v1474 = vadd.f32 %v1458, 0.0
        %v1475 = vadd.f32 %v1459, 0.0
        %v1476 = vadd.f32 %v1460, 0.0
        %s1477 = sld [smem:[#allocation3 + $0x81]]
        %v1478 = vstv %s1477
        %v1479 = vmul.f32 %v1478, %v914
        %v1480 = vmul.f32 %v1478, %v919
        %v1481 = vmul.f32 %v1478, %v954
        %v1482 = vmul.f32 %v1478, %v959
        %v1483 = vmul.f32 %v1478, %v994
        %v1484 = vmul.f32 %v1478, %v999
        %v1485 = vmul.f32 %v1478, %v1034
        %v1486 = vmul.f32 %v1478, %v1039
        %v1487 = vmul.f32 %v1478, %v1074
        %v1488 = vmul.f32 %v1478, %v1079
        %v1489 = vmul.f32 %v1478, %v1114
        %v1490 = vmul.f32 %v1478, %v1119
        %v1491 = vmul.f32 %v1478, %v1154
        %v1492 = vmul.f32 %v1478, %v1159
        %v1493 = vmul.f32 %v1478, %v1194
        %v1494 = vmul.f32 %v1478, %v1199
        %v1495 = vadd.f32 %v1461, %v1479
        %v1496 = vadd.f32 %v1462, %v1480
        %v1497 = vadd.f32 %v1463, %v1481
        %v1498 = vadd.f32 %v1464, %v1482
        %v1499 = vadd.f32 %v1465, %v1483
        %v1500 = vadd.f32 %v1466, %v1484
        %v1501 = vadd.f32 %v1467, %v1485
        %v1502 = vadd.f32 %v1468, %v1486
        %v1503 = vadd.f32 %v1469, %v1487
        %v1504 = vadd.f32 %v1470, %v1488
        %v1505 = vadd.f32 %v1471, %v1489
        %v1506 = vadd.f32 %v1472, %v1490
        %v1507 = vadd.f32 %v1473, %v1491
        %v1508 = vadd.f32 %v1474, %v1492
        %v1509 = vadd.f32 %v1475, %v1493
        %v1510 = vadd.f32 %v1476, %v1494
        %s1511 = sld [smem:[#allocation3 + $0x101]]
        %v1512 = vstv %s1511
        %v1513 = vmul.f32 %v1512, %v924
        %v1514 = vmul.f32 %v1512, %v929
        %v1515 = vmul.f32 %v1512, %v964
        %v1516 = vmul.f32 %v1512, %v969
        %v1517 = vmul.f32 %v1512, %v1004
        %v1518 = vmul.f32 %v1512, %v1009
        %v1519 = vmul.f32 %v1512, %v1044
        %v1520 = vmul.f32 %v1512, %v1049
        %v1521 = vmul.f32 %v1512, %v1084
        %v1522 = vmul.f32 %v1512, %v1089
        %v1523 = vmul.f32 %v1512, %v1124
        %v1524 = vmul.f32 %v1512, %v1129
        %v1525 = vmul.f32 %v1512, %v1164
        %v1526 = vmul.f32 %v1512, %v1169
        %v1527 = vmul.f32 %v1512, %v1204
        %v1528 = vmul.f32 %v1512, %v1209
        %v1529 = vadd.f32 %v1495, %v1513
        %v1530 = vadd.f32 %v1496, %v1514
        %v1531 = vadd.f32 %v1497, %v1515
        %v1532 = vadd.f32 %v1498, %v1516
        %v1533 = vadd.f32 %v1499, %v1517
        %v1534 = vadd.f32 %v1500, %v1518
        %v1535 = vadd.f32 %v1501, %v1519
        %v1536 = vadd.f32 %v1502, %v1520
        %v1537 = vadd.f32 %v1503, %v1521
        %v1538 = vadd.f32 %v1504, %v1522
        %v1539 = vadd.f32 %v1505, %v1523
        %v1540 = vadd.f32 %v1506, %v1524
        %v1541 = vadd.f32 %v1507, %v1525
        %v1542 = vadd.f32 %v1508, %v1526
        %v1543 = vadd.f32 %v1509, %v1527
        %v1544 = vadd.f32 %v1510, %v1528
        %s1545 = sld [smem:[#allocation3 + $0x181]]
        %v1546 = vstv %s1545
        %v1547 = vmul.f32 %v1546, %v934
        %v1548 = vmul.f32 %v1546, %v939
        %v1549 = vmul.f32 %v1546, %v974
        %v1550 = vmul.f32 %v1546, %v979
        %v1551 = vmul.f32 %v1546, %v1014
        %v1552 = vmul.f32 %v1546, %v1019
        %v1553 = vmul.f32 %v1546, %v1054
        %v1554 = vmul.f32 %v1546, %v1059
        %v1555 = vmul.f32 %v1546, %v1094
        %v1556 = vmul.f32 %v1546, %v1099
        %v1557 = vmul.f32 %v1546, %v1134
        %v1558 = vmul.f32 %v1546, %v1139
        %v1559 = vmul.f32 %v1546, %v1174
        %v1560 = vmul.f32 %v1546, %v1179
        %v1561 = vmul.f32 %v1546, %v1214
        %v1562 = vmul.f32 %v1546, %v1219
        %v1563 = vadd.f32 %v1529, %v1547
        %v1564 = vadd.f32 %v1530, %v1548
        %v1565 = vadd.f32 %v1531, %v1549
        %v1566 = vadd.f32 %v1532, %v1550
        %v1567 = vadd.f32 %v1533, %v1551
        %v1568 = vadd.f32 %v1534, %v1552
        %v1569 = vadd.f32 %v1535, %v1553
        %v1570 = vadd.f32 %v1536, %v1554
        %v1571 = vadd.f32 %v1537, %v1555
        %v1572 = vadd.f32 %v1538, %v1556
        %v1573 = vadd.f32 %v1539, %v1557
        %v1574 = vadd.f32 %v1540, %v1558
        %v1575 = vadd.f32 %v1541, %v1559
        %v1576 = vadd.f32 %v1542, %v1560
        %v1577 = vadd.f32 %v1543, %v1561
        %v1578 = vadd.f32 %v1544, %v1562
        %s1579 = sld [smem:[#allocation5 + $0x1]]
        %v1580 = vstv %s1579
        %v1581 = vmul.f32 %v1580, %v1266
        %v1582 = vlaneseq
        %v1583 = vshrl.u32 %v1582, 7
        %v1584 = vsub.s32 0, %v1583
        %v1585 = vrot.slane %v1581, %v1584
        %v1586 = vadd.f32 %v1563, %v1585
        %v1587 = vadd.f32 %v1564, %v1585
        %v1588 = vadd.f32 %v1565, %v1585
        %v1589 = vadd.f32 %v1566, %v1585
        %v1590 = vadd.f32 %v1567, %v1585
        %v1591 = vadd.f32 %v1568, %v1585
        %v1592 = vadd.f32 %v1569, %v1585
        %v1593 = vadd.f32 %v1570, %v1585
        %v1594 = vadd.f32 %v1571, %v1585
        %v1595 = vadd.f32 %v1572, %v1585
        %v1596 = vadd.f32 %v1573, %v1585
        %v1597 = vadd.f32 %v1574, %v1585
        %v1598 = vadd.f32 %v1575, %v1585
        %v1599 = vadd.f32 %v1576, %v1585
        %v1600 = vadd.f32 %v1577, %v1585
        %v1601 = vadd.f32 %v1578, %v1585
        %s1602 = scalar_lea.vmem %s575, 128
        %1603 = vst.msk [vmem:[%s1602] sm:$0xff] %vm1426, %v1586
        %1604 = vst.msk [vmem:[%s1602 + $0x8] sm:$0xff] %vm1426, %v1587
        %1605 = vst.msk [vmem:[%s1602 + $0x10] sm:$0xff] %vm1426, %v1588
        %1606 = vst.msk [vmem:[%s1602 + $0x18] sm:$0xff] %vm1426, %v1589
        %1607 = vst.msk [vmem:[%s1602 + $0x20] sm:$0xff] %vm1426, %v1590
        %1608 = vst.msk [vmem:[%s1602 + $0x28] sm:$0xff] %vm1426, %v1591
        %1609 = vst.msk [vmem:[%s1602 + $0x30] sm:$0xff] %vm1426, %v1592
        %1610 = vst.msk [vmem:[%s1602 + $0x38] sm:$0xff] %vm1426, %v1593
        %1611 = vst.msk [vmem:[%s1602 + $0x40] sm:$0xff] %vm1426, %v1594
        %1612 = vst.msk [vmem:[%s1602 + $0x48] sm:$0xff] %vm1426, %v1595
        %1613 = vst.msk [vmem:[%s1602 + $0x50] sm:$0xff] %vm1426, %v1596
        %1614 = vst.msk [vmem:[%s1602 + $0x58] sm:$0xff] %vm1426, %v1597
        %1615 = vst.msk [vmem:[%s1602 + $0x60] sm:$0xff] %vm1426, %v1598
        %1616 = vst.msk [vmem:[%s1602 + $0x68] sm:$0xff] %vm1426, %v1599
        %1617 = vst.msk [vmem:[%s1602 + $0x70] sm:$0xff] %vm1426, %v1600
        %1618 = vst.msk [vmem:[%s1602 + $0x78] sm:$0xff] %vm1426, %v1601
        %p1619 = scmp.lt.s32.totalorder %s18, 1
        %s1620 = scalar_select %p1619, %s18, 1
        %s1621 = smul.addr %s1620, 32
        %s1622 = smul.addr %s1621, 8
        %s1623 = scalar_lea.vmem %s5, %s1622
        // Predicated region
        $region87: #{mask_decoder_forward.9} parent=73 // pred_check
          %p1624 = pneg %p156
        $region88: #{mask_decoder_forward.9} parent=73 // pred_check_branch
          %1626 = sbr.rel (%p1624) target = $region90
        $region89: #{mask_decoder_forward.9} parent=73 // pred_region
          _
        $region90: #{mask_decoder_forward.9} parent=73 // pred_fallthru
          _
      $region74: #{mask_decoder_forward.9} parent=5 // pred_fallthru
        _
      %p1627 = scmp.le.s32.totalorder 2, %s13
      // Predicated region
      $region91: #{mask_decoder_forward.9} parent=5 // pred_check
        %p1628 = pneg %p1627
      $region92: #{mask_decoder_forward.9} parent=5 // pred_check_branch
        %1630 = sbr.rel (%p1628) target = $region94
      $region93: #{mask_decoder_forward.9} parent=5 // pred_region
        %s1631 = ssub.s32 %s13, 2
        // Predicated region
        $region95: #{mask_decoder_forward.9} parent=93 // pred_check
          %p1632 = pneg %p162
        $region96: #{mask_decoder_forward.9} parent=93 // pred_check_branch
          %1634 = sbr.rel (%p1632) target = $region98
        $region97: #{mask_decoder_forward.9} parent=93 // pred_region
          %p1635 = scmp.lt.s32.totalorder %s19, 1
          %s1636 = scalar_select %p1635, %s19, 1
          %s1637 = smul.addr %s1636, 32
          %s1638 = smul.addr %s1637, 8
          %s1639 = scalar_lea.vmem %s5, %s1638
        $region98: #{mask_decoder_forward.9} parent=93 // pred_fallthru
          _
      $region94: #{mask_decoder_forward.9} parent=5 // pred_fallthru
        _
    $region6: #{mask_decoder_forward.9} parent=1 // loop_footer
      %s17 = sadd.s32 1, %s13
    $region7: #{mask_decoder_forward.9} parent=1 // loop_footer_branch
      %12 = sbr.rel target = $region3
    $region8: #{mask_decoder_forward.9} parent=1 // loop_exit
      _
    %1640 = vsyncpa [#allocation4], 1
    %s1641 = scalar_lea.sflag [#allocation4], 1
    %1642 = vsyncpa %s1641, 1
    %1643 = vsyncpa [#allocation6], 1

// kernel: mask_decoder_forward.6
$region0: #{mask_decoder_forward.6}
  #allocation0 [shape = 'u32[]', space=smem, size = 0x4, offset = 0x4, fixed_abs, tag = 'smem constant byte address 0x4 - core index']
  #allocation1 [shape = 'u32[144,128]{1,0:T(1,128)}', space=vmem, size = 0x12000, scoped, tag = 'internal scratch']
  %s0 = inlined_call_operand.vmem [shape: f32[256,16], index: 0, kind: input, shape index: {}]
  %s1 = inlined_call_operand.vmem [shape: f32[4,16,8], index: 1, kind: input, shape index: {}]
  %s2 = inlined_call_operand.vmem [shape: f32[1,8], index: 2, kind: input, shape index: {}]
  %s3 = inlined_call_operand.vmem [shape: f32[1,8], index: 3, kind: input, shape index: {}]
  %s4 = inlined_call_operand.vmem [shape: f32[1,8], index: 4, kind: input, shape index: {}]
  %s5 = inlined_call_operand.vmem [shape: f32[4,256,8], index: 5, kind: output, shape index: {}]
  %s6 = sld [smem:[#allocation0]]
  $region30: #{mask_decoder_forward.6} parent=0
    _
  %s8 = ssub.s32 1, %s6
  %s9 = scalar_select 0, %s8, %s6
  // Predicated region
  $region2: #{mask_decoder_forward.6} parent=0 // pred_check
    _
  $region3: #{mask_decoder_forward.6} parent=0 // pred_check_branch
    %11 = sbr.rel (0) target = $region5
  $region4: #{mask_decoder_forward.6} parent=0 // pred_region
    _
  $region5: #{mask_decoder_forward.6} parent=0 // pred_fallthru
    _
  // Predicated region
  $region6: #{mask_decoder_forward.6} parent=0 // pred_check
    _
  $region7: #{mask_decoder_forward.6} parent=0 // pred_check_branch
    %13 = sbr.rel (0) target = $region9
  $region8: #{mask_decoder_forward.6} parent=0 // pred_region
    _
  $region9: #{mask_decoder_forward.6} parent=0 // pred_fallthru
    _
  // Predicated region
  $region10: #{mask_decoder_forward.6} parent=0 // pred_check
    _
  $region11: #{mask_decoder_forward.6} parent=0 // pred_check_branch
    %15 = sbr.rel (0) target = $region13
  $region12: #{mask_decoder_forward.6} parent=0 // pred_region
    _
  $region13: #{mask_decoder_forward.6} parent=0 // pred_fallthru
    _
  // Predicated region
  $region14: #{mask_decoder_forward.6} parent=0 // pred_check
    _
  $region15: #{mask_decoder_forward.6} parent=0 // pred_check_branch
    %17 = sbr.rel (0) target = $region17
  $region16: #{mask_decoder_forward.6} parent=0 // pred_region
    _
  $region17: #{mask_decoder_forward.6} parent=0 // pred_fallthru
    _
  // Predicated region
  $region18: #{mask_decoder_forward.6} parent=0 // pred_check
    _
  $region19: #{mask_decoder_forward.6} parent=0 // pred_check_branch
    %19 = sbr.rel (0) target = $region21
  $region20: #{mask_decoder_forward.6} parent=0 // pred_region
    _
  $region21: #{mask_decoder_forward.6} parent=0 // pred_fallthru
    _
  %v20 = vld [vmem:[%s0] sm:$0xff]
  %v21 = vld [vmem:[%s0 + $0x8] sm:$0xff]
  %v22 = vld [vmem:[%s0 + $0x10] sm:$0xff]
  %v23 = vld [vmem:[%s0 + $0x18] sm:$0xff]
  %v24 = vld [vmem:[%s0 + $0x20] sm:$0xff]
  %v25 = vld [vmem:[%s0 + $0x28] sm:$0xff]
  %v26 = vld [vmem:[%s0 + $0x30] sm:$0xff]
  %v27 = vld [vmem:[%s0 + $0x38] sm:$0xff]
  %v28 = vld [vmem:[%s0 + $0x40] sm:$0xff]
  %v29 = vld [vmem:[%s0 + $0x48] sm:$0xff]
  %v30 = vld [vmem:[%s0 + $0x50] sm:$0xff]
  %v31 = vld [vmem:[%s0 + $0x58] sm:$0xff]
  %v32 = vld [vmem:[%s0 + $0x60] sm:$0xff]
  %v33 = vld [vmem:[%s0 + $0x68] sm:$0xff]
  %v34 = vld [vmem:[%s0 + $0x70] sm:$0xff]
  %v35 = vld [vmem:[%s0 + $0x78] sm:$0xff]
  %v36 = vld [vmem:[%s0 + $0x80] sm:$0xff]
  %v37 = vld [vmem:[%s0 + $0x88] sm:$0xff]
  %v38 = vld [vmem:[%s0 + $0x90] sm:$0xff]
  %v39 = vld [vmem:[%s0 + $0x98] sm:$0xff]
  %v40 = vld [vmem:[%s0 + $0xa0] sm:$0xff]
  %v41 = vld [vmem:[%s0 + $0xa8] sm:$0xff]
  %v42 = vld [vmem:[%s0 + $0xb0] sm:$0xff]
  %v43 = vld [vmem:[%s0 + $0xb8] sm:$0xff]
  %v44 = vld [vmem:[%s0 + $0xc0] sm:$0xff]
  %v45 = vld [vmem:[%s0 + $0xc8] sm:$0xff]
  %v46 = vld [vmem:[%s0 + $0xd0] sm:$0xff]
  %v47 = vld [vmem:[%s0 + $0xd8] sm:$0xff]
  %v48 = vld [vmem:[%s0 + $0xe0] sm:$0xff]
  %v49 = vld [vmem:[%s0 + $0xe8] sm:$0xff]
  %v50 = vld [vmem:[%s0 + $0xf0] sm:$0xff]
  %v51 = vld [vmem:[%s0 + $0xf8] sm:$0xff]
  %v52 = vld [vmem:[%s2] sm:$0x1]
  %v53 = vld [vmem:[%s1] sm:$0xff]
  %v54 = vld [vmem:[%s1 + $0x8] sm:$0xff]
  %v56 = vlaneseq
  %v57 = vshrl.u32 %v56, 7
  %v58 = vsub.s32 0, %v57
  %v59 = vrot.slane %v52, %v58
  %vm61 = vcmask 130048
  %v63 = vsel %vm61, %v20, 0
  %v66 = vsel %vm61, %v21, 0
  %v69 = vsel %vm61, %v22, 0
  %v72 = vsel %vm61, %v23, 0
  %v75 = vsel %vm61, %v24, 0
  %v78 = vsel %vm61, %v25, 0
  %v81 = vsel %vm61, %v26, 0
  %v84 = vsel %vm61, %v27, 0
  %v87 = vsel %vm61, %v28, 0
  %v90 = vsel %vm61, %v29, 0
  %v93 = vsel %vm61, %v30, 0
  %v96 = vsel %vm61, %v31, 0
  %v99 = vsel %vm61, %v32, 0
  %v102 = vsel %vm61, %v33, 0
  %v105 = vsel %vm61, %v34, 0
  %v108 = vsel %vm61, %v35, 0
  %v111 = vsel %vm61, %v36, 0
  %v114 = vsel %vm61, %v37, 0
  %v117 = vsel %vm61, %v38, 0
  %v120 = vsel %vm61, %v39, 0
  %v123 = vsel %vm61, %v40, 0
  %v126 = vsel %vm61, %v41, 0
  %v129 = vsel %vm61, %v42, 0
  %v132 = vsel %vm61, %v43, 0
  %v135 = vsel %vm61, %v44, 0
  %v138 = vsel %vm61, %v45, 0
  %v141 = vsel %vm61, %v46, 0
  %v144 = vsel %vm61, %v47, 0
  %v147 = vsel %vm61, %v48, 0
  %v150 = vsel %vm61, %v49, 0
  %v153 = vsel %vm61, %v50, 0
  %v156 = vsel %vm61, %v51, 0
  %158 = vmatprep.subr.mxu0 0.0
  %159 = vmatpush1.msra.mxu0 %v53
  %160 = vmatprep.subr.mxu0 0.0
  %161 = vmatpush1.msra.mxu0 %v54
  %162 = vmatprep.subr.mxu0 0.0
  %163 = vmatpush1.msra.mxu0 0.0
  %164 = vmatprep.subr.mxu0 0.0
  %165 = vmatpush1.msra.mxu0 0.0
  %166 = vmatprep.subr.mxu0 0.0
  %167 = vmatpush1.msra.mxu0 0.0
  %168 = vmatprep.subr.mxu0 0.0
  %169 = vmatpush1.msra.mxu0 0.0
  %170 = vmatprep.subr.mxu0 0.0
  %171 = vmatpush1.msra.mxu0 0.0
  %172 = vmatprep.subr.mxu0 0.0
  %173 = vmatpush1.msra.mxu0 0.0
  %174 = vmatprep.subr.mxu0 0.0
  %175 = vmatpush1.msra.mxu0 0.0
  %176 = vmatprep.subr.mxu0 0.0
  %177 = vmatpush1.msra.mxu0 0.0
  %178 = vmatprep.subr.mxu0 0.0
  %179 = vmatpush1.msra.mxu0 0.0
  %180 = vmatprep.subr.mxu0 0.0
  %181 = vmatpush1.msra.mxu0 0.0
  %182 = vmatprep.subr.mxu0 0.0
  %183 = vmatpush1.msra.mxu0 0.0
  %184 = vmatprep.subr.mxu0 0.0
  %185 = vmatpush1.msra.mxu0 0.0
  %186 = vmatprep.subr.mxu0 0.0
  %187 = vmatpush1.msra.mxu0 0.0
  %188 = vmatprep.subr.mxu0 0.0
  %189 = vmatpush1.msra.mxu0 0.0
  %190 = vmatprep.subr.mxu0 0.0
  %191 = vmatpush1.msra.mxu0 0.0
  %192 = vmatprep.subr.mxu0 0.0
  %193 = vmatpush1.msra.mxu0 0.0
  %194 = vmatprep.subr.mxu0 0.0
  %195 = vmatpush1.msra.mxu0 0.0
  %196 = vmatprep.subr.mxu0 0.0
  %197 = vmatpush1.msra.mxu0 0.0
  %198 = vmatprep.subr.mxu0 0.0
  %199 = vmatpush1.msra.mxu0 0.0
  %200 = vmatprep.subr.mxu0 0.0
  %201 = vmatpush1.msra.mxu0 0.0
  %202 = vmatprep.subr.mxu0 0.0
  %203 = vmatpush1.msra.mxu0 0.0
  %204 = vmatprep.subr.mxu0 0.0
  %205 = vmatpush1.msra.mxu0 0.0
  %206 = vmatprep.subr.mxu0 0.0
  %207 = vmatpush1.msra.mxu0 0.0
  %208 = vmatprep.subr.mxu0 0.0
  %209 = vmatpush1.msra.mxu0 0.0
  %210 = vmatprep.subr.mxu0 0.0
  %211 = vmatpush1.msra.mxu0 0.0
  %212 = vmatprep.subr.mxu0 0.0
  %213 = vmatpush1.msra.mxu0 0.0
  %214 = vmatprep.subr.mxu0 0.0
  %215 = vmatpush1.msra.mxu0 0.0
  %216 = vmatprep.subr.mxu0 0.0
  %217 = vmatpush1.msra.mxu0 0.0
  %218 = vmatprep.subr.mxu0 0.0
  %219 = vmatpush1.msra.mxu0 0.0
  %220 = vmatprep.subr.mxu0 0.0
  %221 = vmatpush1.msra.mxu0 0.0
  %222 = vmatprep.mubr.f32.mxu0 0.0
  %223 = vmatmul.mubr.f32.gmra.mrb[0].mxu0 %v63
  %v224 = vpop.f32.mrb[0].mxu0
  %v225 = vadd.f32 %v59, %v224
  %v226 = vpop.f32.mrb[0].mxu0
  %227 = vmatprep.mubr.f32.mxu0 0.0
  %228 = vmatmul.mubr.f32.gmra.mrb[0].mxu0 %v66
  %v229 = vpop.f32.mrb[0].mxu0
  %v230 = vadd.f32 %v59, %v229
  %v231 = vpop.f32.mrb[0].mxu0
  %232 = vmatprep.mubr.f32.mxu0 0.0
  %233 = vmatmul.mubr.f32.gmra.mrb[0].mxu0 %v69
  %v234 = vpop.f32.mrb[0].mxu0
  %v235 = vadd.f32 %v59, %v234
  %v236 = vpop.f32.mrb[0].mxu0
  %237 = vmatprep.mubr.f32.mxu0 0.0
  %238 = vmatmul.mubr.f32.gmra.mrb[0].mxu0 %v72
  %v239 = vpop.f32.mrb[0].mxu0
  %v240 = vadd.f32 %v59, %v239
  %v241 = vpop.f32.mrb[0].mxu0
  %242 = vmatprep.mubr.f32.mxu0 0.0
  %243 = vmatmul.mubr.f32.gmra.mrb[0].mxu0 %v75
  %v244 = vpop.f32.mrb[0].mxu0
  %v245 = vadd.f32 %v59, %v244
  %v246 = vpop.f32.mrb[0].mxu0
  %247 = vmatprep.mubr.f32.mxu0 0.0
  %248 = vmatmul.mubr.f32.gmra.mrb[0].mxu0 %v78
  %v249 = vpop.f32.mrb[0].mxu0
  %v250 = vadd.f32 %v59, %v249
  %v251 = vpop.f32.mrb[0].mxu0
  %252 = vmatprep.mubr.f32.mxu0 0.0
  %253 = vmatmul.mubr.f32.gmra.mrb[0].mxu0 %v81
  %v254 = vpop.f32.mrb[0].mxu0
  %v255 = vadd.f32 %v59, %v254
  %v256 = vpop.f32.mrb[0].mxu0
  %257 = vmatprep.mubr.f32.mxu0 0.0
  %258 = vmatmul.mubr.f32.gmra.mrb[0].mxu0 %v84
  %v259 = vpop.f32.mrb[0].mxu0
  %v260 = vadd.f32 %v59, %v259
  %v261 = vpop.f32.mrb[0].mxu0
  %262 = vmatprep.mubr.f32.mxu0 0.0
  %263 = vmatmul.mubr.f32.gmra.mrb[0].mxu0 %v87
  %v264 = vpop.f32.mrb[0].mxu0
  %v265 = vadd.f32 %v59, %v264
  %v266 = vpop.f32.mrb[0].mxu0
  %267 = vmatprep.mubr.f32.mxu0 0.0
  %268 = vmatmul.mubr.f32.gmra.mrb[0].mxu0 %v90
  %v269 = vpop.f32.mrb[0].mxu0
  %v270 = vadd.f32 %v59, %v269
  %v271 = vpop.f32.mrb[0].mxu0
  %272 = vmatprep.mubr.f32.mxu0 0.0
  %273 = vmatmul.mubr.f32.gmra.mrb[0].mxu0 %v93
  %v274 = vpop.f32.mrb[0].mxu0
  %v275 = vadd.f32 %v59, %v274
  %v276 = vpop.f32.mrb[0].mxu0
  %277 = vmatprep.mubr.f32.mxu0 0.0
  %278 = vmatmul.mubr.f32.gmra.mrb[0].mxu0 %v96
  %v279 = vpop.f32.mrb[0].mxu0
  %v280 = vadd.f32 %v59, %v279
  %v281 = vpop.f32.mrb[0].mxu0
  %282 = vmatprep.mubr.f32.mxu0 0.0
  %283 = vmatmul.mubr.f32.gmra.mrb[0].mxu0 %v99
  %v284 = vpop.f32.mrb[0].mxu0
  %v285 = vadd.f32 %v59, %v284
  %v286 = vpop.f32.mrb[0].mxu0
  %287 = vmatprep.mubr.f32.mxu0 0.0
  %288 = vmatmul.mubr.f32.gmra.mrb[0].mxu0 %v102
  %v289 = vpop.f32.mrb[0].mxu0
  %v290 = vadd.f32 %v59, %v289
  %v291 = vpop.f32.mrb[0].mxu0
  %292 = vmatprep.mubr.f32.mxu0 0.0
  %293 = vmatmul.mubr.f32.gmra.mrb[0].mxu0 %v105
  %v294 = vpop.f32.mrb[0].mxu0
  %v295 = vadd.f32 %v59, %v294
  %v296 = vpop.f32.mrb[0].mxu0
  %297 = vmatprep.mubr.f32.mxu0 0.0
  %298 = vmatmul.mubr.f32.gmra.mrb[0].mxu0 %v108
  %v299 = vpop.f32.mrb[0].mxu0
  %v300 = vadd.f32 %v59, %v299
  %v301 = vpop.f32.mrb[0].mxu0
  %302 = vmatprep.mubr.f32.mxu0 0.0
  %303 = vmatmul.mubr.f32.gmra.mrb[0].mxu0 %v111
  %v304 = vpop.f32.mrb[0].mxu0
  %v305 = vadd.f32 %v59, %v304
  %v306 = vpop.f32.mrb[0].mxu0
  %307 = vmatprep.mubr.f32.mxu0 0.0
  %308 = vmatmul.mubr.f32.gmra.mrb[0].mxu0 %v114
  %v309 = vpop.f32.mrb[0].mxu0
  %v310 = vadd.f32 %v59, %v309
  %v311 = vpop.f32.mrb[0].mxu0
  %312 = vmatprep.mubr.f32.mxu0 0.0
  %313 = vmatmul.mubr.f32.gmra.mrb[0].mxu0 %v117
  %v314 = vpop.f32.mrb[0].mxu0
  %v315 = vadd.f32 %v59, %v314
  %v316 = vpop.f32.mrb[0].mxu0
  %317 = vmatprep.mubr.f32.mxu0 0.0
  %318 = vmatmul.mubr.f32.gmra.mrb[0].mxu0 %v120
  %v319 = vpop.f32.mrb[0].mxu0
  %v320 = vadd.f32 %v59, %v319
  %v321 = vpop.f32.mrb[0].mxu0
  %322 = vmatprep.mubr.f32.mxu0 0.0
  %323 = vmatmul.mubr.f32.gmra.mrb[0].mxu0 %v123
  %v324 = vpop.f32.mrb[0].mxu0
  %v325 = vadd.f32 %v59, %v324
  %v326 = vpop.f32.mrb[0].mxu0
  %327 = vmatprep.mubr.f32.mxu0 0.0
  %328 = vmatmul.mubr.f32.gmra.mrb[0].mxu0 %v126
  %v329 = vpop.f32.mrb[0].mxu0
  %v330 = vadd.f32 %v59, %v329
  %v331 = vpop.f32.mrb[0].mxu0
  %332 = vmatprep.mubr.f32.mxu0 0.0
  %333 = vmatmul.mubr.f32.gmra.mrb[0].mxu0 %v129
  %v334 = vpop.f32.mrb[0].mxu0
  %v335 = vadd.f32 %v59, %v334
  %v336 = vpop.f32.mrb[0].mxu0
  %337 = vmatprep.mubr.f32.mxu0 0.0
  %338 = vmatmul.mubr.f32.gmra.mrb[0].mxu0 %v132
  %v339 = vpop.f32.mrb[0].mxu0
  %v340 = vadd.f32 %v59, %v339
  %v341 = vpop.f32.mrb[0].mxu0
  %342 = vmatprep.mubr.f32.mxu0 0.0
  %343 = vmatmul.mubr.f32.gmra.mrb[0].mxu0 %v135
  %v344 = vpop.f32.mrb[0].mxu0
  %v345 = vadd.f32 %v59, %v344
  %v346 = vpop.f32.mrb[0].mxu0
  %347 = vmatprep.mubr.f32.mxu0 0.0
  %348 = vmatmul.mubr.f32.gmra.mrb[0].mxu0 %v138
  %v349 = vpop.f32.mrb[0].mxu0
  %v350 = vadd.f32 %v59, %v349
  %v351 = vpop.f32.mrb[0].mxu0
  %352 = vmatprep.mubr.f32.mxu0 0.0
  %353 = vmatmul.mubr.f32.gmra.mrb[0].mxu0 %v141
  %v354 = vpop.f32.mrb[0].mxu0
  %v355 = vadd.f32 %v59, %v354
  %v356 = vpop.f32.mrb[0].mxu0
  %357 = vmatprep.mubr.f32.mxu0 0.0
  %358 = vmatmul.mubr.f32.gmra.mrb[0].mxu0 %v144
  %v359 = vpop.f32.mrb[0].mxu0
  %v360 = vadd.f32 %v59, %v359
  %v361 = vpop.f32.mrb[0].mxu0
  %362 = vmatprep.mubr.f32.mxu0 0.0
  %363 = vmatmul.mubr.f32.gmra.mrb[0].mxu0 %v147
  %v364 = vpop.f32.mrb[0].mxu0
  %v365 = vadd.f32 %v59, %v364
  %v366 = vpop.f32.mrb[0].mxu0
  %367 = vmatprep.mubr.f32.mxu0 0.0
  %368 = vmatmul.mubr.f32.gmra.mrb[0].mxu0 %v150
  %v369 = vpop.f32.mrb[0].mxu0
  %v370 = vadd.f32 %v59, %v369
  %v371 = vpop.f32.mrb[0].mxu0
  %372 = vmatprep.mubr.f32.mxu0 0.0
  %373 = vmatmul.mubr.f32.gmra.mrb[0].mxu0 %v153
  %v374 = vpop.f32.mrb[0].mxu0
  %v375 = vadd.f32 %v59, %v374
  %v376 = vpop.f32.mrb[0].mxu0
  %377 = vmatprep.mubr.f32.mxu0 0.0
  %378 = vmatmul.mubr.f32.gmra.mrb[0].mxu0 %v156
  %v379 = vpop.f32.mrb[0].mxu0
  %v380 = vadd.f32 %v59, %v379
  %v381 = vpop.f32.mrb[0].mxu0
  %382 = vdwg.mxu0
  %v383 = vld [vmem:[%s3] sm:$0x1]
  %v384 = vld [vmem:[%s4] sm:$0x1]
  %vm385 = vcmask 64512
  %v386 = vsel %vm385, %v225, 0.0
  %387 = vadd.xlane.f32.xlu0 %v386
  %v388 = vpop.xlane.xlu0 %387
  %v389 = vsel %vm385, %v230, 0.0
  %390 = vadd.xlane.f32.xlu0 %v389
  %v391 = vpop.xlane.xlu0 %390
  %v392 = vsel %vm385, %v235, 0.0
  %393 = vadd.xlane.f32.xlu0 %v392
  %v394 = vpop.xlane.xlu0 %393
  %v395 = vsel %vm385, %v240, 0.0
  %396 = vadd.xlane.f32.xlu0 %v395
  %v397 = vpop.xlane.xlu0 %396
  %v398 = vsel %vm385, %v245, 0.0
  %399 = vadd.xlane.f32.xlu0 %v398
  %v400 = vpop.xlane.xlu0 %399
  %v401 = vsel %vm385, %v250, 0.0
  %402 = vadd.xlane.f32.xlu0 %v401
  %v403 = vpop.xlane.xlu0 %402
  %v404 = vsel %vm385, %v255, 0.0
  %405 = vadd.xlane.f32.xlu0 %v404
  %v406 = vpop.xlane.xlu0 %405
  %v407 = vsel %vm385, %v260, 0.0
  %408 = vadd.xlane.f32.xlu0 %v407
  %v409 = vpop.xlane.xlu0 %408
  %v410 = vsel %vm385, %v265, 0.0
  %411 = vadd.xlane.f32.xlu0 %v410
  %v412 = vpop.xlane.xlu0 %411
  %v413 = vsel %vm385, %v270, 0.0
  %414 = vadd.xlane.f32.xlu0 %v413
  %v415 = vpop.xlane.xlu0 %414
  %v416 = vsel %vm385, %v275, 0.0
  %417 = vadd.xlane.f32.xlu0 %v416
  %v418 = vpop.xlane.xlu0 %417
  %v419 = vsel %vm385, %v280, 0.0
  %420 = vadd.xlane.f32.xlu0 %v419
  %v421 = vpop.xlane.xlu0 %420
  %v422 = vsel %vm385, %v285, 0.0
  %423 = vadd.xlane.f32.xlu0 %v422
  %v424 = vpop.xlane.xlu0 %423
  %v425 = vsel %vm385, %v290, 0.0
  %426 = vadd.xlane.f32.xlu0 %v425
  %v427 = vpop.xlane.xlu0 %426
  %v428 = vsel %vm385, %v295, 0.0
  %429 = vadd.xlane.f32.xlu0 %v428
  %v430 = vpop.xlane.xlu0 %429
  %v431 = vsel %vm385, %v300, 0.0
  %432 = vadd.xlane.f32.xlu0 %v431
  %v433 = vpop.xlane.xlu0 %432
  %v434 = vsel %vm385, %v305, 0.0
  %435 = vadd.xlane.f32.xlu0 %v434
  %v436 = vpop.xlane.xlu0 %435
  %v437 = vsel %vm385, %v310, 0.0
  %438 = vadd.xlane.f32.xlu0 %v437
  %v439 = vpop.xlane.xlu0 %438
  %v440 = vsel %vm385, %v315, 0.0
  %441 = vadd.xlane.f32.xlu0 %v440
  %v442 = vpop.xlane.xlu0 %441
  %v443 = vsel %vm385, %v320, 0.0
  %444 = vadd.xlane.f32.xlu0 %v443
  %v445 = vpop.xlane.xlu0 %444
  %v446 = vsel %vm385, %v325, 0.0
  %447 = vadd.xlane.f32.xlu0 %v446
  %v448 = vpop.xlane.xlu0 %447
  %v449 = vsel %vm385, %v330, 0.0
  %450 = vadd.xlane.f32.xlu0 %v449
  %v451 = vpop.xlane.xlu0 %450
  %v452 = vsel %vm385, %v335, 0.0
  %453 = vadd.xlane.f32.xlu0 %v452
  %v454 = vpop.xlane.xlu0 %453
  %v455 = vsel %vm385, %v340, 0.0
  %456 = vadd.xlane.f32.xlu0 %v455
  %v457 = vpop.xlane.xlu0 %456
  %v458 = vsel %vm385, %v345, 0.0
  %459 = vadd.xlane.f32.xlu0 %v458
  %v460 = vpop.xlane.xlu0 %459
  %v461 = vsel %vm385, %v350, 0.0
  %462 = vadd.xlane.f32.xlu0 %v461
  %v463 = vpop.xlane.xlu0 %462
  %v464 = vsel %vm385, %v355, 0.0
  %465 = vadd.xlane.f32.xlu0 %v464
  %v466 = vpop.xlane.xlu0 %465
  %v467 = vsel %vm385, %v360, 0.0
  %468 = vadd.xlane.f32.xlu0 %v467
  %v469 = vpop.xlane.xlu0 %468
  %v470 = vsel %vm385, %v365, 0.0
  %471 = vadd.xlane.f32.xlu0 %v470
  %v472 = vpop.xlane.xlu0 %471
  %v473 = vsel %vm385, %v370, 0.0
  %474 = vadd.xlane.f32.xlu0 %v473
  %v475 = vpop.xlane.xlu0 %474
  %v476 = vsel %vm385, %v375, 0.0
  %477 = vadd.xlane.f32.xlu0 %v476
  %v478 = vpop.xlane.xlu0 %477
  %v479 = vsel %vm385, %v380, 0.0
  %480 = vadd.xlane.f32.xlu0 %v479
  %v481 = vpop.xlane.xlu0 %480
  %v482 = vrcp.pop 8.0
  %v483 = vmul.f32 %v388, %v482
  %v484 = vmul.f32 %v391, %v482
  %v485 = vmul.f32 %v394, %v482
  %v486 = vmul.f32 %v397, %v482
  %v487 = vmul.f32 %v400, %v482
  %v488 = vmul.f32 %v403, %v482
  %v489 = vmul.f32 %v406, %v482
  %v490 = vmul.f32 %v409, %v482
  %v491 = vmul.f32 %v412, %v482
  %v492 = vmul.f32 %v415, %v482
  %v493 = vmul.f32 %v418, %v482
  %v494 = vmul.f32 %v421, %v482
  %v495 = vmul.f32 %v424, %v482
  %v496 = vmul.f32 %v427, %v482
  %v497 = vmul.f32 %v430, %v482
  %v498 = vmul.f32 %v433, %v482
  %v499 = vmul.f32 %v436, %v482
  %v500 = vmul.f32 %v439, %v482
  %v501 = vmul.f32 %v442, %v482
  %v502 = vmul.f32 %v445, %v482
  %v503 = vmul.f32 %v448, %v482
  %v504 = vmul.f32 %v451, %v482
  %v505 = vmul.f32 %v454, %v482
  %v506 = vmul.f32 %v457, %v482
  %v507 = vmul.f32 %v460, %v482
  %v508 = vmul.f32 %v463, %v482
  %v509 = vmul.f32 %v466, %v482
  %v510 = vmul.f32 %v469, %v482
  %v511 = vmul.f32 %v472, %v482
  %v512 = vmul.f32 %v475, %v482
  %v513 = vmul.f32 %v478, %v482
  %v514 = vmul.f32 %v481, %v482
  %v515 = vsub.f32 %v225, %v483
  %v516 = vsub.f32 %v230, %v484
  %v517 = vsub.f32 %v235, %v485
  %v518 = vsub.f32 %v240, %v486
  %v519 = vsub.f32 %v245, %v487
  %v520 = vsub.f32 %v250, %v488
  %v521 = vsub.f32 %v255, %v489
  %v522 = vsub.f32 %v260, %v490
  %v523 = vsub.f32 %v265, %v491
  %v524 = vsub.f32 %v270, %v492
  %v525 = vsub.f32 %v275, %v493
  %v526 = vsub.f32 %v280, %v494
  %v527 = vsub.f32 %v285, %v495
  %v528 = vsub.f32 %v290, %v496
  %v529 = vsub.f32 %v295, %v497
  %v530 = vsub.f32 %v300, %v498
  %v531 = vsub.f32 %v305, %v499
  %v532 = vsub.f32 %v310, %v500
  %v533 = vsub.f32 %v315, %v501
  %v534 = vsub.f32 %v320, %v502
  %v535 = vsub.f32 %v325, %v503
  %v536 = vsub.f32 %v330, %v504
  %v537 = vsub.f32 %v335, %v505
  %v538 = vsub.f32 %v340, %v506
  %v539 = vsub.f32 %v345, %v507
  %v540 = vsub.f32 %v350, %v508
  %v541 = vsub.f32 %v355, %v509
  %v542 = vsub.f32 %v360, %v510
  %v543 = vsub.f32 %v365, %v511
  %v544 = vsub.f32 %v370, %v512
  %v545 = vsub.f32 %v375, %v513
  %v546 = vsub.f32 %v380, %v514
  %v547 = vmul.f32 %v515, %v515
  %v548 = vmul.f32 %v516, %v516
  %v549 = vmul.f32 %v517, %v517
  %v550 = vmul.f32 %v518, %v518
  %v551 = vmul.f32 %v519, %v519
  %v552 = vmul.f32 %v520, %v520
  %v553 = vmul.f32 %v521, %v521
  %v554 = vmul.f32 %v522, %v522
  %v555 = vmul.f32 %v523, %v523
  %v556 = vmul.f32 %v524, %v524
  %v557 = vmul.f32 %v525, %v525
  %v558 = vmul.f32 %v526, %v526
  %v559 = vmul.f32 %v527, %v527
  %v560 = vmul.f32 %v528, %v528
  %v561 = vmul.f32 %v529, %v529
  %v562 = vmul.f32 %v530, %v530
  %v563 = vmul.f32 %v531, %v531
  %v564 = vmul.f32 %v532, %v532
  %v565 = vmul.f32 %v533, %v533
  %v566 = vmul.f32 %v534, %v534
  %v567 = vmul.f32 %v535, %v535
  %v568 = vmul.f32 %v536, %v536
  %v569 = vmul.f32 %v537, %v537
  %v570 = vmul.f32 %v538, %v538
  %v571 = vmul.f32 %v539, %v539
  %v572 = vmul.f32 %v540, %v540
  %v573 = vmul.f32 %v541, %v541
  %v574 = vmul.f32 %v542, %v542
  %v575 = vmul.f32 %v543, %v543
  %v576 = vmul.f32 %v544, %v544
  %v577 = vmul.f32 %v545, %v545
  %v578 = vmul.f32 %v546, %v546
  %v579 = vsel %vm385, %v547, 0.0
  %580 = vadd.xlane.f32.xlu0 %v579
  %v581 = vpop.xlane.xlu0 %580
  %v582 = vsel %vm385, %v548, 0.0
  %583 = vadd.xlane.f32.xlu0 %v582
  %v584 = vpop.xlane.xlu0 %583
  %v585 = vsel %vm385, %v549, 0.0
  %586 = vadd.xlane.f32.xlu0 %v585
  %v587 = vpop.xlane.xlu0 %586
  %v588 = vsel %vm385, %v550, 0.0
  %589 = vadd.xlane.f32.xlu0 %v588
  %v590 = vpop.xlane.xlu0 %589
  %v591 = vsel %vm385, %v551, 0.0
  %592 = vadd.xlane.f32.xlu0 %v591
  %v593 = vpop.xlane.xlu0 %592
  %v594 = vsel %vm385, %v552, 0.0
  %595 = vadd.xlane.f32.xlu0 %v594
  %v596 = vpop.xlane.xlu0 %595
  %v597 = vsel %vm385, %v553, 0.0
  %598 = vadd.xlane.f32.xlu0 %v597
  %v599 = vpop.xlane.xlu0 %598
  %v600 = vsel %vm385, %v554, 0.0
  %601 = vadd.xlane.f32.xlu0 %v600
  %v602 = vpop.xlane.xlu0 %601
  %v603 = vsel %vm385, %v555, 0.0
  %604 = vadd.xlane.f32.xlu0 %v603
  %v605 = vpop.xlane.xlu0 %604
  %v606 = vsel %vm385, %v556, 0.0
  %607 = vadd.xlane.f32.xlu0 %v606
  %v608 = vpop.xlane.xlu0 %607
  %v609 = vsel %vm385, %v557, 0.0
  %610 = vadd.xlane.f32.xlu0 %v609
  %v611 = vpop.xlane.xlu0 %610
  %v612 = vsel %vm385, %v558, 0.0
  %613 = vadd.xlane.f32.xlu0 %v612
  %v614 = vpop.xlane.xlu0 %613
  %v615 = vsel %vm385, %v559, 0.0
  %616 = vadd.xlane.f32.xlu0 %v615
  %v617 = vpop.xlane.xlu0 %616
  %v618 = vsel %vm385, %v560, 0.0
  %619 = vadd.xlane.f32.xlu0 %v618
  %v620 = vpop.xlane.xlu0 %619
  %v621 = vsel %vm385, %v561, 0.0
  %622 = vadd.xlane.f32.xlu0 %v621
  %v623 = vpop.xlane.xlu0 %622
  %v624 = vsel %vm385, %v562, 0.0
  %625 = vadd.xlane.f32.xlu0 %v624
  %v626 = vpop.xlane.xlu0 %625
  %v627 = vsel %vm385, %v563, 0.0
  %628 = vadd.xlane.f32.xlu0 %v627
  %v629 = vpop.xlane.xlu0 %628
  %v630 = vsel %vm385, %v564, 0.0
  %631 = vadd.xlane.f32.xlu0 %v630
  %v632 = vpop.xlane.xlu0 %631
  %v633 = vsel %vm385, %v565, 0.0
  %634 = vadd.xlane.f32.xlu0 %v633
  %v635 = vpop.xlane.xlu0 %634
  %v636 = vsel %vm385, %v566, 0.0
  %637 = vadd.xlane.f32.xlu0 %v636
  %v638 = vpop.xlane.xlu0 %637
  %v639 = vsel %vm385, %v567, 0.0
  %640 = vadd.xlane.f32.xlu0 %v639
  %v641 = vpop.xlane.xlu0 %640
  %v642 = vsel %vm385, %v568, 0.0
  %643 = vadd.xlane.f32.xlu0 %v642
  %v644 = vpop.xlane.xlu0 %643
  %v645 = vsel %vm385, %v569, 0.0
  %646 = vadd.xlane.f32.xlu0 %v645
  %v647 = vpop.xlane.xlu0 %646
  %v648 = vsel %vm385, %v570, 0.0
  %649 = vadd.xlane.f32.xlu0 %v648
  %v650 = vpop.xlane.xlu0 %649
  %v651 = vsel %vm385, %v571, 0.0
  %652 = vadd.xlane.f32.xlu0 %v651
  %v653 = vpop.xlane.xlu0 %652
  %v654 = vsel %vm385, %v572, 0.0
  %655 = vadd.xlane.f32.xlu0 %v654
  %v656 = vpop.xlane.xlu0 %655
  %v657 = vsel %vm385, %v573, 0.0
  %658 = vadd.xlane.f32.xlu0 %v657
  %v659 = vpop.xlane.xlu0 %658
  %v660 = vsel %vm385, %v574, 0.0
  %661 = vadd.xlane.f32.xlu0 %v660
  %v662 = vpop.xlane.xlu0 %661
  %v663 = vsel %vm385, %v575, 0.0
  %664 = vadd.xlane.f32.xlu0 %v663
  %v665 = vpop.xlane.xlu0 %664
  %v666 = vsel %vm385, %v576, 0.0
  %667 = vadd.xlane.f32.xlu0 %v666
  %v668 = vpop.xlane.xlu0 %667
  %v669 = vsel %vm385, %v577, 0.0
  %670 = vadd.xlane.f32.xlu0 %v669
  %v671 = vpop.xlane.xlu0 %670
  %v672 = vsel %vm385, %v578, 0.0
  %673 = vadd.xlane.f32.xlu0 %v672
  %v674 = vpop.xlane.xlu0 %673
  %v675 = vmul.f32 %v581, %v482
  %v676 = vmul.f32 %v584, %v482
  %v677 = vmul.f32 %v587, %v482
  %v678 = vmul.f32 %v590, %v482
  %v679 = vmul.f32 %v593, %v482
  %v680 = vmul.f32 %v596, %v482
  %v681 = vmul.f32 %v599, %v482
  %v682 = vmul.f32 %v602, %v482
  %v683 = vmul.f32 %v605, %v482
  %v684 = vmul.f32 %v608, %v482
  %v685 = vmul.f32 %v611, %v482
  %v686 = vmul.f32 %v614, %v482
  %v687 = vmul.f32 %v617, %v482
  %v688 = vmul.f32 %v620, %v482
  %v689 = vmul.f32 %v623, %v482
  %v690 = vmul.f32 %v626, %v482
  %v691 = vmul.f32 %v629, %v482
  %v692 = vmul.f32 %v632, %v482
  %v693 = vmul.f32 %v635, %v482
  %v694 = vmul.f32 %v638, %v482
  %v695 = vmul.f32 %v641, %v482
  %v696 = vmul.f32 %v644, %v482
  %v697 = vmul.f32 %v647, %v482
  %v698 = vmul.f32 %v650, %v482
  %v699 = vmul.f32 %v653, %v482
  %v700 = vmul.f32 %v656, %v482
  %v701 = vmul.f32 %v659, %v482
  %v702 = vmul.f32 %v662, %v482
  %v703 = vmul.f32 %v665, %v482
  %v704 = vmul.f32 %v668, %v482
  %v705 = vmul.f32 %v671, %v482
  %v706 = vmul.f32 %v674, %v482
  %v707 = vadd.f32 %v675, 1e-06
  %v708 = vadd.f32 %v676, 1e-06
  %v709 = vadd.f32 %v677, 1e-06
  %v710 = vadd.f32 %v678, 1e-06
  %v711 = vadd.f32 %v679, 1e-06
  %v712 = vadd.f32 %v680, 1e-06
  %v713 = vadd.f32 %v681, 1e-06
  %v714 = vadd.f32 %v682, 1e-06
  %v715 = vadd.f32 %v683, 1e-06
  %v716 = vadd.f32 %v684, 1e-06
  %v717 = vadd.f32 %v685, 1e-06
  %v718 = vadd.f32 %v686, 1e-06
  %v719 = vadd.f32 %v687, 1e-06
  %v720 = vadd.f32 %v688, 1e-06
  %v721 = vadd.f32 %v689, 1e-06
  %v722 = vadd.f32 %v690, 1e-06
  %v723 = vadd.f32 %v691, 1e-06
  %v724 = vadd.f32 %v692, 1e-06
  %v725 = vadd.f32 %v693, 1e-06
  %v726 = vadd.f32 %v694, 1e-06
  %v727 = vadd.f32 %v695, 1e-06
  %v728 = vadd.f32 %v696, 1e-06
  %v729 = vadd.f32 %v697, 1e-06
  %v730 = vadd.f32 %v698, 1e-06
  %v731 = vadd.f32 %v699, 1e-06
  %v732 = vadd.f32 %v700, 1e-06
  %v733 = vadd.f32 %v701, 1e-06
  %v734 = vadd.f32 %v702, 1e-06
  %v735 = vadd.f32 %v703, 1e-06
  %v736 = vadd.f32 %v704, 1e-06
  %v737 = vadd.f32 %v705, 1e-06
  %v738 = vadd.f32 %v706, 1e-06
  %v739 = vrsqrt.pop %v707
  %v740 = vrsqrt.pop %v708
  %v741 = vrsqrt.pop %v709
  %v742 = vrsqrt.pop %v710
  %v743 = vrsqrt.pop %v711
  %v744 = vrsqrt.pop %v712
  %v745 = vrsqrt.pop %v713
  %v746 = vrsqrt.pop %v714
  %v747 = vrsqrt.pop %v715
  %v748 = vrsqrt.pop %v716
  %v749 = vrsqrt.pop %v717
  %v750 = vrsqrt.pop %v718
  %v751 = vrsqrt.pop %v719
  %v752 = vrsqrt.pop %v720
  %v753 = vrsqrt.pop %v721
  %v754 = vrsqrt.pop %v722
  %v755 = vrsqrt.pop %v723
  %v756 = vrsqrt.pop %v724
  %v757 = vrsqrt.pop %v725
  %v758 = vrsqrt.pop %v726
  %v759 = vrsqrt.pop %v727
  %v760 = vrsqrt.pop %v728
  %v761 = vrsqrt.pop %v729
  %v762 = vrsqrt.pop %v730
  %v763 = vrsqrt.pop %v731
  %v764 = vrsqrt.pop %v732
  %v765 = vrsqrt.pop %v733
  %v766 = vrsqrt.pop %v734
  %v767 = vrsqrt.pop %v735
  %v768 = vrsqrt.pop %v736
  %v769 = vrsqrt.pop %v737
  %v770 = vrsqrt.pop %v738
  %v771 = vmul.f32 %v515, %v739
  %v772 = vmul.f32 %v516, %v740
  %v773 = vmul.f32 %v517, %v741
  %v774 = vmul.f32 %v518, %v742
  %v775 = vmul.f32 %v519, %v743
  %v776 = vmul.f32 %v520, %v744
  %v777 = vmul.f32 %v521, %v745
  %v778 = vmul.f32 %v522, %v746
  %v779 = vmul.f32 %v523, %v747
  %v780 = vmul.f32 %v524, %v748
  %v781 = vmul.f32 %v525, %v749
  %v782 = vmul.f32 %v526, %v750
  %v783 = vmul.f32 %v527, %v751
  %v784 = vmul.f32 %v528, %v752
  %v785 = vmul.f32 %v529, %v753
  %v786 = vmul.f32 %v530, %v754
  %v787 = vmul.f32 %v531, %v755
  %v788 = vmul.f32 %v532, %v756
  %v789 = vmul.f32 %v533, %v757
  %v790 = vmul.f32 %v534, %v758
  %v791 = vmul.f32 %v535, %v759
  %v792 = vmul.f32 %v536, %v760
  %v793 = vmul.f32 %v537, %v761
  %v794 = vmul.f32 %v538, %v762
  %v795 = vmul.f32 %v539, %v763
  %v796 = vmul.f32 %v540, %v764
  %v797 = vmul.f32 %v541, %v765
  %v798 = vmul.f32 %v542, %v766
  %v799 = vmul.f32 %v543, %v767
  %v800 = vmul.f32 %v544, %v768
  %v801 = vmul.f32 %v545, %v769
  %v802 = vmul.f32 %v546, %v770
  %v804 = vlaneseq
  %v805 = vshrl.u32 %v804, 7
  %v806 = vsub.s32 0, %v805
  %v807 = vrot.slane %v383, %v806
  %v809 = vmul.f32 %v771, %v807
  %v810 = vmul.f32 %v772, %v807
  %v811 = vmul.f32 %v773, %v807
  %v812 = vmul.f32 %v774, %v807
  %v813 = vmul.f32 %v775, %v807
  %v814 = vmul.f32 %v776, %v807
  %v815 = vmul.f32 %v777, %v807
  %v816 = vmul.f32 %v778, %v807
  %v817 = vmul.f32 %v779, %v807
  %v818 = vmul.f32 %v780, %v807
  %v819 = vmul.f32 %v781, %v807
  %v820 = vmul.f32 %v782, %v807
  %v821 = vmul.f32 %v783, %v807
  %v822 = vmul.f32 %v784, %v807
  %v823 = vmul.f32 %v785, %v807
  %v824 = vmul.f32 %v786, %v807
  %v825 = vmul.f32 %v787, %v807
  %v826 = vmul.f32 %v788, %v807
  %v827 = vmul.f32 %v789, %v807
  %v828 = vmul.f32 %v790, %v807
  %v829 = vmul.f32 %v791, %v807
  %v830 = vmul.f32 %v792, %v807
  %v831 = vmul.f32 %v793, %v807
  %v832 = vmul.f32 %v794, %v807
  %v833 = vmul.f32 %v795, %v807
  %v834 = vmul.f32 %v796, %v807
  %v835 = vmul.f32 %v797, %v807
  %v836 = vmul.f32 %v798, %v807
  %v837 = vmul.f32 %v799, %v807
  %v838 = vmul.f32 %v800, %v807
  %v839 = vmul.f32 %v801, %v807
  %v840 = vmul.f32 %v802, %v807
  %v842 = vlaneseq
  %v843 = vshrl.u32 %v842, 7
  %v844 = vsub.s32 0, %v843
  %v845 = vrot.slane %v384, %v844
  %v847 = vadd.f32 %v809, %v845
  %v848 = vadd.f32 %v810, %v845
  %v849 = vadd.f32 %v811, %v845
  %v850 = vadd.f32 %v812, %v845
  %v851 = vadd.f32 %v813, %v845
  %v852 = vadd.f32 %v814, %v845
  %v853 = vadd.f32 %v815, %v845
  %v854 = vadd.f32 %v816, %v845
  %v855 = vadd.f32 %v817, %v845
  %v856 = vadd.f32 %v818, %v845
  %v857 = vadd.f32 %v819, %v845
  %v858 = vadd.f32 %v820, %v845
  %v859 = vadd.f32 %v821, %v845
  %v860 = vadd.f32 %v822, %v845
  %v861 = vadd.f32 %v823, %v845
  %v862 = vadd.f32 %v824, %v845
  %v863 = vadd.f32 %v825, %v845
  %v864 = vadd.f32 %v826, %v845
  %v865 = vadd.f32 %v827, %v845
  %v866 = vadd.f32 %v828, %v845
  %v867 = vadd.f32 %v829, %v845
  %v868 = vadd.f32 %v830, %v845
  %v869 = vadd.f32 %v831, %v845
  %v870 = vadd.f32 %v832, %v845
  %v871 = vadd.f32 %v833, %v845
  %v872 = vadd.f32 %v834, %v845
  %v873 = vadd.f32 %v835, %v845
  %v874 = vadd.f32 %v836, %v845
  %v875 = vadd.f32 %v837, %v845
  %v876 = vadd.f32 %v838, %v845
  %v877 = vadd.f32 %v839, %v845
  %v878 = vadd.f32 %v840, %v845
  %v879 = vmul.f32 %v847, 0.5
  %v880 = vmul.f32 %v848, 0.5
  %v881 = vmul.f32 %v849, 0.5
  %v882 = vmul.f32 %v850, 0.5
  %v883 = vmul.f32 %v851, 0.5
  %v884 = vmul.f32 %v852, 0.5
  %v885 = vmul.f32 %v853, 0.5
  %v886 = vmul.f32 %v854, 0.5
  %v887 = vmul.f32 %v855, 0.5
  %v888 = vmul.f32 %v856, 0.5
  %v889 = vmul.f32 %v857, 0.5
  %v890 = vmul.f32 %v858, 0.5
  %v891 = vmul.f32 %v859, 0.5
  %v892 = vmul.f32 %v860, 0.5
  %v893 = vmul.f32 %v861, 0.5
  %v894 = vmul.f32 %v862, 0.5
  %v895 = vmul.f32 %v863, 0.5
  %v896 = vmul.f32 %v864, 0.5
  %v897 = vmul.f32 %v865, 0.5
  %v898 = vmul.f32 %v866, 0.5
  %v899 = vmul.f32 %v867, 0.5
  %v900 = vmul.f32 %v868, 0.5
  %v901 = vmul.f32 %v869, 0.5
  %v902 = vmul.f32 %v870, 0.5
  %v903 = vmul.f32 %v871, 0.5
  %v904 = vmul.f32 %v872, 0.5
  %v905 = vmul.f32 %v873, 0.5
  %v906 = vmul.f32 %v874, 0.5
  %v907 = vmul.f32 %v875, 0.5
  %v908 = vmul.f32 %v876, 0.5
  %v909 = vmul.f32 %v877, 0.5
  %v910 = vmul.f32 %v878, 0.5
  %v911 = vmul.f32 %v847, 0.044715
  %v912 = vmul.f32 %v848, 0.044715
  %v913 = vmul.f32 %v849, 0.044715
  %v914 = vmul.f32 %v850, 0.044715
  %v915 = vmul.f32 %v851, 0.044715
  %v916 = vmul.f32 %v852, 0.044715
  %v917 = vmul.f32 %v853, 0.044715
  %v918 = vmul.f32 %v854, 0.044715
  %v919 = vmul.f32 %v855, 0.044715
  %v920 = vmul.f32 %v856, 0.044715
  %v921 = vmul.f32 %v857, 0.044715
  %v922 = vmul.f32 %v858, 0.044715
  %v923 = vmul.f32 %v859, 0.044715
  %v924 = vmul.f32 %v860, 0.044715
  %v925 = vmul.f32 %v861, 0.044715
  %v926 = vmul.f32 %v862, 0.044715
  %v927 = vmul.f32 %v863, 0.044715
  %v928 = vmul.f32 %v864, 0.044715
  %v929 = vmul.f32 %v865, 0.044715
  %v930 = vmul.f32 %v866, 0.044715
  %v931 = vmul.f32 %v867, 0.044715
  %v932 = vmul.f32 %v868, 0.044715
  %v933 = vmul.f32 %v869, 0.044715
  %v934 = vmul.f32 %v870, 0.044715
  %v935 = vmul.f32 %v871, 0.044715
  %v936 = vmul.f32 %v872, 0.044715
  %v937 = vmul.f32 %v873, 0.044715
  %v938 = vmul.f32 %v874, 0.044715
  %v939 = vmul.f32 %v875, 0.044715
  %v940 = vmul.f32 %v876, 0.044715
  %v941 = vmul.f32 %v877, 0.044715
  %v942 = vmul.f32 %v878, 0.044715
  %v943 = vmul.f32 %v911, %v847
  %v944 = vmul.f32 %v912, %v848
  %v945 = vmul.f32 %v913, %v849
  %v946 = vmul.f32 %v914, %v850
  %v947 = vmul.f32 %v915, %v851
  %v948 = vmul.f32 %v916, %v852
  %v949 = vmul.f32 %v917, %v853
  %v950 = vmul.f32 %v918, %v854
  %v951 = vmul.f32 %v919, %v855
  %v952 = vmul.f32 %v920, %v856
  %v953 = vmul.f32 %v921, %v857
  %v954 = vmul.f32 %v922, %v858
  %v955 = vmul.f32 %v923, %v859
  %v956 = vmul.f32 %v924, %v860
  %v957 = vmul.f32 %v925, %v861
  %v958 = vmul.f32 %v926, %v862
  %v959 = vmul.f32 %v927, %v863
  %v960 = vmul.f32 %v928, %v864
  %v961 = vmul.f32 %v929, %v865
  %v962 = vmul.f32 %v930, %v866
  %v963 = vmul.f32 %v931, %v867
  %v964 = vmul.f32 %v932, %v868
  %v965 = vmul.f32 %v933, %v869
  %v966 = vmul.f32 %v934, %v870
  %v967 = vmul.f32 %v935, %v871
  %v968 = vmul.f32 %v936, %v872
  %v969 = vmul.f32 %v937, %v873
  %v970 = vmul.f32 %v938, %v874
  %v971 = vmul.f32 %v939, %v875
  %v972 = vmul.f32 %v940, %v876
  %v973 = vmul.f32 %v941, %v877
  %v974 = vmul.f32 %v942, %v878
  %v975 = vmul.f32 %v943, %v847
  %v976 = vmul.f32 %v944, %v848
  %v977 = vmul.f32 %v945, %v849
  %v978 = vmul.f32 %v946, %v850
  %v979 = vmul.f32 %v947, %v851
  %v980 = vmul.f32 %v948, %v852
  %v981 = vmul.f32 %v949, %v853
  %v982 = vmul.f32 %v950, %v854
  %v983 = vmul.f32 %v951, %v855
  %v984 = vmul.f32 %v952, %v856
  %v985 = vmul.f32 %v953, %v857
  %v986 = vmul.f32 %v954, %v858
  %v987 = vmul.f32 %v955, %v859
  %v988 = vmul.f32 %v956, %v860
  %v989 = vmul.f32 %v957, %v861
  %v990 = vmul.f32 %v958, %v862
  %v991 = vmul.f32 %v959, %v863
  %v992 = vmul.f32 %v960, %v864
  %v993 = vmul.f32 %v961, %v865
  %v994 = vmul.f32 %v962, %v866
  %v995 = vmul.f32 %v963, %v867
  %v996 = vmul.f32 %v964, %v868
  %v997 = vmul.f32 %v965, %v869
  %v998 = vmul.f32 %v966, %v870
  %v999 = vmul.f32 %v967, %v871
  %v1000 = vmul.f32 %v968, %v872
  %v1001 = vmul.f32 %v969, %v873
  %v1002 = vmul.f32 %v970, %v874
  %v1003 = vmul.f32 %v971, %v875
  %v1004 = vmul.f32 %v972, %v876
  %v1005 = vmul.f32 %v973, %v877
  %v1006 = vmul.f32 %v974, %v878
  %v1007 = vadd.f32 %v847, %v975
  %v1008 = vadd.f32 %v848, %v976
  %v1009 = vadd.f32 %v849, %v977
  %v1010 = vadd.f32 %v850, %v978
  %v1011 = vadd.f32 %v851, %v979
  %v1012 = vadd.f32 %v852, %v980
  %v1013 = vadd.f32 %v853, %v981
  %v1014 = vadd.f32 %v854, %v982
  %v1015 = vadd.f32 %v855, %v983
  %v1016 = vadd.f32 %v856, %v984
  %v1017 = vadd.f32 %v857, %v985
  %v1018 = vadd.f32 %v858, %v986
  %v1019 = vadd.f32 %v859, %v987
  %v1020 = vadd.f32 %v860, %v988
  %v1021 = vadd.f32 %v861, %v989
  %v1022 = vadd.f32 %v862, %v990
  %v1023 = vadd.f32 %v863, %v991
  %v1024 = vadd.f32 %v864, %v992
  %v1025 = vadd.f32 %v865, %v993
  %v1026 = vadd.f32 %v866, %v994
  %v1027 = vadd.f32 %v867, %v995
  %v1028 = vadd.f32 %v868, %v996
  %v1029 = vadd.f32 %v869, %v997
  %v1030 = vadd.f32 %v870, %v998
  %v1031 = vadd.f32 %v871, %v999
  %v1032 = vadd.f32 %v872, %v1000
  %v1033 = vadd.f32 %v873, %v1001
  %v1034 = vadd.f32 %v874, %v1002
  %v1035 = vadd.f32 %v875, %v1003
  %v1036 = vadd.f32 %v876, %v1004
  %v1037 = vadd.f32 %v877, %v1005
  %v1038 = vadd.f32 %v878, %v1006
  %v1039 = vmul.f32 %v1007, 0.7978846
  %v1040 = vmul.f32 %v1008, 0.7978846
  %v1041 = vmul.f32 %v1009, 0.7978846
  %v1042 = vmul.f32 %v1010, 0.7978846
  %v1043 = vmul.f32 %v1011, 0.7978846
  %v1044 = vmul.f32 %v1012, 0.7978846
  %v1045 = vmul.f32 %v1013, 0.7978846
  %v1046 = vmul.f32 %v1014, 0.7978846
  %v1047 = vmul.f32 %v1015, 0.7978846
  %v1048 = vmul.f32 %v1016, 0.7978846
  %v1049 = vmul.f32 %v1017, 0.7978846
  %v1050 = vmul.f32 %v1018, 0.7978846
  %v1051 = vmul.f32 %v1019, 0.7978846
  %v1052 = vmul.f32 %v1020, 0.7978846
  %v1053 = vmul.f32 %v1021, 0.7978846
  %v1054 = vmul.f32 %v1022, 0.7978846
  %v1055 = vmul.f32 %v1023, 0.7978846
  %v1056 = vmul.f32 %v1024, 0.7978846
  %v1057 = vmul.f32 %v1025, 0.7978846
  %v1058 = vmul.f32 %v1026, 0.7978846
  %v1059 = vmul.f32 %v1027, 0.7978846
  %v1060 = vmul.f32 %v1028, 0.7978846
  %v1061 = vmul.f32 %v1029, 0.7978846
  %v1062 = vmul.f32 %v1030, 0.7978846
  %v1063 = vmul.f32 %v1031, 0.7978846
  %v1064 = vmul.f32 %v1032, 0.7978846
  %v1065 = vmul.f32 %v1033, 0.7978846
  %v1066 = vmul.f32 %v1034, 0.7978846
  %v1067 = vmul.f32 %v1035, 0.7978846
  %v1068 = vmul.f32 %v1036, 0.7978846
  %v1069 = vmul.f32 %v1037, 0.7978846
  %v1070 = vmul.f32 %v1038, 0.7978846
  %v1071 = vtanh.pop %v1039
  %v1072 = vtanh.pop %v1040
  %v1073 = vtanh.pop %v1041
  %v1074 = vtanh.pop %v1042
  %v1075 = vtanh.pop %v1043
  %v1076 = vtanh.pop %v1044
  %v1077 = vtanh.pop %v1045
  %v1078 = vtanh.pop %v1046
  %v1079 = vtanh.pop %v1047
  %v1080 = vtanh.pop %v1048
  %v1081 = vtanh.pop %v1049
  %v1082 = vtanh.pop %v1050
  %v1083 = vtanh.pop %v1051
  %v1084 = vtanh.pop %v1052
  %v1085 = vtanh.pop %v1053
  %v1086 = vtanh.pop %v1054
  %v1087 = vtanh.pop %v1055
  %v1088 = vtanh.pop %v1056
  %v1089 = vtanh.pop %v1057
  %v1090 = vtanh.pop %v1058
  %v1091 = vtanh.pop %v1059
  %v1092 = vtanh.pop %v1060
  %v1093 = vtanh.pop %v1061
  %v1094 = vtanh.pop %v1062
  %v1095 = vtanh.pop %v1063
  %v1096 = vtanh.pop %v1064
  %v1097 = vtanh.pop %v1065
  %v1098 = vtanh.pop %v1066
  %v1099 = vtanh.pop %v1067
  %v1100 = vtanh.pop %v1068
  %v1101 = vtanh.pop %v1069
  %v1102 = vtanh.pop %v1070
  %v1103 = vadd.f32 %v1071, 1.0
  %v1104 = vadd.f32 %v1072, 1.0
  %v1105 = vadd.f32 %v1073, 1.0
  %v1106 = vadd.f32 %v1074, 1.0
  %v1107 = vadd.f32 %v1075, 1.0
  %v1108 = vadd.f32 %v1076, 1.0
  %v1109 = vadd.f32 %v1077, 1.0
  %v1110 = vadd.f32 %v1078, 1.0
  %v1111 = vadd.f32 %v1079, 1.0
  %v1112 = vadd.f32 %v1080, 1.0
  %v1113 = vadd.f32 %v1081, 1.0
  %v1114 = vadd.f32 %v1082, 1.0
  %v1115 = vadd.f32 %v1083, 1.0
  %v1116 = vadd.f32 %v1084, 1.0
  %v1117 = vadd.f32 %v1085, 1.0
  %v1118 = vadd.f32 %v1086, 1.0
  %v1119 = vadd.f32 %v1087, 1.0
  %v1120 = vadd.f32 %v1088, 1.0
  %v1121 = vadd.f32 %v1089, 1.0
  %v1122 = vadd.f32 %v1090, 1.0
  %v1123 = vadd.f32 %v1091, 1.0
  %v1124 = vadd.f32 %v1092, 1.0
  %v1125 = vadd.f32 %v1093, 1.0
  %v1126 = vadd.f32 %v1094, 1.0
  %v1127 = vadd.f32 %v1095, 1.0
  %v1128 = vadd.f32 %v1096, 1.0
  %v1129 = vadd.f32 %v1097, 1.0
  %v1130 = vadd.f32 %v1098, 1.0
  %v1131 = vadd.f32 %v1099, 1.0
  %v1132 = vadd.f32 %v1100, 1.0
  %v1133 = vadd.f32 %v1101, 1.0
  %v1134 = vadd.f32 %v1102, 1.0
  %v1135 = vmul.f32 %v879, %v1103
  %v1136 = vmul.f32 %v880, %v1104
  %v1137 = vmul.f32 %v881, %v1105
  %v1138 = vmul.f32 %v882, %v1106
  %v1139 = vmul.f32 %v883, %v1107
  %v1140 = vmul.f32 %v884, %v1108
  %v1141 = vmul.f32 %v885, %v1109
  %v1142 = vmul.f32 %v886, %v1110
  %v1143 = vmul.f32 %v887, %v1111
  %v1144 = vmul.f32 %v888, %v1112
  %v1145 = vmul.f32 %v889, %v1113
  %v1146 = vmul.f32 %v890, %v1114
  %v1147 = vmul.f32 %v891, %v1115
  %v1148 = vmul.f32 %v892, %v1116
  %v1149 = vmul.f32 %v893, %v1117
  %v1150 = vmul.f32 %v894, %v1118
  %v1151 = vmul.f32 %v895, %v1119
  %v1152 = vmul.f32 %v896, %v1120
  %v1153 = vmul.f32 %v897, %v1121
  %v1154 = vmul.f32 %v898, %v1122
  %v1155 = vmul.f32 %v899, %v1123
  %v1156 = vmul.f32 %v900, %v1124
  %v1157 = vmul.f32 %v901, %v1125
  %v1158 = vmul.f32 %v902, %v1126
  %v1159 = vmul.f32 %v903, %v1127
  %v1160 = vmul.f32 %v904, %v1128
  %v1161 = vmul.f32 %v905, %v1129
  %v1162 = vmul.f32 %v906, %v1130
  %v1163 = vmul.f32 %v907, %v1131
  %v1164 = vmul.f32 %v908, %v1132
  %v1165 = vmul.f32 %v909, %v1133
  %v1166 = vmul.f32 %v910, %v1134
  %1167 = vst.msk [vmem:[%s5] sm:$0xff] %vm385, %v1135
  %1168 = vst.msk [vmem:[%s5 + $0x8] sm:$0xff] %vm385, %v1136
  %1169 = vst.msk [vmem:[%s5 + $0x10] sm:$0xff] %vm385, %v1137
  %1170 = vst.msk [vmem:[%s5 + $0x18] sm:$0xff] %vm385, %v1138
  %1171 = vst.msk [vmem:[%s5 + $0x20] sm:$0xff] %vm385, %v1139
  %1172 = vst.msk [vmem:[%s5 + $0x28] sm:$0xff] %vm385, %v1140
  %1173 = vst.msk [vmem:[%s5 + $0x30] sm:$0xff] %vm385, %v1141
  %1174 = vst.msk [vmem:[%s5 + $0x38] sm:$0xff] %vm385, %v1142
  %1175 = vst.msk [vmem:[%s5 + $0x40] sm:$0xff] %vm385, %v1143
  %1176 = vst.msk [vmem:[%s5 + $0x48] sm:$0xff] %vm385, %v1144
  %1177 = vst.msk [vmem:[%s5 + $0x50] sm:$0xff] %vm385, %v1145
  %1178 = vst.msk [vmem:[%s5 + $0x58] sm:$0xff] %vm385, %v1146
  %1179 = vst.msk [vmem:[%s5 + $0x60] sm:$0xff] %vm385, %v1147
  %1180 = vst.msk [vmem:[%s5 + $0x68] sm:$0xff] %vm385, %v1148
  %1181 = vst.msk [vmem:[%s5 + $0x70] sm:$0xff] %vm385, %v1149
  %1182 = vst.msk [vmem:[%s5 + $0x78] sm:$0xff] %vm385, %v1150
  %1183 = vst.msk [vmem:[%s5 + $0x80] sm:$0xff] %vm385, %v1151
  %1184 = vst.msk [vmem:[%s5 + $0x88] sm:$0xff] %vm385, %v1152
  %1185 = vst.msk [vmem:[%s5 + $0x90] sm:$0xff] %vm385, %v1153
  %1186 = vst.msk [vmem:[%s5 + $0x98] sm:$0xff] %vm385, %v1154
  %1187 = vst.msk [vmem:[%s5 + $0xa0] sm:$0xff] %vm385, %v1155
  %1188 = vst.msk [vmem:[%s5 + $0xa8] sm:$0xff] %vm385, %v1156
  %1189 = vst.msk [vmem:[%s5 + $0xb0] sm:$0xff] %vm385, %v1157
  %1190 = vst.msk [vmem:[%s5 + $0xb8] sm:$0xff] %vm385, %v1158
  %1191 = vst.msk [vmem:[%s5 + $0xc0] sm:$0xff] %vm385, %v1159
  %1192 = vst.msk [vmem:[%s5 + $0xc8] sm:$0xff] %vm385, %v1160
  %1193 = vst.msk [vmem:[%s5 + $0xd0] sm:$0xff] %vm385, %v1161
  %1194 = vst.msk [vmem:[%s5 + $0xd8] sm:$0xff] %vm385, %v1162
  %1195 = vst.msk [vmem:[%s5 + $0xe0] sm:$0xff] %vm385, %v1163
  %1196 = vst.msk [vmem:[%s5 + $0xe8] sm:$0xff] %vm385, %v1164
  %1197 = vst.msk [vmem:[%s5 + $0xf0] sm:$0xff] %vm385, %v1165
  %1198 = vst.msk [vmem:[%s5 + $0xf8] sm:$0xff] %vm385, %v1166
  %s1199 = scalar_lea.vmem %s1, 16
  %v1200 = vld [vmem:[%s1199] sm:$0xff]
  %v1201 = vld [vmem:[%s1199 + $0x8] sm:$0xff]
  %1202 = vmatprep.subr.mxu0 0.0
  %1203 = vmatpush1.msra.mxu0 %v1200
  %1204 = vmatprep.subr.mxu0 0.0
  %1205 = vmatpush1.msra.mxu0 %v1201
  %1206 = vmatprep.subr.mxu0 0.0
  %1207 = vmatpush1.msra.mxu0 0.0
  %1208 = vmatprep.subr.mxu0 0.0
  %1209 = vmatpush1.msra.mxu0 0.0
  %1210 = vmatprep.subr.mxu0 0.0
  %1211 = vmatpush1.msra.mxu0 0.0
  %1212 = vmatprep.subr.mxu0 0.0
  %1213 = vmatpush1.msra.mxu0 0.0
  %1214 = vmatprep.subr.mxu0 0.0
  %1215 = vmatpush1.msra.mxu0 0.0
  %1216 = vmatprep.subr.mxu0 0.0
  %1217 = vmatpush1.msra.mxu0 0.0
  %1218 = vmatprep.subr.mxu0 0.0
  %1219 = vmatpush1.msra.mxu0 0.0
  %1220 = vmatprep.subr.mxu0 0.0
  %1221 = vmatpush1.msra.mxu0 0.0
  %1222 = vmatprep.subr.mxu0 0.0
  %1223 = vmatpush1.msra.mxu0 0.0
  %1224 = vmatprep.subr.mxu0 0.0
  %1225 = vmatpush1.msra.mxu0 0.0
  %1226 = vmatprep.subr.mxu0 0.0
  %1227 = vmatpush1.msra.mxu0 0.0
  %1228 = vmatprep.subr.mxu0 0.0
  %1229 = vmatpush1.msra.mxu0 0.0
  %1230 = vmatprep.subr.mxu0 0.0
  %1231 = vmatpush1.msra.mxu0 0.0
  %1232 = vmatprep.subr.mxu0 0.0
  %1233 = vmatpush1.msra.mxu0 0.0
  %1234 = vmatprep.subr.mxu0 0.0
  %1235 = vmatpush1.msra.mxu0 0.0
  %1236 = vmatprep.subr.mxu0 0.0
  %1237 = vmatpush1.msra.mxu0 0.0
  %1238 = vmatprep.subr.mxu0 0.0
  %1239 = vmatpush1.msra.mxu0 0.0
  %1240 = vmatprep.subr.mxu0 0.0
  %1241 = vmatpush1.msra.mxu0 0.0
  %1242 = vmatprep.subr.mxu0 0.0
  %1243 = vmatpush1.msra.mxu0 0.0
  %1244 = vmatprep.subr.mxu0 0.0
  %1245 = vmatpush1.msra.mxu0 0.0
  %1246 = vmatprep.subr.mxu0 0.0
  %1247 = vmatpush1.msra.mxu0 0.0
  %1248 = vmatprep.subr.mxu0 0.0
  %1249 = vmatpush1.msra.mxu0 0.0
  %1250 = vmatprep.subr.mxu0 0.0
  %1251 = vmatpush1.msra.mxu0 0.0
  %1252 = vmatprep.subr.mxu0 0.0
  %1253 = vmatpush1.msra.mxu0 0.0
  %1254 = vmatprep.subr.mxu0 0.0
  %1255 = vmatpush1.msra.mxu0 0.0
  %1256 = vmatprep.subr.mxu0 0.0
  %1257 = vmatpush1.msra.mxu0 0.0
  %1258 = vmatprep.subr.mxu0 0.0
  %1259 = vmatpush1.msra.mxu0 0.0
  %1260 = vmatprep.subr.mxu0 0.0
  %1261 = vmatpush1.msra.mxu0 0.0
  %1262 = vmatprep.subr.mxu0 0.0
  %1263 = vmatpush1.msra.mxu0 0.0
  %1264 = vmatprep.subr.mxu0 0.0
  %1265 = vmatpush1.msra.mxu0 0.0
  %1266 = vmatprep.mubr.f32.mxu0 0.0
  %1267 = vmatmul.mubr.f32.gmra.mrb[0].mxu0 %v63
  %v1268 = vpop.f32.mrb[0].mxu0
  %v1269 = vadd.f32 %v59, %v1268
  %v1270 = vpop.f32.mrb[0].mxu0
  %1271 = vmatprep.mubr.f32.mxu0 0.0
  %1272 = vmatmul.mubr.f32.gmra.mrb[0].mxu0 %v66
  %v1273 = vpop.f32.mrb[0].mxu0
  %v1274 = vadd.f32 %v59, %v1273
  %v1275 = vpop.f32.mrb[0].mxu0
  %1276 = vmatprep.mubr.f32.mxu0 0.0
  %1277 = vmatmul.mubr.f32.gmra.mrb[0].mxu0 %v69
  %v1278 = vpop.f32.mrb[0].mxu0
  %v1279 = vadd.f32 %v59, %v1278
  %v1280 = vpop.f32.mrb[0].mxu0
  %1281 = vmatprep.mubr.f32.mxu0 0.0
  %1282 = vmatmul.mubr.f32.gmra.mrb[0].mxu0 %v72
  %v1283 = vpop.f32.mrb[0].mxu0
  %v1284 = vadd.f32 %v59, %v1283
  %v1285 = vpop.f32.mrb[0].mxu0
  %1286 = vmatprep.mubr.f32.mxu0 0.0
  %1287 = vmatmul.mubr.f32.gmra.mrb[0].mxu0 %v75
  %v1288 = vpop.f32.mrb[0].mxu0
  %v1289 = vadd.f32 %v59, %v1288
  %v1290 = vpop.f32.mrb[0].mxu0
  %1291 = vmatprep.mubr.f32.mxu0 0.0
  %1292 = vmatmul.mubr.f32.gmra.mrb[0].mxu0 %v78
  %v1293 = vpop.f32.mrb[0].mxu0
  %v1294 = vadd.f32 %v59, %v1293
  %v1295 = vpop.f32.mrb[0].mxu0
  %1296 = vmatprep.mubr.f32.mxu0 0.0
  %1297 = vmatmul.mubr.f32.gmra.mrb[0].mxu0 %v81
  %v1298 = vpop.f32.mrb[0].mxu0
  %v1299 = vadd.f32 %v59, %v1298
  %v1300 = vpop.f32.mrb[0].mxu0
  %1301 = vmatprep.mubr.f32.mxu0 0.0
  %1302 = vmatmul.mubr.f32.gmra.mrb[0].mxu0 %v84
  %v1303 = vpop.f32.mrb[0].mxu0
  %v1304 = vadd.f32 %v59, %v1303
  %v1305 = vpop.f32.mrb[0].mxu0
  %1306 = vmatprep.mubr.f32.mxu0 0.0
  %1307 = vmatmul.mubr.f32.gmra.mrb[0].mxu0 %v87
  %v1308 = vpop.f32.mrb[0].mxu0
  %v1309 = vadd.f32 %v59, %v1308
  %v1310 = vpop.f32.mrb[0].mxu0
  %1311 = vmatprep.mubr.f32.mxu0 0.0
  %1312 = vmatmul.mubr.f32.gmra.mrb[0].mxu0 %v90
  %v1313 = vpop.f32.mrb[0].mxu0
  %v1314 = vadd.f32 %v59, %v1313
  %v1315 = vpop.f32.mrb[0].mxu0
  %1316 = vmatprep.mubr.f32.mxu0 0.0
  %1317 = vmatmul.mubr.f32.gmra.mrb[0].mxu0 %v93
  %v1318 = vpop.f32.mrb[0].mxu0
  %v1319 = vadd.f32 %v59, %v1318
  %v1320 = vpop.f32.mrb[0].mxu0
  %1321 = vmatprep.mubr.f32.mxu0 0.0
  %1322 = vmatmul.mubr.f32.gmra.mrb[0].mxu0 %v96
  %v1323 = vpop.f32.mrb[0].mxu0
  %v1324 = vadd.f32 %v59, %v1323
  %v1325 = vpop.f32.mrb[0].mxu0
  %1326 = vmatprep.mubr.f32.mxu0 0.0
  %1327 = vmatmul.mubr.f32.gmra.mrb[0].mxu0 %v99
  %v1328 = vpop.f32.mrb[0].mxu0
  %v1329 = vadd.f32 %v59, %v1328
  %v1330 = vpop.f32.mrb[0].mxu0
  %1331 = vmatprep.mubr.f32.mxu0 0.0
  %1332 = vmatmul.mubr.f32.gmra.mrb[0].mxu0 %v102
  %v1333 = vpop.f32.mrb[0].mxu0
  %v1334 = vadd.f32 %v59, %v1333
  %v1335 = vpop.f32.mrb[0].mxu0
  %1336 = vmatprep.mubr.f32.mxu0 0.0
  %1337 = vmatmul.mubr.f32.gmra.mrb[0].mxu0 %v105
  %v1338 = vpop.f32.mrb[0].mxu0
  %v1339 = vadd.f32 %v59, %v1338
  %v1340 = vpop.f32.mrb[0].mxu0
  %1341 = vmatprep.mubr.f32.mxu0 0.0
  %1342 = vmatmul.mubr.f32.gmra.mrb[0].mxu0 %v108
  %v1343 = vpop.f32.mrb[0].mxu0
  %v1344 = vadd.f32 %v59, %v1343
  %v1345 = vpop.f32.mrb[0].mxu0
  %1346 = vmatprep.mubr.f32.mxu0 0.0
  %1347 = vmatmul.mubr.f32.gmra.mrb[0].mxu0 %v111
  %v1348 = vpop.f32.mrb[0].mxu0
  %v1349 = vadd.f32 %v59, %v1348
  %v1350 = vpop.f32.mrb[0].mxu0
  %1351 = vmatprep.mubr.f32.mxu0 0.0
  %1352 = vmatmul.mubr.f32.gmra.mrb[0].mxu0 %v114
  %v1353 = vpop.f32.mrb[0].mxu0
  %v1354 = vadd.f32 %v59, %v1353
  %v1355 = vpop.f32.mrb[0].mxu0
  %1356 = vmatprep.mubr.f32.mxu0 0.0
  %1357 = vmatmul.mubr.f32.gmra.mrb[0].mxu0 %v117
  %v1358 = vpop.f32.mrb[0].mxu0
  %v1359 = vadd.f32 %v59, %v1358
  %v1360 = vpop.f32.mrb[0].mxu0
  %1361 = vmatprep.mubr.f32.mxu0 0.0
  %1362 = vmatmul.mubr.f32.gmra.mrb[0].mxu0 %v120
  %v1363 = vpop.f32.mrb[0].mxu0
  %v1364 = vadd.f32 %v59, %v1363
  %v1365 = vpop.f32.mrb[0].mxu0
  %1366 = vmatprep.mubr.f32.mxu0 0.0
  %1367 = vmatmul.mubr.f32.gmra.mrb[0].mxu0 %v123
  %v1368 = vpop.f32.mrb[0].mxu0
  %v1369 = vadd.f32 %v59, %v1368
  %v1370 = vpop.f32.mrb[0].mxu0
  %1371 = vmatprep.mubr.f32.mxu0 0.0
  %1372 = vmatmul.mubr.f32.gmra.mrb[0].mxu0 %v126
  %v1373 = vpop.f32.mrb[0].mxu0
  %v1374 = vadd.f32 %v59, %v1373
  %v1375 = vpop.f32.mrb[0].mxu0
  %1376 = vmatprep.mubr.f32.mxu0 0.0
  %1377 = vmatmul.mubr.f32.gmra.mrb[0].mxu0 %v129
  %v1378 = vpop.f32.mrb[0].mxu0
  %v1379 = vadd.f32 %v59, %v1378
  %v1380 = vpop.f32.mrb[0].mxu0
  %1381 = vmatprep.mubr.f32.mxu0 0.0
  %1382 = vmatmul.mubr.f32.gmra.mrb[0].mxu0 %v132
  %v1383 = vpop.f32.mrb[0].mxu0
  %v1384 = vadd.f32 %v59, %v1383
  %v1385 = vpop.f32.mrb[0].mxu0
  %1386 = vmatprep.mubr.f32.mxu0 0.0
  %1387 = vmatmul.mubr.f32.gmra.mrb[0].mxu0 %v135
  %v1388 = vpop.f32.mrb[0].mxu0
  %v1389 = vadd.f32 %v59, %v1388
  %v1390 = vpop.f32.mrb[0].mxu0
  %1391 = vmatprep.mubr.f32.mxu0 0.0
  %1392 = vmatmul.mubr.f32.gmra.mrb[0].mxu0 %v138
  %v1393 = vpop.f32.mrb[0].mxu0
  %v1394 = vadd.f32 %v59, %v1393
  %v1395 = vpop.f32.mrb[0].mxu0
  %1396 = vmatprep.mubr.f32.mxu0 0.0
  %1397 = vmatmul.mubr.f32.gmra.mrb[0].mxu0 %v141
  %v1398 = vpop.f32.mrb[0].mxu0
  %v1399 = vadd.f32 %v59, %v1398
  %v1400 = vpop.f32.mrb[0].mxu0
  %1401 = vmatprep.mubr.f32.mxu0 0.0
  %1402 = vmatmul.mubr.f32.gmra.mrb[0].mxu0 %v144
  %v1403 = vpop.f32.mrb[0].mxu0
  %v1404 = vadd.f32 %v59, %v1403
  %v1405 = vpop.f32.mrb[0].mxu0
  %1406 = vmatprep.mubr.f32.mxu0 0.0
  %1407 = vmatmul.mubr.f32.gmra.mrb[0].mxu0 %v147
  %v1408 = vpop.f32.mrb[0].mxu0
  %v1409 = vadd.f32 %v59, %v1408
  %v1410 = vpop.f32.mrb[0].mxu0
  %1411 = vmatprep.mubr.f32.mxu0 0.0
  %1412 = vmatmul.mubr.f32.gmra.mrb[0].mxu0 %v150
  %v1413 = vpop.f32.mrb[0].mxu0
  %v1414 = vadd.f32 %v59, %v1413
  %v1415 = vpop.f32.mrb[0].mxu0
  %1416 = vmatprep.mubr.f32.mxu0 0.0
  %1417 = vmatmul.mubr.f32.gmra.mrb[0].mxu0 %v153
  %v1418 = vpop.f32.mrb[0].mxu0
  %v1419 = vadd.f32 %v59, %v1418
  %v1420 = vpop.f32.mrb[0].mxu0
  %1421 = vmatprep.mubr.f32.mxu0 0.0
  %1422 = vmatmul.mubr.f32.gmra.mrb[0].mxu0 %v156
  %v1423 = vpop.f32.mrb[0].mxu0
  %v1424 = vadd.f32 %v59, %v1423
  %v1425 = vpop.f32.mrb[0].mxu0
  %1426 = vdwg.mxu0
  %v1427 = vld [vmem:[%s3] sm:$0x1]
  %v1428 = vld [vmem:[%s4] sm:$0x1]
  %v1429 = vsel %vm385, %v1269, 0.0
  %1430 = vadd.xlane.f32.xlu0 %v1429
  %v1431 = vpop.xlane.xlu0 %1430
  %v1432 = vsel %vm385, %v1274, 0.0
  %1433 = vadd.xlane.f32.xlu0 %v1432
  %v1434 = vpop.xlane.xlu0 %1433
  %v1435 = vsel %vm385, %v1279, 0.0
  %1436 = vadd.xlane.f32.xlu0 %v1435
  %v1437 = vpop.xlane.xlu0 %1436
  %v1438 = vsel %vm385, %v1284, 0.0
  %1439 = vadd.xlane.f32.xlu0 %v1438
  %v1440 = vpop.xlane.xlu0 %1439
  %v1441 = vsel %vm385, %v1289, 0.0
  %1442 = vadd.xlane.f32.xlu0 %v1441
  %v1443 = vpop.xlane.xlu0 %1442
  %v1444 = vsel %vm385, %v1294, 0.0
  %1445 = vadd.xlane.f32.xlu0 %v1444
  %v1446 = vpop.xlane.xlu0 %1445
  %v1447 = vsel %vm385, %v1299, 0.0
  %1448 = vadd.xlane.f32.xlu0 %v1447
  %v1449 = vpop.xlane.xlu0 %1448
  %v1450 = vsel %vm385, %v1304, 0.0
  %1451 = vadd.xlane.f32.xlu0 %v1450
  %v1452 = vpop.xlane.xlu0 %1451
  %v1453 = vsel %vm385, %v1309, 0.0
  %1454 = vadd.xlane.f32.xlu0 %v1453
  %v1455 = vpop.xlane.xlu0 %1454
  %v1456 = vsel %vm385, %v1314, 0.0
  %1457 = vadd.xlane.f32.xlu0 %v1456
  %v1458 = vpop.xlane.xlu0 %1457
  %v1459 = vsel %vm385, %v1319, 0.0
  %1460 = vadd.xlane.f32.xlu0 %v1459
  %v1461 = vpop.xlane.xlu0 %1460
  %v1462 = vsel %vm385, %v1324, 0.0
  %1463 = vadd.xlane.f32.xlu0 %v1462
  %v1464 = vpop.xlane.xlu0 %1463
  %v1465 = vsel %vm385, %v1329, 0.0
  %1466 = vadd.xlane.f32.xlu0 %v1465
  %v1467 = vpop.xlane.xlu0 %1466
  %v1468 = vsel %vm385, %v1334, 0.0
  %1469 = vadd.xlane.f32.xlu0 %v1468
  %v1470 = vpop.xlane.xlu0 %1469
  %v1471 = vsel %vm385, %v1339, 0.0
  %1472 = vadd.xlane.f32.xlu0 %v1471
  %v1473 = vpop.xlane.xlu0 %1472
  %v1474 = vsel %vm385, %v1344, 0.0
  %1475 = vadd.xlane.f32.xlu0 %v1474
  %v1476 = vpop.xlane.xlu0 %1475
  %v1477 = vsel %vm385, %v1349, 0.0
  %1478 = vadd.xlane.f32.xlu0 %v1477
  %v1479 = vpop.xlane.xlu0 %1478
  %v1480 = vsel %vm385, %v1354, 0.0
  %1481 = vadd.xlane.f32.xlu0 %v1480
  %v1482 = vpop.xlane.xlu0 %1481
  %v1483 = vsel %vm385, %v1359, 0.0
  %1484 = vadd.xlane.f32.xlu0 %v1483
  %v1485 = vpop.xlane.xlu0 %1484
  %v1486 = vsel %vm385, %v1364, 0.0
  %1487 = vadd.xlane.f32.xlu0 %v1486
  %v1488 = vpop.xlane.xlu0 %1487
  %v1489 = vsel %vm385, %v1369, 0.0
  %1490 = vadd.xlane.f32.xlu0 %v1489
  %v1491 = vpop.xlane.xlu0 %1490
  %v1492 = vsel %vm385, %v1374, 0.0
  %1493 = vadd.xlane.f32.xlu0 %v1492
  %v1494 = vpop.xlane.xlu0 %1493
  %v1495 = vsel %vm385, %v1379, 0.0
  %1496 = vadd.xlane.f32.xlu0 %v1495
  %v1497 = vpop.xlane.xlu0 %1496
  %v1498 = vsel %vm385, %v1384, 0.0
  %1499 = vadd.xlane.f32.xlu0 %v1498
  %v1500 = vpop.xlane.xlu0 %1499
  %v1501 = vsel %vm385, %v1389, 0.0
  %1502 = vadd.xlane.f32.xlu0 %v1501
  %v1503 = vpop.xlane.xlu0 %1502
  %v1504 = vsel %vm385, %v1394, 0.0
  %1505 = vadd.xlane.f32.xlu0 %v1504
  %v1506 = vpop.xlane.xlu0 %1505
  %v1507 = vsel %vm385, %v1399, 0.0
  %1508 = vadd.xlane.f32.xlu0 %v1507
  %v1509 = vpop.xlane.xlu0 %1508
  %v1510 = vsel %vm385, %v1404, 0.0
  %1511 = vadd.xlane.f32.xlu0 %v1510
  %v1512 = vpop.xlane.xlu0 %1511
  %v1513 = vsel %vm385, %v1409, 0.0
  %1514 = vadd.xlane.f32.xlu0 %v1513
  %v1515 = vpop.xlane.xlu0 %1514
  %v1516 = vsel %vm385, %v1414, 0.0
  %1517 = vadd.xlane.f32.xlu0 %v1516
  %v1518 = vpop.xlane.xlu0 %1517
  %v1519 = vsel %vm385, %v1419, 0.0
  %1520 = vadd.xlane.f32.xlu0 %v1519
  %v1521 = vpop.xlane.xlu0 %1520
  %v1522 = vsel %vm385, %v1424, 0.0
  %1523 = vadd.xlane.f32.xlu0 %v1522
  %v1524 = vpop.xlane.xlu0 %1523
  %v1525 = vmul.f32 %v1431, %v482
  %v1526 = vmul.f32 %v1434, %v482
  %v1527 = vmul.f32 %v1437, %v482
  %v1528 = vmul.f32 %v1440, %v482
  %v1529 = vmul.f32 %v1443, %v482
  %v1530 = vmul.f32 %v1446, %v482
  %v1531 = vmul.f32 %v1449, %v482
  %v1532 = vmul.f32 %v1452, %v482
  %v1533 = vmul.f32 %v1455, %v482
  %v1534 = vmul.f32 %v1458, %v482
  %v1535 = vmul.f32 %v1461, %v482
  %v1536 = vmul.f32 %v1464, %v482
  %v1537 = vmul.f32 %v1467, %v482
  %v1538 = vmul.f32 %v1470, %v482
  %v1539 = vmul.f32 %v1473, %v482
  %v1540 = vmul.f32 %v1476, %v482
  %v1541 = vmul.f32 %v1479, %v482
  %v1542 = vmul.f32 %v1482, %v482
  %v1543 = vmul.f32 %v1485, %v482
  %v1544 = vmul.f32 %v1488, %v482
  %v1545 = vmul.f32 %v1491, %v482
  %v1546 = vmul.f32 %v1494, %v482
  %v1547 = vmul.f32 %v1497, %v482
  %v1548 = vmul.f32 %v1500, %v482
  %v1549 = vmul.f32 %v1503, %v482
  %v1550 = vmul.f32 %v1506, %v482
  %v1551 = vmul.f32 %v1509, %v482
  %v1552 = vmul.f32 %v1512, %v482
  %v1553 = vmul.f32 %v1515, %v482
  %v1554 = vmul.f32 %v1518, %v482
  %v1555 = vmul.f32 %v1521, %v482
  %v1556 = vmul.f32 %v1524, %v482
  %v1557 = vsub.f32 %v1269, %v1525
  %v1558 = vsub.f32 %v1274, %v1526
  %v1559 = vsub.f32 %v1279, %v1527
  %v1560 = vsub.f32 %v1284, %v1528
  %v1561 = vsub.f32 %v1289, %v1529
  %v1562 = vsub.f32 %v1294, %v1530
  %v1563 = vsub.f32 %v1299, %v1531
  %v1564 = vsub.f32 %v1304, %v1532
  %v1565 = vsub.f32 %v1309, %v1533
  %v1566 = vsub.f32 %v1314, %v1534
  %v1567 = vsub.f32 %v1319, %v1535
  %v1568 = vsub.f32 %v1324, %v1536
  %v1569 = vsub.f32 %v1329, %v1537
  %v1570 = vsub.f32 %v1334, %v1538
  %v1571 = vsub.f32 %v1339, %v1539
  %v1572 = vsub.f32 %v1344, %v1540
  %v1573 = vsub.f32 %v1349, %v1541
  %v1574 = vsub.f32 %v1354, %v1542
  %v1575 = vsub.f32 %v1359, %v1543
  %v1576 = vsub.f32 %v1364, %v1544
  %v1577 = vsub.f32 %v1369, %v1545
  %v1578 = vsub.f32 %v1374, %v1546
  %v1579 = vsub.f32 %v1379, %v1547
  %v1580 = vsub.f32 %v1384, %v1548
  %v1581 = vsub.f32 %v1389, %v1549
  %v1582 = vsub.f32 %v1394, %v1550
  %v1583 = vsub.f32 %v1399, %v1551
  %v1584 = vsub.f32 %v1404, %v1552
  %v1585 = vsub.f32 %v1409, %v1553
  %v1586 = vsub.f32 %v1414, %v1554
  %v1587 = vsub.f32 %v1419, %v1555
  %v1588 = vsub.f32 %v1424, %v1556
  %v1589 = vmul.f32 %v1557, %v1557
  %v1590 = vmul.f32 %v1558, %v1558
  %v1591 = vmul.f32 %v1559, %v1559
  %v1592 = vmul.f32 %v1560, %v1560
  %v1593 = vmul.f32 %v1561, %v1561
  %v1594 = vmul.f32 %v1562, %v1562
  %v1595 = vmul.f32 %v1563, %v1563
  %v1596 = vmul.f32 %v1564, %v1564
  %v1597 = vmul.f32 %v1565, %v1565
  %v1598 = vmul.f32 %v1566, %v1566
  %v1599 = vmul.f32 %v1567, %v1567
  %v1600 = vmul.f32 %v1568, %v1568
  %v1601 = vmul.f32 %v1569, %v1569
  %v1602 = vmul.f32 %v1570, %v1570
  %v1603 = vmul.f32 %v1571, %v1571
  %v1604 = vmul.f32 %v1572, %v1572
  %v1605 = vmul.f32 %v1573, %v1573
  %v1606 = vmul.f32 %v1574, %v1574
  %v1607 = vmul.f32 %v1575, %v1575
  %v1608 = vmul.f32 %v1576, %v1576
  %v1609 = vmul.f32 %v1577, %v1577
  %v1610 = vmul.f32 %v1578, %v1578
  %v1611 = vmul.f32 %v1579, %v1579
  %v1612 = vmul.f32 %v1580, %v1580
  %v1613 = vmul.f32 %v1581, %v1581
  %v1614 = vmul.f32 %v1582, %v1582
  %v1615 = vmul.f32 %v1583, %v1583
  %v1616 = vmul.f32 %v1584, %v1584
  %v1617 = vmul.f32 %v1585, %v1585
  %v1618 = vmul.f32 %v1586, %v1586
  %v1619 = vmul.f32 %v1587, %v1587
  %v1620 = vmul.f32 %v1588, %v1588
  %v1621 = vsel %vm385, %v1589, 0.0
  %1622 = vadd.xlane.f32.xlu0 %v1621
  %v1623 = vpop.xlane.xlu0 %1622
  %v1624 = vsel %vm385, %v1590, 0.0
  %1625 = vadd.xlane.f32.xlu0 %v1624
  %v1626 = vpop.xlane.xlu0 %1625
  %v1627 = vsel %vm385, %v1591, 0.0
  %1628 = vadd.xlane.f32.xlu0 %v1627
  %v1629 = vpop.xlane.xlu0 %1628
  %v1630 = vsel %vm385, %v1592, 0.0
  %1631 = vadd.xlane.f32.xlu0 %v1630
  %v1632 = vpop.xlane.xlu0 %1631
  %v1633 = vsel %vm385, %v1593, 0.0
  %1634 = vadd.xlane.f32.xlu0 %v1633
  %v1635 = vpop.xlane.xlu0 %1634
  %v1636 = vsel %vm385, %v1594, 0.0
  %1637 = vadd.xlane.f32.xlu0 %v1636
  %v1638 = vpop.xlane.xlu0 %1637
  %v1639 = vsel %vm385, %v1595, 0.0
  %1640 = vadd.xlane.f32.xlu0 %v1639
  %v1641 = vpop.xlane.xlu0 %1640
  %v1642 = vsel %vm385, %v1596, 0.0
  %1643 = vadd.xlane.f32.xlu0 %v1642
  %v1644 = vpop.xlane.xlu0 %1643
  %v1645 = vsel %vm385, %v1597, 0.0
  %1646 = vadd.xlane.f32.xlu0 %v1645
  %v1647 = vpop.xlane.xlu0 %1646
  %v1648 = vsel %vm385, %v1598, 0.0
  %1649 = vadd.xlane.f32.xlu0 %v1648
  %v1650 = vpop.xlane.xlu0 %1649
  %v1651 = vsel %vm385, %v1599, 0.0
  %1652 = vadd.xlane.f32.xlu0 %v1651
  %v1653 = vpop.xlane.xlu0 %1652
  %v1654 = vsel %vm385, %v1600, 0.0
  %1655 = vadd.xlane.f32.xlu0 %v1654
  %v1656 = vpop.xlane.xlu0 %1655
  %v1657 = vsel %vm385, %v1601, 0.0
  %1658 = vadd.xlane.f32.xlu0 %v1657
  %v1659 = vpop.xlane.xlu0 %1658
  %v1660 = vsel %vm385, %v1602, 0.0
  %1661 = vadd.xlane.f32.xlu0 %v1660
  %v1662 = vpop.xlane.xlu0 %1661
  %v1663 = vsel %vm385, %v1603, 0.0
  %1664 = vadd.xlane.f32.xlu0 %v1663
  %v1665 = vpop.xlane.xlu0 %1664
  %v1666 = vsel %vm385, %v1604, 0.0
  %1667 = vadd.xlane.f32.xlu0 %v1666
  %v1668 = vpop.xlane.xlu0 %1667
  %v1669 = vsel %vm385, %v1605, 0.0
  %1670 = vadd.xlane.f32.xlu0 %v1669
  %v1671 = vpop.xlane.xlu0 %1670
  %v1672 = vsel %vm385, %v1606, 0.0
  %1673 = vadd.xlane.f32.xlu0 %v1672
  %v1674 = vpop.xlane.xlu0 %1673
  %v1675 = vsel %vm385, %v1607, 0.0
  %1676 = vadd.xlane.f32.xlu0 %v1675
  %v1677 = vpop.xlane.xlu0 %1676
  %v1678 = vsel %vm385, %v1608, 0.0
  %1679 = vadd.xlane.f32.xlu0 %v1678
  %v1680 = vpop.xlane.xlu0 %1679
  %v1681 = vsel %vm385, %v1609, 0.0
  %1682 = vadd.xlane.f32.xlu0 %v1681
  %v1683 = vpop.xlane.xlu0 %1682
  %v1684 = vsel %vm385, %v1610, 0.0
  %1685 = vadd.xlane.f32.xlu0 %v1684
  %v1686 = vpop.xlane.xlu0 %1685
  %v1687 = vsel %vm385, %v1611, 0.0
  %1688 = vadd.xlane.f32.xlu0 %v1687
  %v1689 = vpop.xlane.xlu0 %1688
  %v1690 = vsel %vm385, %v1612, 0.0
  %1691 = vadd.xlane.f32.xlu0 %v1690
  %v1692 = vpop.xlane.xlu0 %1691
  %v1693 = vsel %vm385, %v1613, 0.0
  %1694 = vadd.xlane.f32.xlu0 %v1693
  %v1695 = vpop.xlane.xlu0 %1694
  %v1696 = vsel %vm385, %v1614, 0.0
  %1697 = vadd.xlane.f32.xlu0 %v1696
  %v1698 = vpop.xlane.xlu0 %1697
  %v1699 = vsel %vm385, %v1615, 0.0
  %1700 = vadd.xlane.f32.xlu0 %v1699
  %v1701 = vpop.xlane.xlu0 %1700
  %v1702 = vsel %vm385, %v1616, 0.0
  %1703 = vadd.xlane.f32.xlu0 %v1702
  %v1704 = vpop.xlane.xlu0 %1703
  %v1705 = vsel %vm385, %v1617, 0.0
  %1706 = vadd.xlane.f32.xlu0 %v1705
  %v1707 = vpop.xlane.xlu0 %1706
  %v1708 = vsel %vm385, %v1618, 0.0
  %1709 = vadd.xlane.f32.xlu0 %v1708
  %v1710 = vpop.xlane.xlu0 %1709
  %v1711 = vsel %vm385, %v1619, 0.0
  %1712 = vadd.xlane.f32.xlu0 %v1711
  %v1713 = vpop.xlane.xlu0 %1712
  %v1714 = vsel %vm385, %v1620, 0.0
  %1715 = vadd.xlane.f32.xlu0 %v1714
  %v1716 = vpop.xlane.xlu0 %1715
  %v1717 = vmul.f32 %v1623, %v482
  %v1718 = vmul.f32 %v1626, %v482
  %v1719 = vmul.f32 %v1629, %v482
  %v1720 = vmul.f32 %v1632, %v482
  %v1721 = vmul.f32 %v1635, %v482
  %v1722 = vmul.f32 %v1638, %v482
  %v1723 = vmul.f32 %v1641, %v482
  %v1724 = vmul.f32 %v1644, %v482
  %v1725 = vmul.f32 %v1647, %v482
  %v1726 = vmul.f32 %v1650, %v482
  %v1727 = vmul.f32 %v1653, %v482
  %v1728 = vmul.f32 %v1656, %v482
  %v1729 = vmul.f32 %v1659, %v482
  %v1730 = vmul.f32 %v1662, %v482
  %v1731 = vmul.f32 %v1665, %v482
  %v1732 = vmul.f32 %v1668, %v482
  %v1733 = vmul.f32 %v1671, %v482
  %v1734 = vmul.f32 %v1674, %v482
  %v1735 = vmul.f32 %v1677, %v482
  %v1736 = vmul.f32 %v1680, %v482
  %v1737 = vmul.f32 %v1683, %v482
  %v1738 = vmul.f32 %v1686, %v482
  %v1739 = vmul.f32 %v1689, %v482
  %v1740 = vmul.f32 %v1692, %v482
  %v1741 = vmul.f32 %v1695, %v482
  %v1742 = vmul.f32 %v1698, %v482
  %v1743 = vmul.f32 %v1701, %v482
  %v1744 = vmul.f32 %v1704, %v482
  %v1745 = vmul.f32 %v1707, %v482
  %v1746 = vmul.f32 %v1710, %v482
  %v1747 = vmul.f32 %v1713, %v482
  %v1748 = vmul.f32 %v1716, %v482
  %v1749 = vadd.f32 %v1717, 1e-06
  %v1750 = vadd.f32 %v1718, 1e-06
  %v1751 = vadd.f32 %v1719, 1e-06
  %v1752 = vadd.f32 %v1720, 1e-06
  %v1753 = vadd.f32 %v1721, 1e-06
  %v1754 = vadd.f32 %v1722, 1e-06
  %v1755 = vadd.f32 %v1723, 1e-06
  %v1756 = vadd.f32 %v1724, 1e-06
  %v1757 = vadd.f32 %v1725, 1e-06
  %v1758 = vadd.f32 %v1726, 1e-06
  %v1759 = vadd.f32 %v1727, 1e-06
  %v1760 = vadd.f32 %v1728, 1e-06
  %v1761 = vadd.f32 %v1729, 1e-06
  %v1762 = vadd.f32 %v1730, 1e-06
  %v1763 = vadd.f32 %v1731, 1e-06
  %v1764 = vadd.f32 %v1732, 1e-06
  %v1765 = vadd.f32 %v1733, 1e-06
  %v1766 = vadd.f32 %v1734, 1e-06
  %v1767 = vadd.f32 %v1735, 1e-06
  %v1768 = vadd.f32 %v1736, 1e-06
  %v1769 = vadd.f32 %v1737, 1e-06
  %v1770 = vadd.f32 %v1738, 1e-06
  %v1771 = vadd.f32 %v1739, 1e-06
  %v1772 = vadd.f32 %v1740, 1e-06
  %v1773 = vadd.f32 %v1741, 1e-06
  %v1774 = vadd.f32 %v1742, 1e-06
  %v1775 = vadd.f32 %v1743, 1e-06
  %v1776 = vadd.f32 %v1744, 1e-06
  %v1777 = vadd.f32 %v1745, 1e-06
  %v1778 = vadd.f32 %v1746, 1e-06
  %v1779 = vadd.f32 %v1747, 1e-06
  %v1780 = vadd.f32 %v1748, 1e-06
  %v1781 = vrsqrt.pop %v1749
  %v1782 = vrsqrt.pop %v1750
  %v1783 = vrsqrt.pop %v1751
  %v1784 = vrsqrt.pop %v1752
  %v1785 = vrsqrt.pop %v1753
  %v1786 = vrsqrt.pop %v1754
  %v1787 = vrsqrt.pop %v1755
  %v1788 = vrsqrt.pop %v1756
  %v1789 = vrsqrt.pop %v1757
  %v1790 = vrsqrt.pop %v1758
  %v1791 = vrsqrt.pop %v1759
  %v1792 = vrsqrt.pop %v1760
  %v1793 = vrsqrt.pop %v1761
  %v1794 = vrsqrt.pop %v1762
  %v1795 = vrsqrt.pop %v1763
  %v1796 = vrsqrt.pop %v1764
  %v1797 = vrsqrt.pop %v1765
  %v1798 = vrsqrt.pop %v1766
  %v1799 = vrsqrt.pop %v1767
  %v1800 = vrsqrt.pop %v1768
  %v1801 = vrsqrt.pop %v1769
  %v1802 = vrsqrt.pop %v1770
  %v1803 = vrsqrt.pop %v1771
  %v1804 = vrsqrt.pop %v1772
  %v1805 = vrsqrt.pop %v1773
  %v1806 = vrsqrt.pop %v1774
  %v1807 = vrsqrt.pop %v1775
  %v1808 = vrsqrt.pop %v1776
  %v1809 = vrsqrt.pop %v1777
  %v1810 = vrsqrt.pop %v1778
  %v1811 = vrsqrt.pop %v1779
  %v1812 = vrsqrt.pop %v1780
  %v1813 = vmul.f32 %v1557, %v1781
  %v1814 = vmul.f32 %v1558, %v1782
  %v1815 = vmul.f32 %v1559, %v1783
  %v1816 = vmul.f32 %v1560, %v1784
  %v1817 = vmul.f32 %v1561, %v1785
  %v1818 = vmul.f32 %v1562, %v1786
  %v1819 = vmul.f32 %v1563, %v1787
  %v1820 = vmul.f32 %v1564, %v1788
  %v1821 = vmul.f32 %v1565, %v1789
  %v1822 = vmul.f32 %v1566, %v1790
  %v1823 = vmul.f32 %v1567, %v1791
  %v1824 = vmul.f32 %v1568, %v1792
  %v1825 = vmul.f32 %v1569, %v1793
  %v1826 = vmul.f32 %v1570, %v1794
  %v1827 = vmul.f32 %v1571, %v1795
  %v1828 = vmul.f32 %v1572, %v1796
  %v1829 = vmul.f32 %v1573, %v1797
  %v1830 = vmul.f32 %v1574, %v1798
  %v1831 = vmul.f32 %v1575, %v1799
  %v1832 = vmul.f32 %v1576, %v1800
  %v1833 = vmul.f32 %v1577, %v1801
  %v1834 = vmul.f32 %v1578, %v1802
  %v1835 = vmul.f32 %v1579, %v1803
  %v1836 = vmul.f32 %v1580, %v1804
  %v1837 = vmul.f32 %v1581, %v1805
  %v1838 = vmul.f32 %v1582, %v1806
  %v1839 = vmul.f32 %v1583, %v1807
  %v1840 = vmul.f32 %v1584, %v1808
  %v1841 = vmul.f32 %v1585, %v1809
  %v1842 = vmul.f32 %v1586, %v1810
  %v1843 = vmul.f32 %v1587, %v1811
  %v1844 = vmul.f32 %v1588, %v1812
  %v1846 = vlaneseq
  %v1847 = vshrl.u32 %v1846, 7
  %v1848 = vsub.s32 0, %v1847
  %v1849 = vrot.slane %v1427, %v1848
  %v1851 = vmul.f32 %v1813, %v1849
  %v1852 = vmul.f32 %v1814, %v1849
  %v1853 = vmul.f32 %v1815, %v1849
  %v1854 = vmul.f32 %v1816, %v1849
  %v1855 = vmul.f32 %v1817, %v1849
  %v1856 = vmul.f32 %v1818, %v1849
  %v1857 = vmul.f32 %v1819, %v1849
  %v1858 = vmul.f32 %v1820, %v1849
  %v1859 = vmul.f32 %v1821, %v1849
  %v1860 = vmul.f32 %v1822, %v1849
  %v1861 = vmul.f32 %v1823, %v1849
  %v1862 = vmul.f32 %v1824, %v1849
  %v1863 = vmul.f32 %v1825, %v1849
  %v1864 = vmul.f32 %v1826, %v1849
  %v1865 = vmul.f32 %v1827, %v1849
  %v1866 = vmul.f32 %v1828, %v1849
  %v1867 = vmul.f32 %v1829, %v1849
  %v1868 = vmul.f32 %v1830, %v1849
  %v1869 = vmul.f32 %v1831, %v1849
  %v1870 = vmul.f32 %v1832, %v1849
  %v1871 = vmul.f32 %v1833, %v1849
  %v1872 = vmul.f32 %v1834, %v1849
  %v1873 = vmul.f32 %v1835, %v1849
  %v1874 = vmul.f32 %v1836, %v1849
  %v1875 = vmul.f32 %v1837, %v1849
  %v1876 = vmul.f32 %v1838, %v1849
  %v1877 = vmul.f32 %v1839, %v1849
  %v1878 = vmul.f32 %v1840, %v1849
  %v1879 = vmul.f32 %v1841, %v1849
  %v1880 = vmul.f32 %v1842, %v1849
  %v1881 = vmul.f32 %v1843, %v1849
  %v1882 = vmul.f32 %v1844, %v1849
  %v1884 = vlaneseq
  %v1885 = vshrl.u32 %v1884, 7
  %v1886 = vsub.s32 0, %v1885
  %v1887 = vrot.slane %v1428, %v1886
  %v1889 = vadd.f32 %v1851, %v1887
  %v1890 = vadd.f32 %v1852, %v1887
  %v1891 = vadd.f32 %v1853, %v1887
  %v1892 = vadd.f32 %v1854, %v1887
  %v1893 = vadd.f32 %v1855, %v1887
  %v1894 = vadd.f32 %v1856, %v1887
  %v1895 = vadd.f32 %v1857, %v1887
  %v1896 = vadd.f32 %v1858, %v1887
  %v1897 = vadd.f32 %v1859, %v1887
  %v1898 = vadd.f32 %v1860, %v1887
  %v1899 = vadd.f32 %v1861, %v1887
  %v1900 = vadd.f32 %v1862, %v1887
  %v1901 = vadd.f32 %v1863, %v1887
  %v1902 = vadd.f32 %v1864, %v1887
  %v1903 = vadd.f32 %v1865, %v1887
  %v1904 = vadd.f32 %v1866, %v1887
  %v1905 = vadd.f32 %v1867, %v1887
  %v1906 = vadd.f32 %v1868, %v1887
  %v1907 = vadd.f32 %v1869, %v1887
  %v1908 = vadd.f32 %v1870, %v1887
  %v1909 = vadd.f32 %v1871, %v1887
  %v1910 = vadd.f32 %v1872, %v1887
  %v1911 = vadd.f32 %v1873, %v1887
  %v1912 = vadd.f32 %v1874, %v1887
  %v1913 = vadd.f32 %v1875, %v1887
  %v1914 = vadd.f32 %v1876, %v1887
  %v1915 = vadd.f32 %v1877, %v1887
  %v1916 = vadd.f32 %v1878, %v1887
  %v1917 = vadd.f32 %v1879, %v1887
  %v1918 = vadd.f32 %v1880, %v1887
  %v1919 = vadd.f32 %v1881, %v1887
  %v1920 = vadd.f32 %v1882, %v1887
  %v1921 = vmul.f32 %v1889, 0.5
  %v1922 = vmul.f32 %v1890, 0.5
  %v1923 = vmul.f32 %v1891, 0.5
  %v1924 = vmul.f32 %v1892, 0.5
  %v1925 = vmul.f32 %v1893, 0.5
  %v1926 = vmul.f32 %v1894, 0.5
  %v1927 = vmul.f32 %v1895, 0.5
  %v1928 = vmul.f32 %v1896, 0.5
  %v1929 = vmul.f32 %v1897, 0.5
  %v1930 = vmul.f32 %v1898, 0.5
  %v1931 = vmul.f32 %v1899, 0.5
  %v1932 = vmul.f32 %v1900, 0.5
  %v1933 = vmul.f32 %v1901, 0.5
  %v1934 = vmul.f32 %v1902, 0.5
  %v1935 = vmul.f32 %v1903, 0.5
  %v1936 = vmul.f32 %v1904, 0.5
  %v1937 = vmul.f32 %v1905, 0.5
  %v1938 = vmul.f32 %v1906, 0.5
  %v1939 = vmul.f32 %v1907, 0.5
  %v1940 = vmul.f32 %v1908, 0.5
  %v1941 = vmul.f32 %v1909, 0.5
  %v1942 = vmul.f32 %v1910, 0.5
  %v1943 = vmul.f32 %v1911, 0.5
  %v1944 = vmul.f32 %v1912, 0.5
  %v1945 = vmul.f32 %v1913, 0.5
  %v1946 = vmul.f32 %v1914, 0.5
  %v1947 = vmul.f32 %v1915, 0.5
  %v1948 = vmul.f32 %v1916, 0.5
  %v1949 = vmul.f32 %v1917, 0.5
  %v1950 = vmul.f32 %v1918, 0.5
  %v1951 = vmul.f32 %v1919, 0.5
  %v1952 = vmul.f32 %v1920, 0.5
  %v1953 = vmul.f32 %v1889, 0.044715
  %v1954 = vmul.f32 %v1890, 0.044715
  %v1955 = vmul.f32 %v1891, 0.044715
  %v1956 = vmul.f32 %v1892, 0.044715
  %v1957 = vmul.f32 %v1893, 0.044715
  %v1958 = vmul.f32 %v1894, 0.044715
  %v1959 = vmul.f32 %v1895, 0.044715
  %v1960 = vmul.f32 %v1896, 0.044715
  %v1961 = vmul.f32 %v1897, 0.044715
  %v1962 = vmul.f32 %v1898, 0.044715
  %v1963 = vmul.f32 %v1899, 0.044715
  %v1964 = vmul.f32 %v1900, 0.044715
  %v1965 = vmul.f32 %v1901, 0.044715
  %v1966 = vmul.f32 %v1902, 0.044715
  %v1967 = vmul.f32 %v1903, 0.044715
  %v1968 = vmul.f32 %v1904, 0.044715
  %v1969 = vmul.f32 %v1905, 0.044715
  %v1970 = vmul.f32 %v1906, 0.044715
  %v1971 = vmul.f32 %v1907, 0.044715
  %v1972 = vmul.f32 %v1908, 0.044715
  %v1973 = vmul.f32 %v1909, 0.044715
  %v1974 = vmul.f32 %v1910, 0.044715
  %v1975 = vmul.f32 %v1911, 0.044715
  %v1976 = vmul.f32 %v1912, 0.044715
  %v1977 = vmul.f32 %v1913, 0.044715
  %v1978 = vmul.f32 %v1914, 0.044715
  %v1979 = vmul.f32 %v1915, 0.044715
  %v1980 = vmul.f32 %v1916, 0.044715
  %v1981 = vmul.f32 %v1917, 0.044715
  %v1982 = vmul.f32 %v1918, 0.044715
  %v1983 = vmul.f32 %v1919, 0.044715
  %v1984 = vmul.f32 %v1920, 0.044715
  %v1985 = vmul.f32 %v1953, %v1889
  %v1986 = vmul.f32 %v1954, %v1890
  %v1987 = vmul.f32 %v1955, %v1891
  %v1988 = vmul.f32 %v1956, %v1892
  %v1989 = vmul.f32 %v1957, %v1893
  %v1990 = vmul.f32 %v1958, %v1894
  %v1991 = vmul.f32 %v1959, %v1895
  %v1992 = vmul.f32 %v1960, %v1896
  %v1993 = vmul.f32 %v1961, %v1897
  %v1994 = vmul.f32 %v1962, %v1898
  %v1995 = vmul.f32 %v1963, %v1899
  %v1996 = vmul.f32 %v1964, %v1900
  %v1997 = vmul.f32 %v1965, %v1901
  %v1998 = vmul.f32 %v1966, %v1902
  %v1999 = vmul.f32 %v1967, %v1903
  %v2000 = vmul.f32 %v1968, %v1904
  %v2001 = vmul.f32 %v1969, %v1905
  %v2002 = vmul.f32 %v1970, %v1906
  %v2003 = vmul.f32 %v1971, %v1907
  %v2004 = vmul.f32 %v1972, %v1908
  %v2005 = vmul.f32 %v1973, %v1909
  %v2006 = vmul.f32 %v1974, %v1910
  %v2007 = vmul.f32 %v1975, %v1911
  %v2008 = vmul.f32 %v1976, %v1912
  %v2009 = vmul.f32 %v1977, %v1913
  %v2010 = vmul.f32 %v1978, %v1914
  %v2011 = vmul.f32 %v1979, %v1915
  %v2012 = vmul.f32 %v1980, %v1916
  %v2013 = vmul.f32 %v1981, %v1917
  %v2014 = vmul.f32 %v1982, %v1918
  %v2015 = vmul.f32 %v1983, %v1919
  %v2016 = vmul.f32 %v1984, %v1920
  %v2017 = vmul.f32 %v1985, %v1889
  %v2018 = vmul.f32 %v1986, %v1890
  %v2019 = vmul.f32 %v1987, %v1891
  %v2020 = vmul.f32 %v1988, %v1892
  %v2021 = vmul.f32 %v1989, %v1893
  %v2022 = vmul.f32 %v1990, %v1894
  %v2023 = vmul.f32 %v1991, %v1895
  %v2024 = vmul.f32 %v1992, %v1896
  %v2025 = vmul.f32 %v1993, %v1897
  %v2026 = vmul.f32 %v1994, %v1898
  %v2027 = vmul.f32 %v1995, %v1899
  %v2028 = vmul.f32 %v1996, %v1900
  %v2029 = vmul.f32 %v1997, %v1901
  %v2030 = vmul.f32 %v1998, %v1902
  %v2031 = vmul.f32 %v1999, %v1903
  %v2032 = vmul.f32 %v2000, %v1904
  %v2033 = vmul.f32 %v2001, %v1905
  %v2034 = vmul.f32 %v2002, %v1906
  %v2035 = vmul.f32 %v2003, %v1907
  %v2036 = vmul.f32 %v2004, %v1908
  %v2037 = vmul.f32 %v2005, %v1909
  %v2038 = vmul.f32 %v2006, %v1910
  %v2039 = vmul.f32 %v2007, %v1911
  %v2040 = vmul.f32 %v2008, %v1912
  %v2041 = vmul.f32 %v2009, %v1913
  %v2042 = vmul.f32 %v2010, %v1914
  %v2043 = vmul.f32 %v2011, %v1915
  %v2044 = vmul.f32 %v2012, %v1916
  %v2045 = vmul.f32 %v2013, %v1917
  %v2046 = vmul.f32 %v2014, %v1918
  %v2047 = vmul.f32 %v2015, %v1919
  %v2048 = vmul.f32 %v2016, %v1920
  %v2049 = vadd.f32 %v1889, %v2017
  %v2050 = vadd.f32 %v1890, %v2018
  %v2051 = vadd.f32 %v1891, %v2019
  %v2052 = vadd.f32 %v1892, %v2020
  %v2053 = vadd.f32 %v1893, %v2021
  %v2054 = vadd.f32 %v1894, %v2022
  %v2055 = vadd.f32 %v1895, %v2023
  %v2056 = vadd.f32 %v1896, %v2024
  %v2057 = vadd.f32 %v1897, %v2025
  %v2058 = vadd.f32 %v1898, %v2026
  %v2059 = vadd.f32 %v1899, %v2027
  %v2060 = vadd.f32 %v1900, %v2028
  %v2061 = vadd.f32 %v1901, %v2029
  %v2062 = vadd.f32 %v1902, %v2030
  %v2063 = vadd.f32 %v1903, %v2031
  %v2064 = vadd.f32 %v1904, %v2032
  %v2065 = vadd.f32 %v1905, %v2033
  %v2066 = vadd.f32 %v1906, %v2034
  %v2067 = vadd.f32 %v1907, %v2035
  %v2068 = vadd.f32 %v1908, %v2036
  %v2069 = vadd.f32 %v1909, %v2037
  %v2070 = vadd.f32 %v1910, %v2038
  %v2071 = vadd.f32 %v1911, %v2039
  %v2072 = vadd.f32 %v1912, %v2040
  %v2073 = vadd.f32 %v1913, %v2041
  %v2074 = vadd.f32 %v1914, %v2042
  %v2075 = vadd.f32 %v1915, %v2043
  %v2076 = vadd.f32 %v1916, %v2044
  %v2077 = vadd.f32 %v1917, %v2045
  %v2078 = vadd.f32 %v1918, %v2046
  %v2079 = vadd.f32 %v1919, %v2047
  %v2080 = vadd.f32 %v1920, %v2048
  %v2081 = vmul.f32 %v2049, 0.7978846
  %v2082 = vmul.f32 %v2050, 0.7978846
  %v2083 = vmul.f32 %v2051, 0.7978846
  %v2084 = vmul.f32 %v2052, 0.7978846
  %v2085 = vmul.f32 %v2053, 0.7978846
  %v2086 = vmul.f32 %v2054, 0.7978846
  %v2087 = vmul.f32 %v2055, 0.7978846
  %v2088 = vmul.f32 %v2056, 0.7978846
  %v2089 = vmul.f32 %v2057, 0.7978846
  %v2090 = vmul.f32 %v2058, 0.7978846
  %v2091 = vmul.f32 %v2059, 0.7978846
  %v2092 = vmul.f32 %v2060, 0.7978846
  %v2093 = vmul.f32 %v2061, 0.7978846
  %v2094 = vmul.f32 %v2062, 0.7978846
  %v2095 = vmul.f32 %v2063, 0.7978846
  %v2096 = vmul.f32 %v2064, 0.7978846
  %v2097 = vmul.f32 %v2065, 0.7978846
  %v2098 = vmul.f32 %v2066, 0.7978846
  %v2099 = vmul.f32 %v2067, 0.7978846
  %v2100 = vmul.f32 %v2068, 0.7978846
  %v2101 = vmul.f32 %v2069, 0.7978846
  %v2102 = vmul.f32 %v2070, 0.7978846
  %v2103 = vmul.f32 %v2071, 0.7978846
  %v2104 = vmul.f32 %v2072, 0.7978846
  %v2105 = vmul.f32 %v2073, 0.7978846
  %v2106 = vmul.f32 %v2074, 0.7978846
  %v2107 = vmul.f32 %v2075, 0.7978846
  %v2108 = vmul.f32 %v2076, 0.7978846
  %v2109 = vmul.f32 %v2077, 0.7978846
  %v2110 = vmul.f32 %v2078, 0.7978846
  %v2111 = vmul.f32 %v2079, 0.7978846
  %v2112 = vmul.f32 %v2080, 0.7978846
  %v2113 = vtanh.pop %v2081
  %v2114 = vtanh.pop %v2082
  %v2115 = vtanh.pop %v2083
  %v2116 = vtanh.pop %v2084
  %v2117 = vtanh.pop %v2085
  %v2118 = vtanh.pop %v2086
  %v2119 = vtanh.pop %v2087
  %v2120 = vtanh.pop %v2088
  %v2121 = vtanh.pop %v2089
  %v2122 = vtanh.pop %v2090
  %v2123 = vtanh.pop %v2091
  %v2124 = vtanh.pop %v2092
  %v2125 = vtanh.pop %v2093
  %v2126 = vtanh.pop %v2094
  %v2127 = vtanh.pop %v2095
  %v2128 = vtanh.pop %v2096
  %v2129 = vtanh.pop %v2097
  %v2130 = vtanh.pop %v2098
  %v2131 = vtanh.pop %v2099
  %v2132 = vtanh.pop %v2100
  %v2133 = vtanh.pop %v2101
  %v2134 = vtanh.pop %v2102
  %v2135 = vtanh.pop %v2103
  %v2136 = vtanh.pop %v2104
  %v2137 = vtanh.pop %v2105
  %v2138 = vtanh.pop %v2106
  %v2139 = vtanh.pop %v2107
  %v2140 = vtanh.pop %v2108
  %v2141 = vtanh.pop %v2109
  %v2142 = vtanh.pop %v2110
  %v2143 = vtanh.pop %v2111
  %v2144 = vtanh.pop %v2112
  %v2145 = vadd.f32 %v2113, 1.0
  %v2146 = vadd.f32 %v2114, 1.0
  %v2147 = vadd.f32 %v2115, 1.0
  %v2148 = vadd.f32 %v2116, 1.0
  %v2149 = vadd.f32 %v2117, 1.0
  %v2150 = vadd.f32 %v2118, 1.0
  %v2151 = vadd.f32 %v2119, 1.0
  %v2152 = vadd.f32 %v2120, 1.0
  %v2153 = vadd.f32 %v2121, 1.0
  %v2154 = vadd.f32 %v2122, 1.0
  %v2155 = vadd.f32 %v2123, 1.0
  %v2156 = vadd.f32 %v2124, 1.0
  %v2157 = vadd.f32 %v2125, 1.0
  %v2158 = vadd.f32 %v2126, 1.0
  %v2159 = vadd.f32 %v2127, 1.0
  %v2160 = vadd.f32 %v2128, 1.0
  %v2161 = vadd.f32 %v2129, 1.0
  %v2162 = vadd.f32 %v2130, 1.0
  %v2163 = vadd.f32 %v2131, 1.0
  %v2164 = vadd.f32 %v2132, 1.0
  %v2165 = vadd.f32 %v2133, 1.0
  %v2166 = vadd.f32 %v2134, 1.0
  %v2167 = vadd.f32 %v2135, 1.0
  %v2168 = vadd.f32 %v2136, 1.0
  %v2169 = vadd.f32 %v2137, 1.0
  %v2170 = vadd.f32 %v2138, 1.0
  %v2171 = vadd.f32 %v2139, 1.0
  %v2172 = vadd.f32 %v2140, 1.0
  %v2173 = vadd.f32 %v2141, 1.0
  %v2174 = vadd.f32 %v2142, 1.0
  %v2175 = vadd.f32 %v2143, 1.0
  %v2176 = vadd.f32 %v2144, 1.0
  %v2177 = vmul.f32 %v1921, %v2145
  %v2178 = vmul.f32 %v1922, %v2146
  %v2179 = vmul.f32 %v1923, %v2147
  %v2180 = vmul.f32 %v1924, %v2148
  %v2181 = vmul.f32 %v1925, %v2149
  %v2182 = vmul.f32 %v1926, %v2150
  %v2183 = vmul.f32 %v1927, %v2151
  %v2184 = vmul.f32 %v1928, %v2152
  %v2185 = vmul.f32 %v1929, %v2153
  %v2186 = vmul.f32 %v1930, %v2154
  %v2187 = vmul.f32 %v1931, %v2155
  %v2188 = vmul.f32 %v1932, %v2156
  %v2189 = vmul.f32 %v1933, %v2157
  %v2190 = vmul.f32 %v1934, %v2158
  %v2191 = vmul.f32 %v1935, %v2159
  %v2192 = vmul.f32 %v1936, %v2160
  %v2193 = vmul.f32 %v1937, %v2161
  %v2194 = vmul.f32 %v1938, %v2162
  %v2195 = vmul.f32 %v1939, %v2163
  %v2196 = vmul.f32 %v1940, %v2164
  %v2197 = vmul.f32 %v1941, %v2165
  %v2198 = vmul.f32 %v1942, %v2166
  %v2199 = vmul.f32 %v1943, %v2167
  %v2200 = vmul.f32 %v1944, %v2168
  %v2201 = vmul.f32 %v1945, %v2169
  %v2202 = vmul.f32 %v1946, %v2170
  %v2203 = vmul.f32 %v1947, %v2171
  %v2204 = vmul.f32 %v1948, %v2172
  %v2205 = vmul.f32 %v1949, %v2173
  %v2206 = vmul.f32 %v1950, %v2174
  %v2207 = vmul.f32 %v1951, %v2175
  %v2208 = vmul.f32 %v1952, %v2176
  %s2209 = scalar_lea.vmem %s5, 256
  %2210 = vst.msk [vmem:[%s2209] sm:$0xff] %vm385, %v2177
  %2211 = vst.msk [vmem:[%s2209 + $0x8] sm:$0xff] %vm385, %v2178
  %2212 = vst.msk [vmem:[%s2209 + $0x10] sm:$0xff] %vm385, %v2179
  %2213 = vst.msk [vmem:[%s2209 + $0x18] sm:$0xff] %vm385, %v2180
  %2214 = vst.msk [vmem:[%s2209 + $0x20] sm:$0xff] %vm385, %v2181
  %2215 = vst.msk [vmem:[%s2209 + $0x28] sm:$0xff] %vm385, %v2182
  %2216 = vst.msk [vmem:[%s2209 + $0x30] sm:$0xff] %vm385, %v2183
  %2217 = vst.msk [vmem:[%s2209 + $0x38] sm:$0xff] %vm385, %v2184
  %2218 = vst.msk [vmem:[%s2209 + $0x40] sm:$0xff] %vm385, %v2185
  %2219 = vst.msk [vmem:[%s2209 + $0x48] sm:$0xff] %vm385, %v2186
  %2220 = vst.msk [vmem:[%s2209 + $0x50] sm:$0xff] %vm385, %v2187
  %2221 = vst.msk [vmem:[%s2209 + $0x58] sm:$0xff] %vm385, %v2188
  %2222 = vst.msk [vmem:[%s2209 + $0x60] sm:$0xff] %vm385, %v2189
  %2223 = vst.msk [vmem:[%s2209 + $0x68] sm:$0xff] %vm385, %v2190
  %2224 = vst.msk [vmem:[%s2209 + $0x70] sm:$0xff] %vm385, %v2191
  %2225 = vst.msk [vmem:[%s2209 + $0x78] sm:$0xff] %vm385, %v2192
  %2226 = vst.msk [vmem:[%s2209 + $0x80] sm:$0xff] %vm385, %v2193
  %2227 = vst.msk [vmem:[%s2209 + $0x88] sm:$0xff] %vm385, %v2194
  %2228 = vst.msk [vmem:[%s2209 + $0x90] sm:$0xff] %vm385, %v2195
  %2229 = vst.msk [vmem:[%s2209 + $0x98] sm:$0xff] %vm385, %v2196
  %2230 = vst.msk [vmem:[%s2209 + $0xa0] sm:$0xff] %vm385, %v2197
  %2231 = vst.msk [vmem:[%s2209 + $0xa8] sm:$0xff] %vm385, %v2198
  %2232 = vst.msk [vmem:[%s2209 + $0xb0] sm:$0xff] %vm385, %v2199
  %2233 = vst.msk [vmem:[%s2209 + $0xb8] sm:$0xff] %vm385, %v2200
  %2234 = vst.msk [vmem:[%s2209 + $0xc0] sm:$0xff] %vm385, %v2201
  %2235 = vst.msk [vmem:[%s2209 + $0xc8] sm:$0xff] %vm385, %v2202
  %2236 = vst.msk [vmem:[%s2209 + $0xd0] sm:$0xff] %vm385, %v2203
  %2237 = vst.msk [vmem:[%s2209 + $0xd8] sm:$0xff] %vm385, %v2204
  %2238 = vst.msk [vmem:[%s2209 + $0xe0] sm:$0xff] %vm385, %v2205
  %2239 = vst.msk [vmem:[%s2209 + $0xe8] sm:$0xff] %vm385, %v2206
  %2240 = vst.msk [vmem:[%s2209 + $0xf0] sm:$0xff] %vm385, %v2207
  %2241 = vst.msk [vmem:[%s2209 + $0xf8] sm:$0xff] %vm385, %v2208
  %s2242 = scalar_lea.vmem %s1, 32
  %v2243 = vld [vmem:[%s2242] sm:$0xff]
  %v2244 = vld [vmem:[%s2242 + $0x8] sm:$0xff]
  %2245 = vmatprep.subr.mxu0 0.0
  %2246 = vmatpush1.msra.mxu0 %v2243
  %2247 = vmatprep.subr.mxu0 0.0
  %2248 = vmatpush1.msra.mxu0 %v2244
  %2249 = vmatprep.subr.mxu0 0.0
  %2250 = vmatpush1.msra.mxu0 0.0
  %2251 = vmatprep.subr.mxu0 0.0
  %2252 = vmatpush1.msra.mxu0 0.0
  %2253 = vmatprep.subr.mxu0 0.0
  %2254 = vmatpush1.msra.mxu0 0.0
  %2255 = vmatprep.subr.mxu0 0.0
  %2256 = vmatpush1.msra.mxu0 0.0
  %2257 = vmatprep.subr.mxu0 0.0
  %2258 = vmatpush1.msra.mxu0 0.0
  %2259 = vmatprep.subr.mxu0 0.0
  %2260 = vmatpush1.msra.mxu0 0.0
  %2261 = vmatprep.subr.mxu0 0.0
  %2262 = vmatpush1.msra.mxu0 0.0
  %2263 = vmatprep.subr.mxu0 0.0
  %2264 = vmatpush1.msra.mxu0 0.0
  %2265 = vmatprep.subr.mxu0 0.0
  %2266 = vmatpush1.msra.mxu0 0.0
  %2267 = vmatprep.subr.mxu0 0.0
  %2268 = vmatpush1.msra.mxu0 0.0
  %2269 = vmatprep.subr.mxu0 0.0
  %2270 = vmatpush1.msra.mxu0 0.0
  %2271 = vmatprep.subr.mxu0 0.0
  %2272 = vmatpush1.msra.mxu0 0.0
  %2273 = vmatprep.subr.mxu0 0.0
  %2274 = vmatpush1.msra.mxu0 0.0
  %2275 = vmatprep.subr.mxu0 0.0
  %2276 = vmatpush1.msra.mxu0 0.0
  %2277 = vmatprep.subr.mxu0 0.0
  %2278 = vmatpush1.msra.mxu0 0.0
  %2279 = vmatprep.subr.mxu0 0.0
  %2280 = vmatpush1.msra.mxu0 0.0
  %2281 = vmatprep.subr.mxu0 0.0
  %2282 = vmatpush1.msra.mxu0 0.0
  %2283 = vmatprep.subr.mxu0 0.0
  %2284 = vmatpush1.msra.mxu0 0.0
  %2285 = vmatprep.subr.mxu0 0.0
  %2286 = vmatpush1.msra.mxu0 0.0
  %2287 = vmatprep.subr.mxu0 0.0
  %2288 = vmatpush1.msra.mxu0 0.0
  %2289 = vmatprep.subr.mxu0 0.0
  %2290 = vmatpush1.msra.mxu0 0.0
  %2291 = vmatprep.subr.mxu0 0.0
  %2292 = vmatpush1.msra.mxu0 0.0
  %2293 = vmatprep.subr.mxu0 0.0
  %2294 = vmatpush1.msra.mxu0 0.0
  %2295 = vmatprep.subr.mxu0 0.0
  %2296 = vmatpush1.msra.mxu0 0.0
  %2297 = vmatprep.subr.mxu0 0.0
  %2298 = vmatpush1.msra.mxu0 0.0
  %2299 = vmatprep.subr.mxu0 0.0
  %2300 = vmatpush1.msra.mxu0 0.0
  %2301 = vmatprep.subr.mxu0 0.0
  %2302 = vmatpush1.msra.mxu0 0.0
  %2303 = vmatprep.subr.mxu0 0.0
  %2304 = vmatpush1.msra.mxu0 0.0
  %2305 = vmatprep.subr.mxu0 0.0
  %2306 = vmatpush1.msra.mxu0 0.0
  %2307 = vmatprep.subr.mxu0 0.0
  %2308 = vmatpush1.msra.mxu0 0.0
  %2309 = vmatprep.mubr.f32.mxu0 0.0
  %2310 = vmatmul.mubr.f32.gmra.mrb[0].mxu0 %v63
  %v2311 = vpop.f32.mrb[0].mxu0
  %v2312 = vadd.f32 %v59, %v2311
  %v2313 = vpop.f32.mrb[0].mxu0
  %2314 = vmatprep.mubr.f32.mxu0 0.0
  %2315 = vmatmul.mubr.f32.gmra.mrb[0].mxu0 %v66
  %v2316 = vpop.f32.mrb[0].mxu0
  %v2317 = vadd.f32 %v59, %v2316
  %v2318 = vpop.f32.mrb[0].mxu0
  %2319 = vmatprep.mubr.f32.mxu0 0.0
  %2320 = vmatmul.mubr.f32.gmra.mrb[0].mxu0 %v69
  %v2321 = vpop.f32.mrb[0].mxu0
  %v2322 = vadd.f32 %v59, %v2321
  %v2323 = vpop.f32.mrb[0].mxu0
  %2324 = vmatprep.mubr.f32.mxu0 0.0
  %2325 = vmatmul.mubr.f32.gmra.mrb[0].mxu0 %v72
  %v2326 = vpop.f32.mrb[0].mxu0
  %v2327 = vadd.f32 %v59, %v2326
  %v2328 = vpop.f32.mrb[0].mxu0
  %2329 = vmatprep.mubr.f32.mxu0 0.0
  %2330 = vmatmul.mubr.f32.gmra.mrb[0].mxu0 %v75
  %v2331 = vpop.f32.mrb[0].mxu0
  %v2332 = vadd.f32 %v59, %v2331
  %v2333 = vpop.f32.mrb[0].mxu0
  %2334 = vmatprep.mubr.f32.mxu0 0.0
  %2335 = vmatmul.mubr.f32.gmra.mrb[0].mxu0 %v78
  %v2336 = vpop.f32.mrb[0].mxu0
  %v2337 = vadd.f32 %v59, %v2336
  %v2338 = vpop.f32.mrb[0].mxu0
  %2339 = vmatprep.mubr.f32.mxu0 0.0
  %2340 = vmatmul.mubr.f32.gmra.mrb[0].mxu0 %v81
  %v2341 = vpop.f32.mrb[0].mxu0
  %v2342 = vadd.f32 %v59, %v2341
  %v2343 = vpop.f32.mrb[0].mxu0
  %2344 = vmatprep.mubr.f32.mxu0 0.0
  %2345 = vmatmul.mubr.f32.gmra.mrb[0].mxu0 %v84
  %v2346 = vpop.f32.mrb[0].mxu0
  %v2347 = vadd.f32 %v59, %v2346
  %v2348 = vpop.f32.mrb[0].mxu0
  %2349 = vmatprep.mubr.f32.mxu0 0.0
  %2350 = vmatmul.mubr.f32.gmra.mrb[0].mxu0 %v87
  %v2351 = vpop.f32.mrb[0].mxu0
  %v2352 = vadd.f32 %v59, %v2351
  %v2353 = vpop.f32.mrb[0].mxu0
  %2354 = vmatprep.mubr.f32.mxu0 0.0
  %2355 = vmatmul.mubr.f32.gmra.mrb[0].mxu0 %v90
  %v2356 = vpop.f32.mrb[0].mxu0
  %v2357 = vadd.f32 %v59, %v2356
  %v2358 = vpop.f32.mrb[0].mxu0
  %2359 = vmatprep.mubr.f32.mxu0 0.0
  %2360 = vmatmul.mubr.f32.gmra.mrb[0].mxu0 %v93
  %v2361 = vpop.f32.mrb[0].mxu0
  %v2362 = vadd.f32 %v59, %v2361
  %v2363 = vpop.f32.mrb[0].mxu0
  %2364 = vmatprep.mubr.f32.mxu0 0.0
  %2365 = vmatmul.mubr.f32.gmra.mrb[0].mxu0 %v96
  %v2366 = vpop.f32.mrb[0].mxu0
  %v2367 = vadd.f32 %v59, %v2366
  %v2368 = vpop.f32.mrb[0].mxu0
  %2369 = vmatprep.mubr.f32.mxu0 0.0
  %2370 = vmatmul.mubr.f32.gmra.mrb[0].mxu0 %v99
  %v2371 = vpop.f32.mrb[0].mxu0
  %v2372 = vadd.f32 %v59, %v2371
  %v2373 = vpop.f32.mrb[0].mxu0
  %2374 = vmatprep.mubr.f32.mxu0 0.0
  %2375 = vmatmul.mubr.f32.gmra.mrb[0].mxu0 %v102
  %v2376 = vpop.f32.mrb[0].mxu0
  %v2377 = vadd.f32 %v59, %v2376
  %v2378 = vpop.f32.mrb[0].mxu0
  %2379 = vmatprep.mubr.f32.mxu0 0.0
  %2380 = vmatmul.mubr.f32.gmra.mrb[0].mxu0 %v105
  %v2381 = vpop.f32.mrb[0].mxu0
  %v2382 = vadd.f32 %v59, %v2381
  %v2383 = vpop.f32.mrb[0].mxu0
  %2384 = vmatprep.mubr.f32.mxu0 0.0
  %2385 = vmatmul.mubr.f32.gmra.mrb[0].mxu0 %v108
  %v2386 = vpop.f32.mrb[0].mxu0
  %v2387 = vadd.f32 %v59, %v2386
  %v2388 = vpop.f32.mrb[0].mxu0
  %2389 = vmatprep.mubr.f32.mxu0 0.0
  %2390 = vmatmul.mubr.f32.gmra.mrb[0].mxu0 %v111
  %v2391 = vpop.f32.mrb[0].mxu0
  %v2392 = vadd.f32 %v59, %v2391
  %v2393 = vpop.f32.mrb[0].mxu0
  %2394 = vmatprep.mubr.f32.mxu0 0.0
  %2395 = vmatmul.mubr.f32.gmra.mrb[0].mxu0 %v114
  %v2396 = vpop.f32.mrb[0].mxu0
  %v2397 = vadd.f32 %v59, %v2396
  %v2398 = vpop.f32.mrb[0].mxu0
  %2399 = vmatprep.mubr.f32.mxu0 0.0
  %2400 = vmatmul.mubr.f32.gmra.mrb[0].mxu0 %v117
  %v2401 = vpop.f32.mrb[0].mxu0
  %v2402 = vadd.f32 %v59, %v2401
  %v2403 = vpop.f32.mrb[0].mxu0
  %2404 = vmatprep.mubr.f32.mxu0 0.0
  %2405 = vmatmul.mubr.f32.gmra.mrb[0].mxu0 %v120
  %v2406 = vpop.f32.mrb[0].mxu0
  %v2407 = vadd.f32 %v59, %v2406
  %v2408 = vpop.f32.mrb[0].mxu0
  %2409 = vmatprep.mubr.f32.mxu0 0.0
  %2410 = vmatmul.mubr.f32.gmra.mrb[0].mxu0 %v123
  %v2411 = vpop.f32.mrb[0].mxu0
  %v2412 = vadd.f32 %v59, %v2411
  %v2413 = vpop.f32.mrb[0].mxu0
  %2414 = vmatprep.mubr.f32.mxu0 0.0
  %2415 = vmatmul.mubr.f32.gmra.mrb[0].mxu0 %v126
  %v2416 = vpop.f32.mrb[0].mxu0
  %v2417 = vadd.f32 %v59, %v2416
  %v2418 = vpop.f32.mrb[0].mxu0
  %2419 = vmatprep.mubr.f32.mxu0 0.0
  %2420 = vmatmul.mubr.f32.gmra.mrb[0].mxu0 %v129
  %v2421 = vpop.f32.mrb[0].mxu0
  %v2422 = vadd.f32 %v59, %v2421
  %v2423 = vpop.f32.mrb[0].mxu0
  %2424 = vmatprep.mubr.f32.mxu0 0.0
  %2425 = vmatmul.mubr.f32.gmra.mrb[0].mxu0 %v132
  %v2426 = vpop.f32.mrb[0].mxu0
  %v2427 = vadd.f32 %v59, %v2426
  %v2428 = vpop.f32.mrb[0].mxu0
  %2429 = vmatprep.mubr.f32.mxu0 0.0
  %2430 = vmatmul.mubr.f32.gmra.mrb[0].mxu0 %v135
  %v2431 = vpop.f32.mrb[0].mxu0
  %v2432 = vadd.f32 %v59, %v2431
  %v2433 = vpop.f32.mrb[0].mxu0
  %2434 = vmatprep.mubr.f32.mxu0 0.0
  %2435 = vmatmul.mubr.f32.gmra.mrb[0].mxu0 %v138
  %v2436 = vpop.f32.mrb[0].mxu0
  %v2437 = vadd.f32 %v59, %v2436
  %v2438 = vpop.f32.mrb[0].mxu0
  %2439 = vmatprep.mubr.f32.mxu0 0.0
  %2440 = vmatmul.mubr.f32.gmra.mrb[0].mxu0 %v141
  %v2441 = vpop.f32.mrb[0].mxu0
  %v2442 = vadd.f32 %v59, %v2441
  %v2443 = vpop.f32.mrb[0].mxu0
  %2444 = vmatprep.mubr.f32.mxu0 0.0
  %2445 = vmatmul.mubr.f32.gmra.mrb[0].mxu0 %v144
  %v2446 = vpop.f32.mrb[0].mxu0
  %v2447 = vadd.f32 %v59, %v2446
  %v2448 = vpop.f32.mrb[0].mxu0
  %2449 = vmatprep.mubr.f32.mxu0 0.0
  %2450 = vmatmul.mubr.f32.gmra.mrb[0].mxu0 %v147
  %v2451 = vpop.f32.mrb[0].mxu0
  %v2452 = vadd.f32 %v59, %v2451
  %v2453 = vpop.f32.mrb[0].mxu0
  %2454 = vmatprep.mubr.f32.mxu0 0.0
  %2455 = vmatmul.mubr.f32.gmra.mrb[0].mxu0 %v150
  %v2456 = vpop.f32.mrb[0].mxu0
  %v2457 = vadd.f32 %v59, %v2456
  %v2458 = vpop.f32.mrb[0].mxu0
  %2459 = vmatprep.mubr.f32.mxu0 0.0
  %2460 = vmatmul.mubr.f32.gmra.mrb[0].mxu0 %v153
  %v2461 = vpop.f32.mrb[0].mxu0
  %v2462 = vadd.f32 %v59, %v2461
  %v2463 = vpop.f32.mrb[0].mxu0
  %2464 = vmatprep.mubr.f32.mxu0 0.0
  %2465 = vmatmul.mubr.f32.gmra.mrb[0].mxu0 %v156
  %v2466 = vpop.f32.mrb[0].mxu0
  %v2467 = vadd.f32 %v59, %v2466
  %v2468 = vpop.f32.mrb[0].mxu0
  %2469 = vdwg.mxu0
  %v2470 = vld [vmem:[%s3] sm:$0x1]
  %v2471 = vld [vmem:[%s4] sm:$0x1]
  %v2472 = vsel %vm385, %v2312, 0.0
  %2473 = vadd.xlane.f32.xlu0 %v2472
  %v2474 = vpop.xlane.xlu0 %2473
  %v2475 = vsel %vm385, %v2317, 0.0
  %2476 = vadd.xlane.f32.xlu0 %v2475
  %v2477 = vpop.xlane.xlu0 %2476
  %v2478 = vsel %vm385, %v2322, 0.0
  %2479 = vadd.xlane.f32.xlu0 %v2478
  %v2480 = vpop.xlane.xlu0 %2479
  %v2481 = vsel %vm385, %v2327, 0.0
  %2482 = vadd.xlane.f32.xlu0 %v2481
  %v2483 = vpop.xlane.xlu0 %2482
  %v2484 = vsel %vm385, %v2332, 0.0
  %2485 = vadd.xlane.f32.xlu0 %v2484
  %v2486 = vpop.xlane.xlu0 %2485
  %v2487 = vsel %vm385, %v2337, 0.0
  %2488 = vadd.xlane.f32.xlu0 %v2487
  %v2489 = vpop.xlane.xlu0 %2488
  %v2490 = vsel %vm385, %v2342, 0.0
  %2491 = vadd.xlane.f32.xlu0 %v2490
  %v2492 = vpop.xlane.xlu0 %2491
  %v2493 = vsel %vm385, %v2347, 0.0
  %2494 = vadd.xlane.f32.xlu0 %v2493
  %v2495 = vpop.xlane.xlu0 %2494
  %v2496 = vsel %vm385, %v2352, 0.0
  %2497 = vadd.xlane.f32.xlu0 %v2496
  %v2498 = vpop.xlane.xlu0 %2497
  %v2499 = vsel %vm385, %v2357, 0.0
  %2500 = vadd.xlane.f32.xlu0 %v2499
  %v2501 = vpop.xlane.xlu0 %2500
  %v2502 = vsel %vm385, %v2362, 0.0
  %2503 = vadd.xlane.f32.xlu0 %v2502
  %v2504 = vpop.xlane.xlu0 %2503
  %v2505 = vsel %vm385, %v2367, 0.0
  %2506 = vadd.xlane.f32.xlu0 %v2505
  %v2507 = vpop.xlane.xlu0 %2506
  %v2508 = vsel %vm385, %v2372, 0.0
  %2509 = vadd.xlane.f32.xlu0 %v2508
  %v2510 = vpop.xlane.xlu0 %2509
  %v2511 = vsel %vm385, %v2377, 0.0
  %2512 = vadd.xlane.f32.xlu0 %v2511
  %v2513 = vpop.xlane.xlu0 %2512
  %v2514 = vsel %vm385, %v2382, 0.0
  %2515 = vadd.xlane.f32.xlu0 %v2514
  %v2516 = vpop.xlane.xlu0 %2515
  %v2517 = vsel %vm385, %v2387, 0.0
  %2518 = vadd.xlane.f32.xlu0 %v2517
  %v2519 = vpop.xlane.xlu0 %2518
  %v2520 = vsel %vm385, %v2392, 0.0
  %2521 = vadd.xlane.f32.xlu0 %v2520
  %v2522 = vpop.xlane.xlu0 %2521
  %v2523 = vsel %vm385, %v2397, 0.0
  %2524 = vadd.xlane.f32.xlu0 %v2523
  %v2525 = vpop.xlane.xlu0 %2524
  %v2526 = vsel %vm385, %v2402, 0.0
  %2527 = vadd.xlane.f32.xlu0 %v2526
  %v2528 = vpop.xlane.xlu0 %2527
  %v2529 = vsel %vm385, %v2407, 0.0
  %2530 = vadd.xlane.f32.xlu0 %v2529
  %v2531 = vpop.xlane.xlu0 %2530
  %v2532 = vsel %vm385, %v2412, 0.0
  %2533 = vadd.xlane.f32.xlu0 %v2532
  %v2534 = vpop.xlane.xlu0 %2533
  %v2535 = vsel %vm385, %v2417, 0.0
  %2536 = vadd.xlane.f32.xlu0 %v2535
  %v2537 = vpop.xlane.xlu0 %2536
  %v2538 = vsel %vm385, %v2422, 0.0
  %2539 = vadd.xlane.f32.xlu0 %v2538
  %v2540 = vpop.xlane.xlu0 %2539
  %v2541 = vsel %vm385, %v2427, 0.0
  %2542 = vadd.xlane.f32.xlu0 %v2541
  %v2543 = vpop.xlane.xlu0 %2542
  %v2544 = vsel %vm385, %v2432, 0.0
  %2545 = vadd.xlane.f32.xlu0 %v2544
  %v2546 = vpop.xlane.xlu0 %2545
  %v2547 = vsel %vm385, %v2437, 0.0
  %2548 = vadd.xlane.f32.xlu0 %v2547
  %v2549 = vpop.xlane.xlu0 %2548
  %v2550 = vsel %vm385, %v2442, 0.0
  %2551 = vadd.xlane.f32.xlu0 %v2550
  %v2552 = vpop.xlane.xlu0 %2551
  %v2553 = vsel %vm385, %v2447, 0.0
  %2554 = vadd.xlane.f32.xlu0 %v2553
  %v2555 = vpop.xlane.xlu0 %2554
  %v2556 = vsel %vm385, %v2452, 0.0
  %2557 = vadd.xlane.f32.xlu0 %v2556
  %v2558 = vpop.xlane.xlu0 %2557
  %v2559 = vsel %vm385, %v2457, 0.0
  %2560 = vadd.xlane.f32.xlu0 %v2559
  %v2561 = vpop.xlane.xlu0 %2560
  %v2562 = vsel %vm385, %v2462, 0.0
  %2563 = vadd.xlane.f32.xlu0 %v2562
  %v2564 = vpop.xlane.xlu0 %2563
  %v2565 = vsel %vm385, %v2467, 0.0
  %2566 = vadd.xlane.f32.xlu0 %v2565
  %v2567 = vpop.xlane.xlu0 %2566
  %v2568 = vmul.f32 %v2474, %v482
  %v2569 = vmul.f32 %v2477, %v482
  %v2570 = vmul.f32 %v2480, %v482
  %v2571 = vmul.f32 %v2483, %v482
  %v2572 = vmul.f32 %v2486, %v482
  %v2573 = vmul.f32 %v2489, %v482
  %v2574 = vmul.f32 %v2492, %v482
  %v2575 = vmul.f32 %v2495, %v482
  %v2576 = vmul.f32 %v2498, %v482
  %v2577 = vmul.f32 %v2501, %v482
  %v2578 = vmul.f32 %v2504, %v482
  %v2579 = vmul.f32 %v2507, %v482
  %v2580 = vmul.f32 %v2510, %v482
  %v2581 = vmul.f32 %v2513, %v482
  %v2582 = vmul.f32 %v2516, %v482
  %v2583 = vmul.f32 %v2519, %v482
  %v2584 = vmul.f32 %v2522, %v482
  %v2585 = vmul.f32 %v2525, %v482
  %v2586 = vmul.f32 %v2528, %v482
  %v2587 = vmul.f32 %v2531, %v482
  %v2588 = vmul.f32 %v2534, %v482
  %v2589 = vmul.f32 %v2537, %v482
  %v2590 = vmul.f32 %v2540, %v482
  %v2591 = vmul.f32 %v2543, %v482
  %v2592 = vmul.f32 %v2546, %v482
  %v2593 = vmul.f32 %v2549, %v482
  %v2594 = vmul.f32 %v2552, %v482
  %v2595 = vmul.f32 %v2555, %v482
  %v2596 = vmul.f32 %v2558, %v482
  %v2597 = vmul.f32 %v2561, %v482
  %v2598 = vmul.f32 %v2564, %v482
  %v2599 = vmul.f32 %v2567, %v482
  %v2600 = vsub.f32 %v2312, %v2568
  %v2601 = vsub.f32 %v2317, %v2569
  %v2602 = vsub.f32 %v2322, %v2570
  %v2603 = vsub.f32 %v2327, %v2571
  %v2604 = vsub.f32 %v2332, %v2572
  %v2605 = vsub.f32 %v2337, %v2573
  %v2606 = vsub.f32 %v2342, %v2574
  %v2607 = vsub.f32 %v2347, %v2575
  %v2608 = vsub.f32 %v2352, %v2576
  %v2609 = vsub.f32 %v2357, %v2577
  %v2610 = vsub.f32 %v2362, %v2578
  %v2611 = vsub.f32 %v2367, %v2579
  %v2612 = vsub.f32 %v2372, %v2580
  %v2613 = vsub.f32 %v2377, %v2581
  %v2614 = vsub.f32 %v2382, %v2582
  %v2615 = vsub.f32 %v2387, %v2583
  %v2616 = vsub.f32 %v2392, %v2584
  %v2617 = vsub.f32 %v2397, %v2585
  %v2618 = vsub.f32 %v2402, %v2586
  %v2619 = vsub.f32 %v2407, %v2587
  %v2620 = vsub.f32 %v2412, %v2588
  %v2621 = vsub.f32 %v2417, %v2589
  %v2622 = vsub.f32 %v2422, %v2590
  %v2623 = vsub.f32 %v2427, %v2591
  %v2624 = vsub.f32 %v2432, %v2592
  %v2625 = vsub.f32 %v2437, %v2593
  %v2626 = vsub.f32 %v2442, %v2594
  %v2627 = vsub.f32 %v2447, %v2595
  %v2628 = vsub.f32 %v2452, %v2596
  %v2629 = vsub.f32 %v2457, %v2597
  %v2630 = vsub.f32 %v2462, %v2598
  %v2631 = vsub.f32 %v2467, %v2599
  %v2632 = vmul.f32 %v2600, %v2600
  %v2633 = vmul.f32 %v2601, %v2601
  %v2634 = vmul.f32 %v2602, %v2602
  %v2635 = vmul.f32 %v2603, %v2603
  %v2636 = vmul.f32 %v2604, %v2604
  %v2637 = vmul.f32 %v2605, %v2605
  %v2638 = vmul.f32 %v2606, %v2606
  %v2639 = vmul.f32 %v2607, %v2607
  %v2640 = vmul.f32 %v2608, %v2608
  %v2641 = vmul.f32 %v2609, %v2609
  %v2642 = vmul.f32 %v2610, %v2610
  %v2643 = vmul.f32 %v2611, %v2611
  %v2644 = vmul.f32 %v2612, %v2612
  %v2645 = vmul.f32 %v2613, %v2613
  %v2646 = vmul.f32 %v2614, %v2614
  %v2647 = vmul.f32 %v2615, %v2615
  %v2648 = vmul.f32 %v2616, %v2616
  %v2649 = vmul.f32 %v2617, %v2617
  %v2650 = vmul.f32 %v2618, %v2618
  %v2651 = vmul.f32 %v2619, %v2619
  %v2652 = vmul.f32 %v2620, %v2620
  %v2653 = vmul.f32 %v2621, %v2621
  %v2654 = vmul.f32 %v2622, %v2622
  %v2655 = vmul.f32 %v2623, %v2623
  %v2656 = vmul.f32 %v2624, %v2624
  %v2657 = vmul.f32 %v2625, %v2625
  %v2658 = vmul.f32 %v2626, %v2626
  %v2659 = vmul.f32 %v2627, %v2627
  %v2660 = vmul.f32 %v2628, %v2628
  %v2661 = vmul.f32 %v2629, %v2629
  %v2662 = vmul.f32 %v2630, %v2630
  %v2663 = vmul.f32 %v2631, %v2631
  %v2664 = vsel %vm385, %v2632, 0.0
  %2665 = vadd.xlane.f32.xlu0 %v2664
  %v2666 = vpop.xlane.xlu0 %2665
  %v2667 = vsel %vm385, %v2633, 0.0
  %2668 = vadd.xlane.f32.xlu0 %v2667
  %v2669 = vpop.xlane.xlu0 %2668
  %v2670 = vsel %vm385, %v2634, 0.0
  %2671 = vadd.xlane.f32.xlu0 %v2670
  %v2672 = vpop.xlane.xlu0 %2671
  %v2673 = vsel %vm385, %v2635, 0.0
  %2674 = vadd.xlane.f32.xlu0 %v2673
  %v2675 = vpop.xlane.xlu0 %2674
  %v2676 = vsel %vm385, %v2636, 0.0
  %2677 = vadd.xlane.f32.xlu0 %v2676
  %v2678 = vpop.xlane.xlu0 %2677
  %v2679 = vsel %vm385, %v2637, 0.0
  %2680 = vadd.xlane.f32.xlu0 %v2679
  %v2681 = vpop.xlane.xlu0 %2680
  %v2682 = vsel %vm385, %v2638, 0.0
  %2683 = vadd.xlane.f32.xlu0 %v2682
  %v2684 = vpop.xlane.xlu0 %2683
  %v2685 = vsel %vm385, %v2639, 0.0
  %2686 = vadd.xlane.f32.xlu0 %v2685
  %v2687 = vpop.xlane.xlu0 %2686
  %v2688 = vsel %vm385, %v2640, 0.0
  %2689 = vadd.xlane.f32.xlu0 %v2688
  %v2690 = vpop.xlane.xlu0 %2689
  %v2691 = vsel %vm385, %v2641, 0.0
  %2692 = vadd.xlane.f32.xlu0 %v2691
  %v2693 = vpop.xlane.xlu0 %2692
  %v2694 = vsel %vm385, %v2642, 0.0
  %2695 = vadd.xlane.f32.xlu0 %v2694
  %v2696 = vpop.xlane.xlu0 %2695
  %v2697 = vsel %vm385, %v2643, 0.0
  %2698 = vadd.xlane.f32.xlu0 %v2697
  %v2699 = vpop.xlane.xlu0 %2698
  %v2700 = vsel %vm385, %v2644, 0.0
  %2701 = vadd.xlane.f32.xlu0 %v2700
  %v2702 = vpop.xlane.xlu0 %2701
  %v2703 = vsel %vm385, %v2645, 0.0
  %2704 = vadd.xlane.f32.xlu0 %v2703
  %v2705 = vpop.xlane.xlu0 %2704
  %v2706 = vsel %vm385, %v2646, 0.0
  %2707 = vadd.xlane.f32.xlu0 %v2706
  %v2708 = vpop.xlane.xlu0 %2707
  %v2709 = vsel %vm385, %v2647, 0.0
  %2710 = vadd.xlane.f32.xlu0 %v2709
  %v2711 = vpop.xlane.xlu0 %2710
  %v2712 = vsel %vm385, %v2648, 0.0
  %2713 = vadd.xlane.f32.xlu0 %v2712
  %v2714 = vpop.xlane.xlu0 %2713
  %v2715 = vsel %vm385, %v2649, 0.0
  %2716 = vadd.xlane.f32.xlu0 %v2715
  %v2717 = vpop.xlane.xlu0 %2716
  %v2718 = vsel %vm385, %v2650, 0.0
  %2719 = vadd.xlane.f32.xlu0 %v2718
  %v2720 = vpop.xlane.xlu0 %2719
  %v2721 = vsel %vm385, %v2651, 0.0
  %2722 = vadd.xlane.f32.xlu0 %v2721
  %v2723 = vpop.xlane.xlu0 %2722
  %v2724 = vsel %vm385, %v2652, 0.0
  %2725 = vadd.xlane.f32.xlu0 %v2724
  %v2726 = vpop.xlane.xlu0 %2725
  %v2727 = vsel %vm385, %v2653, 0.0
  %2728 = vadd.xlane.f32.xlu0 %v2727
  %v2729 = vpop.xlane.xlu0 %2728
  %v2730 = vsel %vm385, %v2654, 0.0
  %2731 = vadd.xlane.f32.xlu0 %v2730
  %v2732 = vpop.xlane.xlu0 %2731
  %v2733 = vsel %vm385, %v2655, 0.0
  %2734 = vadd.xlane.f32.xlu0 %v2733
  %v2735 = vpop.xlane.xlu0 %2734
  %v2736 = vsel %vm385, %v2656, 0.0
  %2737 = vadd.xlane.f32.xlu0 %v2736
  %v2738 = vpop.xlane.xlu0 %2737
  %v2739 = vsel %vm385, %v2657, 0.0
  %2740 = vadd.xlane.f32.xlu0 %v2739
  %v2741 = vpop.xlane.xlu0 %2740
  %v2742 = vsel %vm385, %v2658, 0.0
  %2743 = vadd.xlane.f32.xlu0 %v2742
  %v2744 = vpop.xlane.xlu0 %2743
  %v2745 = vsel %vm385, %v2659, 0.0
  %2746 = vadd.xlane.f32.xlu0 %v2745
  %v2747 = vpop.xlane.xlu0 %2746
  %v2748 = vsel %vm385, %v2660, 0.0
  %2749 = vadd.xlane.f32.xlu0 %v2748
  %v2750 = vpop.xlane.xlu0 %2749
  %v2751 = vsel %vm385, %v2661, 0.0
  %2752 = vadd.xlane.f32.xlu0 %v2751
  %v2753 = vpop.xlane.xlu0 %2752
  %v2754 = vsel %vm385, %v2662, 0.0
  %2755 = vadd.xlane.f32.xlu0 %v2754
  %v2756 = vpop.xlane.xlu0 %2755
  %v2757 = vsel %vm385, %v2663, 0.0
  %2758 = vadd.xlane.f32.xlu0 %v2757
  %v2759 = vpop.xlane.xlu0 %2758
  %v2760 = vmul.f32 %v2666, %v482
  %v2761 = vmul.f32 %v2669, %v482
  %v2762 = vmul.f32 %v2672, %v482
  %v2763 = vmul.f32 %v2675, %v482
  %v2764 = vmul.f32 %v2678, %v482
  %v2765 = vmul.f32 %v2681, %v482
  %v2766 = vmul.f32 %v2684, %v482
  %v2767 = vmul.f32 %v2687, %v482
  %v2768 = vmul.f32 %v2690, %v482
  %v2769 = vmul.f32 %v2693, %v482
  %v2770 = vmul.f32 %v2696, %v482
  %v2771 = vmul.f32 %v2699, %v482
  %v2772 = vmul.f32 %v2702, %v482
  %v2773 = vmul.f32 %v2705, %v482
  %v2774 = vmul.f32 %v2708, %v482
  %v2775 = vmul.f32 %v2711, %v482
  %v2776 = vmul.f32 %v2714, %v482
  %v2777 = vmul.f32 %v2717, %v482
  %v2778 = vmul.f32 %v2720, %v482
  %v2779 = vmul.f32 %v2723, %v482
  %v2780 = vmul.f32 %v2726, %v482
  %v2781 = vmul.f32 %v2729, %v482
  %v2782 = vmul.f32 %v2732, %v482
  %v2783 = vmul.f32 %v2735, %v482
  %v2784 = vmul.f32 %v2738, %v482
  %v2785 = vmul.f32 %v2741, %v482
  %v2786 = vmul.f32 %v2744, %v482
  %v2787 = vmul.f32 %v2747, %v482
  %v2788 = vmul.f32 %v2750, %v482
  %v2789 = vmul.f32 %v2753, %v482
  %v2790 = vmul.f32 %v2756, %v482
  %v2791 = vmul.f32 %v2759, %v482
  %v2792 = vadd.f32 %v2760, 1e-06
  %v2793 = vadd.f32 %v2761, 1e-06
  %v2794 = vadd.f32 %v2762, 1e-06
  %v2795 = vadd.f32 %v2763, 1e-06
  %v2796 = vadd.f32 %v2764, 1e-06
  %v2797 = vadd.f32 %v2765, 1e-06
  %v2798 = vadd.f32 %v2766, 1e-06
  %v2799 = vadd.f32 %v2767, 1e-06
  %v2800 = vadd.f32 %v2768, 1e-06
  %v2801 = vadd.f32 %v2769, 1e-06
  %v2802 = vadd.f32 %v2770, 1e-06
  %v2803 = vadd.f32 %v2771, 1e-06
  %v2804 = vadd.f32 %v2772, 1e-06
  %v2805 = vadd.f32 %v2773, 1e-06
  %v2806 = vadd.f32 %v2774, 1e-06
  %v2807 = vadd.f32 %v2775, 1e-06
  %v2808 = vadd.f32 %v2776, 1e-06
  %v2809 = vadd.f32 %v2777, 1e-06
  %v2810 = vadd.f32 %v2778, 1e-06
  %v2811 = vadd.f32 %v2779, 1e-06
  %v2812 = vadd.f32 %v2780, 1e-06
  %v2813 = vadd.f32 %v2781, 1e-06
  %v2814 = vadd.f32 %v2782, 1e-06
  %v2815 = vadd.f32 %v2783, 1e-06
  %v2816 = vadd.f32 %v2784, 1e-06
  %v2817 = vadd.f32 %v2785, 1e-06
  %v2818 = vadd.f32 %v2786, 1e-06
  %v2819 = vadd.f32 %v2787, 1e-06
  %v2820 = vadd.f32 %v2788, 1e-06
  %v2821 = vadd.f32 %v2789, 1e-06
  %v2822 = vadd.f32 %v2790, 1e-06
  %v2823 = vadd.f32 %v2791, 1e-06
  %v2824 = vrsqrt.pop %v2792
  %v2825 = vrsqrt.pop %v2793
  %v2826 = vrsqrt.pop %v2794
  %v2827 = vrsqrt.pop %v2795
  %v2828 = vrsqrt.pop %v2796
  %v2829 = vrsqrt.pop %v2797
  %v2830 = vrsqrt.pop %v2798
  %v2831 = vrsqrt.pop %v2799
  %v2832 = vrsqrt.pop %v2800
  %v2833 = vrsqrt.pop %v2801
  %v2834 = vrsqrt.pop %v2802
  %v2835 = vrsqrt.pop %v2803
  %v2836 = vrsqrt.pop %v2804
  %v2837 = vrsqrt.pop %v2805
  %v2838 = vrsqrt.pop %v2806
  %v2839 = vrsqrt.pop %v2807
  %v2840 = vrsqrt.pop %v2808
  %v2841 = vrsqrt.pop %v2809
  %v2842 = vrsqrt.pop %v2810
  %v2843 = vrsqrt.pop %v2811
  %v2844 = vrsqrt.pop %v2812
  %v2845 = vrsqrt.pop %v2813
  %v2846 = vrsqrt.pop %v2814
  %v2847 = vrsqrt.pop %v2815
  %v2848 = vrsqrt.pop %v2816
  %v2849 = vrsqrt.pop %v2817
  %v2850 = vrsqrt.pop %v2818
  %v2851 = vrsqrt.pop %v2819
  %v2852 = vrsqrt.pop %v2820
  %v2853 = vrsqrt.pop %v2821
  %v2854 = vrsqrt.pop %v2822
  %v2855 = vrsqrt.pop %v2823
  %v2856 = vmul.f32 %v2600, %v2824
  %v2857 = vmul.f32 %v2601, %v2825
  %v2858 = vmul.f32 %v2602, %v2826
  %v2859 = vmul.f32 %v2603, %v2827
  %v2860 = vmul.f32 %v2604, %v2828
  %v2861 = vmul.f32 %v2605, %v2829
  %v2862 = vmul.f32 %v2606, %v2830
  %v2863 = vmul.f32 %v2607, %v2831
  %v2864 = vmul.f32 %v2608, %v2832
  %v2865 = vmul.f32 %v2609, %v2833
  %v2866 = vmul.f32 %v2610, %v2834
  %v2867 = vmul.f32 %v2611, %v2835
  %v2868 = vmul.f32 %v2612, %v2836
  %v2869 = vmul.f32 %v2613, %v2837
  %v2870 = vmul.f32 %v2614, %v2838
  %v2871 = vmul.f32 %v2615, %v2839
  %v2872 = vmul.f32 %v2616, %v2840
  %v2873 = vmul.f32 %v2617, %v2841
  %v2874 = vmul.f32 %v2618, %v2842
  %v2875 = vmul.f32 %v2619, %v2843
  %v2876 = vmul.f32 %v2620, %v2844
  %v2877 = vmul.f32 %v2621, %v2845
  %v2878 = vmul.f32 %v2622, %v2846
  %v2879 = vmul.f32 %v2623, %v2847
  %v2880 = vmul.f32 %v2624, %v2848
  %v2881 = vmul.f32 %v2625, %v2849
  %v2882 = vmul.f32 %v2626, %v2850
  %v2883 = vmul.f32 %v2627, %v2851
  %v2884 = vmul.f32 %v2628, %v2852
  %v2885 = vmul.f32 %v2629, %v2853
  %v2886 = vmul.f32 %v2630, %v2854
  %v2887 = vmul.f32 %v2631, %v2855
  %v2889 = vlaneseq
  %v2890 = vshrl.u32 %v2889, 7
  %v2891 = vsub.s32 0, %v2890
  %v2892 = vrot.slane %v2470, %v2891
  %v2894 = vmul.f32 %v2856, %v2892
  %v2895 = vmul.f32 %v2857, %v2892
  %v2896 = vmul.f32 %v2858, %v2892
  %v2897 = vmul.f32 %v2859, %v2892
  %v2898 = vmul.f32 %v2860, %v2892
  %v2899 = vmul.f32 %v2861, %v2892
  %v2900 = vmul.f32 %v2862, %v2892
  %v2901 = vmul.f32 %v2863, %v2892
  %v2902 = vmul.f32 %v2864, %v2892
  %v2903 = vmul.f32 %v2865, %v2892
  %v2904 = vmul.f32 %v2866, %v2892
  %v2905 = vmul.f32 %v2867, %v2892
  %v2906 = vmul.f32 %v2868, %v2892
  %v2907 = vmul.f32 %v2869, %v2892
  %v2908 = vmul.f32 %v2870, %v2892
  %v2909 = vmul.f32 %v2871, %v2892
  %v2910 = vmul.f32 %v2872, %v2892
  %v2911 = vmul.f32 %v2873, %v2892
  %v2912 = vmul.f32 %v2874, %v2892
  %v2913 = vmul.f32 %v2875, %v2892
  %v2914 = vmul.f32 %v2876, %v2892
  %v2915 = vmul.f32 %v2877, %v2892
  %v2916 = vmul.f32 %v2878, %v2892
  %v2917 = vmul.f32 %v2879, %v2892
  %v2918 = vmul.f32 %v2880, %v2892
  %v2919 = vmul.f32 %v2881, %v2892
  %v2920 = vmul.f32 %v2882, %v2892
  %v2921 = vmul.f32 %v2883, %v2892
  %v2922 = vmul.f32 %v2884, %v2892
  %v2923 = vmul.f32 %v2885, %v2892
  %v2924 = vmul.f32 %v2886, %v2892
  %v2925 = vmul.f32 %v2887, %v2892
  %v2927 = vlaneseq
  %v2928 = vshrl.u32 %v2927, 7
  %v2929 = vsub.s32 0, %v2928
  %v2930 = vrot.slane %v2471, %v2929
  %v2932 = vadd.f32 %v2894, %v2930
  %v2933 = vadd.f32 %v2895, %v2930
  %v2934 = vadd.f32 %v2896, %v2930
  %v2935 = vadd.f32 %v2897, %v2930
  %v2936 = vadd.f32 %v2898, %v2930
  %v2937 = vadd.f32 %v2899, %v2930
  %v2938 = vadd.f32 %v2900, %v2930
  %v2939 = vadd.f32 %v2901, %v2930
  %v2940 = vadd.f32 %v2902, %v2930
  %v2941 = vadd.f32 %v2903, %v2930
  %v2942 = vadd.f32 %v2904, %v2930
  %v2943 = vadd.f32 %v2905, %v2930
  %v2944 = vadd.f32 %v2906, %v2930
  %v2945 = vadd.f32 %v2907, %v2930
  %v2946 = vadd.f32 %v2908, %v2930
  %v2947 = vadd.f32 %v2909, %v2930
  %v2948 = vadd.f32 %v2910, %v2930
  %v2949 = vadd.f32 %v2911, %v2930
  %v2950 = vadd.f32 %v2912, %v2930
  %v2951 = vadd.f32 %v2913, %v2930
  %v2952 = vadd.f32 %v2914, %v2930
  %v2953 = vadd.f32 %v2915, %v2930
  %v2954 = vadd.f32 %v2916, %v2930
  %v2955 = vadd.f32 %v2917, %v2930
  %v2956 = vadd.f32 %v2918, %v2930
  %v2957 = vadd.f32 %v2919, %v2930
  %v2958 = vadd.f32 %v2920, %v2930
  %v2959 = vadd.f32 %v2921, %v2930
  %v2960 = vadd.f32 %v2922, %v2930
  %v2961 = vadd.f32 %v2923, %v2930
  %v2962 = vadd.f32 %v2924, %v2930
  %v2963 = vadd.f32 %v2925, %v2930
  %v2964 = vmul.f32 %v2932, 0.5
  %v2965 = vmul.f32 %v2933, 0.5
  %v2966 = vmul.f32 %v2934, 0.5
  %v2967 = vmul.f32 %v2935, 0.5
  %v2968 = vmul.f32 %v2936, 0.5
  %v2969 = vmul.f32 %v2937, 0.5
  %v2970 = vmul.f32 %v2938, 0.5
  %v2971 = vmul.f32 %v2939, 0.5
  %v2972 = vmul.f32 %v2940, 0.5
  %v2973 = vmul.f32 %v2941, 0.5
  %v2974 = vmul.f32 %v2942, 0.5
  %v2975 = vmul.f32 %v2943, 0.5
  %v2976 = vmul.f32 %v2944, 0.5
  %v2977 = vmul.f32 %v2945, 0.5
  %v2978 = vmul.f32 %v2946, 0.5
  %v2979 = vmul.f32 %v2947, 0.5
  %v2980 = vmul.f32 %v2948, 0.5
  %v2981 = vmul.f32 %v2949, 0.5
  %v2982 = vmul.f32 %v2950, 0.5
  %v2983 = vmul.f32 %v2951, 0.5
  %v2984 = vmul.f32 %v2952, 0.5
  %v2985 = vmul.f32 %v2953, 0.5
  %v2986 = vmul.f32 %v2954, 0.5
  %v2987 = vmul.f32 %v2955, 0.5
  %v2988 = vmul.f32 %v2956, 0.5
  %v2989 = vmul.f32 %v2957, 0.5
  %v2990 = vmul.f32 %v2958, 0.5
  %v2991 = vmul.f32 %v2959, 0.5
  %v2992 = vmul.f32 %v2960, 0.5
  %v2993 = vmul.f32 %v2961, 0.5
  %v2994 = vmul.f32 %v2962, 0.5
  %v2995 = vmul.f32 %v2963, 0.5
  %v2996 = vmul.f32 %v2932, 0.044715
  %v2997 = vmul.f32 %v2933, 0.044715
  %v2998 = vmul.f32 %v2934, 0.044715
  %v2999 = vmul.f32 %v2935, 0.044715
  %v3000 = vmul.f32 %v2936, 0.044715
  %v3001 = vmul.f32 %v2937, 0.044715
  %v3002 = vmul.f32 %v2938, 0.044715
  %v3003 = vmul.f32 %v2939, 0.044715
  %v3004 = vmul.f32 %v2940, 0.044715
  %v3005 = vmul.f32 %v2941, 0.044715
  %v3006 = vmul.f32 %v2942, 0.044715
  %v3007 = vmul.f32 %v2943, 0.044715
  %v3008 = vmul.f32 %v2944, 0.044715
  %v3009 = vmul.f32 %v2945, 0.044715
  %v3010 = vmul.f32 %v2946, 0.044715
  %v3011 = vmul.f32 %v2947, 0.044715
  %v3012 = vmul.f32 %v2948, 0.044715
  %v3013 = vmul.f32 %v2949, 0.044715
  %v3014 = vmul.f32 %v2950, 0.044715
  %v3015 = vmul.f32 %v2951, 0.044715
  %v3016 = vmul.f32 %v2952, 0.044715
  %v3017 = vmul.f32 %v2953, 0.044715
  %v3018 = vmul.f32 %v2954, 0.044715
  %v3019 = vmul.f32 %v2955, 0.044715
  %v3020 = vmul.f32 %v2956, 0.044715
  %v3021 = vmul.f32 %v2957, 0.044715
  %v3022 = vmul.f32 %v2958, 0.044715
  %v3023 = vmul.f32 %v2959, 0.044715
  %v3024 = vmul.f32 %v2960, 0.044715
  %v3025 = vmul.f32 %v2961, 0.044715
  %v3026 = vmul.f32 %v2962, 0.044715
  %v3027 = vmul.f32 %v2963, 0.044715
  %v3028 = vmul.f32 %v2996, %v2932
  %v3029 = vmul.f32 %v2997, %v2933
  %v3030 = vmul.f32 %v2998, %v2934
  %v3031 = vmul.f32 %v2999, %v2935
  %v3032 = vmul.f32 %v3000, %v2936
  %v3033 = vmul.f32 %v3001, %v2937
  %v3034 = vmul.f32 %v3002, %v2938
  %v3035 = vmul.f32 %v3003, %v2939
  %v3036 = vmul.f32 %v3004, %v2940
  %v3037 = vmul.f32 %v3005, %v2941
  %v3038 = vmul.f32 %v3006, %v2942
  %v3039 = vmul.f32 %v3007, %v2943
  %v3040 = vmul.f32 %v3008, %v2944
  %v3041 = vmul.f32 %v3009, %v2945
  %v3042 = vmul.f32 %v3010, %v2946
  %v3043 = vmul.f32 %v3011, %v2947
  %v3044 = vmul.f32 %v3012, %v2948
  %v3045 = vmul.f32 %v3013, %v2949
  %v3046 = vmul.f32 %v3014, %v2950
  %v3047 = vmul.f32 %v3015, %v2951
  %v3048 = vmul.f32 %v3016, %v2952
  %v3049 = vmul.f32 %v3017, %v2953
  %v3050 = vmul.f32 %v3018, %v2954
  %v3051 = vmul.f32 %v3019, %v2955
  %v3052 = vmul.f32 %v3020, %v2956
  %v3053 = vmul.f32 %v3021, %v2957
  %v3054 = vmul.f32 %v3022, %v2958
  %v3055 = vmul.f32 %v3023, %v2959
  %v3056 = vmul.f32 %v3024, %v2960
  %v3057 = vmul.f32 %v3025, %v2961
  %v3058 = vmul.f32 %v3026, %v2962
  %v3059 = vmul.f32 %v3027, %v2963
  %v3060 = vmul.f32 %v3028, %v2932
  %v3061 = vmul.f32 %v3029, %v2933
  %v3062 = vmul.f32 %v3030, %v2934
  %v3063 = vmul.f32 %v3031, %v2935
  %v3064 = vmul.f32 %v3032, %v2936
  %v3065 = vmul.f32 %v3033, %v2937
  %v3066 = vmul.f32 %v3034, %v2938
  %v3067 = vmul.f32 %v3035, %v2939
  %v3068 = vmul.f32 %v3036, %v2940
  %v3069 = vmul.f32 %v3037, %v2941
  %v3070 = vmul.f32 %v3038, %v2942
  %v3071 = vmul.f32 %v3039, %v2943
  %v3072 = vmul.f32 %v3040, %v2944
  %v3073 = vmul.f32 %v3041, %v2945
  %v3074 = vmul.f32 %v3042, %v2946
  %v3075 = vmul.f32 %v3043, %v2947
  %v3076 = vmul.f32 %v3044, %v2948
  %v3077 = vmul.f32 %v3045, %v2949
  %v3078 = vmul.f32 %v3046, %v2950
  %v3079 = vmul.f32 %v3047, %v2951
  %v3080 = vmul.f32 %v3048, %v2952
  %v3081 = vmul.f32 %v3049, %v2953
  %v3082 = vmul.f32 %v3050, %v2954
  %v3083 = vmul.f32 %v3051, %v2955
  %v3084 = vmul.f32 %v3052, %v2956
  %v3085 = vmul.f32 %v3053, %v2957
  %v3086 = vmul.f32 %v3054, %v2958
  %v3087 = vmul.f32 %v3055, %v2959
  %v3088 = vmul.f32 %v3056, %v2960
  %v3089 = vmul.f32 %v3057, %v2961
  %v3090 = vmul.f32 %v3058, %v2962
  %v3091 = vmul.f32 %v3059, %v2963
  %v3092 = vadd.f32 %v2932, %v3060
  %v3093 = vadd.f32 %v2933, %v3061
  %v3094 = vadd.f32 %v2934, %v3062
  %v3095 = vadd.f32 %v2935, %v3063
  %v3096 = vadd.f32 %v2936, %v3064
  %v3097 = vadd.f32 %v2937, %v3065
  %v3098 = vadd.f32 %v2938, %v3066
  %v3099 = vadd.f32 %v2939, %v3067
  %v3100 = vadd.f32 %v2940, %v3068
  %v3101 = vadd.f32 %v2941, %v3069
  %v3102 = vadd.f32 %v2942, %v3070
  %v3103 = vadd.f32 %v2943, %v3071
  %v3104 = vadd.f32 %v2944, %v3072
  %v3105 = vadd.f32 %v2945, %v3073
  %v3106 = vadd.f32 %v2946, %v3074
  %v3107 = vadd.f32 %v2947, %v3075
  %v3108 = vadd.f32 %v2948, %v3076
  %v3109 = vadd.f32 %v2949, %v3077
  %v3110 = vadd.f32 %v2950, %v3078
  %v3111 = vadd.f32 %v2951, %v3079
  %v3112 = vadd.f32 %v2952, %v3080
  %v3113 = vadd.f32 %v2953, %v3081
  %v3114 = vadd.f32 %v2954, %v3082
  %v3115 = vadd.f32 %v2955, %v3083
  %v3116 = vadd.f32 %v2956, %v3084
  %v3117 = vadd.f32 %v2957, %v3085
  %v3118 = vadd.f32 %v2958, %v3086
  %v3119 = vadd.f32 %v2959, %v3087
  %v3120 = vadd.f32 %v2960, %v3088
  %v3121 = vadd.f32 %v2961, %v3089
  %v3122 = vadd.f32 %v2962, %v3090
  %v3123 = vadd.f32 %v2963, %v3091
  %v3124 = vmul.f32 %v3092, 0.7978846
  %v3125 = vmul.f32 %v3093, 0.7978846
  %v3126 = vmul.f32 %v3094, 0.7978846
  %v3127 = vmul.f32 %v3095, 0.7978846
  %v3128 = vmul.f32 %v3096, 0.7978846
  %v3129 = vmul.f32 %v3097, 0.7978846
  %v3130 = vmul.f32 %v3098, 0.7978846
  %v3131 = vmul.f32 %v3099, 0.7978846
  %v3132 = vmul.f32 %v3100, 0.7978846
  %v3133 = vmul.f32 %v3101, 0.7978846
  %v3134 = vmul.f32 %v3102, 0.7978846
  %v3135 = vmul.f32 %v3103, 0.7978846
  %v3136 = vmul.f32 %v3104, 0.7978846
  %v3137 = vmul.f32 %v3105, 0.7978846
  %v3138 = vmul.f32 %v3106, 0.7978846
  %v3139 = vmul.f32 %v3107, 0.7978846
  %v3140 = vmul.f32 %v3108, 0.7978846
  %v3141 = vmul.f32 %v3109, 0.7978846
  %v3142 = vmul.f32 %v3110, 0.7978846
  %v3143 = vmul.f32 %v3111, 0.7978846
  %v3144 = vmul.f32 %v3112, 0.7978846
  %v3145 = vmul.f32 %v3113, 0.7978846
  %v3146 = vmul.f32 %v3114, 0.7978846
  %v3147 = vmul.f32 %v3115, 0.7978846
  %v3148 = vmul.f32 %v3116, 0.7978846
  %v3149 = vmul.f32 %v3117, 0.7978846
  %v3150 = vmul.f32 %v3118, 0.7978846
  %v3151 = vmul.f32 %v3119, 0.7978846
  %v3152 = vmul.f32 %v3120, 0.7978846
  %v3153 = vmul.f32 %v3121, 0.7978846
  %v3154 = vmul.f32 %v3122, 0.7978846
  %v3155 = vmul.f32 %v3123, 0.7978846
  %v3156 = vtanh.pop %v3124
  %v3157 = vtanh.pop %v3125
  %v3158 = vtanh.pop %v3126
  %v3159 = vtanh.pop %v3127
  %v3160 = vtanh.pop %v3128
  %v3161 = vtanh.pop %v3129
  %v3162 = vtanh.pop %v3130
  %v3163 = vtanh.pop %v3131
  %v3164 = vtanh.pop %v3132
  %v3165 = vtanh.pop %v3133
  %v3166 = vtanh.pop %v3134
  %v3167 = vtanh.pop %v3135
  %v3168 = vtanh.pop %v3136
  %v3169 = vtanh.pop %v3137
  %v3170 = vtanh.pop %v3138
  %v3171 = vtanh.pop %v3139
  %v3172 = vtanh.pop %v3140
  %v3173 = vtanh.pop %v3141
  %v3174 = vtanh.pop %v3142
  %v3175 = vtanh.pop %v3143
  %v3176 = vtanh.pop %v3144
  %v3177 = vtanh.pop %v3145
  %v3178 = vtanh.pop %v3146
  %v3179 = vtanh.pop %v3147
  %v3180 = vtanh.pop %v3148
  %v3181 = vtanh.pop %v3149
  %v3182 = vtanh.pop %v3150
  %v3183 = vtanh.pop %v3151
  %v3184 = vtanh.pop %v3152
  %v3185 = vtanh.pop %v3153
  %v3186 = vtanh.pop %v3154
  %v3187 = vtanh.pop %v3155
  %v3188 = vadd.f32 %v3156, 1.0
  %v3189 = vadd.f32 %v3157, 1.0
  %v3190 = vadd.f32 %v3158, 1.0
  %v3191 = vadd.f32 %v3159, 1.0
  %v3192 = vadd.f32 %v3160, 1.0
  %v3193 = vadd.f32 %v3161, 1.0
  %v3194 = vadd.f32 %v3162, 1.0
  %v3195 = vadd.f32 %v3163, 1.0
  %v3196 = vadd.f32 %v3164, 1.0
  %v3197 = vadd.f32 %v3165, 1.0
  %v3198 = vadd.f32 %v3166, 1.0
  %v3199 = vadd.f32 %v3167, 1.0
  %v3200 = vadd.f32 %v3168, 1.0
  %v3201 = vadd.f32 %v3169, 1.0
  %v3202 = vadd.f32 %v3170, 1.0
  %v3203 = vadd.f32 %v3171, 1.0
  %v3204 = vadd.f32 %v3172, 1.0
  %v3205 = vadd.f32 %v3173, 1.0
  %v3206 = vadd.f32 %v3174, 1.0
  %v3207 = vadd.f32 %v3175, 1.0
  %v3208 = vadd.f32 %v3176, 1.0
  %v3209 = vadd.f32 %v3177, 1.0
  %v3210 = vadd.f32 %v3178, 1.0
  %v3211 = vadd.f32 %v3179, 1.0
  %v3212 = vadd.f32 %v3180, 1.0
  %v3213 = vadd.f32 %v3181, 1.0
  %v3214 = vadd.f32 %v3182, 1.0
  %v3215 = vadd.f32 %v3183, 1.0
  %v3216 = vadd.f32 %v3184, 1.0
  %v3217 = vadd.f32 %v3185, 1.0
  %v3218 = vadd.f32 %v3186, 1.0
  %v3219 = vadd.f32 %v3187, 1.0
  %v3220 = vmul.f32 %v2964, %v3188
  %v3221 = vmul.f32 %v2965, %v3189
  %v3222 = vmul.f32 %v2966, %v3190
  %v3223 = vmul.f32 %v2967, %v3191
  %v3224 = vmul.f32 %v2968, %v3192
  %v3225 = vmul.f32 %v2969, %v3193
  %v3226 = vmul.f32 %v2970, %v3194
  %v3227 = vmul.f32 %v2971, %v3195
  %v3228 = vmul.f32 %v2972, %v3196
  %v3229 = vmul.f32 %v2973, %v3197
  %v3230 = vmul.f32 %v2974, %v3198
  %v3231 = vmul.f32 %v2975, %v3199
  %v3232 = vmul.f32 %v2976, %v3200
  %v3233 = vmul.f32 %v2977, %v3201
  %v3234 = vmul.f32 %v2978, %v3202
  %v3235 = vmul.f32 %v2979, %v3203
  %v3236 = vmul.f32 %v2980, %v3204
  %v3237 = vmul.f32 %v2981, %v3205
  %v3238 = vmul.f32 %v2982, %v3206
  %v3239 = vmul.f32 %v2983, %v3207
  %v3240 = vmul.f32 %v2984, %v3208
  %v3241 = vmul.f32 %v2985, %v3209
  %v3242 = vmul.f32 %v2986, %v3210
  %v3243 = vmul.f32 %v2987, %v3211
  %v3244 = vmul.f32 %v2988, %v3212
  %v3245 = vmul.f32 %v2989, %v3213
  %v3246 = vmul.f32 %v2990, %v3214
  %v3247 = vmul.f32 %v2991, %v3215
  %v3248 = vmul.f32 %v2992, %v3216
  %v3249 = vmul.f32 %v2993, %v3217
  %v3250 = vmul.f32 %v2994, %v3218
  %v3251 = vmul.f32 %v2995, %v3219
  %s3252 = scalar_lea.vmem %s5, 512
  %3253 = vst.msk [vmem:[%s3252] sm:$0xff] %vm385, %v3220
  %3254 = vst.msk [vmem:[%s3252 + $0x8] sm:$0xff] %vm385, %v3221
  %3255 = vst.msk [vmem:[%s3252 + $0x10] sm:$0xff] %vm385, %v3222
  %3256 = vst.msk [vmem:[%s3252 + $0x18] sm:$0xff] %vm385, %v3223
  %3257 = vst.msk [vmem:[%s3252 + $0x20] sm:$0xff] %vm385, %v3224
  %3258 = vst.msk [vmem:[%s3252 + $0x28] sm:$0xff] %vm385, %v3225
  %3259 = vst.msk [vmem:[%s3252 + $0x30] sm:$0xff] %vm385, %v3226
  %3260 = vst.msk [vmem:[%s3252 + $0x38] sm:$0xff] %vm385, %v3227
  %3261 = vst.msk [vmem:[%s3252 + $0x40] sm:$0xff] %vm385, %v3228
  %3262 = vst.msk [vmem:[%s3252 + $0x48] sm:$0xff] %vm385, %v3229
  %3263 = vst.msk [vmem:[%s3252 + $0x50] sm:$0xff] %vm385, %v3230
  %3264 = vst.msk [vmem:[%s3252 + $0x58] sm:$0xff] %vm385, %v3231
  %3265 = vst.msk [vmem:[%s3252 + $0x60] sm:$0xff] %vm385, %v3232
  %3266 = vst.msk [vmem:[%s3252 + $0x68] sm:$0xff] %vm385, %v3233
  %3267 = vst.msk [vmem:[%s3252 + $0x70] sm:$0xff] %vm385, %v3234
  %3268 = vst.msk [vmem:[%s3252 + $0x78] sm:$0xff] %vm385, %v3235
  %3269 = vst.msk [vmem:[%s3252 + $0x80] sm:$0xff] %vm385, %v3236
  %3270 = vst.msk [vmem:[%s3252 + $0x88] sm:$0xff] %vm385, %v3237
  %3271 = vst.msk [vmem:[%s3252 + $0x90] sm:$0xff] %vm385, %v3238
  %3272 = vst.msk [vmem:[%s3252 + $0x98] sm:$0xff] %vm385, %v3239
  %3273 = vst.msk [vmem:[%s3252 + $0xa0] sm:$0xff] %vm385, %v3240
  %3274 = vst.msk [vmem:[%s3252 + $0xa8] sm:$0xff] %vm385, %v3241
  %3275 = vst.msk [vmem:[%s3252 + $0xb0] sm:$0xff] %vm385, %v3242
  %3276 = vst.msk [vmem:[%s3252 + $0xb8] sm:$0xff] %vm385, %v3243
  %3277 = vst.msk [vmem:[%s3252 + $0xc0] sm:$0xff] %vm385, %v3244
  %3278 = vst.msk [vmem:[%s3252 + $0xc8] sm:$0xff] %vm385, %v3245
  %3279 = vst.msk [vmem:[%s3252 + $0xd0] sm:$0xff] %vm385, %v3246
  %3280 = vst.msk [vmem:[%s3252 + $0xd8] sm:$0xff] %vm385, %v3247
  %3281 = vst.msk [vmem:[%s3252 + $0xe0] sm:$0xff] %vm385, %v3248
  %3282 = vst.msk [vmem:[%s3252 + $0xe8] sm:$0xff] %vm385, %v3249
  %3283 = vst.msk [vmem:[%s3252 + $0xf0] sm:$0xff] %vm385, %v3250
  %3284 = vst.msk [vmem:[%s3252 + $0xf8] sm:$0xff] %vm385, %v3251
  %s3285 = scalar_lea.vmem %s1, 48
  %v3286 = vld [vmem:[%s3285] sm:$0xff]
  %v3287 = vld [vmem:[%s3285 + $0x8] sm:$0xff]
  %3288 = vmatprep.subr.mxu0 0.0
  %3289 = vmatpush1.msra.mxu0 %v3286
  %3290 = vmatprep.subr.mxu0 0.0
  %3291 = vmatpush1.msra.mxu0 %v3287
  %3292 = vmatprep.subr.mxu0 0.0
  %3293 = vmatpush1.msra.mxu0 0.0
  %3294 = vmatprep.subr.mxu0 0.0
  %3295 = vmatpush1.msra.mxu0 0.0
  %3296 = vmatprep.subr.mxu0 0.0
  %3297 = vmatpush1.msra.mxu0 0.0
  %3298 = vmatprep.subr.mxu0 0.0
  %3299 = vmatpush1.msra.mxu0 0.0
  %3300 = vmatprep.subr.mxu0 0.0
  %3301 = vmatpush1.msra.mxu0 0.0
  %3302 = vmatprep.subr.mxu0 0.0
  %3303 = vmatpush1.msra.mxu0 0.0
  %3304 = vmatprep.subr.mxu0 0.0
  %3305 = vmatpush1.msra.mxu0 0.0
  %3306 = vmatprep.subr.mxu0 0.0
  %3307 = vmatpush1.msra.mxu0 0.0
  %3308 = vmatprep.subr.mxu0 0.0
  %3309 = vmatpush1.msra.mxu0 0.0
  %3310 = vmatprep.subr.mxu0 0.0
  %3311 = vmatpush1.msra.mxu0 0.0
  %3312 = vmatprep.subr.mxu0 0.0
  %3313 = vmatpush1.msra.mxu0 0.0
  %3314 = vmatprep.subr.mxu0 0.0
  %3315 = vmatpush1.msra.mxu0 0.0
  %3316 = vmatprep.subr.mxu0 0.0
  %3317 = vmatpush1.msra.mxu0 0.0
  %3318 = vmatprep.subr.mxu0 0.0
  %3319 = vmatpush1.msra.mxu0 0.0
  %3320 = vmatprep.subr.mxu0 0.0
  %3321 = vmatpush1.msra.mxu0 0.0
  %3322 = vmatprep.subr.mxu0 0.0
  %3323 = vmatpush1.msra.mxu0 0.0
  %3324 = vmatprep.subr.mxu0 0.0
  %3325 = vmatpush1.msra.mxu0 0.0
  %3326 = vmatprep.subr.mxu0 0.0
  %3327 = vmatpush1.msra.mxu0 0.0
  %3328 = vmatprep.subr.mxu0 0.0
  %3329 = vmatpush1.msra.mxu0 0.0
  %3330 = vmatprep.subr.mxu0 0.0
  %3331 = vmatpush1.msra.mxu0 0.0
  %3332 = vmatprep.subr.mxu0 0.0
  %3333 = vmatpush1.msra.mxu0 0.0
  %3334 = vmatprep.subr.mxu0 0.0
  %3335 = vmatpush1.msra.mxu0 0.0
  %3336 = vmatprep.subr.mxu0 0.0
  %3337 = vmatpush1.msra.mxu0 0.0
  %3338 = vmatprep.subr.mxu0 0.0
  %3339 = vmatpush1.msra.mxu0 0.0
  %3340 = vmatprep.subr.mxu0 0.0
  %3341 = vmatpush1.msra.mxu0 0.0
  %3342 = vmatprep.subr.mxu0 0.0
  %3343 = vmatpush1.msra.mxu0 0.0
  %3344 = vmatprep.subr.mxu0 0.0
  %3345 = vmatpush1.msra.mxu0 0.0
  %3346 = vmatprep.subr.mxu0 0.0
  %3347 = vmatpush1.msra.mxu0 0.0
  %3348 = vmatprep.subr.mxu0 0.0
  %3349 = vmatpush1.msra.mxu0 0.0
  %3350 = vmatprep.subr.mxu0 0.0
  %3351 = vmatpush1.msra.mxu0 0.0
  %3352 = vmatprep.mubr.f32.mxu0 0.0
  %3353 = vmatmul.mubr.f32.gmra.mrb[0].mxu0 %v63
  %v3354 = vpop.f32.mrb[0].mxu0
  %v3355 = vadd.f32 %v59, %v3354
  %v3356 = vpop.f32.mrb[0].mxu0
  %3357 = vmatprep.mubr.f32.mxu0 0.0
  %3358 = vmatmul.mubr.f32.gmra.mrb[0].mxu0 %v66
  %v3359 = vpop.f32.mrb[0].mxu0
  %v3360 = vadd.f32 %v59, %v3359
  %v3361 = vpop.f32.mrb[0].mxu0
  %3362 = vmatprep.mubr.f32.mxu0 0.0
  %3363 = vmatmul.mubr.f32.gmra.mrb[0].mxu0 %v69
  %v3364 = vpop.f32.mrb[0].mxu0
  %v3365 = vadd.f32 %v59, %v3364
  %v3366 = vpop.f32.mrb[0].mxu0
  %3367 = vmatprep.mubr.f32.mxu0 0.0
  %3368 = vmatmul.mubr.f32.gmra.mrb[0].mxu0 %v72
  %v3369 = vpop.f32.mrb[0].mxu0
  %v3370 = vadd.f32 %v59, %v3369
  %v3371 = vpop.f32.mrb[0].mxu0
  %3372 = vmatprep.mubr.f32.mxu0 0.0
  %3373 = vmatmul.mubr.f32.gmra.mrb[0].mxu0 %v75
  %v3374 = vpop.f32.mrb[0].mxu0
  %v3375 = vadd.f32 %v59, %v3374
  %v3376 = vpop.f32.mrb[0].mxu0
  %3377 = vmatprep.mubr.f32.mxu0 0.0
  %3378 = vmatmul.mubr.f32.gmra.mrb[0].mxu0 %v78
  %v3379 = vpop.f32.mrb[0].mxu0
  %v3380 = vadd.f32 %v59, %v3379
  %v3381 = vpop.f32.mrb[0].mxu0
  %3382 = vmatprep.mubr.f32.mxu0 0.0
  %3383 = vmatmul.mubr.f32.gmra.mrb[0].mxu0 %v81
  %v3384 = vpop.f32.mrb[0].mxu0
  %v3385 = vadd.f32 %v59, %v3384
  %v3386 = vpop.f32.mrb[0].mxu0
  %3387 = vmatprep.mubr.f32.mxu0 0.0
  %3388 = vmatmul.mubr.f32.gmra.mrb[0].mxu0 %v84
  %v3389 = vpop.f32.mrb[0].mxu0
  %v3390 = vadd.f32 %v59, %v3389
  %v3391 = vpop.f32.mrb[0].mxu0
  %3392 = vmatprep.mubr.f32.mxu0 0.0
  %3393 = vmatmul.mubr.f32.gmra.mrb[0].mxu0 %v87
  %v3394 = vpop.f32.mrb[0].mxu0
  %v3395 = vadd.f32 %v59, %v3394
  %v3396 = vpop.f32.mrb[0].mxu0
  %3397 = vmatprep.mubr.f32.mxu0 0.0
  %3398 = vmatmul.mubr.f32.gmra.mrb[0].mxu0 %v90
  %v3399 = vpop.f32.mrb[0].mxu0
  %v3400 = vadd.f32 %v59, %v3399
  %v3401 = vpop.f32.mrb[0].mxu0
  %3402 = vmatprep.mubr.f32.mxu0 0.0
  %3403 = vmatmul.mubr.f32.gmra.mrb[0].mxu0 %v93
  %v3404 = vpop.f32.mrb[0].mxu0
  %v3405 = vadd.f32 %v59, %v3404
  %v3406 = vpop.f32.mrb[0].mxu0
  %3407 = vmatprep.mubr.f32.mxu0 0.0
  %3408 = vmatmul.mubr.f32.gmra.mrb[0].mxu0 %v96
  %v3409 = vpop.f32.mrb[0].mxu0
  %v3410 = vadd.f32 %v59, %v3409
  %v3411 = vpop.f32.mrb[0].mxu0
  %3412 = vmatprep.mubr.f32.mxu0 0.0
  %3413 = vmatmul.mubr.f32.gmra.mrb[0].mxu0 %v99
  %v3414 = vpop.f32.mrb[0].mxu0
  %v3415 = vadd.f32 %v59, %v3414
  %v3416 = vpop.f32.mrb[0].mxu0
  %3417 = vmatprep.mubr.f32.mxu0 0.0
  %3418 = vmatmul.mubr.f32.gmra.mrb[0].mxu0 %v102
  %v3419 = vpop.f32.mrb[0].mxu0
  %v3420 = vadd.f32 %v59, %v3419
  %v3421 = vpop.f32.mrb[0].mxu0
  %3422 = vmatprep.mubr.f32.mxu0 0.0
  %3423 = vmatmul.mubr.f32.gmra.mrb[0].mxu0 %v105
  %v3424 = vpop.f32.mrb[0].mxu0
  %v3425 = vadd.f32 %v59, %v3424
  %v3426 = vpop.f32.mrb[0].mxu0
  %3427 = vmatprep.mubr.f32.mxu0 0.0
  %3428 = vmatmul.mubr.f32.gmra.mrb[0].mxu0 %v108
  %v3429 = vpop.f32.mrb[0].mxu0
  %v3430 = vadd.f32 %v59, %v3429
  %v3431 = vpop.f32.mrb[0].mxu0
  %3432 = vmatprep.mubr.f32.mxu0 0.0
  %3433 = vmatmul.mubr.f32.gmra.mrb[0].mxu0 %v111
  %v3434 = vpop.f32.mrb[0].mxu0
  %v3435 = vadd.f32 %v59, %v3434
  %v3436 = vpop.f32.mrb[0].mxu0
  %3437 = vmatprep.mubr.f32.mxu0 0.0
  %3438 = vmatmul.mubr.f32.gmra.mrb[0].mxu0 %v114
  %v3439 = vpop.f32.mrb[0].mxu0
  %v3440 = vadd.f32 %v59, %v3439
  %v3441 = vpop.f32.mrb[0].mxu0
  %3442 = vmatprep.mubr.f32.mxu0 0.0
  %3443 = vmatmul.mubr.f32.gmra.mrb[0].mxu0 %v117
  %v3444 = vpop.f32.mrb[0].mxu0
  %v3445 = vadd.f32 %v59, %v3444
  %v3446 = vpop.f32.mrb[0].mxu0
  %3447 = vmatprep.mubr.f32.mxu0 0.0
  %3448 = vmatmul.mubr.f32.gmra.mrb[0].mxu0 %v120
  %v3449 = vpop.f32.mrb[0].mxu0
  %v3450 = vadd.f32 %v59, %v3449
  %v3451 = vpop.f32.mrb[0].mxu0
  %3452 = vmatprep.mubr.f32.mxu0 0.0
  %3453 = vmatmul.mubr.f32.gmra.mrb[0].mxu0 %v123
  %v3454 = vpop.f32.mrb[0].mxu0
  %v3455 = vadd.f32 %v59, %v3454
  %v3456 = vpop.f32.mrb[0].mxu0
  %3457 = vmatprep.mubr.f32.mxu0 0.0
  %3458 = vmatmul.mubr.f32.gmra.mrb[0].mxu0 %v126
  %v3459 = vpop.f32.mrb[0].mxu0
  %v3460 = vadd.f32 %v59, %v3459
  %v3461 = vpop.f32.mrb[0].mxu0
  %3462 = vmatprep.mubr.f32.mxu0 0.0
  %3463 = vmatmul.mubr.f32.gmra.mrb[0].mxu0 %v129
  %v3464 = vpop.f32.mrb[0].mxu0
  %v3465 = vadd.f32 %v59, %v3464
  %v3466 = vpop.f32.mrb[0].mxu0
  %3467 = vmatprep.mubr.f32.mxu0 0.0
  %3468 = vmatmul.mubr.f32.gmra.mrb[0].mxu0 %v132
  %v3469 = vpop.f32.mrb[0].mxu0
  %v3470 = vadd.f32 %v59, %v3469
  %v3471 = vpop.f32.mrb[0].mxu0
  %3472 = vmatprep.mubr.f32.mxu0 0.0
  %3473 = vmatmul.mubr.f32.gmra.mrb[0].mxu0 %v135
  %v3474 = vpop.f32.mrb[0].mxu0
  %v3475 = vadd.f32 %v59, %v3474
  %v3476 = vpop.f32.mrb[0].mxu0
  %3477 = vmatprep.mubr.f32.mxu0 0.0
  %3478 = vmatmul.mubr.f32.gmra.mrb[0].mxu0 %v138
  %v3479 = vpop.f32.mrb[0].mxu0
  %v3480 = vadd.f32 %v59, %v3479
  %v3481 = vpop.f32.mrb[0].mxu0
  %3482 = vmatprep.mubr.f32.mxu0 0.0
  %3483 = vmatmul.mubr.f32.gmra.mrb[0].mxu0 %v141
  %v3484 = vpop.f32.mrb[0].mxu0
  %v3485 = vadd.f32 %v59, %v3484
  %v3486 = vpop.f32.mrb[0].mxu0
  %3487 = vmatprep.mubr.f32.mxu0 0.0
  %3488 = vmatmul.mubr.f32.gmra.mrb[0].mxu0 %v144
  %v3489 = vpop.f32.mrb[0].mxu0
  %v3490 = vadd.f32 %v59, %v3489
  %v3491 = vpop.f32.mrb[0].mxu0
  %3492 = vmatprep.mubr.f32.mxu0 0.0
  %3493 = vmatmul.mubr.f32.gmra.mrb[0].mxu0 %v147
  %v3494 = vpop.f32.mrb[0].mxu0
  %v3495 = vadd.f32 %v59, %v3494
  %v3496 = vpop.f32.mrb[0].mxu0
  %3497 = vmatprep.mubr.f32.mxu0 0.0
  %3498 = vmatmul.mubr.f32.gmra.mrb[0].mxu0 %v150
  %v3499 = vpop.f32.mrb[0].mxu0
  %v3500 = vadd.f32 %v59, %v3499
  %v3501 = vpop.f32.mrb[0].mxu0
  %3502 = vmatprep.mubr.f32.mxu0 0.0
  %3503 = vmatmul.mubr.f32.gmra.mrb[0].mxu0 %v153
  %v3504 = vpop.f32.mrb[0].mxu0
  %v3505 = vadd.f32 %v59, %v3504
  %v3506 = vpop.f32.mrb[0].mxu0
  %3507 = vmatprep.mubr.f32.mxu0 0.0
  %3508 = vmatmul.mubr.f32.gmra.mrb[0].mxu0 %v156
  %v3509 = vpop.f32.mrb[0].mxu0
  %v3510 = vadd.f32 %v59, %v3509
  %v3511 = vpop.f32.mrb[0].mxu0
  %3512 = vdwg.mxu0
  %v3513 = vld [vmem:[%s3] sm:$0x1]
  %v3514 = vld [vmem:[%s4] sm:$0x1]
  %v3515 = vsel %vm385, %v3355, 0.0
  %3516 = vadd.xlane.f32.xlu0 %v3515
  %v3517 = vpop.xlane.xlu0 %3516
  %v3518 = vsel %vm385, %v3360, 0.0
  %3519 = vadd.xlane.f32.xlu0 %v3518
  %v3520 = vpop.xlane.xlu0 %3519
  %v3521 = vsel %vm385, %v3365, 0.0
  %3522 = vadd.xlane.f32.xlu0 %v3521
  %v3523 = vpop.xlane.xlu0 %3522
  %v3524 = vsel %vm385, %v3370, 0.0
  %3525 = vadd.xlane.f32.xlu0 %v3524
  %v3526 = vpop.xlane.xlu0 %3525
  %v3527 = vsel %vm385, %v3375, 0.0
  %3528 = vadd.xlane.f32.xlu0 %v3527
  %v3529 = vpop.xlane.xlu0 %3528
  %v3530 = vsel %vm385, %v3380, 0.0
  %3531 = vadd.xlane.f32.xlu0 %v3530
  %v3532 = vpop.xlane.xlu0 %3531
  %v3533 = vsel %vm385, %v3385, 0.0
  %3534 = vadd.xlane.f32.xlu0 %v3533
  %v3535 = vpop.xlane.xlu0 %3534
  %v3536 = vsel %vm385, %v3390, 0.0
  %3537 = vadd.xlane.f32.xlu0 %v3536
  %v3538 = vpop.xlane.xlu0 %3537
  %v3539 = vsel %vm385, %v3395, 0.0
  %3540 = vadd.xlane.f32.xlu0 %v3539
  %v3541 = vpop.xlane.xlu0 %3540
  %v3542 = vsel %vm385, %v3400, 0.0
  %3543 = vadd.xlane.f32.xlu0 %v3542
  %v3544 = vpop.xlane.xlu0 %3543
  %v3545 = vsel %vm385, %v3405, 0.0
  %3546 = vadd.xlane.f32.xlu0 %v3545
  %v3547 = vpop.xlane.xlu0 %3546
  %v3548 = vsel %vm385, %v3410, 0.0
  %3549 = vadd.xlane.f32.xlu0 %v3548
  %v3550 = vpop.xlane.xlu0 %3549
  %v3551 = vsel %vm385, %v3415, 0.0
  %3552 = vadd.xlane.f32.xlu0 %v3551
  %v3553 = vpop.xlane.xlu0 %3552
  %v3554 = vsel %vm385, %v3420, 0.0
  %3555 = vadd.xlane.f32.xlu0 %v3554
  %v3556 = vpop.xlane.xlu0 %3555
  %v3557 = vsel %vm385, %v3425, 0.0
  %3558 = vadd.xlane.f32.xlu0 %v3557
  %v3559 = vpop.xlane.xlu0 %3558
  %v3560 = vsel %vm385, %v3430, 0.0
  %3561 = vadd.xlane.f32.xlu0 %v3560
  %v3562 = vpop.xlane.xlu0 %3561
  %v3563 = vsel %vm385, %v3435, 0.0
  %3564 = vadd.xlane.f32.xlu0 %v3563
  %v3565 = vpop.xlane.xlu0 %3564
  %v3566 = vsel %vm385, %v3440, 0.0
  %3567 = vadd.xlane.f32.xlu0 %v3566
  %v3568 = vpop.xlane.xlu0 %3567
  %v3569 = vsel %vm385, %v3445, 0.0
  %3570 = vadd.xlane.f32.xlu0 %v3569
  %v3571 = vpop.xlane.xlu0 %3570
  %v3572 = vsel %vm385, %v3450, 0.0
  %3573 = vadd.xlane.f32.xlu0 %v3572
  %v3574 = vpop.xlane.xlu0 %3573
  %v3575 = vsel %vm385, %v3455, 0.0
  %3576 = vadd.xlane.f32.xlu0 %v3575
  %v3577 = vpop.xlane.xlu0 %3576
  %v3578 = vsel %vm385, %v3460, 0.0
  %3579 = vadd.xlane.f32.xlu0 %v3578
  %v3580 = vpop.xlane.xlu0 %3579
  %v3581 = vsel %vm385, %v3465, 0.0
  %3582 = vadd.xlane.f32.xlu0 %v3581
  %v3583 = vpop.xlane.xlu0 %3582
  %v3584 = vsel %vm385, %v3470, 0.0
  %3585 = vadd.xlane.f32.xlu0 %v3584
  %v3586 = vpop.xlane.xlu0 %3585
  %v3587 = vsel %vm385, %v3475, 0.0
  %3588 = vadd.xlane.f32.xlu0 %v3587
  %v3589 = vpop.xlane.xlu0 %3588
  %v3590 = vsel %vm385, %v3480, 0.0
  %3591 = vadd.xlane.f32.xlu0 %v3590
  %v3592 = vpop.xlane.xlu0 %3591
  %v3593 = vsel %vm385, %v3485, 0.0
  %3594 = vadd.xlane.f32.xlu0 %v3593
  %v3595 = vpop.xlane.xlu0 %3594
  %v3596 = vsel %vm385, %v3490, 0.0
  %3597 = vadd.xlane.f32.xlu0 %v3596
  %v3598 = vpop.xlane.xlu0 %3597
  %v3599 = vsel %vm385, %v3495, 0.0
  %3600 = vadd.xlane.f32.xlu0 %v3599
  %v3601 = vpop.xlane.xlu0 %3600
  %v3602 = vsel %vm385, %v3500, 0.0
  %3603 = vadd.xlane.f32.xlu0 %v3602
  %v3604 = vpop.xlane.xlu0 %3603
  %v3605 = vsel %vm385, %v3505, 0.0
  %3606 = vadd.xlane.f32.xlu0 %v3605
  %v3607 = vpop.xlane.xlu0 %3606
  %v3608 = vsel %vm385, %v3510, 0.0
  %3609 = vadd.xlane.f32.xlu0 %v3608
  %v3610 = vpop.xlane.xlu0 %3609
  %v3611 = vmul.f32 %v3517, %v482
  %v3612 = vmul.f32 %v3520, %v482
  %v3613 = vmul.f32 %v3523, %v482
  %v3614 = vmul.f32 %v3526, %v482
  %v3615 = vmul.f32 %v3529, %v482
  %v3616 = vmul.f32 %v3532, %v482
  %v3617 = vmul.f32 %v3535, %v482
  %v3618 = vmul.f32 %v3538, %v482
  %v3619 = vmul.f32 %v3541, %v482
  %v3620 = vmul.f32 %v3544, %v482
  %v3621 = vmul.f32 %v3547, %v482
  %v3622 = vmul.f32 %v3550, %v482
  %v3623 = vmul.f32 %v3553, %v482
  %v3624 = vmul.f32 %v3556, %v482
  %v3625 = vmul.f32 %v3559, %v482
  %v3626 = vmul.f32 %v3562, %v482
  %v3627 = vmul.f32 %v3565, %v482
  %v3628 = vmul.f32 %v3568, %v482
  %v3629 = vmul.f32 %v3571, %v482
  %v3630 = vmul.f32 %v3574, %v482
  %v3631 = vmul.f32 %v3577, %v482
  %v3632 = vmul.f32 %v3580, %v482
  %v3633 = vmul.f32 %v3583, %v482
  %v3634 = vmul.f32 %v3586, %v482
  %v3635 = vmul.f32 %v3589, %v482
  %v3636 = vmul.f32 %v3592, %v482
  %v3637 = vmul.f32 %v3595, %v482
  %v3638 = vmul.f32 %v3598, %v482
  %v3639 = vmul.f32 %v3601, %v482
  %v3640 = vmul.f32 %v3604, %v482
  %v3641 = vmul.f32 %v3607, %v482
  %v3642 = vmul.f32 %v3610, %v482
  %v3643 = vsub.f32 %v3355, %v3611
  %v3644 = vsub.f32 %v3360, %v3612
  %v3645 = vsub.f32 %v3365, %v3613
  %v3646 = vsub.f32 %v3370, %v3614
  %v3647 = vsub.f32 %v3375, %v3615
  %v3648 = vsub.f32 %v3380, %v3616
  %v3649 = vsub.f32 %v3385, %v3617
  %v3650 = vsub.f32 %v3390, %v3618
  %v3651 = vsub.f32 %v3395, %v3619
  %v3652 = vsub.f32 %v3400, %v3620
  %v3653 = vsub.f32 %v3405, %v3621
  %v3654 = vsub.f32 %v3410, %v3622
  %v3655 = vsub.f32 %v3415, %v3623
  %v3656 = vsub.f32 %v3420, %v3624
  %v3657 = vsub.f32 %v3425, %v3625
  %v3658 = vsub.f32 %v3430, %v3626
  %v3659 = vsub.f32 %v3435, %v3627
  %v3660 = vsub.f32 %v3440, %v3628
  %v3661 = vsub.f32 %v3445, %v3629
  %v3662 = vsub.f32 %v3450, %v3630
  %v3663 = vsub.f32 %v3455, %v3631
  %v3664 = vsub.f32 %v3460, %v3632
  %v3665 = vsub.f32 %v3465, %v3633
  %v3666 = vsub.f32 %v3470, %v3634
  %v3667 = vsub.f32 %v3475, %v3635
  %v3668 = vsub.f32 %v3480, %v3636
  %v3669 = vsub.f32 %v3485, %v3637
  %v3670 = vsub.f32 %v3490, %v3638
  %v3671 = vsub.f32 %v3495, %v3639
  %v3672 = vsub.f32 %v3500, %v3640
  %v3673 = vsub.f32 %v3505, %v3641
  %v3674 = vsub.f32 %v3510, %v3642
  %v3675 = vmul.f32 %v3643, %v3643
  %v3676 = vmul.f32 %v3644, %v3644
  %v3677 = vmul.f32 %v3645, %v3645
  %v3678 = vmul.f32 %v3646, %v3646
  %v3679 = vmul.f32 %v3647, %v3647
  %v3680 = vmul.f32 %v3648, %v3648
  %v3681 = vmul.f32 %v3649, %v3649
  %v3682 = vmul.f32 %v3650, %v3650
  %v3683 = vmul.f32 %v3651, %v3651
  %v3684 = vmul.f32 %v3652, %v3652
  %v3685 = vmul.f32 %v3653, %v3653
  %v3686 = vmul.f32 %v3654, %v3654
  %v3687 = vmul.f32 %v3655, %v3655
  %v3688 = vmul.f32 %v3656, %v3656
  %v3689 = vmul.f32 %v3657, %v3657
  %v3690 = vmul.f32 %v3658, %v3658
  %v3691 = vmul.f32 %v3659, %v3659
  %v3692 = vmul.f32 %v3660, %v3660
  %v3693 = vmul.f32 %v3661, %v3661
  %v3694 = vmul.f32 %v3662, %v3662
  %v3695 = vmul.f32 %v3663, %v3663
  %v3696 = vmul.f32 %v3664, %v3664
  %v3697 = vmul.f32 %v3665, %v3665
  %v3698 = vmul.f32 %v3666, %v3666
  %v3699 = vmul.f32 %v3667, %v3667
  %v3700 = vmul.f32 %v3668, %v3668
  %v3701 = vmul.f32 %v3669, %v3669
  %v3702 = vmul.f32 %v3670, %v3670
  %v3703 = vmul.f32 %v3671, %v3671
  %v3704 = vmul.f32 %v3672, %v3672
  %v3705 = vmul.f32 %v3673, %v3673
  %v3706 = vmul.f32 %v3674, %v3674
  %v3707 = vsel %vm385, %v3675, 0.0
  %3708 = vadd.xlane.f32.xlu0 %v3707
  %v3709 = vpop.xlane.xlu0 %3708
  %v3710 = vsel %vm385, %v3676, 0.0
  %3711 = vadd.xlane.f32.xlu0 %v3710
  %v3712 = vpop.xlane.xlu0 %3711
  %v3713 = vsel %vm385, %v3677, 0.0
  %3714 = vadd.xlane.f32.xlu0 %v3713
  %v3715 = vpop.xlane.xlu0 %3714
  %v3716 = vsel %vm385, %v3678, 0.0
  %3717 = vadd.xlane.f32.xlu0 %v3716
  %v3718 = vpop.xlane.xlu0 %3717
  %v3719 = vsel %vm385, %v3679, 0.0
  %3720 = vadd.xlane.f32.xlu0 %v3719
  %v3721 = vpop.xlane.xlu0 %3720
  %v3722 = vsel %vm385, %v3680, 0.0
  %3723 = vadd.xlane.f32.xlu0 %v3722
  %v3724 = vpop.xlane.xlu0 %3723
  %v3725 = vsel %vm385, %v3681, 0.0
  %3726 = vadd.xlane.f32.xlu0 %v3725
  %v3727 = vpop.xlane.xlu0 %3726
  %v3728 = vsel %vm385, %v3682, 0.0
  %3729 = vadd.xlane.f32.xlu0 %v3728
  %v3730 = vpop.xlane.xlu0 %3729
  %v3731 = vsel %vm385, %v3683, 0.0
  %3732 = vadd.xlane.f32.xlu0 %v3731
  %v3733 = vpop.xlane.xlu0 %3732
  %v3734 = vsel %vm385, %v3684, 0.0
  %3735 = vadd.xlane.f32.xlu0 %v3734
  %v3736 = vpop.xlane.xlu0 %3735
  %v3737 = vsel %vm385, %v3685, 0.0
  %3738 = vadd.xlane.f32.xlu0 %v3737
  %v3739 = vpop.xlane.xlu0 %3738
  %v3740 = vsel %vm385, %v3686, 0.0
  %3741 = vadd.xlane.f32.xlu0 %v3740
  %v3742 = vpop.xlane.xlu0 %3741
  %v3743 = vsel %vm385, %v3687, 0.0
  %3744 = vadd.xlane.f32.xlu0 %v3743
  %v3745 = vpop.xlane.xlu0 %3744
  %v3746 = vsel %vm385, %v3688, 0.0
  %3747 = vadd.xlane.f32.xlu0 %v3746
  %v3748 = vpop.xlane.xlu0 %3747
  %v3749 = vsel %vm385, %v3689, 0.0
  %3750 = vadd.xlane.f32.xlu0 %v3749
  %v3751 = vpop.xlane.xlu0 %3750
  %v3752 = vsel %vm385, %v3690, 0.0
  %3753 = vadd.xlane.f32.xlu0 %v3752
  %v3754 = vpop.xlane.xlu0 %3753
  %v3755 = vsel %vm385, %v3691, 0.0
  %3756 = vadd.xlane.f32.xlu0 %v3755
  %v3757 = vpop.xlane.xlu0 %3756
  %v3758 = vsel %vm385, %v3692, 0.0
  %3759 = vadd.xlane.f32.xlu0 %v3758
  %v3760 = vpop.xlane.xlu0 %3759
  %v3761 = vsel %vm385, %v3693, 0.0
  %3762 = vadd.xlane.f32.xlu0 %v3761
  %v3763 = vpop.xlane.xlu0 %3762
  %v3764 = vsel %vm385, %v3694, 0.0
  %3765 = vadd.xlane.f32.xlu0 %v3764
  %v3766 = vpop.xlane.xlu0 %3765
  %v3767 = vsel %vm385, %v3695, 0.0
  %3768 = vadd.xlane.f32.xlu0 %v3767
  %v3769 = vpop.xlane.xlu0 %3768
  %v3770 = vsel %vm385, %v3696, 0.0
  %3771 = vadd.xlane.f32.xlu0 %v3770
  %v3772 = vpop.xlane.xlu0 %3771
  %v3773 = vsel %vm385, %v3697, 0.0
  %3774 = vadd.xlane.f32.xlu0 %v3773
  %v3775 = vpop.xlane.xlu0 %3774
  %v3776 = vsel %vm385, %v3698, 0.0
  %3777 = vadd.xlane.f32.xlu0 %v3776
  %v3778 = vpop.xlane.xlu0 %3777
  %v3779 = vsel %vm385, %v3699, 0.0
  %3780 = vadd.xlane.f32.xlu0 %v3779
  %v3781 = vpop.xlane.xlu0 %3780
  %v3782 = vsel %vm385, %v3700, 0.0
  %3783 = vadd.xlane.f32.xlu0 %v3782
  %v3784 = vpop.xlane.xlu0 %3783
  %v3785 = vsel %vm385, %v3701, 0.0
  %3786 = vadd.xlane.f32.xlu0 %v3785
  %v3787 = vpop.xlane.xlu0 %3786
  %v3788 = vsel %vm385, %v3702, 0.0
  %3789 = vadd.xlane.f32.xlu0 %v3788
  %v3790 = vpop.xlane.xlu0 %3789
  %v3791 = vsel %vm385, %v3703, 0.0
  %3792 = vadd.xlane.f32.xlu0 %v3791
  %v3793 = vpop.xlane.xlu0 %3792
  %v3794 = vsel %vm385, %v3704, 0.0
  %3795 = vadd.xlane.f32.xlu0 %v3794
  %v3796 = vpop.xlane.xlu0 %3795
  %v3797 = vsel %vm385, %v3705, 0.0
  %3798 = vadd.xlane.f32.xlu0 %v3797
  %v3799 = vpop.xlane.xlu0 %3798
  %v3800 = vsel %vm385, %v3706, 0.0
  %3801 = vadd.xlane.f32.xlu0 %v3800
  %v3802 = vpop.xlane.xlu0 %3801
  %v3803 = vmul.f32 %v3709, %v482
  %v3804 = vmul.f32 %v3712, %v482
  %v3805 = vmul.f32 %v3715, %v482
  %v3806 = vmul.f32 %v3718, %v482
  %v3807 = vmul.f32 %v3721, %v482
  %v3808 = vmul.f32 %v3724, %v482
  %v3809 = vmul.f32 %v3727, %v482
  %v3810 = vmul.f32 %v3730, %v482
  %v3811 = vmul.f32 %v3733, %v482
  %v3812 = vmul.f32 %v3736, %v482
  %v3813 = vmul.f32 %v3739, %v482
  %v3814 = vmul.f32 %v3742, %v482
  %v3815 = vmul.f32 %v3745, %v482
  %v3816 = vmul.f32 %v3748, %v482
  %v3817 = vmul.f32 %v3751, %v482
  %v3818 = vmul.f32 %v3754, %v482
  %v3819 = vmul.f32 %v3757, %v482
  %v3820 = vmul.f32 %v3760, %v482
  %v3821 = vmul.f32 %v3763, %v482
  %v3822 = vmul.f32 %v3766, %v482
  %v3823 = vmul.f32 %v3769, %v482
  %v3824 = vmul.f32 %v3772, %v482
  %v3825 = vmul.f32 %v3775, %v482
  %v3826 = vmul.f32 %v3778, %v482
  %v3827 = vmul.f32 %v3781, %v482
  %v3828 = vmul.f32 %v3784, %v482
  %v3829 = vmul.f32 %v3787, %v482
  %v3830 = vmul.f32 %v3790, %v482
  %v3831 = vmul.f32 %v3793, %v482
  %v3832 = vmul.f32 %v3796, %v482
  %v3833 = vmul.f32 %v3799, %v482
  %v3834 = vmul.f32 %v3802, %v482
  %v3835 = vadd.f32 %v3803, 1e-06
  %v3836 = vadd.f32 %v3804, 1e-06
  %v3837 = vadd.f32 %v3805, 1e-06
  %v3838 = vadd.f32 %v3806, 1e-06
  %v3839 = vadd.f32 %v3807, 1e-06
  %v3840 = vadd.f32 %v3808, 1e-06
  %v3841 = vadd.f32 %v3809, 1e-06
  %v3842 = vadd.f32 %v3810, 1e-06
  %v3843 = vadd.f32 %v3811, 1e-06
  %v3844 = vadd.f32 %v3812, 1e-06
  %v3845 = vadd.f32 %v3813, 1e-06
  %v3846 = vadd.f32 %v3814, 1e-06
  %v3847 = vadd.f32 %v3815, 1e-06
  %v3848 = vadd.f32 %v3816, 1e-06
  %v3849 = vadd.f32 %v3817, 1e-06
  %v3850 = vadd.f32 %v3818, 1e-06
  %v3851 = vadd.f32 %v3819, 1e-06
  %v3852 = vadd.f32 %v3820, 1e-06
  %v3853 = vadd.f32 %v3821, 1e-06
  %v3854 = vadd.f32 %v3822, 1e-06
  %v3855 = vadd.f32 %v3823, 1e-06
  %v3856 = vadd.f32 %v3824, 1e-06
  %v3857 = vadd.f32 %v3825, 1e-06
  %v3858 = vadd.f32 %v3826, 1e-06
  %v3859 = vadd.f32 %v3827, 1e-06
  %v3860 = vadd.f32 %v3828, 1e-06
  %v3861 = vadd.f32 %v3829, 1e-06
  %v3862 = vadd.f32 %v3830, 1e-06
  %v3863 = vadd.f32 %v3831, 1e-06
  %v3864 = vadd.f32 %v3832, 1e-06
  %v3865 = vadd.f32 %v3833, 1e-06
  %v3866 = vadd.f32 %v3834, 1e-06
  %v3867 = vrsqrt.pop %v3835
  %v3868 = vrsqrt.pop %v3836
  %v3869 = vrsqrt.pop %v3837
  %v3870 = vrsqrt.pop %v3838
  %v3871 = vrsqrt.pop %v3839
  %v3872 = vrsqrt.pop %v3840
  %v3873 = vrsqrt.pop %v3841
  %v3874 = vrsqrt.pop %v3842
  %v3875 = vrsqrt.pop %v3843
  %v3876 = vrsqrt.pop %v3844
  %v3877 = vrsqrt.pop %v3845
  %v3878 = vrsqrt.pop %v3846
  %v3879 = vrsqrt.pop %v3847
  %v3880 = vrsqrt.pop %v3848
  %v3881 = vrsqrt.pop %v3849
  %v3882 = vrsqrt.pop %v3850
  %v3883 = vrsqrt.pop %v3851
  %v3884 = vrsqrt.pop %v3852
  %v3885 = vrsqrt.pop %v3853
  %v3886 = vrsqrt.pop %v3854
  %v3887 = vrsqrt.pop %v3855
  %v3888 = vrsqrt.pop %v3856
  %v3889 = vrsqrt.pop %v3857
  %v3890 = vrsqrt.pop %v3858
  %v3891 = vrsqrt.pop %v3859
  %v3892 = vrsqrt.pop %v3860
  %v3893 = vrsqrt.pop %v3861
  %v3894 = vrsqrt.pop %v3862
  %v3895 = vrsqrt.pop %v3863
  %v3896 = vrsqrt.pop %v3864
  %v3897 = vrsqrt.pop %v3865
  %v3898 = vrsqrt.pop %v3866
  %v3899 = vmul.f32 %v3643, %v3867
  %v3900 = vmul.f32 %v3644, %v3868
  %v3901 = vmul.f32 %v3645, %v3869
  %v3902 = vmul.f32 %v3646, %v3870
  %v3903 = vmul.f32 %v3647, %v3871
  %v3904 = vmul.f32 %v3648, %v3872
  %v3905 = vmul.f32 %v3649, %v3873
  %v3906 = vmul.f32 %v3650, %v3874
  %v3907 = vmul.f32 %v3651, %v3875
  %v3908 = vmul.f32 %v3652, %v3876
  %v3909 = vmul.f32 %v3653, %v3877
  %v3910 = vmul.f32 %v3654, %v3878
  %v3911 = vmul.f32 %v3655, %v3879
  %v3912 = vmul.f32 %v3656, %v3880
  %v3913 = vmul.f32 %v3657, %v3881
  %v3914 = vmul.f32 %v3658, %v3882
  %v3915 = vmul.f32 %v3659, %v3883
  %v3916 = vmul.f32 %v3660, %v3884
  %v3917 = vmul.f32 %v3661, %v3885
  %v3918 = vmul.f32 %v3662, %v3886
  %v3919 = vmul.f32 %v3663, %v3887
  %v3920 = vmul.f32 %v3664, %v3888
  %v3921 = vmul.f32 %v3665, %v3889
  %v3922 = vmul.f32 %v3666, %v3890
  %v3923 = vmul.f32 %v3667, %v3891
  %v3924 = vmul.f32 %v3668, %v3892
  %v3925 = vmul.f32 %v3669, %v3893
  %v3926 = vmul.f32 %v3670, %v3894
  %v3927 = vmul.f32 %v3671, %v3895
  %v3928 = vmul.f32 %v3672, %v3896
  %v3929 = vmul.f32 %v3673, %v3897
  %v3930 = vmul.f32 %v3674, %v3898
  %v3932 = vlaneseq
  %v3933 = vshrl.u32 %v3932, 7
  %v3934 = vsub.s32 0, %v3933
  %v3935 = vrot.slane %v3513, %v3934
  %v3937 = vmul.f32 %v3899, %v3935
  %v3938 = vmul.f32 %v3900, %v3935
  %v3939 = vmul.f32 %v3901, %v3935
  %v3940 = vmul.f32 %v3902, %v3935
  %v3941 = vmul.f32 %v3903, %v3935
  %v3942 = vmul.f32 %v3904, %v3935
  %v3943 = vmul.f32 %v3905, %v3935
  %v3944 = vmul.f32 %v3906, %v3935
  %v3945 = vmul.f32 %v3907, %v3935
  %v3946 = vmul.f32 %v3908, %v3935
  %v3947 = vmul.f32 %v3909, %v3935
  %v3948 = vmul.f32 %v3910, %v3935
  %v3949 = vmul.f32 %v3911, %v3935
  %v3950 = vmul.f32 %v3912, %v3935
  %v3951 = vmul.f32 %v3913, %v3935
  %v3952 = vmul.f32 %v3914, %v3935
  %v3953 = vmul.f32 %v3915, %v3935
  %v3954 = vmul.f32 %v3916, %v3935
  %v3955 = vmul.f32 %v3917, %v3935
  %v3956 = vmul.f32 %v3918, %v3935
  %v3957 = vmul.f32 %v3919, %v3935
  %v3958 = vmul.f32 %v3920, %v3935
  %v3959 = vmul.f32 %v3921, %v3935
  %v3960 = vmul.f32 %v3922, %v3935
  %v3961 = vmul.f32 %v3923, %v3935
  %v3962 = vmul.f32 %v3924, %v3935
  %v3963 = vmul.f32 %v3925, %v3935
  %v3964 = vmul.f32 %v3926, %v3935
  %v3965 = vmul.f32 %v3927, %v3935
  %v3966 = vmul.f32 %v3928, %v3935
  %v3967 = vmul.f32 %v3929, %v3935
  %v3968 = vmul.f32 %v3930, %v3935
  %v3970 = vlaneseq
  %v3971 = vshrl.u32 %v3970, 7
  %v3972 = vsub.s32 0, %v3971
  %v3973 = vrot.slane %v3514, %v3972
  %v3975 = vadd.f32 %v3937, %v3973
  %v3976 = vadd.f32 %v3938, %v3973
  %v3977 = vadd.f32 %v3939, %v3973
  %v3978 = vadd.f32 %v3940, %v3973
  %v3979 = vadd.f32 %v3941, %v3973
  %v3980 = vadd.f32 %v3942, %v3973
  %v3981 = vadd.f32 %v3943, %v3973
  %v3982 = vadd.f32 %v3944, %v3973
  %v3983 = vadd.f32 %v3945, %v3973
  %v3984 = vadd.f32 %v3946, %v3973
  %v3985 = vadd.f32 %v3947, %v3973
  %v3986 = vadd.f32 %v3948, %v3973
  %v3987 = vadd.f32 %v3949, %v3973
  %v3988 = vadd.f32 %v3950, %v3973
  %v3989 = vadd.f32 %v3951, %v3973
  %v3990 = vadd.f32 %v3952, %v3973
  %v3991 = vadd.f32 %v3953, %v3973
  %v3992 = vadd.f32 %v3954, %v3973
  %v3993 = vadd.f32 %v3955, %v3973
  %v3994 = vadd.f32 %v3956, %v3973
  %v3995 = vadd.f32 %v3957, %v3973
  %v3996 = vadd.f32 %v3958, %v3973
  %v3997 = vadd.f32 %v3959, %v3973
  %v3998 = vadd.f32 %v3960, %v3973
  %v3999 = vadd.f32 %v3961, %v3973
  %v4000 = vadd.f32 %v3962, %v3973
  %v4001 = vadd.f32 %v3963, %v3973
  %v4002 = vadd.f32 %v3964, %v3973
  %v4003 = vadd.f32 %v3965, %v3973
  %v4004 = vadd.f32 %v3966, %v3973
  %v4005 = vadd.f32 %v3967, %v3973
  %v4006 = vadd.f32 %v3968, %v3973
  %v4007 = vmul.f32 %v3975, 0.5
  %v4008 = vmul.f32 %v3976, 0.5
  %v4009 = vmul.f32 %v3977, 0.5
  %v4010 = vmul.f32 %v3978, 0.5
  %v4011 = vmul.f32 %v3979, 0.5
  %v4012 = vmul.f32 %v3980, 0.5
  %v4013 = vmul.f32 %v3981, 0.5
  %v4014 = vmul.f32 %v3982, 0.5
  %v4015 = vmul.f32 %v3983, 0.5
  %v4016 = vmul.f32 %v3984, 0.5
  %v4017 = vmul.f32 %v3985, 0.5
  %v4018 = vmul.f32 %v3986, 0.5
  %v4019 = vmul.f32 %v3987, 0.5
  %v4020 = vmul.f32 %v3988, 0.5
  %v4021 = vmul.f32 %v3989, 0.5
  %v4022 = vmul.f32 %v3990, 0.5
  %v4023 = vmul.f32 %v3991, 0.5
  %v4024 = vmul.f32 %v3992, 0.5
  %v4025 = vmul.f32 %v3993, 0.5
  %v4026 = vmul.f32 %v3994, 0.5
  %v4027 = vmul.f32 %v3995, 0.5
  %v4028 = vmul.f32 %v3996, 0.5
  %v4029 = vmul.f32 %v3997, 0.5
  %v4030 = vmul.f32 %v3998, 0.5
  %v4031 = vmul.f32 %v3999, 0.5
  %v4032 = vmul.f32 %v4000, 0.5
  %v4033 = vmul.f32 %v4001, 0.5
  %v4034 = vmul.f32 %v4002, 0.5
  %v4035 = vmul.f32 %v4003, 0.5
  %v4036 = vmul.f32 %v4004, 0.5
  %v4037 = vmul.f32 %v4005, 0.5
  %v4038 = vmul.f32 %v4006, 0.5
  %v4039 = vmul.f32 %v3975, 0.044715
  %v4040 = vmul.f32 %v3976, 0.044715
  %v4041 = vmul.f32 %v3977, 0.044715
  %v4042 = vmul.f32 %v3978, 0.044715
  %v4043 = vmul.f32 %v3979, 0.044715
  %v4044 = vmul.f32 %v3980, 0.044715
  %v4045 = vmul.f32 %v3981, 0.044715
  %v4046 = vmul.f32 %v3982, 0.044715
  %v4047 = vmul.f32 %v3983, 0.044715
  %v4048 = vmul.f32 %v3984, 0.044715
  %v4049 = vmul.f32 %v3985, 0.044715
  %v4050 = vmul.f32 %v3986, 0.044715
  %v4051 = vmul.f32 %v3987, 0.044715
  %v4052 = vmul.f32 %v3988, 0.044715
  %v4053 = vmul.f32 %v3989, 0.044715
  %v4054 = vmul.f32 %v3990, 0.044715
  %v4055 = vmul.f32 %v3991, 0.044715
  %v4056 = vmul.f32 %v3992, 0.044715
  %v4057 = vmul.f32 %v3993, 0.044715
  %v4058 = vmul.f32 %v3994, 0.044715
  %v4059 = vmul.f32 %v3995, 0.044715
  %v4060 = vmul.f32 %v3996, 0.044715
  %v4061 = vmul.f32 %v3997, 0.044715
  %v4062 = vmul.f32 %v3998, 0.044715
  %v4063 = vmul.f32 %v3999, 0.044715
  %v4064 = vmul.f32 %v4000, 0.044715
  %v4065 = vmul.f32 %v4001, 0.044715
  %v4066 = vmul.f32 %v4002, 0.044715
  %v4067 = vmul.f32 %v4003, 0.044715
  %v4068 = vmul.f32 %v4004, 0.044715
  %v4069 = vmul.f32 %v4005, 0.044715
  %v4070 = vmul.f32 %v4006, 0.044715
  %v4071 = vmul.f32 %v4039, %v3975
  %v4072 = vmul.f32 %v4040, %v3976
  %v4073 = vmul.f32 %v4041, %v3977
  %v4074 = vmul.f32 %v4042, %v3978
  %v4075 = vmul.f32 %v4043, %v3979
  %v4076 = vmul.f32 %v4044, %v3980
  %v4077 = vmul.f32 %v4045, %v3981
  %v4078 = vmul.f32 %v4046, %v3982
  %v4079 = vmul.f32 %v4047, %v3983
  %v4080 = vmul.f32 %v4048, %v3984
  %v4081 = vmul.f32 %v4049, %v3985
  %v4082 = vmul.f32 %v4050, %v3986
  %v4083 = vmul.f32 %v4051, %v3987
  %v4084 = vmul.f32 %v4052, %v3988
  %v4085 = vmul.f32 %v4053, %v3989
  %v4086 = vmul.f32 %v4054, %v3990
  %v4087 = vmul.f32 %v4055, %v3991
  %v4088 = vmul.f32 %v4056, %v3992
  %v4089 = vmul.f32 %v4057, %v3993
  %v4090 = vmul.f32 %v4058, %v3994
  %v4091 = vmul.f32 %v4059, %v3995
  %v4092 = vmul.f32 %v4060, %v3996
  %v4093 = vmul.f32 %v4061, %v3997
  %v4094 = vmul.f32 %v4062, %v3998
  %v4095 = vmul.f32 %v4063, %v3999
  %v4096 = vmul.f32 %v4064, %v4000
  %v4097 = vmul.f32 %v4065, %v4001
  %v4098 = vmul.f32 %v4066, %v4002
  %v4099 = vmul.f32 %v4067, %v4003
  %v4100 = vmul.f32 %v4068, %v4004
  %v4101 = vmul.f32 %v4069, %v4005
  %v4102 = vmul.f32 %v4070, %v4006
  %v4103 = vmul.f32 %v4071, %v3975
  %v4104 = vmul.f32 %v4072, %v3976
  %v4105 = vmul.f32 %v4073, %v3977
  %v4106 = vmul.f32 %v4074, %v3978
  %v4107 = vmul.f32 %v4075, %v3979
  %v4108 = vmul.f32 %v4076, %v3980
  %v4109 = vmul.f32 %v4077, %v3981
  %v4110 = vmul.f32 %v4078, %v3982
  %v4111 = vmul.f32 %v4079, %v3983
  %v4112 = vmul.f32 %v4080, %v3984
  %v4113 = vmul.f32 %v4081, %v3985
  %v4114 = vmul.f32 %v4082, %v3986
  %v4115 = vmul.f32 %v4083, %v3987
  %v4116 = vmul.f32 %v4084, %v3988
  %v4117 = vmul.f32 %v4085, %v3989
  %v4118 = vmul.f32 %v4086, %v3990
  %v4119 = vmul.f32 %v4087, %v3991
  %v4120 = vmul.f32 %v4088, %v3992
  %v4121 = vmul.f32 %v4089, %v3993
  %v4122 = vmul.f32 %v4090, %v3994
  %v4123 = vmul.f32 %v4091, %v3995
  %v4124 = vmul.f32 %v4092, %v3996
  %v4125 = vmul.f32 %v4093, %v3997
  %v4126 = vmul.f32 %v4094, %v3998
  %v4127 = vmul.f32 %v4095, %v3999
  %v4128 = vmul.f32 %v4096, %v4000
  %v4129 = vmul.f32 %v4097, %v4001
  %v4130 = vmul.f32 %v4098, %v4002
  %v4131 = vmul.f32 %v4099, %v4003
  %v4132 = vmul.f32 %v4100, %v4004
  %v4133 = vmul.f32 %v4101, %v4005
  %v4134 = vmul.f32 %v4102, %v4006
  %v4135 = vadd.f32 %v3975, %v4103
  %v4136 = vadd.f32 %v3976, %v4104
  %v4137 = vadd.f32 %v3977, %v4105
  %v4138 = vadd.f32 %v3978, %v4106
  %v4139 = vadd.f32 %v3979, %v4107
  %v4140 = vadd.f32 %v3980, %v4108
  %v4141 = vadd.f32 %v3981, %v4109
  %v4142 = vadd.f32 %v3982, %v4110
  %v4143 = vadd.f32 %v3983, %v4111
  %v4144 = vadd.f32 %v3984, %v4112
  %v4145 = vadd.f32 %v3985, %v4113
  %v4146 = vadd.f32 %v3986, %v4114
  %v4147 = vadd.f32 %v3987, %v4115
  %v4148 = vadd.f32 %v3988, %v4116
  %v4149 = vadd.f32 %v3989, %v4117
  %v4150 = vadd.f32 %v3990, %v4118
  %v4151 = vadd.f32 %v3991, %v4119
  %v4152 = vadd.f32 %v3992, %v4120
  %v4153 = vadd.f32 %v3993, %v4121
  %v4154 = vadd.f32 %v3994, %v4122
  %v4155 = vadd.f32 %v3995, %v4123
  %v4156 = vadd.f32 %v3996, %v4124
  %v4157 = vadd.f32 %v3997, %v4125
  %v4158 = vadd.f32 %v3998, %v4126
  %v4159 = vadd.f32 %v3999, %v4127
  %v4160 = vadd.f32 %v4000, %v4128
  %v4161 = vadd.f32 %v4001, %v4129
  %v4162 = vadd.f32 %v4002, %v4130
  %v4163 = vadd.f32 %v4003, %v4131
  %v4164 = vadd.f32 %v4004, %v4132
  %v4165 = vadd.f32 %v4005, %v4133
  %v4166 = vadd.f32 %v4006, %v4134
  %v4167 = vmul.f32 %v4135, 0.7978846
  %v4168 = vmul.f32 %v4136, 0.7978846
  %v4169 = vmul.f32 %v4137, 0.7978846
  %v4170 = vmul.f32 %v4138, 0.7978846
  %v4171 = vmul.f32 %v4139, 0.7978846
  %v4172 = vmul.f32 %v4140, 0.7978846
  %v4173 = vmul.f32 %v4141, 0.7978846
  %v4174 = vmul.f32 %v4142, 0.7978846
  %v4175 = vmul.f32 %v4143, 0.7978846
  %v4176 = vmul.f32 %v4144, 0.7978846
  %v4177 = vmul.f32 %v4145, 0.7978846
  %v4178 = vmul.f32 %v4146, 0.7978846
  %v4179 = vmul.f32 %v4147, 0.7978846
  %v4180 = vmul.f32 %v4148, 0.7978846
  %v4181 = vmul.f32 %v4149, 0.7978846
  %v4182 = vmul.f32 %v4150, 0.7978846
  %v4183 = vmul.f32 %v4151, 0.7978846
  %v4184 = vmul.f32 %v4152, 0.7978846
  %v4185 = vmul.f32 %v4153, 0.7978846
  %v4186 = vmul.f32 %v4154, 0.7978846
  %v4187 = vmul.f32 %v4155, 0.7978846
  %v4188 = vmul.f32 %v4156, 0.7978846
  %v4189 = vmul.f32 %v4157, 0.7978846
  %v4190 = vmul.f32 %v4158, 0.7978846
  %v4191 = vmul.f32 %v4159, 0.7978846
  %v4192 = vmul.f32 %v4160, 0.7978846
  %v4193 = vmul.f32 %v4161, 0.7978846
  %v4194 = vmul.f32 %v4162, 0.7978846
  %v4195 = vmul.f32 %v4163, 0.7978846
  %v4196 = vmul.f32 %v4164, 0.7978846
  %v4197 = vmul.f32 %v4165, 0.7978846
  %v4198 = vmul.f32 %v4166, 0.7978846
  %v4199 = vtanh.pop %v4167
  %v4200 = vtanh.pop %v4168
  %v4201 = vtanh.pop %v4169
  %v4202 = vtanh.pop %v4170
  %v4203 = vtanh.pop %v4171
  %v4204 = vtanh.pop %v4172
  %v4205 = vtanh.pop %v4173
  %v4206 = vtanh.pop %v4174
  %v4207 = vtanh.pop %v4175
  %v4208 = vtanh.pop %v4176
  %v4209 = vtanh.pop %v4177
  %v4210 = vtanh.pop %v4178
  %v4211 = vtanh.pop %v4179
  %v4212 = vtanh.pop %v4180
  %v4213 = vtanh.pop %v4181
  %v4214 = vtanh.pop %v4182
  %v4215 = vtanh.pop %v4183
  %v4216 = vtanh.pop %v4184
  %v4217 = vtanh.pop %v4185
  %v4218 = vtanh.pop %v4186
  %v4219 = vtanh.pop %v4187
  %v4220 = vtanh.pop %v4188
  %v4221 = vtanh.pop %v4189
  %v4222 = vtanh.pop %v4190
  %v4223 = vtanh.pop %v4191
  %v4224 = vtanh.pop %v4192
  %v4225 = vtanh.pop %v4193
  %v4226 = vtanh.pop %v4194
  %v4227 = vtanh.pop %v4195
  %v4228 = vtanh.pop %v4196
  %v4229 = vtanh.pop %v4197
  %v4230 = vtanh.pop %v4198
  %v4231 = vadd.f32 %v4199, 1.0
  %v4232 = vadd.f32 %v4200, 1.0
  %v4233 = vadd.f32 %v4201, 1.0
  %v4234 = vadd.f32 %v4202, 1.0
  %v4235 = vadd.f32 %v4203, 1.0
  %v4236 = vadd.f32 %v4204, 1.0
  %v4237 = vadd.f32 %v4205, 1.0
  %v4238 = vadd.f32 %v4206, 1.0
  %v4239 = vadd.f32 %v4207, 1.0
  %v4240 = vadd.f32 %v4208, 1.0
  %v4241 = vadd.f32 %v4209, 1.0
  %v4242 = vadd.f32 %v4210, 1.0
  %v4243 = vadd.f32 %v4211, 1.0
  %v4244 = vadd.f32 %v4212, 1.0
  %v4245 = vadd.f32 %v4213, 1.0
  %v4246 = vadd.f32 %v4214, 1.0
  %v4247 = vadd.f32 %v4215, 1.0
  %v4248 = vadd.f32 %v4216, 1.0
  %v4249 = vadd.f32 %v4217, 1.0
  %v4250 = vadd.f32 %v4218, 1.0
  %v4251 = vadd.f32 %v4219, 1.0
  %v4252 = vadd.f32 %v4220, 1.0
  %v4253 = vadd.f32 %v4221, 1.0
  %v4254 = vadd.f32 %v4222, 1.0
  %v4255 = vadd.f32 %v4223, 1.0
  %v4256 = vadd.f32 %v4224, 1.0
  %v4257 = vadd.f32 %v4225, 1.0
  %v4258 = vadd.f32 %v4226, 1.0
  %v4259 = vadd.f32 %v4227, 1.0
  %v4260 = vadd.f32 %v4228, 1.0
  %v4261 = vadd.f32 %v4229, 1.0
  %v4262 = vadd.f32 %v4230, 1.0
  %v4263 = vmul.f32 %v4007, %v4231
  %v4264 = vmul.f32 %v4008, %v4232
  %v4265 = vmul.f32 %v4009, %v4233
  %v4266 = vmul.f32 %v4010, %v4234
  %v4267 = vmul.f32 %v4011, %v4235
  %v4268 = vmul.f32 %v4012, %v4236
  %v4269 = vmul.f32 %v4013, %v4237
  %v4270 = vmul.f32 %v4014, %v4238
  %v4271 = vmul.f32 %v4015, %v4239
  %v4272 = vmul.f32 %v4016, %v4240
  %v4273 = vmul.f32 %v4017, %v4241
  %v4274 = vmul.f32 %v4018, %v4242
  %v4275 = vmul.f32 %v4019, %v4243
  %v4276 = vmul.f32 %v4020, %v4244
  %v4277 = vmul.f32 %v4021, %v4245
  %v4278 = vmul.f32 %v4022, %v4246
  %v4279 = vmul.f32 %v4023, %v4247
  %v4280 = vmul.f32 %v4024, %v4248
  %v4281 = vmul.f32 %v4025, %v4249
  %v4282 = vmul.f32 %v4026, %v4250
  %v4283 = vmul.f32 %v4027, %v4251
  %v4284 = vmul.f32 %v4028, %v4252
  %v4285 = vmul.f32 %v4029, %v4253
  %v4286 = vmul.f32 %v4030, %v4254
  %v4287 = vmul.f32 %v4031, %v4255
  %v4288 = vmul.f32 %v4032, %v4256
  %v4289 = vmul.f32 %v4033, %v4257
  %v4290 = vmul.f32 %v4034, %v4258
  %v4291 = vmul.f32 %v4035, %v4259
  %v4292 = vmul.f32 %v4036, %v4260
  %v4293 = vmul.f32 %v4037, %v4261
  %v4294 = vmul.f32 %v4038, %v4262
  %s4295 = scalar_lea.vmem %s5, 768
  %4296 = vst.msk [vmem:[%s4295] sm:$0xff] %vm385, %v4263
  %4297 = vst.msk [vmem:[%s4295 + $0x8] sm:$0xff] %vm385, %v4264
  %4298 = vst.msk [vmem:[%s4295 + $0x10] sm:$0xff] %vm385, %v4265
  %4299 = vst.msk [vmem:[%s4295 + $0x18] sm:$0xff] %vm385, %v4266
  %4300 = vst.msk [vmem:[%s4295 + $0x20] sm:$0xff] %vm385, %v4267
  %4301 = vst.msk [vmem:[%s4295 + $0x28] sm:$0xff] %vm385, %v4268
  %4302 = vst.msk [vmem:[%s4295 + $0x30] sm:$0xff] %vm385, %v4269
  %4303 = vst.msk [vmem:[%s4295 + $0x38] sm:$0xff] %vm385, %v4270
  %4304 = vst.msk [vmem:[%s4295 + $0x40] sm:$0xff] %vm385, %v4271
  %4305 = vst.msk [vmem:[%s4295 + $0x48] sm:$0xff] %vm385, %v4272
  %4306 = vst.msk [vmem:[%s4295 + $0x50] sm:$0xff] %vm385, %v4273
  %4307 = vst.msk [vmem:[%s4295 + $0x58] sm:$0xff] %vm385, %v4274
  %4308 = vst.msk [vmem:[%s4295 + $0x60] sm:$0xff] %vm385, %v4275
  %4309 = vst.msk [vmem:[%s4295 + $0x68] sm:$0xff] %vm385, %v4276
  %4310 = vst.msk [vmem:[%s4295 + $0x70] sm:$0xff] %vm385, %v4277
  %4311 = vst.msk [vmem:[%s4295 + $0x78] sm:$0xff] %vm385, %v4278
  %4312 = vst.msk [vmem:[%s4295 + $0x80] sm:$0xff] %vm385, %v4279
  %4313 = vst.msk [vmem:[%s4295 + $0x88] sm:$0xff] %vm385, %v4280
  %4314 = vst.msk [vmem:[%s4295 + $0x90] sm:$0xff] %vm385, %v4281
  %4315 = vst.msk [vmem:[%s4295 + $0x98] sm:$0xff] %vm385, %v4282
  %4316 = vst.msk [vmem:[%s4295 + $0xa0] sm:$0xff] %vm385, %v4283
  %4317 = vst.msk [vmem:[%s4295 + $0xa8] sm:$0xff] %vm385, %v4284
  %4318 = vst.msk [vmem:[%s4295 + $0xb0] sm:$0xff] %vm385, %v4285
  %4319 = vst.msk [vmem:[%s4295 + $0xb8] sm:$0xff] %vm385, %v4286
  %4320 = vst.msk [vmem:[%s4295 + $0xc0] sm:$0xff] %vm385, %v4287
  %4321 = vst.msk [vmem:[%s4295 + $0xc8] sm:$0xff] %vm385, %v4288
  %4322 = vst.msk [vmem:[%s4295 + $0xd0] sm:$0xff] %vm385, %v4289
  %4323 = vst.msk [vmem:[%s4295 + $0xd8] sm:$0xff] %vm385, %v4290
  %4324 = vst.msk [vmem:[%s4295 + $0xe0] sm:$0xff] %vm385, %v4291
  %4325 = vst.msk [vmem:[%s4295 + $0xe8] sm:$0xff] %vm385, %v4292
  %4326 = vst.msk [vmem:[%s4295 + $0xf0] sm:$0xff] %vm385, %v4293
  %4327 = vst.msk [vmem:[%s4295 + $0xf8] sm:$0xff] %vm385, %v4294
  // Predicated region
  $region22: #{mask_decoder_forward.6} parent=0 // pred_check
    _
  $region23: #{mask_decoder_forward.6} parent=0 // pred_check_branch
    %4329 = sbr.rel (0) target = $region25
  $region24: #{mask_decoder_forward.6} parent=0 // pred_region
    _
  $region25: #{mask_decoder_forward.6} parent=0 // pred_fallthru
    _
  // Predicated region
  $region26: #{mask_decoder_forward.6} parent=0 // pred_check
    _
  $region27: #{mask_decoder_forward.6} parent=0 // pred_check_branch
    %4331 = sbr.rel (0) target = $region29
  $region28: #{mask_decoder_forward.6} parent=0 // pred_region
    _
  $region29: #{mask_decoder_forward.6} parent=0 // pred_fallthru
    _

</llo_original>
